<compile_context>
chip_gen: v7x
topology: tpu7x:2x2x1
jax: 0.10.0
libtpu: 0.0.40
codegen_flags: <defaults>
</compile_context>

<pallas_src>
import jax
import jax.numpy as jnp
from jax.experimental import pallas as pl
from jax.experimental.pallas import tpu as pltpu

LANE = 128  # TPU lane width


def _pad_last(a, n):
    return jnp.pad(a, [(0, 0)] * (a.ndim - 1) + [(0, n - a.shape[-1])])


# --------------------- one-time parameter preparation ---------------------- #

def prepare_kernel_params(tp, H, W):
    """Convert PyTorch-layout RetinalCNN parameters to the fused-kernel layout."""
    f32 = jnp.float32
    w3 = tp["conv3d_w"].astype(f32)[:, 0, :, 0, 0]          # (C3D, D)
    b3 = tp["conv3d_b"].astype(f32)                         # (C3D,)
    w1 = tp["conv1_w"].astype(f32)                          # (C1, C3D, 3, 3)
    b1 = tp["conv1_b"].astype(f32)                          # (C1,)
    w2 = tp["conv2_w"].astype(f32)                          # (C2, C1, 3, 3)
    b2 = tp["conv2_b"].astype(f32)                          # (C2,)
    fc1w = tp["fc1_w"].astype(f32)                          # (HID, C2*H2*W2)
    fc1b = tp["fc1_b"].astype(f32)
    fc2w = tp["fc2_w"].astype(f32)                          # (OUT, HID)
    fc2b = tp["fc2_b"].astype(f32)

    C3D, D = w3.shape
    C1, C2 = w1.shape[0], w2.shape[0]
    HID, OUT = fc1w.shape[0], fc2w.shape[0]
    H2, W2 = H // 4, W // 4
    P = H2 * W2
    assert max(C1, C2, HID, OUT, D) <= LANE
    assert fc1w.shape[1] == C2 * P

    # fold conv3d into conv1: Weff[kh,kw,d,o] = sum_c w3[c,d] * w1[o,c,kh,kw]
    weff = jnp.einsum("cd,ocij->ijdo", w3, w1)              # (3,3,D,C1)
    weff = _pad_last(weff, LANE)                            # C1 -> 128
    weff = jnp.pad(weff, ((0, 0), (0, 0), (0, LANE - D), (0, 0)))  # D -> 128
    weff = weff.reshape(9 * LANE, LANE)

    # exact spatially-varying effective bias (conv3d bias only where conv1 taps
    # hit real pixels, not the zero padding ring)
    T = jnp.einsum("c,ocij->ijo", b3, w1)                   # (3,3,C1)
    Mp = jnp.pad(jnp.ones((H, W), f32), ((1, 1), (1, 1)))   # in-bounds indicator
    bmap = jnp.broadcast_to(b1, (H, W, C1))
    for kh in range(3):
        for kw in range(3):
            bmap = bmap + Mp[kh:kh + H, kw:kw + W, None] * T[kh, kw][None, None, :]
    biasmap1 = _pad_last(bmap.reshape(H * W, C1), LANE)     # (H*W, 128)

    # conv2 taps: (kh, kw, cin, cout), both channel dims lane-padded to 128
    w2t = jnp.transpose(w2, (2, 3, 1, 0))                   # (3,3,C1,C2)
    w2t = _pad_last(w2t, LANE)
    w2t = jnp.pad(w2t, ((0, 0), (0, 0), (0, LANE - C1), (0, 0)))
    w2p = w2t.reshape(9 * LANE, LANE)
    b2p = _pad_last(b2.reshape(1, C2), LANE)

    # fc1 regrouped per pooled spatial position p = h2*W2 + w2 (PyTorch NCHW flatten)
    wr = fc1w.reshape(HID, C2, P)
    wr = jnp.transpose(wr, (2, 1, 0))                       # (P, C2, HID)
    wr = _pad_last(wr, LANE)
    wr = jnp.pad(wr, ((0, 0), (0, LANE - C2), (0, 0)))      # (P, 128, 128)
    bfc1 = _pad_last(fc1b.reshape(1, HID), LANE)

    wfc2 = _pad_last(jnp.transpose(fc2w, (1, 0)), LANE)     # (HID, 128)
    wfc2 = jnp.pad(wfc2, ((0, LANE - HID), (0, 0)))         # (128, 128)
    bfc2 = _pad_last(fc2b.reshape(1, OUT), LANE)

    return dict(weff=weff, biasmap1=biasmap1, w2p=w2p, b2p=b2p,
                wfc1r=wr, bfc1=bfc1, wfc2p=wfc2, bfc2p=bfc2,
                out_dim=OUT, depth=D)


# ------------------------------ fused forward ------------------------------ #

def retinal_cnn_forward(x, kp):
    """x: (B, 1, D, H, W) float32 (PyTorch NCDHW).  Returns (B, output_size)."""
    B, cin, D, H, W = x.shape
    assert cin == 1 and D == kp["depth"]
    assert H % 4 == 0 and W % 4 == 0, "pool/flatten assume H, W divisible by 4"
    Ho, Wo = H // 2, W // 2
    H2, W2 = H // 4, W // 4
    P = H2 * W2
    OUT = kp["out_dim"]
    f32 = jnp.float32

    # NCDHW -> NHW(D) with the depth on the 128-lane axis, plus the spatial
    # zero-pad ring for the 3x3 convs (tiny, one-time input prep).
    xn = jnp.transpose(x[:, 0].astype(f32), (0, 2, 3, 1))           # (B,H,W,D)
    xn = jnp.pad(xn, ((0, 0), (1, 1), (1, 1), (0, LANE - D)))        # (B,H+2,W+2,128)

    def kernel(x_ref, weff_ref, bm1_ref, w2_ref, b2_ref, wfc1_ref, bfc1_ref,
               wfc2_ref, bfc2_ref, out_ref, hp1_sc, pad2_sc, hp2_sc):
        # ---- stage 1: conv1 (with conv3d folded in) + bias map + ReLU ----
        acc1 = bm1_ref[...]                                          # (H*W, 128)
        for kh in range(3):
            for kw in range(3):
                t = kh * 3 + kw
                xt = x_ref[0, kh:kh + H, kw:kw + W, :].reshape(H * W, LANE)
                acc1 = acc1 + jnp.dot(xt, weff_ref[t * LANE:(t + 1) * LANE, :],
                                      preferred_element_type=jnp.float32)
        v1 = jnp.maximum(acc1, 0.0)
        # 2x2 max pool: row pairs via tile-aligned reshape, col pairs via
        # stride-2 VMEM reads.
        hp1 = jnp.max(v1.reshape(Ho, 2, W, LANE), axis=1)            # (Ho, W, 128)
        hp1_sc[...] = hp1.reshape(Ho * W, LANE)
        pooled1 = jnp.maximum(hp1_sc[pl.ds(0, Ho * Wo, 2), :],
                              hp1_sc[pl.ds(1, Ho * Wo, 2), :])       # (Ho*Wo, 128)
        # zero-padded VMEM buffer feeding conv2's in-kernel im2col
        pad2_sc[...] = jnp.zeros(pad2_sc.shape, jnp.float32)
        pad2_sc[1:Ho + 1, 1:Wo + 1, :] = pooled1.reshape(Ho, Wo, LANE)

        # ---- stage 2: conv2 + bias + ReLU + pool ----
        acc2 = jnp.zeros((Ho * Wo, LANE), jnp.float32)
        for kh in range(3):
            for kw in range(3):
                t = kh * 3 + kw
                xt2 = pad2_sc[kh:kh + Ho, kw:kw + Wo, :].reshape(Ho * Wo, LANE)
                acc2 = acc2 + jnp.dot(xt2, w2_ref[t * LANE:(t + 1) * LANE, :],
                                      preferred_element_type=jnp.float32)
        v2 = jnp.maximum(acc2 + b2_ref[...], 0.0)
        hp2 = jnp.max(v2.reshape(H2, 2, Wo, LANE), axis=1)           # (H2, Wo, 128)
        hp2_sc[...] = hp2.reshape(H2 * Wo, LANE)
        pooled2 = jnp.maximum(hp2_sc[pl.ds(0, P, 2), :],
                              hp2_sc[pl.ds(1, P, 2), :])             # (P, 128)

        # ---- stage 3: fc1 + ReLU, fc2 fused in the epilogue ----
        h1 = bfc1_ref[...]                                           # (1, 128)
        for p in range(P):
            h1 = h1 + jnp.dot(pooled2[p:p + 1, :], wfc1_ref[p],
                              preferred_element_type=jnp.float32)
        h1 = jnp.maximum(h1, 0.0)
        o = jnp.dot(h1, wfc2_ref[...],
                    preferred_element_type=jnp.float32) + bfc2_ref[...]  # (1, 128)
        out_ref[...] = jnp.broadcast_to(o[None], (1, 8, LANE))

    def whole(a):
        n = a.ndim
        return pl.BlockSpec(a.shape, lambda b: (0,) * n)

    out_padded = pl.pallas_call(
        kernel,
        out_shape=jax.ShapeDtypeStruct((B, 8, LANE), f32),
        grid=(B,),
        in_specs=[
            pl.BlockSpec((1, H + 2, W + 2, LANE), lambda b: (b, 0, 0, 0)),
            whole(kp["weff"]), whole(kp["biasmap1"]),
            whole(kp["w2p"]), whole(kp["b2p"]),
            whole(kp["wfc1r"]), whole(kp["bfc1"]),
            whole(kp["wfc2p"]), whole(kp["bfc2p"]),
        ],
        out_specs=pl.BlockSpec((1, 8, LANE), lambda b: (b, 0, 0)),
        scratch_shapes=[
            pltpu.VMEM((Ho * W, LANE), f32),            # row-pooled conv1
            pltpu.VMEM((Ho + 2, Wo + 2, LANE), f32),    # zero-padded conv2 input
            pltpu.VMEM((H2 * Wo, LANE), f32),           # row-pooled conv2
        ],
        compiler_params=pltpu.CompilerParams(dimension_semantics=("parallel",)),
    )(xn, kp["weff"], kp["biasmap1"], kp["w2p"], kp["b2p"],
      kp["wfc1r"], kp["bfc1"], kp["wfc2p"], kp["bfc2p"])

    return out_padded[:, 0, :OUT]


# ----------------------------- pure-JAX reference --------------------------- #

def reference_forward(x, tp):
    """Plain XLA implementation mirroring the PyTorch module (for validation)."""
    f32 = jnp.float32
    hi = jax.lax.Precision.HIGHEST
    x = x.astype(f32)
    B = x.shape[0]
    w3 = tp["conv3d_w"][:, 0, :, 0, 0]
    y = jnp.einsum("bdhw,cd->bchw", x[:, 0], w3,
                   precision=hi) + tp["conv3d_b"][None, :, None, None]

    def conv2d(z, w, b):
        out = jax.lax.conv_general_dilated(
            z, w, window_strides=(1, 1), padding=((1, 1), (1, 1)),
            dimension_numbers=("NCHW", "OIHW", "NCHW"), precision=hi)
        return out + b[None, :, None, None]

    def pool(z):
        return jax.lax.reduce_window(z, -jnp.inf, jax.lax.max,
                                     (1, 1, 2, 2), (1, 1, 2, 2), "VALID")

    y = pool(jax.nn.relu(conv2d(y, tp["conv1_w"], tp["conv1_b"])))
    y = pool(jax.nn.relu(conv2d(y, tp["conv2_w"], tp["conv2_b"])))
    y = y.reshape(B, -1)
    y = jax.nn.relu(jnp.dot(y, tp["fc1_w"].T, precision=hi) + tp["fc1_b"])
    return jnp.dot(y, tp["fc2_w"].T, precision=hi) + tp["fc2_b"]


# ----------------------------------- main ----------------------------------- #

if __name__ == "__main__":
    B, D, H, W = 2, 8, 16, 16
    C3D, C1, C2 = 10, 32, 64
    HID, OUT = 128, 1
    TO_LINEAR = C2 * (H // 4) * (W // 4)   # 64 * 4 * 4 = 1024

    key = jax.random.PRNGKey(0)
    ks = jax.random.split(key, 11)
    # Synthetic parameters in the PyTorch layouts of RetinalCNN.__init__.
    tp = {
        "conv3d_w": 0.20 * jax.random.normal(ks[0], (C3D, 1, D, 1, 1), jnp.float32),
        "conv3d_b": 0.10 * jax.random.normal(ks[1], (C3D,), jnp.float32),
        "conv1_w": 0.10 * jax.random.normal(ks[2], (C1, C3D, 3, 3), jnp.float32),
        "conv1_b": 0.10 * jax.random.normal(ks[3], (C1,), jnp.float32),
        "conv2_w": 0.08 * jax.random.normal(ks[4], (C2, C1, 3, 3), jnp.float32),
        "conv2_b": 0.10 * jax.random.normal(ks[5], (C2,), jnp.float32),
        "fc1_w": 0.03 * jax.random.normal(ks[6], (HID, TO_LINEAR), jnp.float32),
        "fc1_b": 0.05 * jax.random.normal(ks[7], (HID,), jnp.float32),
        "fc2_w": 0.10 * jax.random.normal(ks[8], (OUT, HID), jnp.float32),
        "fc2_b": 0.05 * jax.random.normal(ks[9], (OUT,), jnp.float32),
    }
    x = jax.random.normal(ks[10], (B, 1, D, H, W), jnp.float32)

    kp = prepare_kernel_params(tp, H, W)
    out = jax.block_until_ready(retinal_cnn_forward(x, kp))
    ref = jax.block_until_ready(reference_forward(x, tp))

    assert out.shape == (B, OUT), out.shape
    assert bool(jnp.all(jnp.isfinite(out)))
    err = float(jnp.max(jnp.abs(out - ref)))
    tol = 5e-2 + 2e-2 * float(jnp.max(jnp.abs(ref)))
    assert err <= tol, (err, tol)
    print("KERNEL_OK")
</pallas_src>

<mosaic_0001>
module attributes {stable_mosaic.version = 11 : i64} {
  func.func @kernel(%arg0: i32, %arg1: memref<1x18x18x128xf32, #tpu.memory_space<vmem>>, %arg2: memref<1152x128xf32, #tpu.memory_space<vmem>>, %arg3: memref<256x128xf32, #tpu.memory_space<vmem>>, %arg4: memref<1152x128xf32, #tpu.memory_space<vmem>>, %arg5: memref<1x128xf32, #tpu.memory_space<vmem>>, %arg6: memref<16x128x128xf32, #tpu.memory_space<vmem>>, %arg7: memref<1x128xf32, #tpu.memory_space<vmem>>, %arg8: memref<128x128xf32, #tpu.memory_space<vmem>>, %arg9: memref<1x128xf32, #tpu.memory_space<vmem>>, %arg10: memref<1x8x128xf32, #tpu.memory_space<vmem>>, %arg11: memref<128x128xf32, #tpu.memory_space<vmem>>, %arg12: memref<10x10x128xf32, #tpu.memory_space<vmem>>, %arg13: memref<32x128xf32, #tpu.memory_space<vmem>>) attributes {dimension_semantics = [#tpu.dimension_semantics<parallel>], iteration_bounds = array<i64: 2>, scalar_prefetch = 0 : i64, scratch_operands = 3 : i64, tpu.core_type = #tpu.core_type<tc>, window_params = [{transform_indices = @transform_0, window_bounds = array<i64: 1, 18, 18, 128>}, {pipeline_mode = #tpu.pipeline_mode<synchronous>, transform_indices = @transform_1, window_bounds = array<i64: 1152, 128>}, {pipeline_mode = #tpu.pipeline_mode<synchronous>, transform_indices = @transform_2, window_bounds = array<i64: 256, 128>}, {pipeline_mode = #tpu.pipeline_mode<synchronous>, transform_indices = @transform_3, window_bounds = array<i64: 1152, 128>}, {pipeline_mode = #tpu.pipeline_mode<synchronous>, transform_indices = @transform_4, window_bounds = array<i64: 1, 128>}, {pipeline_mode = #tpu.pipeline_mode<synchronous>, transform_indices = @transform_5, window_bounds = array<i64: 16, 128, 128>}, {pipeline_mode = #tpu.pipeline_mode<synchronous>, transform_indices = @transform_6, window_bounds = array<i64: 1, 128>}, {pipeline_mode = #tpu.pipeline_mode<synchronous>, transform_indices = @transform_7, window_bounds = array<i64: 128, 128>}, {pipeline_mode = #tpu.pipeline_mode<synchronous>, transform_indices = @transform_8, window_bounds = array<i64: 1, 128>}, {transform_indices = @transform_9, window_bounds = array<i64: 1, 8, 128>}]} {
    %c0 = arith.constant 0 : index
    %c0_0 = arith.constant 0 : index
    %0 = vector.load %arg3[%c0, %c0_0] : memref<256x128xf32, #tpu.memory_space<vmem>>, vector<256x128xf32>
    %c0_1 = arith.constant 0 : index
    %c0_2 = arith.constant 0 : index
    %c0_3 = arith.constant 0 : index
    %c0_4 = arith.constant 0 : index
    %1 = vector.load %arg1[%c0_1, %c0_2, %c0_3, %c0_4] : memref<1x18x18x128xf32, #tpu.memory_space<vmem>>, vector<1x16x16x128xf32>
    %2 = vector.shape_cast %1 : vector<1x16x16x128xf32> to vector<16x16x128xf32>
    %3 = vector.shape_cast %2 : vector<16x16x128xf32> to vector<256x128xf32>
    %c0_5 = arith.constant 0 : index
    %c0_6 = arith.constant 0 : index
    %4 = vector.load %arg2[%c0_5, %c0_6] : memref<1152x128xf32, #tpu.memory_space<vmem>>, vector<128x128xf32>
    %cst = arith.constant dense<0.000000e+00> : vector<256x128xf32>
    %5 = tpu.matmul %3, %4, %cst {dimension_numbers = #tpu.dot_dimension_numbers<[1], [0], [0], [1], [0, 0, 1, 1], [], []>} : vector<256x128xf32>, vector<128x128xf32>, vector<256x128xf32> -> vector<256x128xf32>
    %6 = arith.addf %0, %5 : vector<256x128xf32>
    %c0_7 = arith.constant 0 : index
    %c0_8 = arith.constant 0 : index
    %c1 = arith.constant 1 : index
    %c0_9 = arith.constant 0 : index
    %7 = vector.load %arg1[%c0_7, %c0_8, %c1, %c0_9] : memref<1x18x18x128xf32, #tpu.memory_space<vmem>>, vector<1x16x16x128xf32>
    %8 = vector.shape_cast %7 : vector<1x16x16x128xf32> to vector<16x16x128xf32>
    %9 = vector.shape_cast %8 : vector<16x16x128xf32> to vector<256x128xf32>
    %c128 = arith.constant 128 : index
    %c0_10 = arith.constant 0 : index
    %10 = vector.load %arg2[%c128, %c0_10] : memref<1152x128xf32, #tpu.memory_space<vmem>>, vector<128x128xf32>
    %cst_11 = arith.constant dense<0.000000e+00> : vector<256x128xf32>
    %11 = tpu.matmul %9, %10, %cst_11 {dimension_numbers = #tpu.dot_dimension_numbers<[1], [0], [0], [1], [0, 0, 1, 1], [], []>} : vector<256x128xf32>, vector<128x128xf32>, vector<256x128xf32> -> vector<256x128xf32>
    %12 = arith.addf %6, %11 : vector<256x128xf32>
    %c0_12 = arith.constant 0 : index
    %c0_13 = arith.constant 0 : index
    %c2 = arith.constant 2 : index
    %c0_14 = arith.constant 0 : index
    %13 = vector.load %arg1[%c0_12, %c0_13, %c2, %c0_14] : memref<1x18x18x128xf32, #tpu.memory_space<vmem>>, vector<1x16x16x128xf32>
    %14 = vector.shape_cast %13 : vector<1x16x16x128xf32> to vector<16x16x128xf32>
    %15 = vector.shape_cast %14 : vector<16x16x128xf32> to vector<256x128xf32>
    %c256 = arith.constant 256 : index
    %c0_15 = arith.constant 0 : index
    %16 = vector.load %arg2[%c256, %c0_15] : memref<1152x128xf32, #tpu.memory_space<vmem>>, vector<128x128xf32>
    %cst_16 = arith.constant dense<0.000000e+00> : vector<256x128xf32>
    %17 = tpu.matmul %15, %16, %cst_16 {dimension_numbers = #tpu.dot_dimension_numbers<[1], [0], [0], [1], [0, 0, 1, 1], [], []>} : vector<256x128xf32>, vector<128x128xf32>, vector<256x128xf32> -> vector<256x128xf32>
    %18 = arith.addf %12, %17 : vector<256x128xf32>
    %c0_17 = arith.constant 0 : index
    %c1_18 = arith.constant 1 : index
    %c0_19 = arith.constant 0 : index
    %c0_20 = arith.constant 0 : index
    %19 = vector.load %arg1[%c0_17, %c1_18, %c0_19, %c0_20] : memref<1x18x18x128xf32, #tpu.memory_space<vmem>>, vector<1x16x16x128xf32>
    %20 = vector.shape_cast %19 : vector<1x16x16x128xf32> to vector<16x16x128xf32>
    %21 = vector.shape_cast %20 : vector<16x16x128xf32> to vector<256x128xf32>
    %c384 = arith.constant 384 : index
    %c0_21 = arith.constant 0 : index
    %22 = vector.load %arg2[%c384, %c0_21] : memref<1152x128xf32, #tpu.memory_space<vmem>>, vector<128x128xf32>
    %cst_22 = arith.constant dense<0.000000e+00> : vector<256x128xf32>
    %23 = tpu.matmul %21, %22, %cst_22 {dimension_numbers = #tpu.dot_dimension_numbers<[1], [0], [0], [1], [0, 0, 1, 1], [], []>} : vector<256x128xf32>, vector<128x128xf32>, vector<256x128xf32> -> vector<256x128xf32>
    %24 = arith.addf %18, %23 : vector<256x128xf32>
    %c0_23 = arith.constant 0 : index
    %c1_24 = arith.constant 1 : index
    %c1_25 = arith.constant 1 : index
    %c0_26 = arith.constant 0 : index
    %25 = vector.load %arg1[%c0_23, %c1_24, %c1_25, %c0_26] : memref<1x18x18x128xf32, #tpu.memory_space<vmem>>, vector<1x16x16x128xf32>
    %26 = vector.shape_cast %25 : vector<1x16x16x128xf32> to vector<16x16x128xf32>
    %27 = vector.shape_cast %26 : vector<16x16x128xf32> to vector<256x128xf32>
    %c512 = arith.constant 512 : index
    %c0_27 = arith.constant 0 : index
    %28 = vector.load %arg2[%c512, %c0_27] : memref<1152x128xf32, #tpu.memory_space<vmem>>, vector<128x128xf32>
    %cst_28 = arith.constant dense<0.000000e+00> : vector<256x128xf32>
    %29 = tpu.matmul %27, %28, %cst_28 {dimension_numbers = #tpu.dot_dimension_numbers<[1], [0], [0], [1], [0, 0, 1, 1], [], []>} : vector<256x128xf32>, vector<128x128xf32>, vector<256x128xf32> -> vector<256x128xf32>
    %30 = arith.addf %24, %29 : vector<256x128xf32>
    %c0_29 = arith.constant 0 : index
    %c1_30 = arith.constant 1 : index
    %c2_31 = arith.constant 2 : index
    %c0_32 = arith.constant 0 : index
    %31 = vector.load %arg1[%c0_29, %c1_30, %c2_31, %c0_32] : memref<1x18x18x128xf32, #tpu.memory_space<vmem>>, vector<1x16x16x128xf32>
    %32 = vector.shape_cast %31 : vector<1x16x16x128xf32> to vector<16x16x128xf32>
    %33 = vector.shape_cast %32 : vector<16x16x128xf32> to vector<256x128xf32>
    %c640 = arith.constant 640 : index
    %c0_33 = arith.constant 0 : index
    %34 = vector.load %arg2[%c640, %c0_33] : memref<1152x128xf32, #tpu.memory_space<vmem>>, vector<128x128xf32>
    %cst_34 = arith.constant dense<0.000000e+00> : vector<256x128xf32>
    %35 = tpu.matmul %33, %34, %cst_34 {dimension_numbers = #tpu.dot_dimension_numbers<[1], [0], [0], [1], [0, 0, 1, 1], [], []>} : vector<256x128xf32>, vector<128x128xf32>, vector<256x128xf32> -> vector<256x128xf32>
    %36 = arith.addf %30, %35 : vector<256x128xf32>
    %c0_35 = arith.constant 0 : index
    %c2_36 = arith.constant 2 : index
    %c0_37 = arith.constant 0 : index
    %c0_38 = arith.constant 0 : index
    %37 = vector.load %arg1[%c0_35, %c2_36, %c0_37, %c0_38] : memref<1x18x18x128xf32, #tpu.memory_space<vmem>>, vector<1x16x16x128xf32>
    %38 = vector.shape_cast %37 : vector<1x16x16x128xf32> to vector<16x16x128xf32>
    %39 = vector.shape_cast %38 : vector<16x16x128xf32> to vector<256x128xf32>
    %c768 = arith.constant 768 : index
    %c0_39 = arith.constant 0 : index
    %40 = vector.load %arg2[%c768, %c0_39] : memref<1152x128xf32, #tpu.memory_space<vmem>>, vector<128x128xf32>
    %cst_40 = arith.constant dense<0.000000e+00> : vector<256x128xf32>
    %41 = tpu.matmul %39, %40, %cst_40 {dimension_numbers = #tpu.dot_dimension_numbers<[1], [0], [0], [1], [0, 0, 1, 1], [], []>} : vector<256x128xf32>, vector<128x128xf32>, vector<256x128xf32> -> vector<256x128xf32>
    %42 = arith.addf %36, %41 : vector<256x128xf32>
    %c0_41 = arith.constant 0 : index
    %c2_42 = arith.constant 2 : index
    %c1_43 = arith.constant 1 : index
    %c0_44 = arith.constant 0 : index
    %43 = vector.load %arg1[%c0_41, %c2_42, %c1_43, %c0_44] : memref<1x18x18x128xf32, #tpu.memory_space<vmem>>, vector<1x16x16x128xf32>
    %44 = vector.shape_cast %43 : vector<1x16x16x128xf32> to vector<16x16x128xf32>
    %45 = vector.shape_cast %44 : vector<16x16x128xf32> to vector<256x128xf32>
    %c896 = arith.constant 896 : index
    %c0_45 = arith.constant 0 : index
    %46 = vector.load %arg2[%c896, %c0_45] : memref<1152x128xf32, #tpu.memory_space<vmem>>, vector<128x128xf32>
    %cst_46 = arith.constant dense<0.000000e+00> : vector<256x128xf32>
    %47 = tpu.matmul %45, %46, %cst_46 {dimension_numbers = #tpu.dot_dimension_numbers<[1], [0], [0], [1], [0, 0, 1, 1], [], []>} : vector<256x128xf32>, vector<128x128xf32>, vector<256x128xf32> -> vector<256x128xf32>
    %48 = arith.addf %42, %47 : vector<256x128xf32>
    %c0_47 = arith.constant 0 : index
    %c2_48 = arith.constant 2 : index
    %c2_49 = arith.constant 2 : index
    %c0_50 = arith.constant 0 : index
    %49 = vector.load %arg1[%c0_47, %c2_48, %c2_49, %c0_50] : memref<1x18x18x128xf32, #tpu.memory_space<vmem>>, vector<1x16x16x128xf32>
    %50 = vector.shape_cast %49 : vector<1x16x16x128xf32> to vector<16x16x128xf32>
    %51 = vector.shape_cast %50 : vector<16x16x128xf32> to vector<256x128xf32>
    %c1024 = arith.constant 1024 : index
    %c0_51 = arith.constant 0 : index
    %52 = vector.load %arg2[%c1024, %c0_51] : memref<1152x128xf32, #tpu.memory_space<vmem>>, vector<128x128xf32>
    %cst_52 = arith.constant dense<0.000000e+00> : vector<256x128xf32>
    %53 = tpu.matmul %51, %52, %cst_52 {dimension_numbers = #tpu.dot_dimension_numbers<[1], [0], [0], [1], [0, 0, 1, 1], [], []>} : vector<256x128xf32>, vector<128x128xf32>, vector<256x128xf32> -> vector<256x128xf32>
    %54 = arith.addf %48, %53 : vector<256x128xf32>
    %cst_53 = arith.constant 0.000000e+00 : f32
    %55 = vector.broadcast %cst_53 : f32 to vector<256x128xf32>
    %56 = arith.maximumf %54, %55 : vector<256x128xf32>
    %57 = vector.shape_cast %56 : vector<256x128xf32> to vector<8x2x16x128xf32>
    %cst_54 = arith.constant dense<0xFF800000> : vector<8x16x128xf32>
    %58 = vector.multi_reduction <maximumf>, %57, %cst_54 [1] : vector<8x2x16x128xf32> to vector<8x16x128xf32>
    %59 = vector.shape_cast %58 : vector<8x16x128xf32> to vector<128x128xf32>
    %c0_55 = arith.constant 0 : index
    %c0_56 = arith.constant 0 : index
    %60 = vector.load %arg11[%c0_55, %c0_56] : memref<128x128xf32, #tpu.memory_space<vmem>>, vector<128x128xf32>
    tpu.vector_store %arg11[%c0_55, %c0_56], %59 {strides = array<i32>} : memref<128x128xf32, #tpu.memory_space<vmem>>, vector<128x128xf32>,
    %c0_57 = arith.constant 0 : index
    %c0_58 = arith.constant 0 : index
    %61 = tpu.strided_load %arg11[%c0_57, %c0_58] {strides = array<i32: 2, 1>} : memref<128x128xf32, #tpu.memory_space<vmem>>, vector<64x128xf32>
    %c1_59 = arith.constant 1 : index
    %c0_60 = arith.constant 0 : index
    %62 = tpu.strided_load %arg11[%c1_59, %c0_60] {strides = array<i32: 2, 1>} : memref<128x128xf32, #tpu.memory_space<vmem>>, vector<64x128xf32>
    %63 = arith.maximumf %61, %62 : vector<64x128xf32>
    %cst_61 = arith.constant 0.000000e+00 : f32
    %64 = vector.broadcast %cst_61 : f32 to vector<10x10x128xf32>
    %c0_62 = arith.constant 0 : index
    %c0_63 = arith.constant 0 : index
    %c0_64 = arith.constant 0 : index
    %65 = vector.load %arg12[%c0_62, %c0_63, %c0_64] : memref<10x10x128xf32, #tpu.memory_space<vmem>>, vector<10x10x128xf32>
    tpu.vector_store %arg12[%c0_62, %c0_63, %c0_64], %64 {strides = array<i32>} : memref<10x10x128xf32, #tpu.memory_space<vmem>>, vector<10x10x128xf32>,
    %66 = vector.shape_cast %63 : vector<64x128xf32> to vector<8x8x128xf32>
    %c1_65 = arith.constant 1 : index
    %c1_66 = arith.constant 1 : index
    %c0_67 = arith.constant 0 : index
    %67 = vector.load %arg12[%c1_65, %c1_66, %c0_67] : memref<10x10x128xf32, #tpu.memory_space<vmem>>, vector<8x8x128xf32>
    tpu.vector_store %arg12[%c1_65, %c1_66, %c0_67], %66 {strides = array<i32>} : memref<10x10x128xf32, #tpu.memory_space<vmem>>, vector<8x8x128xf32>,
    %cst_68 = arith.constant 0.000000e+00 : f32
    %68 = vector.broadcast %cst_68 : f32 to vector<64x128xf32>
    %c0_69 = arith.constant 0 : index
    %c0_70 = arith.constant 0 : index
    %c0_71 = arith.constant 0 : index
    %69 = vector.load %arg12[%c0_69, %c0_70, %c0_71] : memref<10x10x128xf32, #tpu.memory_space<vmem>>, vector<8x8x128xf32>
    %70 = vector.shape_cast %69 : vector<8x8x128xf32> to vector<64x128xf32>
    %c0_72 = arith.constant 0 : index
    %c0_73 = arith.constant 0 : index
    %71 = vector.load %arg4[%c0_72, %c0_73] : memref<1152x128xf32, #tpu.memory_space<vmem>>, vector<128x128xf32>
    %cst_74 = arith.constant dense<0.000000e+00> : vector<64x128xf32>
    %72 = tpu.matmul %70, %71, %cst_74 {dimension_numbers = #tpu.dot_dimension_numbers<[1], [0], [0], [1], [0, 0, 1, 1], [], []>} : vector<64x128xf32>, vector<128x128xf32>, vector<64x128xf32> -> vector<64x128xf32>
    %73 = arith.addf %68, %72 : vector<64x128xf32>
    %c0_75 = arith.constant 0 : index
    %c1_76 = arith.constant 1 : index
    %c0_77 = arith.constant 0 : index
    %74 = vector.load %arg12[%c0_75, %c1_76, %c0_77] : memref<10x10x128xf32, #tpu.memory_space<vmem>>, vector<8x8x128xf32>
    %75 = vector.shape_cast %74 : vector<8x8x128xf32> to vector<64x128xf32>
    %c128_78 = arith.constant 128 : index
    %c0_79 = arith.constant 0 : index
    %76 = vector.load %arg4[%c128_78, %c0_79] : memref<1152x128xf32, #tpu.memory_space<vmem>>, vector<128x128xf32>
    %cst_80 = arith.constant dense<0.000000e+00> : vector<64x128xf32>
    %77 = tpu.matmul %75, %76, %cst_80 {dimension_numbers = #tpu.dot_dimension_numbers<[1], [0], [0], [1], [0, 0, 1, 1], [], []>} : vector<64x128xf32>, vector<128x128xf32>, vector<64x128xf32> -> vector<64x128xf32>
    %78 = arith.addf %73, %77 : vector<64x128xf32>
    %c0_81 = arith.constant 0 : index
    %c2_82 = arith.constant 2 : index
    %c0_83 = arith.constant 0 : index
    %79 = vector.load %arg12[%c0_81, %c2_82, %c0_83] : memref<10x10x128xf32, #tpu.memory_space<vmem>>, vector<8x8x128xf32>
    %80 = vector.shape_cast %79 : vector<8x8x128xf32> to vector<64x128xf32>
    %c256_84 = arith.constant 256 : index
    %c0_85 = arith.constant 0 : index
    %81 = vector.load %arg4[%c256_84, %c0_85] : memref<1152x128xf32, #tpu.memory_space<vmem>>, vector<128x128xf32>
    %cst_86 = arith.constant dense<0.000000e+00> : vector<64x128xf32>
    %82 = tpu.matmul %80, %81, %cst_86 {dimension_numbers = #tpu.dot_dimension_numbers<[1], [0], [0], [1], [0, 0, 1, 1], [], []>} : vector<64x128xf32>, vector<128x128xf32>, vector<64x128xf32> -> vector<64x128xf32>
    %83 = arith.addf %78, %82 : vector<64x128xf32>
    %c1_87 = arith.constant 1 : index
    %c0_88 = arith.constant 0 : index
    %c0_89 = arith.constant 0 : index
    %84 = vector.load %arg12[%c1_87, %c0_88, %c0_89] : memref<10x10x128xf32, #tpu.memory_space<vmem>>, vector<8x8x128xf32>
    %85 = vector.shape_cast %84 : vector<8x8x128xf32> to vector<64x128xf32>
    %c384_90 = arith.constant 384 : index
    %c0_91 = arith.constant 0 : index
    %86 = vector.load %arg4[%c384_90, %c0_91] : memref<1152x128xf32, #tpu.memory_space<vmem>>, vector<128x128xf32>
    %cst_92 = arith.constant dense<0.000000e+00> : vector<64x128xf32>
    %87 = tpu.matmul %85, %86, %cst_92 {dimension_numbers = #tpu.dot_dimension_numbers<[1], [0], [0], [1], [0, 0, 1, 1], [], []>} : vector<64x128xf32>, vector<128x128xf32>, vector<64x128xf32> -> vector<64x128xf32>
    %88 = arith.addf %83, %87 : vector<64x128xf32>
    %c1_93 = arith.constant 1 : index
    %c1_94 = arith.constant 1 : index
    %c0_95 = arith.constant 0 : index
    %89 = vector.load %arg12[%c1_93, %c1_94, %c0_95] : memref<10x10x128xf32, #tpu.memory_space<vmem>>, vector<8x8x128xf32>
    %90 = vector.shape_cast %89 : vector<8x8x128xf32> to vector<64x128xf32>
    %c512_96 = arith.constant 512 : index
    %c0_97 = arith.constant 0 : index
    %91 = vector.load %arg4[%c512_96, %c0_97] : memref<1152x128xf32, #tpu.memory_space<vmem>>, vector<128x128xf32>
    %cst_98 = arith.constant dense<0.000000e+00> : vector<64x128xf32>
    %92 = tpu.matmul %90, %91, %cst_98 {dimension_numbers = #tpu.dot_dimension_numbers<[1], [0], [0], [1], [0, 0, 1, 1], [], []>} : vector<64x128xf32>, vector<128x128xf32>, vector<64x128xf32> -> vector<64x128xf32>
    %93 = arith.addf %88, %92 : vector<64x128xf32>
    %c1_99 = arith.constant 1 : index
    %c2_100 = arith.constant 2 : index
    %c0_101 = arith.constant 0 : index
    %94 = vector.load %arg12[%c1_99, %c2_100, %c0_101] : memref<10x10x128xf32, #tpu.memory_space<vmem>>, vector<8x8x128xf32>
    %95 = vector.shape_cast %94 : vector<8x8x128xf32> to vector<64x128xf32>
    %c640_102 = arith.constant 640 : index
    %c0_103 = arith.constant 0 : index
    %96 = vector.load %arg4[%c640_102, %c0_103] : memref<1152x128xf32, #tpu.memory_space<vmem>>, vector<128x128xf32>
    %cst_104 = arith.constant dense<0.000000e+00> : vector<64x128xf32>
    %97 = tpu.matmul %95, %96, %cst_104 {dimension_numbers = #tpu.dot_dimension_numbers<[1], [0], [0], [1], [0, 0, 1, 1], [], []>} : vector<64x128xf32>, vector<128x128xf32>, vector<64x128xf32> -> vector<64x128xf32>
    %98 = arith.addf %93, %97 : vector<64x128xf32>
    %c2_105 = arith.constant 2 : index
    %c0_106 = arith.constant 0 : index
    %c0_107 = arith.constant 0 : index
    %99 = vector.load %arg12[%c2_105, %c0_106, %c0_107] : memref<10x10x128xf32, #tpu.memory_space<vmem>>, vector<8x8x128xf32>
    %100 = vector.shape_cast %99 : vector<8x8x128xf32> to vector<64x128xf32>
    %c768_108 = arith.constant 768 : index
    %c0_109 = arith.constant 0 : index
    %101 = vector.load %arg4[%c768_108, %c0_109] : memref<1152x128xf32, #tpu.memory_space<vmem>>, vector<128x128xf32>
    %cst_110 = arith.constant dense<0.000000e+00> : vector<64x128xf32>
    %102 = tpu.matmul %100, %101, %cst_110 {dimension_numbers = #tpu.dot_dimension_numbers<[1], [0], [0], [1], [0, 0, 1, 1], [], []>} : vector<64x128xf32>, vector<128x128xf32>, vector<64x128xf32> -> vector<64x128xf32>
    %103 = arith.addf %98, %102 : vector<64x128xf32>
    %c2_111 = arith.constant 2 : index
    %c1_112 = arith.constant 1 : index
    %c0_113 = arith.constant 0 : index
    %104 = vector.load %arg12[%c2_111, %c1_112, %c0_113] : memref<10x10x128xf32, #tpu.memory_space<vmem>>, vector<8x8x128xf32>
    %105 = vector.shape_cast %104 : vector<8x8x128xf32> to vector<64x128xf32>
    %c896_114 = arith.constant 896 : index
    %c0_115 = arith.constant 0 : index
    %106 = vector.load %arg4[%c896_114, %c0_115] : memref<1152x128xf32, #tpu.memory_space<vmem>>, vector<128x128xf32>
    %cst_116 = arith.constant dense<0.000000e+00> : vector<64x128xf32>
    %107 = tpu.matmul %105, %106, %cst_116 {dimension_numbers = #tpu.dot_dimension_numbers<[1], [0], [0], [1], [0, 0, 1, 1], [], []>} : vector<64x128xf32>, vector<128x128xf32>, vector<64x128xf32> -> vector<64x128xf32>
    %108 = arith.addf %103, %107 : vector<64x128xf32>
    %c2_117 = arith.constant 2 : index
    %c2_118 = arith.constant 2 : index
    %c0_119 = arith.constant 0 : index
    %109 = vector.load %arg12[%c2_117, %c2_118, %c0_119] : memref<10x10x128xf32, #tpu.memory_space<vmem>>, vector<8x8x128xf32>
    %110 = vector.shape_cast %109 : vector<8x8x128xf32> to vector<64x128xf32>
    %c1024_120 = arith.constant 1024 : index
    %c0_121 = arith.constant 0 : index
    %111 = vector.load %arg4[%c1024_120, %c0_121] : memref<1152x128xf32, #tpu.memory_space<vmem>>, vector<128x128xf32>
    %cst_122 = arith.constant dense<0.000000e+00> : vector<64x128xf32>
    %112 = tpu.matmul %110, %111, %cst_122 {dimension_numbers = #tpu.dot_dimension_numbers<[1], [0], [0], [1], [0, 0, 1, 1], [], []>} : vector<64x128xf32>, vector<128x128xf32>, vector<64x128xf32> -> vector<64x128xf32>
    %113 = arith.addf %108, %112 : vector<64x128xf32>
    %c0_123 = arith.constant 0 : index
    %c0_124 = arith.constant 0 : index
    %114 = vector.load %arg5[%c0_123, %c0_124] : memref<1x128xf32, #tpu.memory_space<vmem>>, vector<1x128xf32>
    %115 = vector.broadcast %114 : vector<1x128xf32> to vector<64x128xf32>
    %116 = arith.addf %113, %115 : vector<64x128xf32>
    %cst_125 = arith.constant 0.000000e+00 : f32
    %117 = vector.broadcast %cst_125 : f32 to vector<64x128xf32>
    %118 = arith.maximumf %116, %117 : vector<64x128xf32>
    %119 = vector.shape_cast %118 : vector<64x128xf32> to vector<4x2x8x128xf32>
    %cst_126 = arith.constant dense<0xFF800000> : vector<4x8x128xf32>
    %120 = vector.multi_reduction <maximumf>, %119, %cst_126 [1] : vector<4x2x8x128xf32> to vector<4x8x128xf32>
    %121 = vector.shape_cast %120 : vector<4x8x128xf32> to vector<32x128xf32>
    %c0_127 = arith.constant 0 : index
    %c0_128 = arith.constant 0 : index
    %122 = vector.load %arg13[%c0_127, %c0_128] : memref<32x128xf32, #tpu.memory_space<vmem>>, vector<32x128xf32>
    tpu.vector_store %arg13[%c0_127, %c0_128], %121 {strides = array<i32>} : memref<32x128xf32, #tpu.memory_space<vmem>>, vector<32x128xf32>,
    %c0_129 = arith.constant 0 : index
    %c0_130 = arith.constant 0 : index
    %123 = tpu.strided_load %arg13[%c0_129, %c0_130] {strides = array<i32: 2, 1>} : memref<32x128xf32, #tpu.memory_space<vmem>>, vector<16x128xf32>
    %c1_131 = arith.constant 1 : index
    %c0_132 = arith.constant 0 : index
    %124 = tpu.strided_load %arg13[%c1_131, %c0_132] {strides = array<i32: 2, 1>} : memref<32x128xf32, #tpu.memory_space<vmem>>, vector<16x128xf32>
    %125 = arith.maximumf %123, %124 : vector<16x128xf32>
    %c0_133 = arith.constant 0 : index
    %c0_134 = arith.constant 0 : index
    %126 = vector.load %arg7[%c0_133, %c0_134] : memref<1x128xf32, #tpu.memory_space<vmem>>, vector<1x128xf32>
    %127 = vector.extract_strided_slice %125 {offsets = [0, 0], sizes = [1, 128], strides = [1, 1]} : vector<16x128xf32> to vector<1x128xf32>
    %c0_135 = arith.constant 0 : index
    %c0_136 = arith.constant 0 : index
    %c0_137 = arith.constant 0 : index
    %128 = vector.load %arg6[%c0_135, %c0_136, %c0_137] : memref<16x128x128xf32, #tpu.memory_space<vmem>>, vector<1x128x128xf32>
    %129 = vector.shape_cast %128 : vector<1x128x128xf32> to vector<128x128xf32>
    %cst_138 = arith.constant dense<0.000000e+00> : vector<1x128xf32>
    %130 = tpu.matmul %127, %129, %cst_138 {dimension_numbers = #tpu.dot_dimension_numbers<[1], [0], [0], [1], [0, 0, 1, 1], [], []>} : vector<1x128xf32>, vector<128x128xf32>, vector<1x128xf32> -> vector<1x128xf32>
    %131 = arith.addf %126, %130 : vector<1x128xf32>
    %132 = vector.extract_strided_slice %125 {offsets = [1, 0], sizes = [1, 128], strides = [1, 1]} : vector<16x128xf32> to vector<1x128xf32>
    %c1_139 = arith.constant 1 : index
    %c0_140 = arith.constant 0 : index
    %c0_141 = arith.constant 0 : index
    %133 = vector.load %arg6[%c1_139, %c0_140, %c0_141] : memref<16x128x128xf32, #tpu.memory_space<vmem>>, vector<1x128x128xf32>
    %134 = vector.shape_cast %133 : vector<1x128x128xf32> to vector<128x128xf32>
    %cst_142 = arith.constant dense<0.000000e+00> : vector<1x128xf32>
    %135 = tpu.matmul %132, %134, %cst_142 {dimension_numbers = #tpu.dot_dimension_numbers<[1], [0], [0], [1], [0, 0, 1, 1], [], []>} : vector<1x128xf32>, vector<128x128xf32>, vector<1x128xf32> -> vector<1x128xf32>
    %136 = arith.addf %131, %135 : vector<1x128xf32>
    %137 = vector.extract_strided_slice %125 {offsets = [2, 0], sizes = [1, 128], strides = [1, 1]} : vector<16x128xf32> to vector<1x128xf32>
    %c2_143 = arith.constant 2 : index
    %c0_144 = arith.constant 0 : index
    %c0_145 = arith.constant 0 : index
    %138 = vector.load %arg6[%c2_143, %c0_144, %c0_145] : memref<16x128x128xf32, #tpu.memory_space<vmem>>, vector<1x128x128xf32>
    %139 = vector.shape_cast %138 : vector<1x128x128xf32> to vector<128x128xf32>
    %cst_146 = arith.constant dense<0.000000e+00> : vector<1x128xf32>
    %140 = tpu.matmul %137, %139, %cst_146 {dimension_numbers = #tpu.dot_dimension_numbers<[1], [0], [0], [1], [0, 0, 1, 1], [], []>} : vector<1x128xf32>, vector<128x128xf32>, vector<1x128xf32> -> vector<1x128xf32>
    %141 = arith.addf %136, %140 : vector<1x128xf32>
    %142 = vector.extract_strided_slice %125 {offsets = [3, 0], sizes = [1, 128], strides = [1, 1]} : vector<16x128xf32> to vector<1x128xf32>
    %c3 = arith.constant 3 : index
    %c0_147 = arith.constant 0 : index
    %c0_148 = arith.constant 0 : index
    %143 = vector.load %arg6[%c3, %c0_147, %c0_148] : memref<16x128x128xf32, #tpu.memory_space<vmem>>, vector<1x128x128xf32>
    %144 = vector.shape_cast %143 : vector<1x128x128xf32> to vector<128x128xf32>
    %cst_149 = arith.constant dense<0.000000e+00> : vector<1x128xf32>
    %145 = tpu.matmul %142, %144, %cst_149 {dimension_numbers = #tpu.dot_dimension_numbers<[1], [0], [0], [1], [0, 0, 1, 1], [], []>} : vector<1x128xf32>, vector<128x128xf32>, vector<1x128xf32> -> vector<1x128xf32>
    %146 = arith.addf %141, %145 : vector<1x128xf32>
    %147 = vector.extract_strided_slice %125 {offsets = [4, 0], sizes = [1, 128], strides = [1, 1]} : vector<16x128xf32> to vector<1x128xf32>
    %c4 = arith.constant 4 : index
    %c0_150 = arith.constant 0 : index
    %c0_151 = arith.constant 0 : index
    %148 = vector.load %arg6[%c4, %c0_150, %c0_151] : memref<16x128x128xf32, #tpu.memory_space<vmem>>, vector<1x128x128xf32>
    %149 = vector.shape_cast %148 : vector<1x128x128xf32> to vector<128x128xf32>
    %cst_152 = arith.constant dense<0.000000e+00> : vector<1x128xf32>
    %150 = tpu.matmul %147, %149, %cst_152 {dimension_numbers = #tpu.dot_dimension_numbers<[1], [0], [0], [1], [0, 0, 1, 1], [], []>} : vector<1x128xf32>, vector<128x128xf32>, vector<1x128xf32> -> vector<1x128xf32>
    %151 = arith.addf %146, %150 : vector<1x128xf32>
    %152 = vector.extract_strided_slice %125 {offsets = [5, 0], sizes = [1, 128], strides = [1, 1]} : vector<16x128xf32> to vector<1x128xf32>
    %c5 = arith.constant 5 : index
    %c0_153 = arith.constant 0 : index
    %c0_154 = arith.constant 0 : index
    %153 = vector.load %arg6[%c5, %c0_153, %c0_154] : memref<16x128x128xf32, #tpu.memory_space<vmem>>, vector<1x128x128xf32>
    %154 = vector.shape_cast %153 : vector<1x128x128xf32> to vector<128x128xf32>
    %cst_155 = arith.constant dense<0.000000e+00> : vector<1x128xf32>
    %155 = tpu.matmul %152, %154, %cst_155 {dimension_numbers = #tpu.dot_dimension_numbers<[1], [0], [0], [1], [0, 0, 1, 1], [], []>} : vector<1x128xf32>, vector<128x128xf32>, vector<1x128xf32> -> vector<1x128xf32>
    %156 = arith.addf %151, %155 : vector<1x128xf32>
    %157 = vector.extract_strided_slice %125 {offsets = [6, 0], sizes = [1, 128], strides = [1, 1]} : vector<16x128xf32> to vector<1x128xf32>
    %c6 = arith.constant 6 : index
    %c0_156 = arith.constant 0 : index
    %c0_157 = arith.constant 0 : index
    %158 = vector.load %arg6[%c6, %c0_156, %c0_157] : memref<16x128x128xf32, #tpu.memory_space<vmem>>, vector<1x128x128xf32>
    %159 = vector.shape_cast %158 : vector<1x128x128xf32> to vector<128x128xf32>
    %cst_158 = arith.constant dense<0.000000e+00> : vector<1x128xf32>
    %160 = tpu.matmul %157, %159, %cst_158 {dimension_numbers = #tpu.dot_dimension_numbers<[1], [0], [0], [1], [0, 0, 1, 1], [], []>} : vector<1x128xf32>, vector<128x128xf32>, vector<1x128xf32> -> vector<1x128xf32>
    %161 = arith.addf %156, %160 : vector<1x128xf32>
    %162 = vector.extract_strided_slice %125 {offsets = [7, 0], sizes = [1, 128], strides = [1, 1]} : vector<16x128xf32> to vector<1x128xf32>
    %c7 = arith.constant 7 : index
    %c0_159 = arith.constant 0 : index
    %c0_160 = arith.constant 0 : index
    %163 = vector.load %arg6[%c7, %c0_159, %c0_160] : memref<16x128x128xf32, #tpu.memory_space<vmem>>, vector<1x128x128xf32>
    %164 = vector.shape_cast %163 : vector<1x128x128xf32> to vector<128x128xf32>
    %cst_161 = arith.constant dense<0.000000e+00> : vector<1x128xf32>
    %165 = tpu.matmul %162, %164, %cst_161 {dimension_numbers = #tpu.dot_dimension_numbers<[1], [0], [0], [1], [0, 0, 1, 1], [], []>} : vector<1x128xf32>, vector<128x128xf32>, vector<1x128xf32> -> vector<1x128xf32>
    %166 = arith.addf %161, %165 : vector<1x128xf32>
    %167 = vector.extract_strided_slice %125 {offsets = [8, 0], sizes = [1, 128], strides = [1, 1]} : vector<16x128xf32> to vector<1x128xf32>
    %c8 = arith.constant 8 : index
    %c0_162 = arith.constant 0 : index
    %c0_163 = arith.constant 0 : index
    %168 = vector.load %arg6[%c8, %c0_162, %c0_163] : memref<16x128x128xf32, #tpu.memory_space<vmem>>, vector<1x128x128xf32>
    %169 = vector.shape_cast %168 : vector<1x128x128xf32> to vector<128x128xf32>
    %cst_164 = arith.constant dense<0.000000e+00> : vector<1x128xf32>
    %170 = tpu.matmul %167, %169, %cst_164 {dimension_numbers = #tpu.dot_dimension_numbers<[1], [0], [0], [1], [0, 0, 1, 1], [], []>} : vector<1x128xf32>, vector<128x128xf32>, vector<1x128xf32> -> vector<1x128xf32>
    %171 = arith.addf %166, %170 : vector<1x128xf32>
    %172 = vector.extract_strided_slice %125 {offsets = [9, 0], sizes = [1, 128], strides = [1, 1]} : vector<16x128xf32> to vector<1x128xf32>
    %c9 = arith.constant 9 : index
    %c0_165 = arith.constant 0 : index
    %c0_166 = arith.constant 0 : index
    %173 = vector.load %arg6[%c9, %c0_165, %c0_166] : memref<16x128x128xf32, #tpu.memory_space<vmem>>, vector<1x128x128xf32>
    %174 = vector.shape_cast %173 : vector<1x128x128xf32> to vector<128x128xf32>
    %cst_167 = arith.constant dense<0.000000e+00> : vector<1x128xf32>
    %175 = tpu.matmul %172, %174, %cst_167 {dimension_numbers = #tpu.dot_dimension_numbers<[1], [0], [0], [1], [0, 0, 1, 1], [], []>} : vector<1x128xf32>, vector<128x128xf32>, vector<1x128xf32> -> vector<1x128xf32>
    %176 = arith.addf %171, %175 : vector<1x128xf32>
    %177 = vector.extract_strided_slice %125 {offsets = [10, 0], sizes = [1, 128], strides = [1, 1]} : vector<16x128xf32> to vector<1x128xf32>
    %c10 = arith.constant 10 : index
    %c0_168 = arith.constant 0 : index
    %c0_169 = arith.constant 0 : index
    %178 = vector.load %arg6[%c10, %c0_168, %c0_169] : memref<16x128x128xf32, #tpu.memory_space<vmem>>, vector<1x128x128xf32>
    %179 = vector.shape_cast %178 : vector<1x128x128xf32> to vector<128x128xf32>
    %cst_170 = arith.constant dense<0.000000e+00> : vector<1x128xf32>
    %180 = tpu.matmul %177, %179, %cst_170 {dimension_numbers = #tpu.dot_dimension_numbers<[1], [0], [0], [1], [0, 0, 1, 1], [], []>} : vector<1x128xf32>, vector<128x128xf32>, vector<1x128xf32> -> vector<1x128xf32>
    %181 = arith.addf %176, %180 : vector<1x128xf32>
    %182 = vector.extract_strided_slice %125 {offsets = [11, 0], sizes = [1, 128], strides = [1, 1]} : vector<16x128xf32> to vector<1x128xf32>
    %c11 = arith.constant 11 : index
    %c0_171 = arith.constant 0 : index
    %c0_172 = arith.constant 0 : index
    %183 = vector.load %arg6[%c11, %c0_171, %c0_172] : memref<16x128x128xf32, #tpu.memory_space<vmem>>, vector<1x128x128xf32>
    %184 = vector.shape_cast %183 : vector<1x128x128xf32> to vector<128x128xf32>
    %cst_173 = arith.constant dense<0.000000e+00> : vector<1x128xf32>
    %185 = tpu.matmul %182, %184, %cst_173 {dimension_numbers = #tpu.dot_dimension_numbers<[1], [0], [0], [1], [0, 0, 1, 1], [], []>} : vector<1x128xf32>, vector<128x128xf32>, vector<1x128xf32> -> vector<1x128xf32>
    %186 = arith.addf %181, %185 : vector<1x128xf32>
    %187 = vector.extract_strided_slice %125 {offsets = [12, 0], sizes = [1, 128], strides = [1, 1]} : vector<16x128xf32> to vector<1x128xf32>
    %c12 = arith.constant 12 : index
    %c0_174 = arith.constant 0 : index
    %c0_175 = arith.constant 0 : index
    %188 = vector.load %arg6[%c12, %c0_174, %c0_175] : memref<16x128x128xf32, #tpu.memory_space<vmem>>, vector<1x128x128xf32>
    %189 = vector.shape_cast %188 : vector<1x128x128xf32> to vector<128x128xf32>
    %cst_176 = arith.constant dense<0.000000e+00> : vector<1x128xf32>
    %190 = tpu.matmul %187, %189, %cst_176 {dimension_numbers = #tpu.dot_dimension_numbers<[1], [0], [0], [1], [0, 0, 1, 1], [], []>} : vector<1x128xf32>, vector<128x128xf32>, vector<1x128xf32> -> vector<1x128xf32>
    %191 = arith.addf %186, %190 : vector<1x128xf32>
    %192 = vector.extract_strided_slice %125 {offsets = [13, 0], sizes = [1, 128], strides = [1, 1]} : vector<16x128xf32> to vector<1x128xf32>
    %c13 = arith.constant 13 : index
    %c0_177 = arith.constant 0 : index
    %c0_178 = arith.constant 0 : index
    %193 = vector.load %arg6[%c13, %c0_177, %c0_178] : memref<16x128x128xf32, #tpu.memory_space<vmem>>, vector<1x128x128xf32>
    %194 = vector.shape_cast %193 : vector<1x128x128xf32> to vector<128x128xf32>
    %cst_179 = arith.constant dense<0.000000e+00> : vector<1x128xf32>
    %195 = tpu.matmul %192, %194, %cst_179 {dimension_numbers = #tpu.dot_dimension_numbers<[1], [0], [0], [1], [0, 0, 1, 1], [], []>} : vector<1x128xf32>, vector<128x128xf32>, vector<1x128xf32> -> vector<1x128xf32>
    %196 = arith.addf %191, %195 : vector<1x128xf32>
    %197 = vector.extract_strided_slice %125 {offsets = [14, 0], sizes = [1, 128], strides = [1, 1]} : vector<16x128xf32> to vector<1x128xf32>
    %c14 = arith.constant 14 : index
    %c0_180 = arith.constant 0 : index
    %c0_181 = arith.constant 0 : index
    %198 = vector.load %arg6[%c14, %c0_180, %c0_181] : memref<16x128x128xf32, #tpu.memory_space<vmem>>, vector<1x128x128xf32>
    %199 = vector.shape_cast %198 : vector<1x128x128xf32> to vector<128x128xf32>
    %cst_182 = arith.constant dense<0.000000e+00> : vector<1x128xf32>
    %200 = tpu.matmul %197, %199, %cst_182 {dimension_numbers = #tpu.dot_dimension_numbers<[1], [0], [0], [1], [0, 0, 1, 1], [], []>} : vector<1x128xf32>, vector<128x128xf32>, vector<1x128xf32> -> vector<1x128xf32>
    %201 = arith.addf %196, %200 : vector<1x128xf32>
    %202 = vector.extract_strided_slice %125 {offsets = [15, 0], sizes = [1, 128], strides = [1, 1]} : vector<16x128xf32> to vector<1x128xf32>
    %c15 = arith.constant 15 : index
    %c0_183 = arith.constant 0 : index
    %c0_184 = arith.constant 0 : index
    %203 = vector.load %arg6[%c15, %c0_183, %c0_184] : memref<16x128x128xf32, #tpu.memory_space<vmem>>, vector<1x128x128xf32>
    %204 = vector.shape_cast %203 : vector<1x128x128xf32> to vector<128x128xf32>
    %cst_185 = arith.constant dense<0.000000e+00> : vector<1x128xf32>
    %205 = tpu.matmul %202, %204, %cst_185 {dimension_numbers = #tpu.dot_dimension_numbers<[1], [0], [0], [1], [0, 0, 1, 1], [], []>} : vector<1x128xf32>, vector<128x128xf32>, vector<1x128xf32> -> vector<1x128xf32>
    %206 = arith.addf %201, %205 : vector<1x128xf32>
    %cst_186 = arith.constant 0.000000e+00 : f32
    %207 = vector.broadcast %cst_186 : f32 to vector<1x128xf32>
    %208 = arith.maximumf %206, %207 : vector<1x128xf32>
    %c0_187 = arith.constant 0 : index
    %c0_188 = arith.constant 0 : index
    %209 = vector.load %arg8[%c0_187, %c0_188] : memref<128x128xf32, #tpu.memory_space<vmem>>, vector<128x128xf32>
    %cst_189 = arith.constant dense<0.000000e+00> : vector<1x128xf32>
    %210 = tpu.matmul %208, %209, %cst_189 {dimension_numbers = #tpu.dot_dimension_numbers<[1], [0], [0], [1], [0, 0, 1, 1], [], []>} : vector<1x128xf32>, vector<128x128xf32>, vector<1x128xf32> -> vector<1x128xf32>
    %c0_190 = arith.constant 0 : index
    %c0_191 = arith.constant 0 : index
    %211 = vector.load %arg9[%c0_190, %c0_191] : memref<1x128xf32, #tpu.memory_space<vmem>>, vector<1x128xf32>
    %212 = arith.addf %210, %211 : vector<1x128xf32>
    %213 = vector.shape_cast %212 : vector<1x128xf32> to vector<1x1x128xf32>
    %214 = vector.shape_cast %213 : vector<1x1x128xf32> to vector<1x1x128xf32>
    %215 = vector.broadcast %214 : vector<1x1x128xf32> to vector<1x8x128xf32>
    %c0_192 = arith.constant 0 : index
    %c0_193 = arith.constant 0 : index
    %c0_194 = arith.constant 0 : index
    %216 = vector.load %arg10[%c0_192, %c0_193, %c0_194] : memref<1x8x128xf32, #tpu.memory_space<vmem>>, vector<1x8x128xf32>
    tpu.vector_store %arg10[%c0_192, %c0_193, %c0_194], %215 {strides = array<i32>} : memref<1x8x128xf32, #tpu.memory_space<vmem>>, vector<1x8x128xf32>,
    return
  }
  func.func @transform_0(%arg0: i32) -> (i32, i32, i32, i32) {
    %c0_i32 = arith.constant 0 : i32
    %c0_i32_0 = arith.constant 0 : i32
    %c0_i32_1 = arith.constant 0 : i32
    %c0_i32_2 = arith.constant 0 : i32
    return %arg0, %c0_i32, %c0_i32_0, %c0_i32_1 : i32, i32, i32, i32
  }
  func.func @transform_1(%arg0: i32) -> (i32, i32) {
    %c0_i32 = arith.constant 0 : i32
    %c0_i32_0 = arith.constant 0 : i32
    %c0_i32_1 = arith.constant 0 : i32
    return %c0_i32, %c0_i32_0 : i32, i32
  }
  func.func @transform_2(%arg0: i32) -> (i32, i32) {
    %c0_i32 = arith.constant 0 : i32
    %c0_i32_0 = arith.constant 0 : i32
    %c0_i32_1 = arith.constant 0 : i32
    return %c0_i32, %c0_i32_0 : i32, i32
  }
  func.func @transform_3(%arg0: i32) -> (i32, i32) {
    %c0_i32 = arith.constant 0 : i32
    %c0_i32_0 = arith.constant 0 : i32
    %c0_i32_1 = arith.constant 0 : i32
    return %c0_i32, %c0_i32_0 : i32, i32
  }
  func.func @transform_4(%arg0: i32) -> (i32, i32) {
    %c0_i32 = arith.constant 0 : i32
    %c0_i32_0 = arith.constant 0 : i32
    %c0_i32_1 = arith.constant 0 : i32
    return %c0_i32, %c0_i32_0 : i32, i32
  }
  func.func @transform_5(%arg0: i32) -> (i32, i32, i32) {
    %c0_i32 = arith.constant 0 : i32
    %c0_i32_0 = arith.constant 0 : i32
    %c0_i32_1 = arith.constant 0 : i32
    %c0_i32_2 = arith.constant 0 : i32
    return %c0_i32, %c0_i32_0, %c0_i32_1 : i32, i32, i32
  }
  func.func @transform_6(%arg0: i32) -> (i32, i32) {
    %c0_i32 = arith.constant 0 : i32
    %c0_i32_0 = arith.constant 0 : i32
    %c0_i32_1 = arith.constant 0 : i32
    return %c0_i32, %c0_i32_0 : i32, i32
  }
  func.func @transform_7(%arg0: i32) -> (i32, i32) {
    %c0_i32 = arith.constant 0 : i32
    %c0_i32_0 = arith.constant 0 : i32
    %c0_i32_1 = arith.constant 0 : i32
    return %c0_i32, %c0_i32_0 : i32, i32
  }
  func.func @transform_8(%arg0: i32) -> (i32, i32) {
    %c0_i32 = arith.constant 0 : i32
    %c0_i32_0 = arith.constant 0 : i32
    %c0_i32_1 = arith.constant 0 : i32
    return %c0_i32, %c0_i32_0 : i32, i32
  }
  func.func @transform_9(%arg0: i32) -> (i32, i32, i32) {
    %c0_i32 = arith.constant 0 : i32
    %c0_i32_0 = arith.constant 0 : i32
    %c0_i32_1 = arith.constant 0 : i32
    return %arg0, %c0_i32, %c0_i32_0 : i32, i32, i32
  }
}

</mosaic_0001>

<llo_original>
// kernel: tpu_custom_call.1
$region0: #{tpu_custom_call.1}
  #allocation0 [shape = 'u32[]', space=smem, size = 0x4, offset = 0x4, fixed_abs, tag = 'smem constant byte address 0x4 - core index']
  #allocation1 [shape = 'u32[144,128]{1,0:T(1,128)}', space=vmem, size = 0x12000, scoped, tag = 'internal scratch']
  #allocation2 [shape = 'f32[128,128]{1,0:T(8,128)}', space=vmem, size = 0x10000, scoped, tag = 'scratch operand']
  #allocation3 [shape = 'f32[10,10,128]{2,1,0:T(8,128)}', space=vmem, size = 0x14000, scoped, tag = 'scratch operand']
  #allocation4 [shape = 'f32[32,128]{1,0:T(8,128)}', space=vmem, size = 0x4000, scoped, tag = 'scratch operand']
  %s0 = inlined_call_operand.vmem [shape: f32[2,18,18,128], index: 0, kind: input, shape index: {}]
  %s1 = inlined_call_operand.vmem [shape: f32[1152,128], index: 1, kind: input, shape index: {}]
  %s2 = inlined_call_operand.vmem [shape: f32[256,128], index: 2, kind: input, shape index: {}]
  %s3 = inlined_call_operand.hbm [shape: f32[1152,128], index: 3, kind: input, shape index: {}]
  %s4 = inlined_call_operand.vmem [shape: f32[1,128], index: 4, kind: input, shape index: {}]
  %s5 = inlined_call_operand.hbm [shape: f32[16,128,128], index: 5, kind: input, shape index: {}]
  %s6 = inlined_call_operand.vmem [shape: f32[1,128], index: 6, kind: input, shape index: {}]
  %s7 = inlined_call_operand.hbm [shape: f32[128,128], index: 7, kind: input, shape index: {}]
  %s8 = inlined_call_operand.vmem [shape: f32[1,128], index: 8, kind: input, shape index: {}]
  %s9 = inlined_call_operand.hbm [shape: f32[2,8,128], index: 9, kind: output, shape index: {}]
  %s10 = sld [smem:[#allocation0]]
  $region81: #{tpu_custom_call.1} parent=0
    _
  %s12 = ssub.s32 1, %s10
  %s13 = scalar_select 0, %s12, %s10
  $region1: #{tpu_custom_call.1} parent=0
    #allocation5 [shape = 'u8[589824]{0}', space=vmem, size = 0x90000, scoped, tag = 'input window, operand 3, single buffered']
    #allocation6 [shape = 's32[2]{0}', space=sflag, size = 0x8, scoped, tag = 'scoped memory for tpu_custom_call.1']
    #allocation7 [shape = 's32[2]{0}', space=sflag, size = 0x8, scoped, tag = 'scoped memory for tpu_custom_call.1']
    #allocation8 [shape = 'u8[1048576]{0}', space=vmem, size = 0x100000, scoped, tag = 'input window, operand 5, single buffered']
    #allocation9 [shape = 's32[1]{0}', space=sflag, size = 0x4, scoped, tag = 'scoped memory for tpu_custom_call.1']
    #allocation10 [shape = 'u8[65536]{0}', space=vmem, size = 0x10000, scoped, tag = 'input window, operand 7, single buffered']
    #allocation11 [shape = 'u8[8192]{0}', space=vmem, size = 0x2000, scoped, tag = 'output window, operand 0']
    %14 = vsyncpa [#allocation6], 0
    %15 = vsyncpa [#allocation9], 0
    %16 = vsyncpa [#allocation7], 0
    %s17 = scalar_lea.sflag [#allocation7], 1
    %18 = vsyncpa %s17, 0
    loop: start=0, step=1, limit=4
    $region2: #{tpu_custom_call.1} parent=1 // loop_pre_header
      _
    $region3: #{tpu_custom_call.1} parent=1 // loop_header
      %s20 = sphi 0, %s24
      %p21 = scmp.ge.s32.totalorder %s20, 4
      %s30 = sphi 0, %s32
      %s33 = sphi 0, %s30
      %s34 = sphi 0, %s33
      %s50 = sphi 0, %s34
      %s54 = sphi 0, %s54
      %s56 = sphi 0, %s54
      %s57 = sphi 0, %s56
      %s71 = sphi 0, %s57
      %s75 = sphi 0, %s75
      %s77 = sphi 0, %s75
      %s78 = sphi 0, %s77
      %s92 = sphi 0, %s78
      %s96 = sphi 0, %s96
      %s98 = sphi 0, %s96
      %s99 = sphi 0, %s98
      %s113 = sphi 0, %s99
      %s117 = sphi 0, %s117
      %s119 = sphi 0, %s117
      %s120 = sphi 0, %s119
      %s134 = sphi 0, %s120
      %s138 = sphi 0, %s138
      %s140 = sphi 0, %s138
      %s141 = sphi 0, %s140
      %s155 = sphi 0, %s141
      %s159 = sphi 0, %s159
      %s161 = sphi 0, %s159
      %s162 = sphi 0, %s161
      %s176 = sphi 0, %s162
      %s180 = sphi 0, %s180
      %s182 = sphi 0, %s180
      %s183 = sphi 0, %s182
      %s197 = sphi 0, %s183
      %s201 = sphi 0, %s201
      %s203 = sphi 0, %s201
      %s204 = sphi 0, %s203
      %s218 = sphi 0, %s204
      %s224 = sphi 0, %s226
      %s227 = sphi 0, %s224
      %s228 = sphi 0, %s227
      %s244 = sphi 0, %s228
    $region4: #{tpu_custom_call.1} parent=1 // loop_header_branch
      %23 = sbr.rel (%p21) target = $region8
    $region5: #{tpu_custom_call.1} parent=1 // loop_body
      %s25 = ssub.s32 %s20, 1
      %s26 = ssub.s32 %s20, 2
      %s27 = sadd.s32 %s20, 1
      %s28 = ssub.s32 %s20, %s27
      %p29 = scmp.eq.s32.totalorder %s28, 0
      %s31 = sadd.s32 %s30, 1
      %s32 = scalar_select %p29, %s30, %s31
      %p35 = pneg %p29
      %p36 = scmp.eq.s32.totalorder %s20, 1
      %p37 = por %p35, %p36
      %p38 = scmp.ne.s32.totalorder %s30, %s33
      %p39 = scmp.eq.s32.totalorder %s20, 0
      %p40 = por %p38, %p39
      %p41 = scmp.ne.s32.totalorder %s30, %s33
      %p42 = scmp.eq.s32.totalorder %s25, 1
      %p43 = por %p41, %p42
      %p44 = scmp.ne.s32.totalorder %s33, %s34
      %p45 = scmp.eq.s32.totalorder %s25, 0
      %p46 = por %p44, %p45
      %p47 = scmp.ne.s32.totalorder %s33, %s34
      %p48 = scmp.eq.s32.totalorder %s26, 1
      %p49 = por %p47, %p48
      %p51 = scmp.ne.s32.totalorder %s34, %s50
      %p52 = scmp.eq.s32.totalorder %s26, 0
      %p53 = por %p51, %p52
      %s55 = sadd.s32 %s54, 1
      %p58 = scmp.eq.s32.totalorder %s20, 1
      %p59 = scmp.ne.s32.totalorder %s54, %s56
      %p60 = scmp.eq.s32.totalorder %s20, 0
      %p61 = por %p59, %p60
      %p62 = scmp.ne.s32.totalorder %s54, %s56
      %p63 = scmp.eq.s32.totalorder %s25, 1
      %p64 = por %p62, %p63
      %p65 = scmp.ne.s32.totalorder %s56, %s57
      %p66 = scmp.eq.s32.totalorder %s25, 0
      %p67 = por %p65, %p66
      %p68 = scmp.ne.s32.totalorder %s56, %s57
      %p69 = scmp.eq.s32.totalorder %s26, 1
      %p70 = por %p68, %p69
      %p72 = scmp.ne.s32.totalorder %s57, %s71
      %p73 = scmp.eq.s32.totalorder %s26, 0
      %p74 = por %p72, %p73
      %s76 = sadd.s32 %s75, 1
      %p79 = scmp.eq.s32.totalorder %s20, 1
      %p80 = scmp.ne.s32.totalorder %s75, %s77
      %p81 = scmp.eq.s32.totalorder %s20, 0
      %p82 = por %p80, %p81
      %p83 = scmp.ne.s32.totalorder %s75, %s77
      %p84 = scmp.eq.s32.totalorder %s25, 1
      %p85 = por %p83, %p84
      %p86 = scmp.ne.s32.totalorder %s77, %s78
      %p87 = scmp.eq.s32.totalorder %s25, 0
      %p88 = por %p86, %p87
      %p89 = scmp.ne.s32.totalorder %s77, %s78
      %p90 = scmp.eq.s32.totalorder %s26, 1
      %p91 = por %p89, %p90
      %p93 = scmp.ne.s32.totalorder %s78, %s92
      %p94 = scmp.eq.s32.totalorder %s26, 0
      %p95 = por %p93, %p94
      %s97 = sadd.s32 %s96, 1
      %p100 = scmp.eq.s32.totalorder %s20, 1
      %p101 = scmp.ne.s32.totalorder %s96, %s98
      %p102 = scmp.eq.s32.totalorder %s20, 0
      %p103 = por %p101, %p102
      %p104 = scmp.ne.s32.totalorder %s96, %s98
      %p105 = scmp.eq.s32.totalorder %s25, 1
      %p106 = por %p104, %p105
      %p107 = scmp.ne.s32.totalorder %s98, %s99
      %p108 = scmp.eq.s32.totalorder %s25, 0
      %p109 = por %p107, %p108
      %p110 = scmp.ne.s32.totalorder %s98, %s99
      %p111 = scmp.eq.s32.totalorder %s26, 1
      %p112 = por %p110, %p111
      %p114 = scmp.ne.s32.totalorder %s99, %s113
      %p115 = scmp.eq.s32.totalorder %s26, 0
      %p116 = por %p114, %p115
      %s118 = sadd.s32 %s117, 1
      %p121 = scmp.eq.s32.totalorder %s20, 1
      %p122 = scmp.ne.s32.totalorder %s117, %s119
      %p123 = scmp.eq.s32.totalorder %s20, 0
      %p124 = por %p122, %p123
      %p125 = scmp.ne.s32.totalorder %s117, %s119
      %p126 = scmp.eq.s32.totalorder %s25, 1
      %p127 = por %p125, %p126
      %p128 = scmp.ne.s32.totalorder %s119, %s120
      %p129 = scmp.eq.s32.totalorder %s25, 0
      %p130 = por %p128, %p129
      %p131 = scmp.ne.s32.totalorder %s119, %s120
      %p132 = scmp.eq.s32.totalorder %s26, 1
      %p133 = por %p131, %p132
      %p135 = scmp.ne.s32.totalorder %s120, %s134
      %p136 = scmp.eq.s32.totalorder %s26, 0
      %p137 = por %p135, %p136
      %s139 = sadd.s32 %s138, 1
      %p142 = scmp.eq.s32.totalorder %s20, 1
      %p143 = scmp.ne.s32.totalorder %s138, %s140
      %p144 = scmp.eq.s32.totalorder %s20, 0
      %p145 = por %p143, %p144
      %p146 = scmp.ne.s32.totalorder %s138, %s140
      %p147 = scmp.eq.s32.totalorder %s25, 1
      %p148 = por %p146, %p147
      %p149 = scmp.ne.s32.totalorder %s140, %s141
      %p150 = scmp.eq.s32.totalorder %s25, 0
      %p151 = por %p149, %p150
      %p152 = scmp.ne.s32.totalorder %s140, %s141
      %p153 = scmp.eq.s32.totalorder %s26, 1
      %p154 = por %p152, %p153
      %p156 = scmp.ne.s32.totalorder %s141, %s155
      %p157 = scmp.eq.s32.totalorder %s26, 0
      %p158 = por %p156, %p157
      %s160 = sadd.s32 %s159, 1
      %p163 = scmp.eq.s32.totalorder %s20, 1
      %p164 = scmp.ne.s32.totalorder %s159, %s161
      %p165 = scmp.eq.s32.totalorder %s20, 0
      %p166 = por %p164, %p165
      %p167 = scmp.ne.s32.totalorder %s159, %s161
      %p168 = scmp.eq.s32.totalorder %s25, 1
      %p169 = por %p167, %p168
      %p170 = scmp.ne.s32.totalorder %s161, %s162
      %p171 = scmp.eq.s32.totalorder %s25, 0
      %p172 = por %p170, %p171
      %p173 = scmp.ne.s32.totalorder %s161, %s162
      %p174 = scmp.eq.s32.totalorder %s26, 1
      %p175 = por %p173, %p174
      %p177 = scmp.ne.s32.totalorder %s162, %s176
      %p178 = scmp.eq.s32.totalorder %s26, 0
      %p179 = por %p177, %p178
      %s181 = sadd.s32 %s180, 1
      %p184 = scmp.eq.s32.totalorder %s20, 1
      %p185 = scmp.ne.s32.totalorder %s180, %s182
      %p186 = scmp.eq.s32.totalorder %s20, 0
      %p187 = por %p185, %p186
      %p188 = scmp.ne.s32.totalorder %s180, %s182
      %p189 = scmp.eq.s32.totalorder %s25, 1
      %p190 = por %p188, %p189
      %p191 = scmp.ne.s32.totalorder %s182, %s183
      %p192 = scmp.eq.s32.totalorder %s25, 0
      %p193 = por %p191, %p192
      %p194 = scmp.ne.s32.totalorder %s182, %s183
      %p195 = scmp.eq.s32.totalorder %s26, 1
      %p196 = por %p194, %p195
      %p198 = scmp.ne.s32.totalorder %s183, %s197
      %p199 = scmp.eq.s32.totalorder %s26, 0
      %p200 = por %p198, %p199
      %s202 = sadd.s32 %s201, 1
      %p205 = scmp.eq.s32.totalorder %s20, 1
      %p206 = scmp.ne.s32.totalorder %s201, %s203
      %p207 = scmp.eq.s32.totalorder %s20, 0
      %p208 = por %p206, %p207
      %p209 = scmp.ne.s32.totalorder %s201, %s203
      %p210 = scmp.eq.s32.totalorder %s25, 1
      %p211 = por %p209, %p210
      %p212 = scmp.ne.s32.totalorder %s203, %s204
      %p213 = scmp.eq.s32.totalorder %s25, 0
      %p214 = por %p212, %p213
      %p215 = scmp.ne.s32.totalorder %s203, %s204
      %p216 = scmp.eq.s32.totalorder %s26, 1
      %p217 = por %p215, %p216
      %p219 = scmp.ne.s32.totalorder %s204, %s218
      %p220 = scmp.eq.s32.totalorder %s26, 0
      %p221 = por %p219, %p220
      %s222 = ssub.s32 %s20, %s27
      %p223 = scmp.eq.s32.totalorder %s222, 0
      %s225 = sadd.s32 %s224, 1
      %s226 = scalar_select %p223, %s224, %s225
      %p229 = pneg %p223
      %p230 = scmp.eq.s32.totalorder %s20, 1
      %p231 = por %p229, %p230
      %p232 = scmp.ne.s32.totalorder %s224, %s227
      %p233 = scmp.eq.s32.totalorder %s20, 0
      %p234 = por %p232, %p233
      %p235 = scmp.ne.s32.totalorder %s224, %s227
      %p236 = scmp.eq.s32.totalorder %s25, 1
      %p237 = por %p235, %p236
      %p238 = scmp.ne.s32.totalorder %s227, %s228
      %p239 = scmp.eq.s32.totalorder %s25, 0
      %p240 = por %p238, %p239
      %p241 = scmp.ne.s32.totalorder %s227, %s228
      %p242 = scmp.eq.s32.totalorder %s26, 1
      %p243 = por %p241, %p242
      %p245 = scmp.ne.s32.totalorder %s228, %s244
      %p246 = scmp.eq.s32.totalorder %s26, 0
      %p247 = por %p245, %p246
      %p248 = scmp.le.s32.totalorder 1, %s20
      %p249 = scmp.lt.s32.totalorder %s20, 3
      %p250 = pnand %p248, %p249
      %p251 = pneg %p250
      // Predicated region
      $region9: #{tpu_custom_call.1} parent=5 // pred_check
        _
      $region10: #{tpu_custom_call.1} parent=5 // pred_check_branch
        %253 = sbr.rel (%p250) target = $region12
      $region11: #{tpu_custom_call.1} parent=5 // pred_region
        %s254 = ssub.s32 %s20, 1
        // Predicated region
        $region13: #{tpu_custom_call.1} parent=11 // pred_check
          %p255 = pneg %p67
        $region14: #{tpu_custom_call.1} parent=11 // pred_check_branch
          %257 = sbr.rel (%p255) target = $region16
        $region15: #{tpu_custom_call.1} parent=11 // pred_region
          _
        $region16: #{tpu_custom_call.1} parent=11 // pred_fallthru
          _
        // Predicated region
        $region17: #{tpu_custom_call.1} parent=11 // pred_check
          %p258 = pneg %p88
        $region18: #{tpu_custom_call.1} parent=11 // pred_check_branch
          %260 = sbr.rel (%p258) target = $region20
        $region19: #{tpu_custom_call.1} parent=11 // pred_region
          _
        $region20: #{tpu_custom_call.1} parent=11 // pred_fallthru
          _
        // Predicated region
        $region21: #{tpu_custom_call.1} parent=11 // pred_check
          %p261 = pneg %p109
        $region22: #{tpu_custom_call.1} parent=11 // pred_check_branch
          %263 = sbr.rel (%p261) target = $region24
        $region23: #{tpu_custom_call.1} parent=11 // pred_region
          %s265 = ssub.s32 18432, 18432
          %266 = vsyncadd [#allocation6], %s265
          %s267 = sshll.u32 [#allocation5], 4
          %s268 = int_to_ptr.vmem [resolvable:$true] %s267
          %273 = dma.hbm_to_vmem [thread:$0]  %s3, 18432, %s268, [#allocation6], 128, 128, 8
        $region24: #{tpu_custom_call.1} parent=11 // pred_fallthru
          _
        // Predicated region
        $region25: #{tpu_custom_call.1} parent=11 // pred_check
          %p274 = pneg %p130
        $region26: #{tpu_custom_call.1} parent=11 // pred_check_branch
          %276 = sbr.rel (%p274) target = $region28
        $region27: #{tpu_custom_call.1} parent=11 // pred_region
          _
        $region28: #{tpu_custom_call.1} parent=11 // pred_fallthru
          _
        // Predicated region
        $region29: #{tpu_custom_call.1} parent=11 // pred_check
          %p277 = pneg %p151
        $region30: #{tpu_custom_call.1} parent=11 // pred_check_branch
          %279 = sbr.rel (%p277) target = $region32
        $region31: #{tpu_custom_call.1} parent=11 // pred_region
          %s281 = ssub.s32 32768, 32768
          %282 = vsyncadd [#allocation9], %s281
          %s283 = sshll.u32 [#allocation8], 4
          %s284 = int_to_ptr.vmem [resolvable:$true] %s283
          %289 = dma.hbm_to_vmem [thread:$0]  %s5, 32768, %s284, [#allocation9], 128, 128, 8
        $region32: #{tpu_custom_call.1} parent=11 // pred_fallthru
          _
        // Predicated region
        $region33: #{tpu_custom_call.1} parent=11 // pred_check
          %p290 = pneg %p172
        $region34: #{tpu_custom_call.1} parent=11 // pred_check_branch
          %292 = sbr.rel (%p290) target = $region36
        $region35: #{tpu_custom_call.1} parent=11 // pred_region
          _
        $region36: #{tpu_custom_call.1} parent=11 // pred_fallthru
          _
        // Predicated region
        $region37: #{tpu_custom_call.1} parent=11 // pred_check
          %p293 = pneg %p193
        $region38: #{tpu_custom_call.1} parent=11 // pred_check_branch
          %295 = sbr.rel (%p293) target = $region40
        $region39: #{tpu_custom_call.1} parent=11 // pred_region
          %s297 = ssub.s32 2048, 2048
          %298 = vsyncadd [#allocation9], %s297
          %s299 = sshll.u32 [#allocation10], 4
          %s300 = int_to_ptr.vmem [resolvable:$true] %s299
          %305 = dma.hbm_to_vmem [thread:$0]  %s7, 2048, %s300, [#allocation9], 128, 128, 8
        $region40: #{tpu_custom_call.1} parent=11 // pred_fallthru
          _
        // Predicated region
        $region41: #{tpu_custom_call.1} parent=11 // pred_check
          %p306 = pneg %p214
        $region42: #{tpu_custom_call.1} parent=11 // pred_check_branch
          %308 = sbr.rel (%p306) target = $region44
        $region43: #{tpu_custom_call.1} parent=11 // pred_region
          _
        $region44: #{tpu_custom_call.1} parent=11 // pred_fallthru
          _
      $region12: #{tpu_custom_call.1} parent=5 // pred_fallthru
        _
      %p309 = scmp.lt.s32.totalorder %s20, 2
      // Predicated region
      $region45: #{tpu_custom_call.1} parent=5 // pred_check
        %p310 = pneg %p309
      $region46: #{tpu_custom_call.1} parent=5 // pred_check_branch
        %312 = sbr.rel (%p310) target = $region48
      $region47: #{tpu_custom_call.1} parent=5 // pred_region
        // Predicated region
        $region49: #{tpu_custom_call.1} parent=47 // pred_check
          %p313 = pneg %p40
        $region50: #{tpu_custom_call.1} parent=47 // pred_check_branch
          %315 = sbr.rel (%p313) target = $region52
        $region51: #{tpu_custom_call.1} parent=47 // pred_region
          %p316 = scmp.lt.s32.totalorder %s20, 1
          %s317 = scalar_select %p316, %s20, 1
          %s318 = smul.addr %s317, 54
          %s319 = smul.addr %s318, 8
          %s320 = scalar_lea.vmem %s0, %s319
        $region52: #{tpu_custom_call.1} parent=47 // pred_fallthru
          _
      $region48: #{tpu_custom_call.1} parent=5 // pred_fallthru
        _
      %p321 = scmp.le.s32.totalorder 1, %s20
      %p322 = scmp.lt.s32.totalorder %s20, 3
      %p323 = pnand %p321, %p322
      %p324 = pneg %p323
      // Predicated region
      $region53: #{tpu_custom_call.1} parent=5 // pred_check
        _
      $region54: #{tpu_custom_call.1} parent=5 // pred_check_branch
        %326 = sbr.rel (%p323) target = $region56
      $region55: #{tpu_custom_call.1} parent=5 // pred_region
        %s327 = ssub.s32 %s20, 1
        // Predicated region
        $region57: #{tpu_custom_call.1} parent=55 // pred_check
          %p328 = pneg %p109
        $region58: #{tpu_custom_call.1} parent=55 // pred_check_branch
          %330 = sbr.rel (%p328) target = $region60
        $region59: #{tpu_custom_call.1} parent=55 // pred_region
          %331 = dma.done [#allocation6], 18432
        $region60: #{tpu_custom_call.1} parent=55 // pred_fallthru
          _
        // Predicated region
        $region61: #{tpu_custom_call.1} parent=55 // pred_check
          %p332 = pneg %p151
        $region62: #{tpu_custom_call.1} parent=55 // pred_check_branch
          %334 = sbr.rel (%p332) target = $region64
        $region63: #{tpu_custom_call.1} parent=55 // pred_region
          %335 = dma.done [#allocation9], 32768
        $region64: #{tpu_custom_call.1} parent=55 // pred_fallthru
          _
        // Predicated region
        $region65: #{tpu_custom_call.1} parent=55 // pred_check
          %p336 = pneg %p193
        $region66: #{tpu_custom_call.1} parent=55 // pred_check_branch
          %338 = sbr.rel (%p336) target = $region68
        $region67: #{tpu_custom_call.1} parent=55 // pred_region
          %339 = dma.done [#allocation9], 2048
        $region68: #{tpu_custom_call.1} parent=55 // pred_fallthru
          _
        %p340 = scmp.lt.s32.totalorder %s25, 1
        %s341 = scalar_select %p340, %s25, 1
        %s342 = smul.addr %s341, 54
        %s343 = smul.addr %s342, 8
        %s344 = scalar_lea.vmem %s0, %s343
        %p345 = pneg %p46
        %p346 = pneg %p43
        %p347 = pneg %p67
        %p348 = pneg %p64
        %p349 = pneg %p88
        %p350 = pneg %p85
        %p351 = pneg %p109
        %p352 = pneg %p106
        %p353 = pneg %p130
        %p354 = pneg %p127
        %p355 = pneg %p151
        %p356 = pneg %p148
        %p357 = pneg %p172
        %p358 = pneg %p169
        %p359 = pneg %p193
        %p360 = pneg %p190
        %p361 = pneg %p214
        %p362 = pneg %p211
        %p363 = pneg %p240
        %p364 = pneg %p237
        %s365 = sand.u32 %s227, 1
        %s366 = scalar_lea.sflag [#allocation7], %s365
        %s367 = sand.u32 %s227, 1
        %s368 = smul.addr %s367, 8
        %s369 = scalar_lea.vmem [#allocation11], %s368
        %p370 = scmp.lt.s32.totalorder %s25, 1
        %s371 = scalar_select %p370, %s25, 1
        %s372 = smul.addr %s371, 54
        %s373 = smul.addr %s372, 8
        %s374 = scalar_lea.vmem %s0, %s373
        %v375 = vld [vmem:[%s2] sm:$0xff]
        %v376 = vld [vmem:[%s2 + $0x8] sm:$0xff]
        %v377 = vld [vmem:[%s2 + $0x10] sm:$0xff]
        %v378 = vld [vmem:[%s2 + $0x18] sm:$0xff]
        %v379 = vld [vmem:[%s2 + $0x20] sm:$0xff]
        %v380 = vld [vmem:[%s2 + $0x28] sm:$0xff]
        %v381 = vld [vmem:[%s2 + $0x30] sm:$0xff]
        %v382 = vld [vmem:[%s2 + $0x38] sm:$0xff]
        %v383 = vld [vmem:[%s2 + $0x40] sm:$0xff]
        %v384 = vld [vmem:[%s2 + $0x48] sm:$0xff]
        %v385 = vld [vmem:[%s2 + $0x50] sm:$0xff]
        %v386 = vld [vmem:[%s2 + $0x58] sm:$0xff]
        %v387 = vld [vmem:[%s2 + $0x60] sm:$0xff]
        %v388 = vld [vmem:[%s2 + $0x68] sm:$0xff]
        %v389 = vld [vmem:[%s2 + $0x70] sm:$0xff]
        %v390 = vld [vmem:[%s2 + $0x78] sm:$0xff]
        %v391 = vld [vmem:[%s2 + $0x80] sm:$0xff]
        %v392 = vld [vmem:[%s2 + $0x88] sm:$0xff]
        %v393 = vld [vmem:[%s2 + $0x90] sm:$0xff]
        %v394 = vld [vmem:[%s2 + $0x98] sm:$0xff]
        %v395 = vld [vmem:[%s2 + $0xa0] sm:$0xff]
        %v396 = vld [vmem:[%s2 + $0xa8] sm:$0xff]
        %v397 = vld [vmem:[%s2 + $0xb0] sm:$0xff]
        %v398 = vld [vmem:[%s2 + $0xb8] sm:$0xff]
        %v399 = vld [vmem:[%s2 + $0xc0] sm:$0xff]
        %v400 = vld [vmem:[%s2 + $0xc8] sm:$0xff]
        %v401 = vld [vmem:[%s2 + $0xd0] sm:$0xff]
        %v402 = vld [vmem:[%s2 + $0xd8] sm:$0xff]
        %v403 = vld [vmem:[%s2 + $0xe0] sm:$0xff]
        %v404 = vld [vmem:[%s2 + $0xe8] sm:$0xff]
        %v405 = vld [vmem:[%s2 + $0xf0] sm:$0xff]
        %v406 = vld [vmem:[%s2 + $0xf8] sm:$0xff]
        %v407 = vld [vmem:[%s374] sm:$0xff]
        %v408 = vld [vmem:[%s374 + $0x8] sm:$0xff]
        %v409 = vld [vmem:[%s374 + $0x18] sm:$0xff]
        %v410 = vld [vmem:[%s374 + $0x20] sm:$0xff]
        %v411 = vld [vmem:[%s374 + $0x30] sm:$0xff]
        %v412 = vld [vmem:[%s374 + $0x38] sm:$0xff]
        %v413 = vld [vmem:[%s374 + $0x48] sm:$0xff]
        %v414 = vld [vmem:[%s374 + $0x50] sm:$0xff]
        %v415 = vld [vmem:[%s374 + $0x60] sm:$0xff]
        %v416 = vld [vmem:[%s374 + $0x68] sm:$0xff]
        %v417 = vld [vmem:[%s374 + $0x78] sm:$0xff]
        %v418 = vld [vmem:[%s374 + $0x80] sm:$0xff]
        %v419 = vld [vmem:[%s374 + $0x90] sm:$0xff]
        %v420 = vld [vmem:[%s374 + $0x98] sm:$0xff]
        %v421 = vld [vmem:[%s374 + $0xa8] sm:$0xff]
        %v422 = vld [vmem:[%s374 + $0xb0] sm:$0xff]
        %v423 = vld [vmem:[%s374 + $0xc0] sm:$0xff]
        %v424 = vld [vmem:[%s374 + $0xc8] sm:$0xff]
        %v425 = vld [vmem:[%s374 + $0xd8] sm:$0xff]
        %v426 = vld [vmem:[%s374 + $0xe0] sm:$0xff]
        %v427 = vld [vmem:[%s374 + $0xf0] sm:$0xff]
        %v428 = vld [vmem:[%s374 + $0xf8] sm:$0xff]
        %v429 = vld [vmem:[%s374 + $0x108] sm:$0xff]
        %v430 = vld [vmem:[%s374 + $0x110] sm:$0xff]
        %v431 = vld [vmem:[%s374 + $0x120] sm:$0xff]
        %v432 = vld [vmem:[%s374 + $0x128] sm:$0xff]
        %v433 = vld [vmem:[%s374 + $0x138] sm:$0xff]
        %v434 = vld [vmem:[%s374 + $0x140] sm:$0xff]
        %v435 = vld [vmem:[%s374 + $0x150] sm:$0xff]
        %v436 = vld [vmem:[%s374 + $0x158] sm:$0xff]
        %v437 = vld [vmem:[%s374 + $0x168] sm:$0xff]
        %v438 = vld [vmem:[%s374 + $0x170] sm:$0xff]
        %v439 = vld [vmem:[%s1] sm:$0xff]
        %v440 = vld [vmem:[%s1 + $0x8] sm:$0xff]
        %v441 = vld [vmem:[%s1 + $0x10] sm:$0xff]
        %v442 = vld [vmem:[%s1 + $0x18] sm:$0xff]
        %v443 = vld [vmem:[%s1 + $0x20] sm:$0xff]
        %v444 = vld [vmem:[%s1 + $0x28] sm:$0xff]
        %v445 = vld [vmem:[%s1 + $0x30] sm:$0xff]
        %v446 = vld [vmem:[%s1 + $0x38] sm:$0xff]
        %v447 = vld [vmem:[%s1 + $0x40] sm:$0xff]
        %v448 = vld [vmem:[%s1 + $0x48] sm:$0xff]
        %v449 = vld [vmem:[%s1 + $0x50] sm:$0xff]
        %v450 = vld [vmem:[%s1 + $0x58] sm:$0xff]
        %v451 = vld [vmem:[%s1 + $0x60] sm:$0xff]
        %v452 = vld [vmem:[%s1 + $0x68] sm:$0xff]
        %v453 = vld [vmem:[%s1 + $0x70] sm:$0xff]
        %v454 = vld [vmem:[%s1 + $0x78] sm:$0xff]
        %455 = vmatprep.subr.mxu0 0.0
        %456 = vmatpush1.msra.mxu0 %v439
        %457 = vmatprep.subr.mxu0 0.0
        %458 = vmatpush1.msra.mxu0 %v440
        %459 = vmatprep.subr.mxu0 0.0
        %460 = vmatpush1.msra.mxu0 %v441
        %461 = vmatprep.subr.mxu0 0.0
        %462 = vmatpush1.msra.mxu0 %v442
        %463 = vmatprep.subr.mxu0 0.0
        %464 = vmatpush1.msra.mxu0 %v443
        %465 = vmatprep.subr.mxu0 0.0
        %466 = vmatpush1.msra.mxu0 %v444
        %467 = vmatprep.subr.mxu0 0.0
        %468 = vmatpush1.msra.mxu0 %v445
        %469 = vmatprep.subr.mxu0 0.0
        %470 = vmatpush1.msra.mxu0 %v446
        %471 = vmatprep.subr.mxu0 0.0
        %472 = vmatpush1.msra.mxu0 %v447
        %473 = vmatprep.subr.mxu0 0.0
        %474 = vmatpush1.msra.mxu0 %v448
        %475 = vmatprep.subr.mxu0 0.0
        %476 = vmatpush1.msra.mxu0 %v449
        %477 = vmatprep.subr.mxu0 0.0
        %478 = vmatpush1.msra.mxu0 %v450
        %479 = vmatprep.subr.mxu0 0.0
        %480 = vmatpush1.msra.mxu0 %v451
        %481 = vmatprep.subr.mxu0 0.0
        %482 = vmatpush1.msra.mxu0 %v452
        %483 = vmatprep.subr.mxu0 0.0
        %484 = vmatpush1.msra.mxu0 %v453
        %485 = vmatprep.subr.mxu0 0.0
        %486 = vmatpush1.msra.mxu0 %v454
        %487 = vmatprep.subr.mxu0 0.0
        %488 = vmatpush1.msra.mxu0 0.0
        %489 = vmatprep.subr.mxu0 0.0
        %490 = vmatpush1.msra.mxu0 0.0
        %491 = vmatprep.subr.mxu0 0.0
        %492 = vmatpush1.msra.mxu0 0.0
        %493 = vmatprep.subr.mxu0 0.0
        %494 = vmatpush1.msra.mxu0 0.0
        %495 = vmatprep.subr.mxu0 0.0
        %496 = vmatpush1.msra.mxu0 0.0
        %497 = vmatprep.subr.mxu0 0.0
        %498 = vmatpush1.msra.mxu0 0.0
        %499 = vmatprep.subr.mxu0 0.0
        %500 = vmatpush1.msra.mxu0 0.0
        %501 = vmatprep.subr.mxu0 0.0
        %502 = vmatpush1.msra.mxu0 0.0
        %503 = vmatprep.subr.mxu0 0.0
        %504 = vmatpush1.msra.mxu0 0.0
        %505 = vmatprep.subr.mxu0 0.0
        %506 = vmatpush1.msra.mxu0 0.0
        %507 = vmatprep.subr.mxu0 0.0
        %508 = vmatpush1.msra.mxu0 0.0
        %509 = vmatprep.subr.mxu0 0.0
        %510 = vmatpush1.msra.mxu0 0.0
        %511 = vmatprep.subr.mxu0 0.0
        %512 = vmatpush1.msra.mxu0 0.0
        %513 = vmatprep.subr.mxu0 0.0
        %514 = vmatpush1.msra.mxu0 0.0
        %515 = vmatprep.subr.mxu0 0.0
        %516 = vmatpush1.msra.mxu0 0.0
        %517 = vmatprep.subr.mxu0 0.0
        %518 = vmatpush1.msra.mxu0 0.0
        %519 = vmatprep.mubr.f32.mxu0 0.0
        %520 = vmatmul.mubr.f32.gmra.mrb[0].mxu0 %v407
        %v521 = vpop.f32.mrb[0].mxu0
        %v522 = vadd.f32 0.0, %v521
        %v523 = vpop.f32.mrb[0].mxu0
        %524 = vmatprep.mubr.f32.mxu0 0.0
        %525 = vmatmul.mubr.f32.gmra.mrb[0].mxu0 %v408
        %v526 = vpop.f32.mrb[0].mxu0
        %v527 = vadd.f32 0.0, %v526
        %v528 = vpop.f32.mrb[0].mxu0
        %529 = vmatprep.mubr.f32.mxu0 0.0
        %530 = vmatmul.mubr.f32.gmra.mrb[0].mxu0 %v409
        %v531 = vpop.f32.mrb[0].mxu0
        %v532 = vadd.f32 0.0, %v531
        %v533 = vpop.f32.mrb[0].mxu0
        %534 = vmatprep.mubr.f32.mxu0 0.0
        %535 = vmatmul.mubr.f32.gmra.mrb[0].mxu0 %v410
        %v536 = vpop.f32.mrb[0].mxu0
        %v537 = vadd.f32 0.0, %v536
        %v538 = vpop.f32.mrb[0].mxu0
        %539 = vmatprep.mubr.f32.mxu0 0.0
        %540 = vmatmul.mubr.f32.gmra.mrb[0].mxu0 %v411
        %v541 = vpop.f32.mrb[0].mxu0
        %v542 = vadd.f32 0.0, %v541
        %v543 = vpop.f32.mrb[0].mxu0
        %544 = vmatprep.mubr.f32.mxu0 0.0
        %545 = vmatmul.mubr.f32.gmra.mrb[0].mxu0 %v412
        %v546 = vpop.f32.mrb[0].mxu0
        %v547 = vadd.f32 0.0, %v546
        %v548 = vpop.f32.mrb[0].mxu0
        %549 = vmatprep.mubr.f32.mxu0 0.0
        %550 = vmatmul.mubr.f32.gmra.mrb[0].mxu0 %v413
        %v551 = vpop.f32.mrb[0].mxu0
        %v552 = vadd.f32 0.0, %v551
        %v553 = vpop.f32.mrb[0].mxu0
        %554 = vmatprep.mubr.f32.mxu0 0.0
        %555 = vmatmul.mubr.f32.gmra.mrb[0].mxu0 %v414
        %v556 = vpop.f32.mrb[0].mxu0
        %v557 = vadd.f32 0.0, %v556
        %v558 = vpop.f32.mrb[0].mxu0
        %559 = vmatprep.mubr.f32.mxu0 0.0
        %560 = vmatmul.mubr.f32.gmra.mrb[0].mxu0 %v415
        %v561 = vpop.f32.mrb[0].mxu0
        %v562 = vadd.f32 0.0, %v561
        %v563 = vpop.f32.mrb[0].mxu0
        %564 = vmatprep.mubr.f32.mxu0 0.0
        %565 = vmatmul.mubr.f32.gmra.mrb[0].mxu0 %v416
        %v566 = vpop.f32.mrb[0].mxu0
        %v567 = vadd.f32 0.0, %v566
        %v568 = vpop.f32.mrb[0].mxu0
        %569 = vmatprep.mubr.f32.mxu0 0.0
        %570 = vmatmul.mubr.f32.gmra.mrb[0].mxu0 %v417
        %v571 = vpop.f32.mrb[0].mxu0
        %v572 = vadd.f32 0.0, %v571
        %v573 = vpop.f32.mrb[0].mxu0
        %574 = vmatprep.mubr.f32.mxu0 0.0
        %575 = vmatmul.mubr.f32.gmra.mrb[0].mxu0 %v418
        %v576 = vpop.f32.mrb[0].mxu0
        %v577 = vadd.f32 0.0, %v576
        %v578 = vpop.f32.mrb[0].mxu0
        %579 = vmatprep.mubr.f32.mxu0 0.0
        %580 = vmatmul.mubr.f32.gmra.mrb[0].mxu0 %v419
        %v581 = vpop.f32.mrb[0].mxu0
        %v582 = vadd.f32 0.0, %v581
        %v583 = vpop.f32.mrb[0].mxu0
        %584 = vmatprep.mubr.f32.mxu0 0.0
        %585 = vmatmul.mubr.f32.gmra.mrb[0].mxu0 %v420
        %v586 = vpop.f32.mrb[0].mxu0
        %v587 = vadd.f32 0.0, %v586
        %v588 = vpop.f32.mrb[0].mxu0
        %589 = vmatprep.mubr.f32.mxu0 0.0
        %590 = vmatmul.mubr.f32.gmra.mrb[0].mxu0 %v421
        %v591 = vpop.f32.mrb[0].mxu0
        %v592 = vadd.f32 0.0, %v591
        %v593 = vpop.f32.mrb[0].mxu0
        %594 = vmatprep.mubr.f32.mxu0 0.0
        %595 = vmatmul.mubr.f32.gmra.mrb[0].mxu0 %v422
        %v596 = vpop.f32.mrb[0].mxu0
        %v597 = vadd.f32 0.0, %v596
        %v598 = vpop.f32.mrb[0].mxu0
        %599 = vmatprep.mubr.f32.mxu0 0.0
        %600 = vmatmul.mubr.f32.gmra.mrb[0].mxu0 %v423
        %v601 = vpop.f32.mrb[0].mxu0
        %v602 = vadd.f32 0.0, %v601
        %v603 = vpop.f32.mrb[0].mxu0
        %604 = vmatprep.mubr.f32.mxu0 0.0
        %605 = vmatmul.mubr.f32.gmra.mrb[0].mxu0 %v424
        %v606 = vpop.f32.mrb[0].mxu0
        %v607 = vadd.f32 0.0, %v606
        %v608 = vpop.f32.mrb[0].mxu0
        %609 = vmatprep.mubr.f32.mxu0 0.0
        %610 = vmatmul.mubr.f32.gmra.mrb[0].mxu0 %v425
        %v611 = vpop.f32.mrb[0].mxu0
        %v612 = vadd.f32 0.0, %v611
        %v613 = vpop.f32.mrb[0].mxu0
        %614 = vmatprep.mubr.f32.mxu0 0.0
        %615 = vmatmul.mubr.f32.gmra.mrb[0].mxu0 %v426
        %v616 = vpop.f32.mrb[0].mxu0
        %v617 = vadd.f32 0.0, %v616
        %v618 = vpop.f32.mrb[0].mxu0
        %619 = vmatprep.mubr.f32.mxu0 0.0
        %620 = vmatmul.mubr.f32.gmra.mrb[0].mxu0 %v427
        %v621 = vpop.f32.mrb[0].mxu0
        %v622 = vadd.f32 0.0, %v621
        %v623 = vpop.f32.mrb[0].mxu0
        %624 = vmatprep.mubr.f32.mxu0 0.0
        %625 = vmatmul.mubr.f32.gmra.mrb[0].mxu0 %v428
        %v626 = vpop.f32.mrb[0].mxu0
        %v627 = vadd.f32 0.0, %v626
        %v628 = vpop.f32.mrb[0].mxu0
        %629 = vmatprep.mubr.f32.mxu0 0.0
        %630 = vmatmul.mubr.f32.gmra.mrb[0].mxu0 %v429
        %v631 = vpop.f32.mrb[0].mxu0
        %v632 = vadd.f32 0.0, %v631
        %v633 = vpop.f32.mrb[0].mxu0
        %634 = vmatprep.mubr.f32.mxu0 0.0
        %635 = vmatmul.mubr.f32.gmra.mrb[0].mxu0 %v430
        %v636 = vpop.f32.mrb[0].mxu0
        %v637 = vadd.f32 0.0, %v636
        %v638 = vpop.f32.mrb[0].mxu0
        %639 = vmatprep.mubr.f32.mxu0 0.0
        %640 = vmatmul.mubr.f32.gmra.mrb[0].mxu0 %v431
        %v641 = vpop.f32.mrb[0].mxu0
        %v642 = vadd.f32 0.0, %v641
        %v643 = vpop.f32.mrb[0].mxu0
        %644 = vmatprep.mubr.f32.mxu0 0.0
        %645 = vmatmul.mubr.f32.gmra.mrb[0].mxu0 %v432
        %v646 = vpop.f32.mrb[0].mxu0
        %v647 = vadd.f32 0.0, %v646
        %v648 = vpop.f32.mrb[0].mxu0
        %649 = vmatprep.mubr.f32.mxu0 0.0
        %650 = vmatmul.mubr.f32.gmra.mrb[0].mxu0 %v433
        %v651 = vpop.f32.mrb[0].mxu0
        %v652 = vadd.f32 0.0, %v651
        %v653 = vpop.f32.mrb[0].mxu0
        %654 = vmatprep.mubr.f32.mxu0 0.0
        %655 = vmatmul.mubr.f32.gmra.mrb[0].mxu0 %v434
        %v656 = vpop.f32.mrb[0].mxu0
        %v657 = vadd.f32 0.0, %v656
        %v658 = vpop.f32.mrb[0].mxu0
        %659 = vmatprep.mubr.f32.mxu0 0.0
        %660 = vmatmul.mubr.f32.gmra.mrb[0].mxu0 %v435
        %v661 = vpop.f32.mrb[0].mxu0
        %v662 = vadd.f32 0.0, %v661
        %v663 = vpop.f32.mrb[0].mxu0
        %664 = vmatprep.mubr.f32.mxu0 0.0
        %665 = vmatmul.mubr.f32.gmra.mrb[0].mxu0 %v436
        %v666 = vpop.f32.mrb[0].mxu0
        %v667 = vadd.f32 0.0, %v666
        %v668 = vpop.f32.mrb[0].mxu0
        %669 = vmatprep.mubr.f32.mxu0 0.0
        %670 = vmatmul.mubr.f32.gmra.mrb[0].mxu0 %v437
        %v671 = vpop.f32.mrb[0].mxu0
        %v672 = vadd.f32 0.0, %v671
        %v673 = vpop.f32.mrb[0].mxu0
        %674 = vmatprep.mubr.f32.mxu0 0.0
        %675 = vmatmul.mubr.f32.gmra.mrb[0].mxu0 %v438
        %v676 = vpop.f32.mrb[0].mxu0
        %v677 = vadd.f32 0.0, %v676
        %v678 = vpop.f32.mrb[0].mxu0
        %679 = vdwg.mxu0
        %v680 = vadd.f32 %v375, %v522
        %v681 = vadd.f32 %v376, %v527
        %v682 = vadd.f32 %v377, %v532
        %v683 = vadd.f32 %v378, %v537
        %v684 = vadd.f32 %v379, %v542
        %v685 = vadd.f32 %v380, %v547
        %v686 = vadd.f32 %v381, %v552
        %v687 = vadd.f32 %v382, %v557
        %v688 = vadd.f32 %v383, %v562
        %v689 = vadd.f32 %v384, %v567
        %v690 = vadd.f32 %v385, %v572
        %v691 = vadd.f32 %v386, %v577
        %v692 = vadd.f32 %v387, %v582
        %v693 = vadd.f32 %v388, %v587
        %v694 = vadd.f32 %v389, %v592
        %v695 = vadd.f32 %v390, %v597
        %v696 = vadd.f32 %v391, %v602
        %v697 = vadd.f32 %v392, %v607
        %v698 = vadd.f32 %v393, %v612
        %v699 = vadd.f32 %v394, %v617
        %v700 = vadd.f32 %v395, %v622
        %v701 = vadd.f32 %v396, %v627
        %v702 = vadd.f32 %v397, %v632
        %v703 = vadd.f32 %v398, %v637
        %v704 = vadd.f32 %v399, %v642
        %v705 = vadd.f32 %v400, %v647
        %v706 = vadd.f32 %v401, %v652
        %v707 = vadd.f32 %v402, %v657
        %v708 = vadd.f32 %v403, %v662
        %v709 = vadd.f32 %v404, %v667
        %v710 = vadd.f32 %v405, %v672
        %v711 = vadd.f32 %v406, %v677
        %v712 = vld [vmem:[%s374 + $0x1] sm:$0xff]
        %v713 = vld [vmem:[%s374 + $0x9] sm:$0xff]
        %v714 = vld [vmem:[%s374 + $0x19] sm:$0xff]
        %v715 = vld [vmem:[%s374 + $0x21] sm:$0xff]
        %v716 = vld [vmem:[%s374 + $0x31] sm:$0xff]
        %v717 = vld [vmem:[%s374 + $0x39] sm:$0xff]
        %v718 = vld [vmem:[%s374 + $0x49] sm:$0xff]
        %v719 = vld [vmem:[%s374 + $0x51] sm:$0xff]
        %v720 = vld [vmem:[%s374 + $0x61] sm:$0xff]
        %v721 = vld [vmem:[%s374 + $0x69] sm:$0xff]
        %v722 = vld [vmem:[%s374 + $0x79] sm:$0xff]
        %v723 = vld [vmem:[%s374 + $0x81] sm:$0xff]
        %v724 = vld [vmem:[%s374 + $0x91] sm:$0xff]
        %v725 = vld [vmem:[%s374 + $0x99] sm:$0xff]
        %v726 = vld [vmem:[%s374 + $0xa9] sm:$0xff]
        %v727 = vld [vmem:[%s374 + $0xb1] sm:$0xff]
        %v728 = vld [vmem:[%s374 + $0xc1] sm:$0xff]
        %v729 = vld [vmem:[%s374 + $0xc9] sm:$0xff]
        %v730 = vld [vmem:[%s374 + $0xd9] sm:$0xff]
        %v731 = vld [vmem:[%s374 + $0xe1] sm:$0xff]
        %v732 = vld [vmem:[%s374 + $0xf1] sm:$0xff]
        %v733 = vld [vmem:[%s374 + $0xf9] sm:$0xff]
        %v734 = vld [vmem:[%s374 + $0x109] sm:$0xff]
        %v735 = vld [vmem:[%s374 + $0x111] sm:$0xff]
        %v736 = vld [vmem:[%s374 + $0x121] sm:$0xff]
        %v737 = vld [vmem:[%s374 + $0x129] sm:$0xff]
        %v738 = vld [vmem:[%s374 + $0x139] sm:$0xff]
        %v739 = vld [vmem:[%s374 + $0x141] sm:$0xff]
        %v740 = vld [vmem:[%s374 + $0x151] sm:$0xff]
        %v741 = vld [vmem:[%s374 + $0x159] sm:$0xff]
        %v742 = vld [vmem:[%s374 + $0x169] sm:$0xff]
        %v743 = vld [vmem:[%s374 + $0x171] sm:$0xff]
        %v744 = vld [vmem:[%s1 + $0x80] sm:$0xff]
        %v745 = vld [vmem:[%s1 + $0x88] sm:$0xff]
        %v746 = vld [vmem:[%s1 + $0x90] sm:$0xff]
        %v747 = vld [vmem:[%s1 + $0x98] sm:$0xff]
        %v748 = vld [vmem:[%s1 + $0xa0] sm:$0xff]
        %v749 = vld [vmem:[%s1 + $0xa8] sm:$0xff]
        %v750 = vld [vmem:[%s1 + $0xb0] sm:$0xff]
        %v751 = vld [vmem:[%s1 + $0xb8] sm:$0xff]
        %v752 = vld [vmem:[%s1 + $0xc0] sm:$0xff]
        %v753 = vld [vmem:[%s1 + $0xc8] sm:$0xff]
        %v754 = vld [vmem:[%s1 + $0xd0] sm:$0xff]
        %v755 = vld [vmem:[%s1 + $0xd8] sm:$0xff]
        %v756 = vld [vmem:[%s1 + $0xe0] sm:$0xff]
        %v757 = vld [vmem:[%s1 + $0xe8] sm:$0xff]
        %v758 = vld [vmem:[%s1 + $0xf0] sm:$0xff]
        %v759 = vld [vmem:[%s1 + $0xf8] sm:$0xff]
        %760 = vmatprep.subr.mxu0 0.0
        %761 = vmatpush1.msra.mxu0 %v744
        %762 = vmatprep.subr.mxu0 0.0
        %763 = vmatpush1.msra.mxu0 %v745
        %764 = vmatprep.subr.mxu0 0.0
        %765 = vmatpush1.msra.mxu0 %v746
        %766 = vmatprep.subr.mxu0 0.0
        %767 = vmatpush1.msra.mxu0 %v747
        %768 = vmatprep.subr.mxu0 0.0
        %769 = vmatpush1.msra.mxu0 %v748
        %770 = vmatprep.subr.mxu0 0.0
        %771 = vmatpush1.msra.mxu0 %v749
        %772 = vmatprep.subr.mxu0 0.0
        %773 = vmatpush1.msra.mxu0 %v750
        %774 = vmatprep.subr.mxu0 0.0
        %775 = vmatpush1.msra.mxu0 %v751
        %776 = vmatprep.subr.mxu0 0.0
        %777 = vmatpush1.msra.mxu0 %v752
        %778 = vmatprep.subr.mxu0 0.0
        %779 = vmatpush1.msra.mxu0 %v753
        %780 = vmatprep.subr.mxu0 0.0
        %781 = vmatpush1.msra.mxu0 %v754
        %782 = vmatprep.subr.mxu0 0.0
        %783 = vmatpush1.msra.mxu0 %v755
        %784 = vmatprep.subr.mxu0 0.0
        %785 = vmatpush1.msra.mxu0 %v756
        %786 = vmatprep.subr.mxu0 0.0
        %787 = vmatpush1.msra.mxu0 %v757
        %788 = vmatprep.subr.mxu0 0.0
        %789 = vmatpush1.msra.mxu0 %v758
        %790 = vmatprep.subr.mxu0 0.0
        %791 = vmatpush1.msra.mxu0 %v759
        %792 = vmatprep.subr.mxu0 0.0
        %793 = vmatpush1.msra.mxu0 0.0
        %794 = vmatprep.subr.mxu0 0.0
        %795 = vmatpush1.msra.mxu0 0.0
        %796 = vmatprep.subr.mxu0 0.0
        %797 = vmatpush1.msra.mxu0 0.0
        %798 = vmatprep.subr.mxu0 0.0
        %799 = vmatpush1.msra.mxu0 0.0
        %800 = vmatprep.subr.mxu0 0.0
        %801 = vmatpush1.msra.mxu0 0.0
        %802 = vmatprep.subr.mxu0 0.0
        %803 = vmatpush1.msra.mxu0 0.0
        %804 = vmatprep.subr.mxu0 0.0
        %805 = vmatpush1.msra.mxu0 0.0
        %806 = vmatprep.subr.mxu0 0.0
        %807 = vmatpush1.msra.mxu0 0.0
        %808 = vmatprep.subr.mxu0 0.0
        %809 = vmatpush1.msra.mxu0 0.0
        %810 = vmatprep.subr.mxu0 0.0
        %811 = vmatpush1.msra.mxu0 0.0
        %812 = vmatprep.subr.mxu0 0.0
        %813 = vmatpush1.msra.mxu0 0.0
        %814 = vmatprep.subr.mxu0 0.0
        %815 = vmatpush1.msra.mxu0 0.0
        %816 = vmatprep.subr.mxu0 0.0
        %817 = vmatpush1.msra.mxu0 0.0
        %818 = vmatprep.subr.mxu0 0.0
        %819 = vmatpush1.msra.mxu0 0.0
        %820 = vmatprep.subr.mxu0 0.0
        %821 = vmatpush1.msra.mxu0 0.0
        %822 = vmatprep.subr.mxu0 0.0
        %823 = vmatpush1.msra.mxu0 0.0
        %824 = vmatprep.mubr.f32.mxu0 0.0
        %825 = vmatmul.mubr.f32.gmra.mrb[0].mxu0 %v712
        %v826 = vpop.f32.mrb[0].mxu0
        %v827 = vadd.f32 0.0, %v826
        %v828 = vpop.f32.mrb[0].mxu0
        %829 = vmatprep.mubr.f32.mxu0 0.0
        %830 = vmatmul.mubr.f32.gmra.mrb[0].mxu0 %v713
        %v831 = vpop.f32.mrb[0].mxu0
        %v832 = vadd.f32 0.0, %v831
        %v833 = vpop.f32.mrb[0].mxu0
        %834 = vmatprep.mubr.f32.mxu0 0.0
        %835 = vmatmul.mubr.f32.gmra.mrb[0].mxu0 %v714
        %v836 = vpop.f32.mrb[0].mxu0
        %v837 = vadd.f32 0.0, %v836
        %v838 = vpop.f32.mrb[0].mxu0
        %839 = vmatprep.mubr.f32.mxu0 0.0
        %840 = vmatmul.mubr.f32.gmra.mrb[0].mxu0 %v715
        %v841 = vpop.f32.mrb[0].mxu0
        %v842 = vadd.f32 0.0, %v841
        %v843 = vpop.f32.mrb[0].mxu0
        %844 = vmatprep.mubr.f32.mxu0 0.0
        %845 = vmatmul.mubr.f32.gmra.mrb[0].mxu0 %v716
        %v846 = vpop.f32.mrb[0].mxu0
        %v847 = vadd.f32 0.0, %v846
        %v848 = vpop.f32.mrb[0].mxu0
        %849 = vmatprep.mubr.f32.mxu0 0.0
        %850 = vmatmul.mubr.f32.gmra.mrb[0].mxu0 %v717
        %v851 = vpop.f32.mrb[0].mxu0
        %v852 = vadd.f32 0.0, %v851
        %v853 = vpop.f32.mrb[0].mxu0
        %854 = vmatprep.mubr.f32.mxu0 0.0
        %855 = vmatmul.mubr.f32.gmra.mrb[0].mxu0 %v718
        %v856 = vpop.f32.mrb[0].mxu0
        %v857 = vadd.f32 0.0, %v856
        %v858 = vpop.f32.mrb[0].mxu0
        %859 = vmatprep.mubr.f32.mxu0 0.0
        %860 = vmatmul.mubr.f32.gmra.mrb[0].mxu0 %v719
        %v861 = vpop.f32.mrb[0].mxu0
        %v862 = vadd.f32 0.0, %v861
        %v863 = vpop.f32.mrb[0].mxu0
        %864 = vmatprep.mubr.f32.mxu0 0.0
        %865 = vmatmul.mubr.f32.gmra.mrb[0].mxu0 %v720
        %v866 = vpop.f32.mrb[0].mxu0
        %v867 = vadd.f32 0.0, %v866
        %v868 = vpop.f32.mrb[0].mxu0
        %869 = vmatprep.mubr.f32.mxu0 0.0
        %870 = vmatmul.mubr.f32.gmra.mrb[0].mxu0 %v721
        %v871 = vpop.f32.mrb[0].mxu0
        %v872 = vadd.f32 0.0, %v871
        %v873 = vpop.f32.mrb[0].mxu0
        %874 = vmatprep.mubr.f32.mxu0 0.0
        %875 = vmatmul.mubr.f32.gmra.mrb[0].mxu0 %v722
        %v876 = vpop.f32.mrb[0].mxu0
        %v877 = vadd.f32 0.0, %v876
        %v878 = vpop.f32.mrb[0].mxu0
        %879 = vmatprep.mubr.f32.mxu0 0.0
        %880 = vmatmul.mubr.f32.gmra.mrb[0].mxu0 %v723
        %v881 = vpop.f32.mrb[0].mxu0
        %v882 = vadd.f32 0.0, %v881
        %v883 = vpop.f32.mrb[0].mxu0
        %884 = vmatprep.mubr.f32.mxu0 0.0
        %885 = vmatmul.mubr.f32.gmra.mrb[0].mxu0 %v724
        %v886 = vpop.f32.mrb[0].mxu0
        %v887 = vadd.f32 0.0, %v886
        %v888 = vpop.f32.mrb[0].mxu0
        %889 = vmatprep.mubr.f32.mxu0 0.0
        %890 = vmatmul.mubr.f32.gmra.mrb[0].mxu0 %v725
        %v891 = vpop.f32.mrb[0].mxu0
        %v892 = vadd.f32 0.0, %v891
        %v893 = vpop.f32.mrb[0].mxu0
        %894 = vmatprep.mubr.f32.mxu0 0.0
        %895 = vmatmul.mubr.f32.gmra.mrb[0].mxu0 %v726
        %v896 = vpop.f32.mrb[0].mxu0
        %v897 = vadd.f32 0.0, %v896
        %v898 = vpop.f32.mrb[0].mxu0
        %899 = vmatprep.mubr.f32.mxu0 0.0
        %900 = vmatmul.mubr.f32.gmra.mrb[0].mxu0 %v727
        %v901 = vpop.f32.mrb[0].mxu0
        %v902 = vadd.f32 0.0, %v901
        %v903 = vpop.f32.mrb[0].mxu0
        %904 = vmatprep.mubr.f32.mxu0 0.0
        %905 = vmatmul.mubr.f32.gmra.mrb[0].mxu0 %v728
        %v906 = vpop.f32.mrb[0].mxu0
        %v907 = vadd.f32 0.0, %v906
        %v908 = vpop.f32.mrb[0].mxu0
        %909 = vmatprep.mubr.f32.mxu0 0.0
        %910 = vmatmul.mubr.f32.gmra.mrb[0].mxu0 %v729
        %v911 = vpop.f32.mrb[0].mxu0
        %v912 = vadd.f32 0.0, %v911
        %v913 = vpop.f32.mrb[0].mxu0
        %914 = vmatprep.mubr.f32.mxu0 0.0
        %915 = vmatmul.mubr.f32.gmra.mrb[0].mxu0 %v730
        %v916 = vpop.f32.mrb[0].mxu0
        %v917 = vadd.f32 0.0, %v916
        %v918 = vpop.f32.mrb[0].mxu0
        %919 = vmatprep.mubr.f32.mxu0 0.0
        %920 = vmatmul.mubr.f32.gmra.mrb[0].mxu0 %v731
        %v921 = vpop.f32.mrb[0].mxu0
        %v922 = vadd.f32 0.0, %v921
        %v923 = vpop.f32.mrb[0].mxu0
        %924 = vmatprep.mubr.f32.mxu0 0.0
        %925 = vmatmul.mubr.f32.gmra.mrb[0].mxu0 %v732
        %v926 = vpop.f32.mrb[0].mxu0
        %v927 = vadd.f32 0.0, %v926
        %v928 = vpop.f32.mrb[0].mxu0
        %929 = vmatprep.mubr.f32.mxu0 0.0
        %930 = vmatmul.mubr.f32.gmra.mrb[0].mxu0 %v733
        %v931 = vpop.f32.mrb[0].mxu0
        %v932 = vadd.f32 0.0, %v931
        %v933 = vpop.f32.mrb[0].mxu0
        %934 = vmatprep.mubr.f32.mxu0 0.0
        %935 = vmatmul.mubr.f32.gmra.mrb[0].mxu0 %v734
        %v936 = vpop.f32.mrb[0].mxu0
        %v937 = vadd.f32 0.0, %v936
        %v938 = vpop.f32.mrb[0].mxu0
        %939 = vmatprep.mubr.f32.mxu0 0.0
        %940 = vmatmul.mubr.f32.gmra.mrb[0].mxu0 %v735
        %v941 = vpop.f32.mrb[0].mxu0
        %v942 = vadd.f32 0.0, %v941
        %v943 = vpop.f32.mrb[0].mxu0
        %944 = vmatprep.mubr.f32.mxu0 0.0
        %945 = vmatmul.mubr.f32.gmra.mrb[0].mxu0 %v736
        %v946 = vpop.f32.mrb[0].mxu0
        %v947 = vadd.f32 0.0, %v946
        %v948 = vpop.f32.mrb[0].mxu0
        %949 = vmatprep.mubr.f32.mxu0 0.0
        %950 = vmatmul.mubr.f32.gmra.mrb[0].mxu0 %v737
        %v951 = vpop.f32.mrb[0].mxu0
        %v952 = vadd.f32 0.0, %v951
        %v953 = vpop.f32.mrb[0].mxu0
        %954 = vmatprep.mubr.f32.mxu0 0.0
        %955 = vmatmul.mubr.f32.gmra.mrb[0].mxu0 %v738
        %v956 = vpop.f32.mrb[0].mxu0
        %v957 = vadd.f32 0.0, %v956
        %v958 = vpop.f32.mrb[0].mxu0
        %959 = vmatprep.mubr.f32.mxu0 0.0
        %960 = vmatmul.mubr.f32.gmra.mrb[0].mxu0 %v739
        %v961 = vpop.f32.mrb[0].mxu0
        %v962 = vadd.f32 0.0, %v961
        %v963 = vpop.f32.mrb[0].mxu0
        %964 = vmatprep.mubr.f32.mxu0 0.0
        %965 = vmatmul.mubr.f32.gmra.mrb[0].mxu0 %v740
        %v966 = vpop.f32.mrb[0].mxu0
        %v967 = vadd.f32 0.0, %v966
        %v968 = vpop.f32.mrb[0].mxu0
        %969 = vmatprep.mubr.f32.mxu0 0.0
        %970 = vmatmul.mubr.f32.gmra.mrb[0].mxu0 %v741
        %v971 = vpop.f32.mrb[0].mxu0
        %v972 = vadd.f32 0.0, %v971
        %v973 = vpop.f32.mrb[0].mxu0
        %974 = vmatprep.mubr.f32.mxu0 0.0
        %975 = vmatmul.mubr.f32.gmra.mrb[0].mxu0 %v742
        %v976 = vpop.f32.mrb[0].mxu0
        %v977 = vadd.f32 0.0, %v976
        %v978 = vpop.f32.mrb[0].mxu0
        %979 = vmatprep.mubr.f32.mxu0 0.0
        %980 = vmatmul.mubr.f32.gmra.mrb[0].mxu0 %v743
        %v981 = vpop.f32.mrb[0].mxu0
        %v982 = vadd.f32 0.0, %v981
        %v983 = vpop.f32.mrb[0].mxu0
        %984 = vdwg.mxu0
        %v985 = vadd.f32 %v680, %v827
        %v986 = vadd.f32 %v681, %v832
        %v987 = vadd.f32 %v682, %v837
        %v988 = vadd.f32 %v683, %v842
        %v989 = vadd.f32 %v684, %v847
        %v990 = vadd.f32 %v685, %v852
        %v991 = vadd.f32 %v686, %v857
        %v992 = vadd.f32 %v687, %v862
        %v993 = vadd.f32 %v688, %v867
        %v994 = vadd.f32 %v689, %v872
        %v995 = vadd.f32 %v690, %v877
        %v996 = vadd.f32 %v691, %v882
        %v997 = vadd.f32 %v692, %v887
        %v998 = vadd.f32 %v693, %v892
        %v999 = vadd.f32 %v694, %v897
        %v1000 = vadd.f32 %v695, %v902
        %v1001 = vadd.f32 %v696, %v907
        %v1002 = vadd.f32 %v697, %v912
        %v1003 = vadd.f32 %v698, %v917
        %v1004 = vadd.f32 %v699, %v922
        %v1005 = vadd.f32 %v700, %v927
        %v1006 = vadd.f32 %v701, %v932
        %v1007 = vadd.f32 %v702, %v937
        %v1008 = vadd.f32 %v703, %v942
        %v1009 = vadd.f32 %v704, %v947
        %v1010 = vadd.f32 %v705, %v952
        %v1011 = vadd.f32 %v706, %v957
        %v1012 = vadd.f32 %v707, %v962
        %v1013 = vadd.f32 %v708, %v967
        %v1014 = vadd.f32 %v709, %v972
        %v1015 = vadd.f32 %v710, %v977
        %v1016 = vadd.f32 %v711, %v982
        %v1017 = vld [vmem:[%s374 + $0x2] sm:$0xff]
        %v1018 = vld [vmem:[%s374 + $0xa] sm:$0xff]
        %v1019 = vld [vmem:[%s374 + $0x1a] sm:$0xff]
        %v1020 = vld [vmem:[%s374 + $0x22] sm:$0xff]
        %v1021 = vld [vmem:[%s374 + $0x32] sm:$0xff]
        %v1022 = vld [vmem:[%s374 + $0x3a] sm:$0xff]
        %v1023 = vld [vmem:[%s374 + $0x4a] sm:$0xff]
        %v1024 = vld [vmem:[%s374 + $0x52] sm:$0xff]
        %v1025 = vld [vmem:[%s374 + $0x62] sm:$0xff]
        %v1026 = vld [vmem:[%s374 + $0x6a] sm:$0xff]
        %v1027 = vld [vmem:[%s374 + $0x7a] sm:$0xff]
        %v1028 = vld [vmem:[%s374 + $0x82] sm:$0xff]
        %v1029 = vld [vmem:[%s374 + $0x92] sm:$0xff]
        %v1030 = vld [vmem:[%s374 + $0x9a] sm:$0xff]
        %v1031 = vld [vmem:[%s374 + $0xaa] sm:$0xff]
        %v1032 = vld [vmem:[%s374 + $0xb2] sm:$0xff]
        %v1033 = vld [vmem:[%s374 + $0xc2] sm:$0xff]
        %v1034 = vld [vmem:[%s374 + $0xca] sm:$0xff]
        %v1035 = vld [vmem:[%s374 + $0xda] sm:$0xff]
        %v1036 = vld [vmem:[%s374 + $0xe2] sm:$0xff]
        %v1037 = vld [vmem:[%s374 + $0xf2] sm:$0xff]
        %v1038 = vld [vmem:[%s374 + $0xfa] sm:$0xff]
        %v1039 = vld [vmem:[%s374 + $0x10a] sm:$0xff]
        %v1040 = vld [vmem:[%s374 + $0x112] sm:$0xff]
        %v1041 = vld [vmem:[%s374 + $0x122] sm:$0xff]
        %v1042 = vld [vmem:[%s374 + $0x12a] sm:$0xff]
        %v1043 = vld [vmem:[%s374 + $0x13a] sm:$0xff]
        %v1044 = vld [vmem:[%s374 + $0x142] sm:$0xff]
        %v1045 = vld [vmem:[%s374 + $0x152] sm:$0xff]
        %v1046 = vld [vmem:[%s374 + $0x15a] sm:$0xff]
        %v1047 = vld [vmem:[%s374 + $0x16a] sm:$0xff]
        %v1048 = vld [vmem:[%s374 + $0x172] sm:$0xff]
        %v1049 = vld [vmem:[%s1 + $0x100] sm:$0xff]
        %v1050 = vld [vmem:[%s1 + $0x108] sm:$0xff]
        %v1051 = vld [vmem:[%s1 + $0x110] sm:$0xff]
        %v1052 = vld [vmem:[%s1 + $0x118] sm:$0xff]
        %v1053 = vld [vmem:[%s1 + $0x120] sm:$0xff]
        %v1054 = vld [vmem:[%s1 + $0x128] sm:$0xff]
        %v1055 = vld [vmem:[%s1 + $0x130] sm:$0xff]
        %v1056 = vld [vmem:[%s1 + $0x138] sm:$0xff]
        %v1057 = vld [vmem:[%s1 + $0x140] sm:$0xff]
        %v1058 = vld [vmem:[%s1 + $0x148] sm:$0xff]
        %v1059 = vld [vmem:[%s1 + $0x150] sm:$0xff]
        %v1060 = vld [vmem:[%s1 + $0x158] sm:$0xff]
        %v1061 = vld [vmem:[%s1 + $0x160] sm:$0xff]
        %v1062 = vld [vmem:[%s1 + $0x168] sm:$0xff]
        %v1063 = vld [vmem:[%s1 + $0x170] sm:$0xff]
        %v1064 = vld [vmem:[%s1 + $0x178] sm:$0xff]
        %1065 = vmatprep.subr.mxu0 0.0
        %1066 = vmatpush1.msra.mxu0 %v1049
        %1067 = vmatprep.subr.mxu0 0.0
        %1068 = vmatpush1.msra.mxu0 %v1050
        %1069 = vmatprep.subr.mxu0 0.0
        %1070 = vmatpush1.msra.mxu0 %v1051
        %1071 = vmatprep.subr.mxu0 0.0
        %1072 = vmatpush1.msra.mxu0 %v1052
        %1073 = vmatprep.subr.mxu0 0.0
        %1074 = vmatpush1.msra.mxu0 %v1053
        %1075 = vmatprep.subr.mxu0 0.0
        %1076 = vmatpush1.msra.mxu0 %v1054
        %1077 = vmatprep.subr.mxu0 0.0
        %1078 = vmatpush1.msra.mxu0 %v1055
        %1079 = vmatprep.subr.mxu0 0.0
        %1080 = vmatpush1.msra.mxu0 %v1056
        %1081 = vmatprep.subr.mxu0 0.0
        %1082 = vmatpush1.msra.mxu0 %v1057
        %1083 = vmatprep.subr.mxu0 0.0
        %1084 = vmatpush1.msra.mxu0 %v1058
        %1085 = vmatprep.subr.mxu0 0.0
        %1086 = vmatpush1.msra.mxu0 %v1059
        %1087 = vmatprep.subr.mxu0 0.0
        %1088 = vmatpush1.msra.mxu0 %v1060
        %1089 = vmatprep.subr.mxu0 0.0
        %1090 = vmatpush1.msra.mxu0 %v1061
        %1091 = vmatprep.subr.mxu0 0.0
        %1092 = vmatpush1.msra.mxu0 %v1062
        %1093 = vmatprep.subr.mxu0 0.0
        %1094 = vmatpush1.msra.mxu0 %v1063
        %1095 = vmatprep.subr.mxu0 0.0
        %1096 = vmatpush1.msra.mxu0 %v1064
        %1097 = vmatprep.subr.mxu0 0.0
        %1098 = vmatpush1.msra.mxu0 0.0
        %1099 = vmatprep.subr.mxu0 0.0
        %1100 = vmatpush1.msra.mxu0 0.0
        %1101 = vmatprep.subr.mxu0 0.0
        %1102 = vmatpush1.msra.mxu0 0.0
        %1103 = vmatprep.subr.mxu0 0.0
        %1104 = vmatpush1.msra.mxu0 0.0
        %1105 = vmatprep.subr.mxu0 0.0
        %1106 = vmatpush1.msra.mxu0 0.0
        %1107 = vmatprep.subr.mxu0 0.0
        %1108 = vmatpush1.msra.mxu0 0.0
        %1109 = vmatprep.subr.mxu0 0.0
        %1110 = vmatpush1.msra.mxu0 0.0
        %1111 = vmatprep.subr.mxu0 0.0
        %1112 = vmatpush1.msra.mxu0 0.0
        %1113 = vmatprep.subr.mxu0 0.0
        %1114 = vmatpush1.msra.mxu0 0.0
        %1115 = vmatprep.subr.mxu0 0.0
        %1116 = vmatpush1.msra.mxu0 0.0
        %1117 = vmatprep.subr.mxu0 0.0
        %1118 = vmatpush1.msra.mxu0 0.0
        %1119 = vmatprep.subr.mxu0 0.0
        %1120 = vmatpush1.msra.mxu0 0.0
        %1121 = vmatprep.subr.mxu0 0.0
        %1122 = vmatpush1.msra.mxu0 0.0
        %1123 = vmatprep.subr.mxu0 0.0
        %1124 = vmatpush1.msra.mxu0 0.0
        %1125 = vmatprep.subr.mxu0 0.0
        %1126 = vmatpush1.msra.mxu0 0.0
        %1127 = vmatprep.subr.mxu0 0.0
        %1128 = vmatpush1.msra.mxu0 0.0
        %1129 = vmatprep.mubr.f32.mxu0 0.0
        %1130 = vmatmul.mubr.f32.gmra.mrb[0].mxu0 %v1017
        %v1131 = vpop.f32.mrb[0].mxu0
        %v1132 = vadd.f32 0.0, %v1131
        %v1133 = vpop.f32.mrb[0].mxu0
        %1134 = vmatprep.mubr.f32.mxu0 0.0
        %1135 = vmatmul.mubr.f32.gmra.mrb[0].mxu0 %v1018
        %v1136 = vpop.f32.mrb[0].mxu0
        %v1137 = vadd.f32 0.0, %v1136
        %v1138 = vpop.f32.mrb[0].mxu0
        %1139 = vmatprep.mubr.f32.mxu0 0.0
        %1140 = vmatmul.mubr.f32.gmra.mrb[0].mxu0 %v1019
        %v1141 = vpop.f32.mrb[0].mxu0
        %v1142 = vadd.f32 0.0, %v1141
        %v1143 = vpop.f32.mrb[0].mxu0
        %1144 = vmatprep.mubr.f32.mxu0 0.0
        %1145 = vmatmul.mubr.f32.gmra.mrb[0].mxu0 %v1020
        %v1146 = vpop.f32.mrb[0].mxu0
        %v1147 = vadd.f32 0.0, %v1146
        %v1148 = vpop.f32.mrb[0].mxu0
        %1149 = vmatprep.mubr.f32.mxu0 0.0
        %1150 = vmatmul.mubr.f32.gmra.mrb[0].mxu0 %v1021
        %v1151 = vpop.f32.mrb[0].mxu0
        %v1152 = vadd.f32 0.0, %v1151
        %v1153 = vpop.f32.mrb[0].mxu0
        %1154 = vmatprep.mubr.f32.mxu0 0.0
        %1155 = vmatmul.mubr.f32.gmra.mrb[0].mxu0 %v1022
        %v1156 = vpop.f32.mrb[0].mxu0
        %v1157 = vadd.f32 0.0, %v1156
        %v1158 = vpop.f32.mrb[0].mxu0
        %1159 = vmatprep.mubr.f32.mxu0 0.0
        %1160 = vmatmul.mubr.f32.gmra.mrb[0].mxu0 %v1023
        %v1161 = vpop.f32.mrb[0].mxu0
        %v1162 = vadd.f32 0.0, %v1161
        %v1163 = vpop.f32.mrb[0].mxu0
        %1164 = vmatprep.mubr.f32.mxu0 0.0
        %1165 = vmatmul.mubr.f32.gmra.mrb[0].mxu0 %v1024
        %v1166 = vpop.f32.mrb[0].mxu0
        %v1167 = vadd.f32 0.0, %v1166
        %v1168 = vpop.f32.mrb[0].mxu0
        %1169 = vmatprep.mubr.f32.mxu0 0.0
        %1170 = vmatmul.mubr.f32.gmra.mrb[0].mxu0 %v1025
        %v1171 = vpop.f32.mrb[0].mxu0
        %v1172 = vadd.f32 0.0, %v1171
        %v1173 = vpop.f32.mrb[0].mxu0
        %1174 = vmatprep.mubr.f32.mxu0 0.0
        %1175 = vmatmul.mubr.f32.gmra.mrb[0].mxu0 %v1026
        %v1176 = vpop.f32.mrb[0].mxu0
        %v1177 = vadd.f32 0.0, %v1176
        %v1178 = vpop.f32.mrb[0].mxu0
        %1179 = vmatprep.mubr.f32.mxu0 0.0
        %1180 = vmatmul.mubr.f32.gmra.mrb[0].mxu0 %v1027
        %v1181 = vpop.f32.mrb[0].mxu0
        %v1182 = vadd.f32 0.0, %v1181
        %v1183 = vpop.f32.mrb[0].mxu0
        %1184 = vmatprep.mubr.f32.mxu0 0.0
        %1185 = vmatmul.mubr.f32.gmra.mrb[0].mxu0 %v1028
        %v1186 = vpop.f32.mrb[0].mxu0
        %v1187 = vadd.f32 0.0, %v1186
        %v1188 = vpop.f32.mrb[0].mxu0
        %1189 = vmatprep.mubr.f32.mxu0 0.0
        %1190 = vmatmul.mubr.f32.gmra.mrb[0].mxu0 %v1029
        %v1191 = vpop.f32.mrb[0].mxu0
        %v1192 = vadd.f32 0.0, %v1191
        %v1193 = vpop.f32.mrb[0].mxu0
        %1194 = vmatprep.mubr.f32.mxu0 0.0
        %1195 = vmatmul.mubr.f32.gmra.mrb[0].mxu0 %v1030
        %v1196 = vpop.f32.mrb[0].mxu0
        %v1197 = vadd.f32 0.0, %v1196
        %v1198 = vpop.f32.mrb[0].mxu0
        %1199 = vmatprep.mubr.f32.mxu0 0.0
        %1200 = vmatmul.mubr.f32.gmra.mrb[0].mxu0 %v1031
        %v1201 = vpop.f32.mrb[0].mxu0
        %v1202 = vadd.f32 0.0, %v1201
        %v1203 = vpop.f32.mrb[0].mxu0
        %1204 = vmatprep.mubr.f32.mxu0 0.0
        %1205 = vmatmul.mubr.f32.gmra.mrb[0].mxu0 %v1032
        %v1206 = vpop.f32.mrb[0].mxu0
        %v1207 = vadd.f32 0.0, %v1206
        %v1208 = vpop.f32.mrb[0].mxu0
        %1209 = vmatprep.mubr.f32.mxu0 0.0
        %1210 = vmatmul.mubr.f32.gmra.mrb[0].mxu0 %v1033
        %v1211 = vpop.f32.mrb[0].mxu0
        %v1212 = vadd.f32 0.0, %v1211
        %v1213 = vpop.f32.mrb[0].mxu0
        %1214 = vmatprep.mubr.f32.mxu0 0.0
        %1215 = vmatmul.mubr.f32.gmra.mrb[0].mxu0 %v1034
        %v1216 = vpop.f32.mrb[0].mxu0
        %v1217 = vadd.f32 0.0, %v1216
        %v1218 = vpop.f32.mrb[0].mxu0
        %1219 = vmatprep.mubr.f32.mxu0 0.0
        %1220 = vmatmul.mubr.f32.gmra.mrb[0].mxu0 %v1035
        %v1221 = vpop.f32.mrb[0].mxu0
        %v1222 = vadd.f32 0.0, %v1221
        %v1223 = vpop.f32.mrb[0].mxu0
        %1224 = vmatprep.mubr.f32.mxu0 0.0
        %1225 = vmatmul.mubr.f32.gmra.mrb[0].mxu0 %v1036
        %v1226 = vpop.f32.mrb[0].mxu0
        %v1227 = vadd.f32 0.0, %v1226
        %v1228 = vpop.f32.mrb[0].mxu0
        %1229 = vmatprep.mubr.f32.mxu0 0.0
        %1230 = vmatmul.mubr.f32.gmra.mrb[0].mxu0 %v1037
        %v1231 = vpop.f32.mrb[0].mxu0
        %v1232 = vadd.f32 0.0, %v1231
        %v1233 = vpop.f32.mrb[0].mxu0
        %1234 = vmatprep.mubr.f32.mxu0 0.0
        %1235 = vmatmul.mubr.f32.gmra.mrb[0].mxu0 %v1038
        %v1236 = vpop.f32.mrb[0].mxu0
        %v1237 = vadd.f32 0.0, %v1236
        %v1238 = vpop.f32.mrb[0].mxu0
        %1239 = vmatprep.mubr.f32.mxu0 0.0
        %1240 = vmatmul.mubr.f32.gmra.mrb[0].mxu0 %v1039
        %v1241 = vpop.f32.mrb[0].mxu0
        %v1242 = vadd.f32 0.0, %v1241
        %v1243 = vpop.f32.mrb[0].mxu0
        %1244 = vmatprep.mubr.f32.mxu0 0.0
        %1245 = vmatmul.mubr.f32.gmra.mrb[0].mxu0 %v1040
        %v1246 = vpop.f32.mrb[0].mxu0
        %v1247 = vadd.f32 0.0, %v1246
        %v1248 = vpop.f32.mrb[0].mxu0
        %1249 = vmatprep.mubr.f32.mxu0 0.0
        %1250 = vmatmul.mubr.f32.gmra.mrb[0].mxu0 %v1041
        %v1251 = vpop.f32.mrb[0].mxu0
        %v1252 = vadd.f32 0.0, %v1251
        %v1253 = vpop.f32.mrb[0].mxu0
        %1254 = vmatprep.mubr.f32.mxu0 0.0
        %1255 = vmatmul.mubr.f32.gmra.mrb[0].mxu0 %v1042
        %v1256 = vpop.f32.mrb[0].mxu0
        %v1257 = vadd.f32 0.0, %v1256
        %v1258 = vpop.f32.mrb[0].mxu0
        %1259 = vmatprep.mubr.f32.mxu0 0.0
        %1260 = vmatmul.mubr.f32.gmra.mrb[0].mxu0 %v1043
        %v1261 = vpop.f32.mrb[0].mxu0
        %v1262 = vadd.f32 0.0, %v1261
        %v1263 = vpop.f32.mrb[0].mxu0
        %1264 = vmatprep.mubr.f32.mxu0 0.0
        %1265 = vmatmul.mubr.f32.gmra.mrb[0].mxu0 %v1044
        %v1266 = vpop.f32.mrb[0].mxu0
        %v1267 = vadd.f32 0.0, %v1266
        %v1268 = vpop.f32.mrb[0].mxu0
        %1269 = vmatprep.mubr.f32.mxu0 0.0
        %1270 = vmatmul.mubr.f32.gmra.mrb[0].mxu0 %v1045
        %v1271 = vpop.f32.mrb[0].mxu0
        %v1272 = vadd.f32 0.0, %v1271
        %v1273 = vpop.f32.mrb[0].mxu0
        %1274 = vmatprep.mubr.f32.mxu0 0.0
        %1275 = vmatmul.mubr.f32.gmra.mrb[0].mxu0 %v1046
        %v1276 = vpop.f32.mrb[0].mxu0
        %v1277 = vadd.f32 0.0, %v1276
        %v1278 = vpop.f32.mrb[0].mxu0
        %1279 = vmatprep.mubr.f32.mxu0 0.0
        %1280 = vmatmul.mubr.f32.gmra.mrb[0].mxu0 %v1047
        %v1281 = vpop.f32.mrb[0].mxu0
        %v1282 = vadd.f32 0.0, %v1281
        %v1283 = vpop.f32.mrb[0].mxu0
        %1284 = vmatprep.mubr.f32.mxu0 0.0
        %1285 = vmatmul.mubr.f32.gmra.mrb[0].mxu0 %v1048
        %v1286 = vpop.f32.mrb[0].mxu0
        %v1287 = vadd.f32 0.0, %v1286
        %v1288 = vpop.f32.mrb[0].mxu0
        %1289 = vdwg.mxu0
        %v1290 = vadd.f32 %v985, %v1132
        %v1291 = vadd.f32 %v986, %v1137
        %v1292 = vadd.f32 %v987, %v1142
        %v1293 = vadd.f32 %v988, %v1147
        %v1294 = vadd.f32 %v989, %v1152
        %v1295 = vadd.f32 %v990, %v1157
        %v1296 = vadd.f32 %v991, %v1162
        %v1297 = vadd.f32 %v992, %v1167
        %v1298 = vadd.f32 %v993, %v1172
        %v1299 = vadd.f32 %v994, %v1177
        %v1300 = vadd.f32 %v995, %v1182
        %v1301 = vadd.f32 %v996, %v1187
        %v1302 = vadd.f32 %v997, %v1192
        %v1303 = vadd.f32 %v998, %v1197
        %v1304 = vadd.f32 %v999, %v1202
        %v1305 = vadd.f32 %v1000, %v1207
        %v1306 = vadd.f32 %v1001, %v1212
        %v1307 = vadd.f32 %v1002, %v1217
        %v1308 = vadd.f32 %v1003, %v1222
        %v1309 = vadd.f32 %v1004, %v1227
        %v1310 = vadd.f32 %v1005, %v1232
        %v1311 = vadd.f32 %v1006, %v1237
        %v1312 = vadd.f32 %v1007, %v1242
        %v1313 = vadd.f32 %v1008, %v1247
        %v1314 = vadd.f32 %v1009, %v1252
        %v1315 = vadd.f32 %v1010, %v1257
        %v1316 = vadd.f32 %v1011, %v1262
        %v1317 = vadd.f32 %v1012, %v1267
        %v1318 = vadd.f32 %v1013, %v1272
        %v1319 = vadd.f32 %v1014, %v1277
        %v1320 = vadd.f32 %v1015, %v1282
        %v1321 = vadd.f32 %v1016, %v1287
        %s1322 = scalar_lea.vmem %s374, 24
        %v1323 = vld [vmem:[%s1322] sm:$0xff]
        %v1324 = vld [vmem:[%s1322 + $0x8] sm:$0xff]
        %v1325 = vld [vmem:[%s1322 + $0x18] sm:$0xff]
        %v1326 = vld [vmem:[%s1322 + $0x20] sm:$0xff]
        %v1327 = vld [vmem:[%s1322 + $0x30] sm:$0xff]
        %v1328 = vld [vmem:[%s1322 + $0x38] sm:$0xff]
        %v1329 = vld [vmem:[%s1322 + $0x48] sm:$0xff]
        %v1330 = vld [vmem:[%s1322 + $0x50] sm:$0xff]
        %v1331 = vld [vmem:[%s1322 + $0x60] sm:$0xff]
        %v1332 = vld [vmem:[%s1322 + $0x68] sm:$0xff]
        %v1333 = vld [vmem:[%s1322 + $0x78] sm:$0xff]
        %v1334 = vld [vmem:[%s1322 + $0x80] sm:$0xff]
        %v1335 = vld [vmem:[%s1322 + $0x90] sm:$0xff]
        %v1336 = vld [vmem:[%s1322 + $0x98] sm:$0xff]
        %v1337 = vld [vmem:[%s1322 + $0xa8] sm:$0xff]
        %v1338 = vld [vmem:[%s1322 + $0xb0] sm:$0xff]
        %v1339 = vld [vmem:[%s1322 + $0xc0] sm:$0xff]
        %v1340 = vld [vmem:[%s1322 + $0xc8] sm:$0xff]
        %v1341 = vld [vmem:[%s1322 + $0xd8] sm:$0xff]
        %v1342 = vld [vmem:[%s1322 + $0xe0] sm:$0xff]
        %v1343 = vld [vmem:[%s1322 + $0xf0] sm:$0xff]
        %v1344 = vld [vmem:[%s1322 + $0xf8] sm:$0xff]
        %v1345 = vld [vmem:[%s1322 + $0x108] sm:$0xff]
        %v1346 = vld [vmem:[%s1322 + $0x110] sm:$0xff]
        %v1347 = vld [vmem:[%s1322 + $0x120] sm:$0xff]
        %v1348 = vld [vmem:[%s1322 + $0x128] sm:$0xff]
        %v1349 = vld [vmem:[%s1322 + $0x138] sm:$0xff]
        %v1350 = vld [vmem:[%s1322 + $0x140] sm:$0xff]
        %v1351 = vld [vmem:[%s1322 + $0x150] sm:$0xff]
        %v1352 = vld [vmem:[%s1322 + $0x158] sm:$0xff]
        %v1353 = vld [vmem:[%s1322 + $0x168] sm:$0xff]
        %v1354 = vld [vmem:[%s1322 + $0x170] sm:$0xff]
        %v1355 = vld [vmem:[%s1 + $0x180] sm:$0xff]
        %v1356 = vld [vmem:[%s1 + $0x188] sm:$0xff]
        %v1357 = vld [vmem:[%s1 + $0x190] sm:$0xff]
        %v1358 = vld [vmem:[%s1 + $0x198] sm:$0xff]
        %v1359 = vld [vmem:[%s1 + $0x1a0] sm:$0xff]
        %v1360 = vld [vmem:[%s1 + $0x1a8] sm:$0xff]
        %v1361 = vld [vmem:[%s1 + $0x1b0] sm:$0xff]
        %v1362 = vld [vmem:[%s1 + $0x1b8] sm:$0xff]
        %v1363 = vld [vmem:[%s1 + $0x1c0] sm:$0xff]
        %v1364 = vld [vmem:[%s1 + $0x1c8] sm:$0xff]
        %v1365 = vld [vmem:[%s1 + $0x1d0] sm:$0xff]
        %v1366 = vld [vmem:[%s1 + $0x1d8] sm:$0xff]
        %v1367 = vld [vmem:[%s1 + $0x1e0] sm:$0xff]
        %v1368 = vld [vmem:[%s1 + $0x1e8] sm:$0xff]
        %v1369 = vld [vmem:[%s1 + $0x1f0] sm:$0xff]
        %v1370 = vld [vmem:[%s1 + $0x1f8] sm:$0xff]
        %1371 = vmatprep.subr.mxu0 0.0
        %1372 = vmatpush1.msra.mxu0 %v1355
        %1373 = vmatprep.subr.mxu0 0.0
        %1374 = vmatpush1.msra.mxu0 %v1356
        %1375 = vmatprep.subr.mxu0 0.0
        %1376 = vmatpush1.msra.mxu0 %v1357
        %1377 = vmatprep.subr.mxu0 0.0
        %1378 = vmatpush1.msra.mxu0 %v1358
        %1379 = vmatprep.subr.mxu0 0.0
        %1380 = vmatpush1.msra.mxu0 %v1359
        %1381 = vmatprep.subr.mxu0 0.0
        %1382 = vmatpush1.msra.mxu0 %v1360
        %1383 = vmatprep.subr.mxu0 0.0
        %1384 = vmatpush1.msra.mxu0 %v1361
        %1385 = vmatprep.subr.mxu0 0.0
        %1386 = vmatpush1.msra.mxu0 %v1362
        %1387 = vmatprep.subr.mxu0 0.0
        %1388 = vmatpush1.msra.mxu0 %v1363
        %1389 = vmatprep.subr.mxu0 0.0
        %1390 = vmatpush1.msra.mxu0 %v1364
        %1391 = vmatprep.subr.mxu0 0.0
        %1392 = vmatpush1.msra.mxu0 %v1365
        %1393 = vmatprep.subr.mxu0 0.0
        %1394 = vmatpush1.msra.mxu0 %v1366
        %1395 = vmatprep.subr.mxu0 0.0
        %1396 = vmatpush1.msra.mxu0 %v1367
        %1397 = vmatprep.subr.mxu0 0.0
        %1398 = vmatpush1.msra.mxu0 %v1368
        %1399 = vmatprep.subr.mxu0 0.0
        %1400 = vmatpush1.msra.mxu0 %v1369
        %1401 = vmatprep.subr.mxu0 0.0
        %1402 = vmatpush1.msra.mxu0 %v1370
        %1403 = vmatprep.subr.mxu0 0.0
        %1404 = vmatpush1.msra.mxu0 0.0
        %1405 = vmatprep.subr.mxu0 0.0
        %1406 = vmatpush1.msra.mxu0 0.0
        %1407 = vmatprep.subr.mxu0 0.0
        %1408 = vmatpush1.msra.mxu0 0.0
        %1409 = vmatprep.subr.mxu0 0.0
        %1410 = vmatpush1.msra.mxu0 0.0
        %1411 = vmatprep.subr.mxu0 0.0
        %1412 = vmatpush1.msra.mxu0 0.0
        %1413 = vmatprep.subr.mxu0 0.0
        %1414 = vmatpush1.msra.mxu0 0.0
        %1415 = vmatprep.subr.mxu0 0.0
        %1416 = vmatpush1.msra.mxu0 0.0
        %1417 = vmatprep.subr.mxu0 0.0
        %1418 = vmatpush1.msra.mxu0 0.0
        %1419 = vmatprep.subr.mxu0 0.0
        %1420 = vmatpush1.msra.mxu0 0.0
        %1421 = vmatprep.subr.mxu0 0.0
        %1422 = vmatpush1.msra.mxu0 0.0
        %1423 = vmatprep.subr.mxu0 0.0
        %1424 = vmatpush1.msra.mxu0 0.0
        %1425 = vmatprep.subr.mxu0 0.0
        %1426 = vmatpush1.msra.mxu0 0.0
        %1427 = vmatprep.subr.mxu0 0.0
        %1428 = vmatpush1.msra.mxu0 0.0
        %1429 = vmatprep.subr.mxu0 0.0
        %1430 = vmatpush1.msra.mxu0 0.0
        %1431 = vmatprep.subr.mxu0 0.0
        %1432 = vmatpush1.msra.mxu0 0.0
        %1433 = vmatprep.subr.mxu0 0.0
        %1434 = vmatpush1.msra.mxu0 0.0
        %1435 = vmatprep.mubr.f32.mxu0 0.0
        %1436 = vmatmul.mubr.f32.gmra.mrb[0].mxu0 %v1323
        %v1437 = vpop.f32.mrb[0].mxu0
        %v1438 = vadd.f32 0.0, %v1437
        %v1439 = vpop.f32.mrb[0].mxu0
        %1440 = vmatprep.mubr.f32.mxu0 0.0
        %1441 = vmatmul.mubr.f32.gmra.mrb[0].mxu0 %v1324
        %v1442 = vpop.f32.mrb[0].mxu0
        %v1443 = vadd.f32 0.0, %v1442
        %v1444 = vpop.f32.mrb[0].mxu0
        %1445 = vmatprep.mubr.f32.mxu0 0.0
        %1446 = vmatmul.mubr.f32.gmra.mrb[0].mxu0 %v1325
        %v1447 = vpop.f32.mrb[0].mxu0
        %v1448 = vadd.f32 0.0, %v1447
        %v1449 = vpop.f32.mrb[0].mxu0
        %1450 = vmatprep.mubr.f32.mxu0 0.0
        %1451 = vmatmul.mubr.f32.gmra.mrb[0].mxu0 %v1326
        %v1452 = vpop.f32.mrb[0].mxu0
        %v1453 = vadd.f32 0.0, %v1452
        %v1454 = vpop.f32.mrb[0].mxu0
        %1455 = vmatprep.mubr.f32.mxu0 0.0
        %1456 = vmatmul.mubr.f32.gmra.mrb[0].mxu0 %v1327
        %v1457 = vpop.f32.mrb[0].mxu0
        %v1458 = vadd.f32 0.0, %v1457
        %v1459 = vpop.f32.mrb[0].mxu0
        %1460 = vmatprep.mubr.f32.mxu0 0.0
        %1461 = vmatmul.mubr.f32.gmra.mrb[0].mxu0 %v1328
        %v1462 = vpop.f32.mrb[0].mxu0
        %v1463 = vadd.f32 0.0, %v1462
        %v1464 = vpop.f32.mrb[0].mxu0
        %1465 = vmatprep.mubr.f32.mxu0 0.0
        %1466 = vmatmul.mubr.f32.gmra.mrb[0].mxu0 %v1329
        %v1467 = vpop.f32.mrb[0].mxu0
        %v1468 = vadd.f32 0.0, %v1467
        %v1469 = vpop.f32.mrb[0].mxu0
        %1470 = vmatprep.mubr.f32.mxu0 0.0
        %1471 = vmatmul.mubr.f32.gmra.mrb[0].mxu0 %v1330
        %v1472 = vpop.f32.mrb[0].mxu0
        %v1473 = vadd.f32 0.0, %v1472
        %v1474 = vpop.f32.mrb[0].mxu0
        %1475 = vmatprep.mubr.f32.mxu0 0.0
        %1476 = vmatmul.mubr.f32.gmra.mrb[0].mxu0 %v1331
        %v1477 = vpop.f32.mrb[0].mxu0
        %v1478 = vadd.f32 0.0, %v1477
        %v1479 = vpop.f32.mrb[0].mxu0
        %1480 = vmatprep.mubr.f32.mxu0 0.0
        %1481 = vmatmul.mubr.f32.gmra.mrb[0].mxu0 %v1332
        %v1482 = vpop.f32.mrb[0].mxu0
        %v1483 = vadd.f32 0.0, %v1482
        %v1484 = vpop.f32.mrb[0].mxu0
        %1485 = vmatprep.mubr.f32.mxu0 0.0
        %1486 = vmatmul.mubr.f32.gmra.mrb[0].mxu0 %v1333
        %v1487 = vpop.f32.mrb[0].mxu0
        %v1488 = vadd.f32 0.0, %v1487
        %v1489 = vpop.f32.mrb[0].mxu0
        %1490 = vmatprep.mubr.f32.mxu0 0.0
        %1491 = vmatmul.mubr.f32.gmra.mrb[0].mxu0 %v1334
        %v1492 = vpop.f32.mrb[0].mxu0
        %v1493 = vadd.f32 0.0, %v1492
        %v1494 = vpop.f32.mrb[0].mxu0
        %1495 = vmatprep.mubr.f32.mxu0 0.0
        %1496 = vmatmul.mubr.f32.gmra.mrb[0].mxu0 %v1335
        %v1497 = vpop.f32.mrb[0].mxu0
        %v1498 = vadd.f32 0.0, %v1497
        %v1499 = vpop.f32.mrb[0].mxu0
        %1500 = vmatprep.mubr.f32.mxu0 0.0
        %1501 = vmatmul.mubr.f32.gmra.mrb[0].mxu0 %v1336
        %v1502 = vpop.f32.mrb[0].mxu0
        %v1503 = vadd.f32 0.0, %v1502
        %v1504 = vpop.f32.mrb[0].mxu0
        %1505 = vmatprep.mubr.f32.mxu0 0.0
        %1506 = vmatmul.mubr.f32.gmra.mrb[0].mxu0 %v1337
        %v1507 = vpop.f32.mrb[0].mxu0
        %v1508 = vadd.f32 0.0, %v1507
        %v1509 = vpop.f32.mrb[0].mxu0
        %1510 = vmatprep.mubr.f32.mxu0 0.0
        %1511 = vmatmul.mubr.f32.gmra.mrb[0].mxu0 %v1338
        %v1512 = vpop.f32.mrb[0].mxu0
        %v1513 = vadd.f32 0.0, %v1512
        %v1514 = vpop.f32.mrb[0].mxu0
        %1515 = vmatprep.mubr.f32.mxu0 0.0
        %1516 = vmatmul.mubr.f32.gmra.mrb[0].mxu0 %v1339
        %v1517 = vpop.f32.mrb[0].mxu0
        %v1518 = vadd.f32 0.0, %v1517
        %v1519 = vpop.f32.mrb[0].mxu0
        %1520 = vmatprep.mubr.f32.mxu0 0.0
        %1521 = vmatmul.mubr.f32.gmra.mrb[0].mxu0 %v1340
        %v1522 = vpop.f32.mrb[0].mxu0
        %v1523 = vadd.f32 0.0, %v1522
        %v1524 = vpop.f32.mrb[0].mxu0
        %1525 = vmatprep.mubr.f32.mxu0 0.0
        %1526 = vmatmul.mubr.f32.gmra.mrb[0].mxu0 %v1341
        %v1527 = vpop.f32.mrb[0].mxu0
        %v1528 = vadd.f32 0.0, %v1527
        %v1529 = vpop.f32.mrb[0].mxu0
        %1530 = vmatprep.mubr.f32.mxu0 0.0
        %1531 = vmatmul.mubr.f32.gmra.mrb[0].mxu0 %v1342
        %v1532 = vpop.f32.mrb[0].mxu0
        %v1533 = vadd.f32 0.0, %v1532
        %v1534 = vpop.f32.mrb[0].mxu0
        %1535 = vmatprep.mubr.f32.mxu0 0.0
        %1536 = vmatmul.mubr.f32.gmra.mrb[0].mxu0 %v1343
        %v1537 = vpop.f32.mrb[0].mxu0
        %v1538 = vadd.f32 0.0, %v1537
        %v1539 = vpop.f32.mrb[0].mxu0
        %1540 = vmatprep.mubr.f32.mxu0 0.0
        %1541 = vmatmul.mubr.f32.gmra.mrb[0].mxu0 %v1344
        %v1542 = vpop.f32.mrb[0].mxu0
        %v1543 = vadd.f32 0.0, %v1542
        %v1544 = vpop.f32.mrb[0].mxu0
        %1545 = vmatprep.mubr.f32.mxu0 0.0
        %1546 = vmatmul.mubr.f32.gmra.mrb[0].mxu0 %v1345
        %v1547 = vpop.f32.mrb[0].mxu0
        %v1548 = vadd.f32 0.0, %v1547
        %v1549 = vpop.f32.mrb[0].mxu0
        %1550 = vmatprep.mubr.f32.mxu0 0.0
        %1551 = vmatmul.mubr.f32.gmra.mrb[0].mxu0 %v1346
        %v1552 = vpop.f32.mrb[0].mxu0
        %v1553 = vadd.f32 0.0, %v1552
        %v1554 = vpop.f32.mrb[0].mxu0
        %1555 = vmatprep.mubr.f32.mxu0 0.0
        %1556 = vmatmul.mubr.f32.gmra.mrb[0].mxu0 %v1347
        %v1557 = vpop.f32.mrb[0].mxu0
        %v1558 = vadd.f32 0.0, %v1557
        %v1559 = vpop.f32.mrb[0].mxu0
        %1560 = vmatprep.mubr.f32.mxu0 0.0
        %1561 = vmatmul.mubr.f32.gmra.mrb[0].mxu0 %v1348
        %v1562 = vpop.f32.mrb[0].mxu0
        %v1563 = vadd.f32 0.0, %v1562
        %v1564 = vpop.f32.mrb[0].mxu0
        %1565 = vmatprep.mubr.f32.mxu0 0.0
        %1566 = vmatmul.mubr.f32.gmra.mrb[0].mxu0 %v1349
        %v1567 = vpop.f32.mrb[0].mxu0
        %v1568 = vadd.f32 0.0, %v1567
        %v1569 = vpop.f32.mrb[0].mxu0
        %1570 = vmatprep.mubr.f32.mxu0 0.0
        %1571 = vmatmul.mubr.f32.gmra.mrb[0].mxu0 %v1350
        %v1572 = vpop.f32.mrb[0].mxu0
        %v1573 = vadd.f32 0.0, %v1572
        %v1574 = vpop.f32.mrb[0].mxu0
        %1575 = vmatprep.mubr.f32.mxu0 0.0
        %1576 = vmatmul.mubr.f32.gmra.mrb[0].mxu0 %v1351
        %v1577 = vpop.f32.mrb[0].mxu0
        %v1578 = vadd.f32 0.0, %v1577
        %v1579 = vpop.f32.mrb[0].mxu0
        %1580 = vmatprep.mubr.f32.mxu0 0.0
        %1581 = vmatmul.mubr.f32.gmra.mrb[0].mxu0 %v1352
        %v1582 = vpop.f32.mrb[0].mxu0
        %v1583 = vadd.f32 0.0, %v1582
        %v1584 = vpop.f32.mrb[0].mxu0
        %1585 = vmatprep.mubr.f32.mxu0 0.0
        %1586 = vmatmul.mubr.f32.gmra.mrb[0].mxu0 %v1353
        %v1587 = vpop.f32.mrb[0].mxu0
        %v1588 = vadd.f32 0.0, %v1587
        %v1589 = vpop.f32.mrb[0].mxu0
        %1590 = vmatprep.mubr.f32.mxu0 0.0
        %1591 = vmatmul.mubr.f32.gmra.mrb[0].mxu0 %v1354
        %v1592 = vpop.f32.mrb[0].mxu0
        %v1593 = vadd.f32 0.0, %v1592
        %v1594 = vpop.f32.mrb[0].mxu0
        %1595 = vdwg.mxu0
        %v1596 = vadd.f32 %v1290, %v1438
        %v1597 = vadd.f32 %v1291, %v1443
        %v1598 = vadd.f32 %v1292, %v1448
        %v1599 = vadd.f32 %v1293, %v1453
        %v1600 = vadd.f32 %v1294, %v1458
        %v1601 = vadd.f32 %v1295, %v1463
        %v1602 = vadd.f32 %v1296, %v1468
        %v1603 = vadd.f32 %v1297, %v1473
        %v1604 = vadd.f32 %v1298, %v1478
        %v1605 = vadd.f32 %v1299, %v1483
        %v1606 = vadd.f32 %v1300, %v1488
        %v1607 = vadd.f32 %v1301, %v1493
        %v1608 = vadd.f32 %v1302, %v1498
        %v1609 = vadd.f32 %v1303, %v1503
        %v1610 = vadd.f32 %v1304, %v1508
        %v1611 = vadd.f32 %v1305, %v1513
        %v1612 = vadd.f32 %v1306, %v1518
        %v1613 = vadd.f32 %v1307, %v1523
        %v1614 = vadd.f32 %v1308, %v1528
        %v1615 = vadd.f32 %v1309, %v1533
        %v1616 = vadd.f32 %v1310, %v1538
        %v1617 = vadd.f32 %v1311, %v1543
        %v1618 = vadd.f32 %v1312, %v1548
        %v1619 = vadd.f32 %v1313, %v1553
        %v1620 = vadd.f32 %v1314, %v1558
        %v1621 = vadd.f32 %v1315, %v1563
        %v1622 = vadd.f32 %v1316, %v1568
        %v1623 = vadd.f32 %v1317, %v1573
        %v1624 = vadd.f32 %v1318, %v1578
        %v1625 = vadd.f32 %v1319, %v1583
        %v1626 = vadd.f32 %v1320, %v1588
        %v1627 = vadd.f32 %v1321, %v1593
        %v1628 = vld [vmem:[%s1322 + $0x1] sm:$0xff]
        %v1629 = vld [vmem:[%s1322 + $0x9] sm:$0xff]
        %v1630 = vld [vmem:[%s1322 + $0x19] sm:$0xff]
        %v1631 = vld [vmem:[%s1322 + $0x21] sm:$0xff]
        %v1632 = vld [vmem:[%s1322 + $0x31] sm:$0xff]
        %v1633 = vld [vmem:[%s1322 + $0x39] sm:$0xff]
        %v1634 = vld [vmem:[%s1322 + $0x49] sm:$0xff]
        %v1635 = vld [vmem:[%s1322 + $0x51] sm:$0xff]
        %v1636 = vld [vmem:[%s1322 + $0x61] sm:$0xff]
        %v1637 = vld [vmem:[%s1322 + $0x69] sm:$0xff]
        %v1638 = vld [vmem:[%s1322 + $0x79] sm:$0xff]
        %v1639 = vld [vmem:[%s1322 + $0x81] sm:$0xff]
        %v1640 = vld [vmem:[%s1322 + $0x91] sm:$0xff]
        %v1641 = vld [vmem:[%s1322 + $0x99] sm:$0xff]
        %v1642 = vld [vmem:[%s1322 + $0xa9] sm:$0xff]
        %v1643 = vld [vmem:[%s1322 + $0xb1] sm:$0xff]
        %v1644 = vld [vmem:[%s1322 + $0xc1] sm:$0xff]
        %v1645 = vld [vmem:[%s1322 + $0xc9] sm:$0xff]
        %v1646 = vld [vmem:[%s1322 + $0xd9] sm:$0xff]
        %v1647 = vld [vmem:[%s1322 + $0xe1] sm:$0xff]
        %v1648 = vld [vmem:[%s1322 + $0xf1] sm:$0xff]
        %v1649 = vld [vmem:[%s1322 + $0xf9] sm:$0xff]
        %v1650 = vld [vmem:[%s1322 + $0x109] sm:$0xff]
        %v1651 = vld [vmem:[%s1322 + $0x111] sm:$0xff]
        %v1652 = vld [vmem:[%s1322 + $0x121] sm:$0xff]
        %v1653 = vld [vmem:[%s1322 + $0x129] sm:$0xff]
        %v1654 = vld [vmem:[%s1322 + $0x139] sm:$0xff]
        %v1655 = vld [vmem:[%s1322 + $0x141] sm:$0xff]
        %v1656 = vld [vmem:[%s1322 + $0x151] sm:$0xff]
        %v1657 = vld [vmem:[%s1322 + $0x159] sm:$0xff]
        %v1658 = vld [vmem:[%s1322 + $0x169] sm:$0xff]
        %v1659 = vld [vmem:[%s1322 + $0x171] sm:$0xff]
        %v1660 = vld [vmem:[%s1 + $0x200] sm:$0xff]
        %v1661 = vld [vmem:[%s1 + $0x208] sm:$0xff]
        %v1662 = vld [vmem:[%s1 + $0x210] sm:$0xff]
        %v1663 = vld [vmem:[%s1 + $0x218] sm:$0xff]
        %v1664 = vld [vmem:[%s1 + $0x220] sm:$0xff]
        %v1665 = vld [vmem:[%s1 + $0x228] sm:$0xff]
        %v1666 = vld [vmem:[%s1 + $0x230] sm:$0xff]
        %v1667 = vld [vmem:[%s1 + $0x238] sm:$0xff]
        %v1668 = vld [vmem:[%s1 + $0x240] sm:$0xff]
        %v1669 = vld [vmem:[%s1 + $0x248] sm:$0xff]
        %v1670 = vld [vmem:[%s1 + $0x250] sm:$0xff]
        %v1671 = vld [vmem:[%s1 + $0x258] sm:$0xff]
        %v1672 = vld [vmem:[%s1 + $0x260] sm:$0xff]
        %v1673 = vld [vmem:[%s1 + $0x268] sm:$0xff]
        %v1674 = vld [vmem:[%s1 + $0x270] sm:$0xff]
        %v1675 = vld [vmem:[%s1 + $0x278] sm:$0xff]
        %1676 = vmatprep.subr.mxu0 0.0
        %1677 = vmatpush1.msra.mxu0 %v1660
        %1678 = vmatprep.subr.mxu0 0.0
        %1679 = vmatpush1.msra.mxu0 %v1661
        %1680 = vmatprep.subr.mxu0 0.0
        %1681 = vmatpush1.msra.mxu0 %v1662
        %1682 = vmatprep.subr.mxu0 0.0
        %1683 = vmatpush1.msra.mxu0 %v1663
        %1684 = vmatprep.subr.mxu0 0.0
        %1685 = vmatpush1.msra.mxu0 %v1664
        %1686 = vmatprep.subr.mxu0 0.0
        %1687 = vmatpush1.msra.mxu0 %v1665
        %1688 = vmatprep.subr.mxu0 0.0
        %1689 = vmatpush1.msra.mxu0 %v1666
        %1690 = vmatprep.subr.mxu0 0.0
        %1691 = vmatpush1.msra.mxu0 %v1667
        %1692 = vmatprep.subr.mxu0 0.0
        %1693 = vmatpush1.msra.mxu0 %v1668
        %1694 = vmatprep.subr.mxu0 0.0
        %1695 = vmatpush1.msra.mxu0 %v1669
        %1696 = vmatprep.subr.mxu0 0.0
        %1697 = vmatpush1.msra.mxu0 %v1670
        %1698 = vmatprep.subr.mxu0 0.0
        %1699 = vmatpush1.msra.mxu0 %v1671
        %1700 = vmatprep.subr.mxu0 0.0
        %1701 = vmatpush1.msra.mxu0 %v1672
        %1702 = vmatprep.subr.mxu0 0.0
        %1703 = vmatpush1.msra.mxu0 %v1673
        %1704 = vmatprep.subr.mxu0 0.0
        %1705 = vmatpush1.msra.mxu0 %v1674
        %1706 = vmatprep.subr.mxu0 0.0
        %1707 = vmatpush1.msra.mxu0 %v1675
        %1708 = vmatprep.subr.mxu0 0.0
        %1709 = vmatpush1.msra.mxu0 0.0
        %1710 = vmatprep.subr.mxu0 0.0
        %1711 = vmatpush1.msra.mxu0 0.0
        %1712 = vmatprep.subr.mxu0 0.0
        %1713 = vmatpush1.msra.mxu0 0.0
        %1714 = vmatprep.subr.mxu0 0.0
        %1715 = vmatpush1.msra.mxu0 0.0
        %1716 = vmatprep.subr.mxu0 0.0
        %1717 = vmatpush1.msra.mxu0 0.0
        %1718 = vmatprep.subr.mxu0 0.0
        %1719 = vmatpush1.msra.mxu0 0.0
        %1720 = vmatprep.subr.mxu0 0.0
        %1721 = vmatpush1.msra.mxu0 0.0
        %1722 = vmatprep.subr.mxu0 0.0
        %1723 = vmatpush1.msra.mxu0 0.0
        %1724 = vmatprep.subr.mxu0 0.0
        %1725 = vmatpush1.msra.mxu0 0.0
        %1726 = vmatprep.subr.mxu0 0.0
        %1727 = vmatpush1.msra.mxu0 0.0
        %1728 = vmatprep.subr.mxu0 0.0
        %1729 = vmatpush1.msra.mxu0 0.0
        %1730 = vmatprep.subr.mxu0 0.0
        %1731 = vmatpush1.msra.mxu0 0.0
        %1732 = vmatprep.subr.mxu0 0.0
        %1733 = vmatpush1.msra.mxu0 0.0
        %1734 = vmatprep.subr.mxu0 0.0
        %1735 = vmatpush1.msra.mxu0 0.0
        %1736 = vmatprep.subr.mxu0 0.0
        %1737 = vmatpush1.msra.mxu0 0.0
        %1738 = vmatprep.subr.mxu0 0.0
        %1739 = vmatpush1.msra.mxu0 0.0
        %1740 = vmatprep.mubr.f32.mxu0 0.0
        %1741 = vmatmul.mubr.f32.gmra.mrb[0].mxu0 %v1628
        %v1742 = vpop.f32.mrb[0].mxu0
        %v1743 = vadd.f32 0.0, %v1742
        %v1744 = vpop.f32.mrb[0].mxu0
        %1745 = vmatprep.mubr.f32.mxu0 0.0
        %1746 = vmatmul.mubr.f32.gmra.mrb[0].mxu0 %v1629
        %v1747 = vpop.f32.mrb[0].mxu0
        %v1748 = vadd.f32 0.0, %v1747
        %v1749 = vpop.f32.mrb[0].mxu0
        %1750 = vmatprep.mubr.f32.mxu0 0.0
        %1751 = vmatmul.mubr.f32.gmra.mrb[0].mxu0 %v1630
        %v1752 = vpop.f32.mrb[0].mxu0
        %v1753 = vadd.f32 0.0, %v1752
        %v1754 = vpop.f32.mrb[0].mxu0
        %1755 = vmatprep.mubr.f32.mxu0 0.0
        %1756 = vmatmul.mubr.f32.gmra.mrb[0].mxu0 %v1631
        %v1757 = vpop.f32.mrb[0].mxu0
        %v1758 = vadd.f32 0.0, %v1757
        %v1759 = vpop.f32.mrb[0].mxu0
        %1760 = vmatprep.mubr.f32.mxu0 0.0
        %1761 = vmatmul.mubr.f32.gmra.mrb[0].mxu0 %v1632
        %v1762 = vpop.f32.mrb[0].mxu0
        %v1763 = vadd.f32 0.0, %v1762
        %v1764 = vpop.f32.mrb[0].mxu0
        %1765 = vmatprep.mubr.f32.mxu0 0.0
        %1766 = vmatmul.mubr.f32.gmra.mrb[0].mxu0 %v1633
        %v1767 = vpop.f32.mrb[0].mxu0
        %v1768 = vadd.f32 0.0, %v1767
        %v1769 = vpop.f32.mrb[0].mxu0
        %1770 = vmatprep.mubr.f32.mxu0 0.0
        %1771 = vmatmul.mubr.f32.gmra.mrb[0].mxu0 %v1634
        %v1772 = vpop.f32.mrb[0].mxu0
        %v1773 = vadd.f32 0.0, %v1772
        %v1774 = vpop.f32.mrb[0].mxu0
        %1775 = vmatprep.mubr.f32.mxu0 0.0
        %1776 = vmatmul.mubr.f32.gmra.mrb[0].mxu0 %v1635
        %v1777 = vpop.f32.mrb[0].mxu0
        %v1778 = vadd.f32 0.0, %v1777
        %v1779 = vpop.f32.mrb[0].mxu0
        %1780 = vmatprep.mubr.f32.mxu0 0.0
        %1781 = vmatmul.mubr.f32.gmra.mrb[0].mxu0 %v1636
        %v1782 = vpop.f32.mrb[0].mxu0
        %v1783 = vadd.f32 0.0, %v1782
        %v1784 = vpop.f32.mrb[0].mxu0
        %1785 = vmatprep.mubr.f32.mxu0 0.0
        %1786 = vmatmul.mubr.f32.gmra.mrb[0].mxu0 %v1637
        %v1787 = vpop.f32.mrb[0].mxu0
        %v1788 = vadd.f32 0.0, %v1787
        %v1789 = vpop.f32.mrb[0].mxu0
        %1790 = vmatprep.mubr.f32.mxu0 0.0
        %1791 = vmatmul.mubr.f32.gmra.mrb[0].mxu0 %v1638
        %v1792 = vpop.f32.mrb[0].mxu0
        %v1793 = vadd.f32 0.0, %v1792
        %v1794 = vpop.f32.mrb[0].mxu0
        %1795 = vmatprep.mubr.f32.mxu0 0.0
        %1796 = vmatmul.mubr.f32.gmra.mrb[0].mxu0 %v1639
        %v1797 = vpop.f32.mrb[0].mxu0
        %v1798 = vadd.f32 0.0, %v1797
        %v1799 = vpop.f32.mrb[0].mxu0
        %1800 = vmatprep.mubr.f32.mxu0 0.0
        %1801 = vmatmul.mubr.f32.gmra.mrb[0].mxu0 %v1640
        %v1802 = vpop.f32.mrb[0].mxu0
        %v1803 = vadd.f32 0.0, %v1802
        %v1804 = vpop.f32.mrb[0].mxu0
        %1805 = vmatprep.mubr.f32.mxu0 0.0
        %1806 = vmatmul.mubr.f32.gmra.mrb[0].mxu0 %v1641
        %v1807 = vpop.f32.mrb[0].mxu0
        %v1808 = vadd.f32 0.0, %v1807
        %v1809 = vpop.f32.mrb[0].mxu0
        %1810 = vmatprep.mubr.f32.mxu0 0.0
        %1811 = vmatmul.mubr.f32.gmra.mrb[0].mxu0 %v1642
        %v1812 = vpop.f32.mrb[0].mxu0
        %v1813 = vadd.f32 0.0, %v1812
        %v1814 = vpop.f32.mrb[0].mxu0
        %1815 = vmatprep.mubr.f32.mxu0 0.0
        %1816 = vmatmul.mubr.f32.gmra.mrb[0].mxu0 %v1643
        %v1817 = vpop.f32.mrb[0].mxu0
        %v1818 = vadd.f32 0.0, %v1817
        %v1819 = vpop.f32.mrb[0].mxu0
        %1820 = vmatprep.mubr.f32.mxu0 0.0
        %1821 = vmatmul.mubr.f32.gmra.mrb[0].mxu0 %v1644
        %v1822 = vpop.f32.mrb[0].mxu0
        %v1823 = vadd.f32 0.0, %v1822
        %v1824 = vpop.f32.mrb[0].mxu0
        %1825 = vmatprep.mubr.f32.mxu0 0.0
        %1826 = vmatmul.mubr.f32.gmra.mrb[0].mxu0 %v1645
        %v1827 = vpop.f32.mrb[0].mxu0
        %v1828 = vadd.f32 0.0, %v1827
        %v1829 = vpop.f32.mrb[0].mxu0
        %1830 = vmatprep.mubr.f32.mxu0 0.0
        %1831 = vmatmul.mubr.f32.gmra.mrb[0].mxu0 %v1646
        %v1832 = vpop.f32.mrb[0].mxu0
        %v1833 = vadd.f32 0.0, %v1832
        %v1834 = vpop.f32.mrb[0].mxu0
        %1835 = vmatprep.mubr.f32.mxu0 0.0
        %1836 = vmatmul.mubr.f32.gmra.mrb[0].mxu0 %v1647
        %v1837 = vpop.f32.mrb[0].mxu0
        %v1838 = vadd.f32 0.0, %v1837
        %v1839 = vpop.f32.mrb[0].mxu0
        %1840 = vmatprep.mubr.f32.mxu0 0.0
        %1841 = vmatmul.mubr.f32.gmra.mrb[0].mxu0 %v1648
        %v1842 = vpop.f32.mrb[0].mxu0
        %v1843 = vadd.f32 0.0, %v1842
        %v1844 = vpop.f32.mrb[0].mxu0
        %1845 = vmatprep.mubr.f32.mxu0 0.0
        %1846 = vmatmul.mubr.f32.gmra.mrb[0].mxu0 %v1649
        %v1847 = vpop.f32.mrb[0].mxu0
        %v1848 = vadd.f32 0.0, %v1847
        %v1849 = vpop.f32.mrb[0].mxu0
        %1850 = vmatprep.mubr.f32.mxu0 0.0
        %1851 = vmatmul.mubr.f32.gmra.mrb[0].mxu0 %v1650
        %v1852 = vpop.f32.mrb[0].mxu0
        %v1853 = vadd.f32 0.0, %v1852
        %v1854 = vpop.f32.mrb[0].mxu0
        %1855 = vmatprep.mubr.f32.mxu0 0.0
        %1856 = vmatmul.mubr.f32.gmra.mrb[0].mxu0 %v1651
        %v1857 = vpop.f32.mrb[0].mxu0
        %v1858 = vadd.f32 0.0, %v1857
        %v1859 = vpop.f32.mrb[0].mxu0
        %1860 = vmatprep.mubr.f32.mxu0 0.0
        %1861 = vmatmul.mubr.f32.gmra.mrb[0].mxu0 %v1652
        %v1862 = vpop.f32.mrb[0].mxu0
        %v1863 = vadd.f32 0.0, %v1862
        %v1864 = vpop.f32.mrb[0].mxu0
        %1865 = vmatprep.mubr.f32.mxu0 0.0
        %1866 = vmatmul.mubr.f32.gmra.mrb[0].mxu0 %v1653
        %v1867 = vpop.f32.mrb[0].mxu0
        %v1868 = vadd.f32 0.0, %v1867
        %v1869 = vpop.f32.mrb[0].mxu0
        %1870 = vmatprep.mubr.f32.mxu0 0.0
        %1871 = vmatmul.mubr.f32.gmra.mrb[0].mxu0 %v1654
        %v1872 = vpop.f32.mrb[0].mxu0
        %v1873 = vadd.f32 0.0, %v1872
        %v1874 = vpop.f32.mrb[0].mxu0
        %1875 = vmatprep.mubr.f32.mxu0 0.0
        %1876 = vmatmul.mubr.f32.gmra.mrb[0].mxu0 %v1655
        %v1877 = vpop.f32.mrb[0].mxu0
        %v1878 = vadd.f32 0.0, %v1877
        %v1879 = vpop.f32.mrb[0].mxu0
        %1880 = vmatprep.mubr.f32.mxu0 0.0
        %1881 = vmatmul.mubr.f32.gmra.mrb[0].mxu0 %v1656
        %v1882 = vpop.f32.mrb[0].mxu0
        %v1883 = vadd.f32 0.0, %v1882
        %v1884 = vpop.f32.mrb[0].mxu0
        %1885 = vmatprep.mubr.f32.mxu0 0.0
        %1886 = vmatmul.mubr.f32.gmra.mrb[0].mxu0 %v1657
        %v1887 = vpop.f32.mrb[0].mxu0
        %v1888 = vadd.f32 0.0, %v1887
        %v1889 = vpop.f32.mrb[0].mxu0
        %1890 = vmatprep.mubr.f32.mxu0 0.0
        %1891 = vmatmul.mubr.f32.gmra.mrb[0].mxu0 %v1658
        %v1892 = vpop.f32.mrb[0].mxu0
        %v1893 = vadd.f32 0.0, %v1892
        %v1894 = vpop.f32.mrb[0].mxu0
        %1895 = vmatprep.mubr.f32.mxu0 0.0
        %1896 = vmatmul.mubr.f32.gmra.mrb[0].mxu0 %v1659
        %v1897 = vpop.f32.mrb[0].mxu0
        %v1898 = vadd.f32 0.0, %v1897
        %v1899 = vpop.f32.mrb[0].mxu0
        %1900 = vdwg.mxu0
        %v1901 = vadd.f32 %v1596, %v1743
        %v1902 = vadd.f32 %v1597, %v1748
        %v1903 = vadd.f32 %v1598, %v1753
        %v1904 = vadd.f32 %v1599, %v1758
        %v1905 = vadd.f32 %v1600, %v1763
        %v1906 = vadd.f32 %v1601, %v1768
        %v1907 = vadd.f32 %v1602, %v1773
        %v1908 = vadd.f32 %v1603, %v1778
        %v1909 = vadd.f32 %v1604, %v1783
        %v1910 = vadd.f32 %v1605, %v1788
        %v1911 = vadd.f32 %v1606, %v1793
        %v1912 = vadd.f32 %v1607, %v1798
        %v1913 = vadd.f32 %v1608, %v1803
        %v1914 = vadd.f32 %v1609, %v1808
        %v1915 = vadd.f32 %v1610, %v1813
        %v1916 = vadd.f32 %v1611, %v1818
        %v1917 = vadd.f32 %v1612, %v1823
        %v1918 = vadd.f32 %v1613, %v1828
        %v1919 = vadd.f32 %v1614, %v1833
        %v1920 = vadd.f32 %v1615, %v1838
        %v1921 = vadd.f32 %v1616, %v1843
        %v1922 = vadd.f32 %v1617, %v1848
        %v1923 = vadd.f32 %v1618, %v1853
        %v1924 = vadd.f32 %v1619, %v1858
        %v1925 = vadd.f32 %v1620, %v1863
        %v1926 = vadd.f32 %v1621, %v1868
        %v1927 = vadd.f32 %v1622, %v1873
        %v1928 = vadd.f32 %v1623, %v1878
        %v1929 = vadd.f32 %v1624, %v1883
        %v1930 = vadd.f32 %v1625, %v1888
        %v1931 = vadd.f32 %v1626, %v1893
        %v1932 = vadd.f32 %v1627, %v1898
        %v1933 = vld [vmem:[%s1322 + $0x2] sm:$0xff]
        %v1934 = vld [vmem:[%s1322 + $0xa] sm:$0xff]
        %v1935 = vld [vmem:[%s1322 + $0x1a] sm:$0xff]
        %v1936 = vld [vmem:[%s1322 + $0x22] sm:$0xff]
        %v1937 = vld [vmem:[%s1322 + $0x32] sm:$0xff]
        %v1938 = vld [vmem:[%s1322 + $0x3a] sm:$0xff]
        %v1939 = vld [vmem:[%s1322 + $0x4a] sm:$0xff]
        %v1940 = vld [vmem:[%s1322 + $0x52] sm:$0xff]
        %v1941 = vld [vmem:[%s1322 + $0x62] sm:$0xff]
        %v1942 = vld [vmem:[%s1322 + $0x6a] sm:$0xff]
        %v1943 = vld [vmem:[%s1322 + $0x7a] sm:$0xff]
        %v1944 = vld [vmem:[%s1322 + $0x82] sm:$0xff]
        %v1945 = vld [vmem:[%s1322 + $0x92] sm:$0xff]
        %v1946 = vld [vmem:[%s1322 + $0x9a] sm:$0xff]
        %v1947 = vld [vmem:[%s1322 + $0xaa] sm:$0xff]
        %v1948 = vld [vmem:[%s1322 + $0xb2] sm:$0xff]
        %v1949 = vld [vmem:[%s1322 + $0xc2] sm:$0xff]
        %v1950 = vld [vmem:[%s1322 + $0xca] sm:$0xff]
        %v1951 = vld [vmem:[%s1322 + $0xda] sm:$0xff]
        %v1952 = vld [vmem:[%s1322 + $0xe2] sm:$0xff]
        %v1953 = vld [vmem:[%s1322 + $0xf2] sm:$0xff]
        %v1954 = vld [vmem:[%s1322 + $0xfa] sm:$0xff]
        %v1955 = vld [vmem:[%s1322 + $0x10a] sm:$0xff]
        %v1956 = vld [vmem:[%s1322 + $0x112] sm:$0xff]
        %v1957 = vld [vmem:[%s1322 + $0x122] sm:$0xff]
        %v1958 = vld [vmem:[%s1322 + $0x12a] sm:$0xff]
        %v1959 = vld [vmem:[%s1322 + $0x13a] sm:$0xff]
        %v1960 = vld [vmem:[%s1322 + $0x142] sm:$0xff]
        %v1961 = vld [vmem:[%s1322 + $0x152] sm:$0xff]
        %v1962 = vld [vmem:[%s1322 + $0x15a] sm:$0xff]
        %v1963 = vld [vmem:[%s1322 + $0x16a] sm:$0xff]
        %v1964 = vld [vmem:[%s1322 + $0x172] sm:$0xff]
        %v1965 = vld [vmem:[%s1 + $0x280] sm:$0xff]
        %v1966 = vld [vmem:[%s1 + $0x288] sm:$0xff]
        %v1967 = vld [vmem:[%s1 + $0x290] sm:$0xff]
        %v1968 = vld [vmem:[%s1 + $0x298] sm:$0xff]
        %v1969 = vld [vmem:[%s1 + $0x2a0] sm:$0xff]
        %v1970 = vld [vmem:[%s1 + $0x2a8] sm:$0xff]
        %v1971 = vld [vmem:[%s1 + $0x2b0] sm:$0xff]
        %v1972 = vld [vmem:[%s1 + $0x2b8] sm:$0xff]
        %v1973 = vld [vmem:[%s1 + $0x2c0] sm:$0xff]
        %v1974 = vld [vmem:[%s1 + $0x2c8] sm:$0xff]
        %v1975 = vld [vmem:[%s1 + $0x2d0] sm:$0xff]
        %v1976 = vld [vmem:[%s1 + $0x2d8] sm:$0xff]
        %v1977 = vld [vmem:[%s1 + $0x2e0] sm:$0xff]
        %v1978 = vld [vmem:[%s1 + $0x2e8] sm:$0xff]
        %v1979 = vld [vmem:[%s1 + $0x2f0] sm:$0xff]
        %v1980 = vld [vmem:[%s1 + $0x2f8] sm:$0xff]
        %1981 = vmatprep.subr.mxu0 0.0
        %1982 = vmatpush1.msra.mxu0 %v1965
        %1983 = vmatprep.subr.mxu0 0.0
        %1984 = vmatpush1.msra.mxu0 %v1966
        %1985 = vmatprep.subr.mxu0 0.0
        %1986 = vmatpush1.msra.mxu0 %v1967
        %1987 = vmatprep.subr.mxu0 0.0
        %1988 = vmatpush1.msra.mxu0 %v1968
        %1989 = vmatprep.subr.mxu0 0.0
        %1990 = vmatpush1.msra.mxu0 %v1969
        %1991 = vmatprep.subr.mxu0 0.0
        %1992 = vmatpush1.msra.mxu0 %v1970
        %1993 = vmatprep.subr.mxu0 0.0
        %1994 = vmatpush1.msra.mxu0 %v1971
        %1995 = vmatprep.subr.mxu0 0.0
        %1996 = vmatpush1.msra.mxu0 %v1972
        %1997 = vmatprep.subr.mxu0 0.0
        %1998 = vmatpush1.msra.mxu0 %v1973
        %1999 = vmatprep.subr.mxu0 0.0
        %2000 = vmatpush1.msra.mxu0 %v1974
        %2001 = vmatprep.subr.mxu0 0.0
        %2002 = vmatpush1.msra.mxu0 %v1975
        %2003 = vmatprep.subr.mxu0 0.0
        %2004 = vmatpush1.msra.mxu0 %v1976
        %2005 = vmatprep.subr.mxu0 0.0
        %2006 = vmatpush1.msra.mxu0 %v1977
        %2007 = vmatprep.subr.mxu0 0.0
        %2008 = vmatpush1.msra.mxu0 %v1978
        %2009 = vmatprep.subr.mxu0 0.0
        %2010 = vmatpush1.msra.mxu0 %v1979
        %2011 = vmatprep.subr.mxu0 0.0
        %2012 = vmatpush1.msra.mxu0 %v1980
        %2013 = vmatprep.subr.mxu0 0.0
        %2014 = vmatpush1.msra.mxu0 0.0
        %2015 = vmatprep.subr.mxu0 0.0
        %2016 = vmatpush1.msra.mxu0 0.0
        %2017 = vmatprep.subr.mxu0 0.0
        %2018 = vmatpush1.msra.mxu0 0.0
        %2019 = vmatprep.subr.mxu0 0.0
        %2020 = vmatpush1.msra.mxu0 0.0
        %2021 = vmatprep.subr.mxu0 0.0
        %2022 = vmatpush1.msra.mxu0 0.0
        %2023 = vmatprep.subr.mxu0 0.0
        %2024 = vmatpush1.msra.mxu0 0.0
        %2025 = vmatprep.subr.mxu0 0.0
        %2026 = vmatpush1.msra.mxu0 0.0
        %2027 = vmatprep.subr.mxu0 0.0
        %2028 = vmatpush1.msra.mxu0 0.0
        %2029 = vmatprep.subr.mxu0 0.0
        %2030 = vmatpush1.msra.mxu0 0.0
        %2031 = vmatprep.subr.mxu0 0.0
        %2032 = vmatpush1.msra.mxu0 0.0
        %2033 = vmatprep.subr.mxu0 0.0
        %2034 = vmatpush1.msra.mxu0 0.0
        %2035 = vmatprep.subr.mxu0 0.0
        %2036 = vmatpush1.msra.mxu0 0.0
        %2037 = vmatprep.subr.mxu0 0.0
        %2038 = vmatpush1.msra.mxu0 0.0
        %2039 = vmatprep.subr.mxu0 0.0
        %2040 = vmatpush1.msra.mxu0 0.0
        %2041 = vmatprep.subr.mxu0 0.0
        %2042 = vmatpush1.msra.mxu0 0.0
        %2043 = vmatprep.subr.mxu0 0.0
        %2044 = vmatpush1.msra.mxu0 0.0
        %2045 = vmatprep.mubr.f32.mxu0 0.0
        %2046 = vmatmul.mubr.f32.gmra.mrb[0].mxu0 %v1933
        %v2047 = vpop.f32.mrb[0].mxu0
        %v2048 = vadd.f32 0.0, %v2047
        %v2049 = vpop.f32.mrb[0].mxu0
        %2050 = vmatprep.mubr.f32.mxu0 0.0
        %2051 = vmatmul.mubr.f32.gmra.mrb[0].mxu0 %v1934
        %v2052 = vpop.f32.mrb[0].mxu0
        %v2053 = vadd.f32 0.0, %v2052
        %v2054 = vpop.f32.mrb[0].mxu0
        %2055 = vmatprep.mubr.f32.mxu0 0.0
        %2056 = vmatmul.mubr.f32.gmra.mrb[0].mxu0 %v1935
        %v2057 = vpop.f32.mrb[0].mxu0
        %v2058 = vadd.f32 0.0, %v2057
        %v2059 = vpop.f32.mrb[0].mxu0
        %2060 = vmatprep.mubr.f32.mxu0 0.0
        %2061 = vmatmul.mubr.f32.gmra.mrb[0].mxu0 %v1936
        %v2062 = vpop.f32.mrb[0].mxu0
        %v2063 = vadd.f32 0.0, %v2062
        %v2064 = vpop.f32.mrb[0].mxu0
        %2065 = vmatprep.mubr.f32.mxu0 0.0
        %2066 = vmatmul.mubr.f32.gmra.mrb[0].mxu0 %v1937
        %v2067 = vpop.f32.mrb[0].mxu0
        %v2068 = vadd.f32 0.0, %v2067
        %v2069 = vpop.f32.mrb[0].mxu0
        %2070 = vmatprep.mubr.f32.mxu0 0.0
        %2071 = vmatmul.mubr.f32.gmra.mrb[0].mxu0 %v1938
        %v2072 = vpop.f32.mrb[0].mxu0
        %v2073 = vadd.f32 0.0, %v2072
        %v2074 = vpop.f32.mrb[0].mxu0
        %2075 = vmatprep.mubr.f32.mxu0 0.0
        %2076 = vmatmul.mubr.f32.gmra.mrb[0].mxu0 %v1939
        %v2077 = vpop.f32.mrb[0].mxu0
        %v2078 = vadd.f32 0.0, %v2077
        %v2079 = vpop.f32.mrb[0].mxu0
        %2080 = vmatprep.mubr.f32.mxu0 0.0
        %2081 = vmatmul.mubr.f32.gmra.mrb[0].mxu0 %v1940
        %v2082 = vpop.f32.mrb[0].mxu0
        %v2083 = vadd.f32 0.0, %v2082
        %v2084 = vpop.f32.mrb[0].mxu0
        %2085 = vmatprep.mubr.f32.mxu0 0.0
        %2086 = vmatmul.mubr.f32.gmra.mrb[0].mxu0 %v1941
        %v2087 = vpop.f32.mrb[0].mxu0
        %v2088 = vadd.f32 0.0, %v2087
        %v2089 = vpop.f32.mrb[0].mxu0
        %2090 = vmatprep.mubr.f32.mxu0 0.0
        %2091 = vmatmul.mubr.f32.gmra.mrb[0].mxu0 %v1942
        %v2092 = vpop.f32.mrb[0].mxu0
        %v2093 = vadd.f32 0.0, %v2092
        %v2094 = vpop.f32.mrb[0].mxu0
        %2095 = vmatprep.mubr.f32.mxu0 0.0
        %2096 = vmatmul.mubr.f32.gmra.mrb[0].mxu0 %v1943
        %v2097 = vpop.f32.mrb[0].mxu0
        %v2098 = vadd.f32 0.0, %v2097
        %v2099 = vpop.f32.mrb[0].mxu0
        %2100 = vmatprep.mubr.f32.mxu0 0.0
        %2101 = vmatmul.mubr.f32.gmra.mrb[0].mxu0 %v1944
        %v2102 = vpop.f32.mrb[0].mxu0
        %v2103 = vadd.f32 0.0, %v2102
        %v2104 = vpop.f32.mrb[0].mxu0
        %2105 = vmatprep.mubr.f32.mxu0 0.0
        %2106 = vmatmul.mubr.f32.gmra.mrb[0].mxu0 %v1945
        %v2107 = vpop.f32.mrb[0].mxu0
        %v2108 = vadd.f32 0.0, %v2107
        %v2109 = vpop.f32.mrb[0].mxu0
        %2110 = vmatprep.mubr.f32.mxu0 0.0
        %2111 = vmatmul.mubr.f32.gmra.mrb[0].mxu0 %v1946
        %v2112 = vpop.f32.mrb[0].mxu0
        %v2113 = vadd.f32 0.0, %v2112
        %v2114 = vpop.f32.mrb[0].mxu0
        %2115 = vmatprep.mubr.f32.mxu0 0.0
        %2116 = vmatmul.mubr.f32.gmra.mrb[0].mxu0 %v1947
        %v2117 = vpop.f32.mrb[0].mxu0
        %v2118 = vadd.f32 0.0, %v2117
        %v2119 = vpop.f32.mrb[0].mxu0
        %2120 = vmatprep.mubr.f32.mxu0 0.0
        %2121 = vmatmul.mubr.f32.gmra.mrb[0].mxu0 %v1948
        %v2122 = vpop.f32.mrb[0].mxu0
        %v2123 = vadd.f32 0.0, %v2122
        %v2124 = vpop.f32.mrb[0].mxu0
        %2125 = vmatprep.mubr.f32.mxu0 0.0
        %2126 = vmatmul.mubr.f32.gmra.mrb[0].mxu0 %v1949
        %v2127 = vpop.f32.mrb[0].mxu0
        %v2128 = vadd.f32 0.0, %v2127
        %v2129 = vpop.f32.mrb[0].mxu0
        %2130 = vmatprep.mubr.f32.mxu0 0.0
        %2131 = vmatmul.mubr.f32.gmra.mrb[0].mxu0 %v1950
        %v2132 = vpop.f32.mrb[0].mxu0
        %v2133 = vadd.f32 0.0, %v2132
        %v2134 = vpop.f32.mrb[0].mxu0
        %2135 = vmatprep.mubr.f32.mxu0 0.0
        %2136 = vmatmul.mubr.f32.gmra.mrb[0].mxu0 %v1951
        %v2137 = vpop.f32.mrb[0].mxu0
        %v2138 = vadd.f32 0.0, %v2137
        %v2139 = vpop.f32.mrb[0].mxu0
        %2140 = vmatprep.mubr.f32.mxu0 0.0
        %2141 = vmatmul.mubr.f32.gmra.mrb[0].mxu0 %v1952
        %v2142 = vpop.f32.mrb[0].mxu0
        %v2143 = vadd.f32 0.0, %v2142
        %v2144 = vpop.f32.mrb[0].mxu0
        %2145 = vmatprep.mubr.f32.mxu0 0.0
        %2146 = vmatmul.mubr.f32.gmra.mrb[0].mxu0 %v1953
        %v2147 = vpop.f32.mrb[0].mxu0
        %v2148 = vadd.f32 0.0, %v2147
        %v2149 = vpop.f32.mrb[0].mxu0
        %2150 = vmatprep.mubr.f32.mxu0 0.0
        %2151 = vmatmul.mubr.f32.gmra.mrb[0].mxu0 %v1954
        %v2152 = vpop.f32.mrb[0].mxu0
        %v2153 = vadd.f32 0.0, %v2152
        %v2154 = vpop.f32.mrb[0].mxu0
        %2155 = vmatprep.mubr.f32.mxu0 0.0
        %2156 = vmatmul.mubr.f32.gmra.mrb[0].mxu0 %v1955
        %v2157 = vpop.f32.mrb[0].mxu0
        %v2158 = vadd.f32 0.0, %v2157
        %v2159 = vpop.f32.mrb[0].mxu0
        %2160 = vmatprep.mubr.f32.mxu0 0.0
        %2161 = vmatmul.mubr.f32.gmra.mrb[0].mxu0 %v1956
        %v2162 = vpop.f32.mrb[0].mxu0
        %v2163 = vadd.f32 0.0, %v2162
        %v2164 = vpop.f32.mrb[0].mxu0
        %2165 = vmatprep.mubr.f32.mxu0 0.0
        %2166 = vmatmul.mubr.f32.gmra.mrb[0].mxu0 %v1957
        %v2167 = vpop.f32.mrb[0].mxu0
        %v2168 = vadd.f32 0.0, %v2167
        %v2169 = vpop.f32.mrb[0].mxu0
        %2170 = vmatprep.mubr.f32.mxu0 0.0
        %2171 = vmatmul.mubr.f32.gmra.mrb[0].mxu0 %v1958
        %v2172 = vpop.f32.mrb[0].mxu0
        %v2173 = vadd.f32 0.0, %v2172
        %v2174 = vpop.f32.mrb[0].mxu0
        %2175 = vmatprep.mubr.f32.mxu0 0.0
        %2176 = vmatmul.mubr.f32.gmra.mrb[0].mxu0 %v1959
        %v2177 = vpop.f32.mrb[0].mxu0
        %v2178 = vadd.f32 0.0, %v2177
        %v2179 = vpop.f32.mrb[0].mxu0
        %2180 = vmatprep.mubr.f32.mxu0 0.0
        %2181 = vmatmul.mubr.f32.gmra.mrb[0].mxu0 %v1960
        %v2182 = vpop.f32.mrb[0].mxu0
        %v2183 = vadd.f32 0.0, %v2182
        %v2184 = vpop.f32.mrb[0].mxu0
        %2185 = vmatprep.mubr.f32.mxu0 0.0
        %2186 = vmatmul.mubr.f32.gmra.mrb[0].mxu0 %v1961
        %v2187 = vpop.f32.mrb[0].mxu0
        %v2188 = vadd.f32 0.0, %v2187
        %v2189 = vpop.f32.mrb[0].mxu0
        %2190 = vmatprep.mubr.f32.mxu0 0.0
        %2191 = vmatmul.mubr.f32.gmra.mrb[0].mxu0 %v1962
        %v2192 = vpop.f32.mrb[0].mxu0
        %v2193 = vadd.f32 0.0, %v2192
        %v2194 = vpop.f32.mrb[0].mxu0
        %2195 = vmatprep.mubr.f32.mxu0 0.0
        %2196 = vmatmul.mubr.f32.gmra.mrb[0].mxu0 %v1963
        %v2197 = vpop.f32.mrb[0].mxu0
        %v2198 = vadd.f32 0.0, %v2197
        %v2199 = vpop.f32.mrb[0].mxu0
        %2200 = vmatprep.mubr.f32.mxu0 0.0
        %2201 = vmatmul.mubr.f32.gmra.mrb[0].mxu0 %v1964
        %v2202 = vpop.f32.mrb[0].mxu0
        %v2203 = vadd.f32 0.0, %v2202
        %v2204 = vpop.f32.mrb[0].mxu0
        %2205 = vdwg.mxu0
        %v2206 = vadd.f32 %v1901, %v2048
        %v2207 = vadd.f32 %v1902, %v2053
        %v2208 = vadd.f32 %v1903, %v2058
        %v2209 = vadd.f32 %v1904, %v2063
        %v2210 = vadd.f32 %v1905, %v2068
        %v2211 = vadd.f32 %v1906, %v2073
        %v2212 = vadd.f32 %v1907, %v2078
        %v2213 = vadd.f32 %v1908, %v2083
        %v2214 = vadd.f32 %v1909, %v2088
        %v2215 = vadd.f32 %v1910, %v2093
        %v2216 = vadd.f32 %v1911, %v2098
        %v2217 = vadd.f32 %v1912, %v2103
        %v2218 = vadd.f32 %v1913, %v2108
        %v2219 = vadd.f32 %v1914, %v2113
        %v2220 = vadd.f32 %v1915, %v2118
        %v2221 = vadd.f32 %v1916, %v2123
        %v2222 = vadd.f32 %v1917, %v2128
        %v2223 = vadd.f32 %v1918, %v2133
        %v2224 = vadd.f32 %v1919, %v2138
        %v2225 = vadd.f32 %v1920, %v2143
        %v2226 = vadd.f32 %v1921, %v2148
        %v2227 = vadd.f32 %v1922, %v2153
        %v2228 = vadd.f32 %v1923, %v2158
        %v2229 = vadd.f32 %v1924, %v2163
        %v2230 = vadd.f32 %v1925, %v2168
        %v2231 = vadd.f32 %v1926, %v2173
        %v2232 = vadd.f32 %v1927, %v2178
        %v2233 = vadd.f32 %v1928, %v2183
        %v2234 = vadd.f32 %v1929, %v2188
        %v2235 = vadd.f32 %v1930, %v2193
        %v2236 = vadd.f32 %v1931, %v2198
        %v2237 = vadd.f32 %v1932, %v2203
        %s2238 = scalar_lea.vmem %s374, 48
        %v2239 = vld [vmem:[%s2238] sm:$0xff]
        %v2240 = vld [vmem:[%s2238 + $0x8] sm:$0xff]
        %v2241 = vld [vmem:[%s2238 + $0x18] sm:$0xff]
        %v2242 = vld [vmem:[%s2238 + $0x20] sm:$0xff]
        %v2243 = vld [vmem:[%s2238 + $0x30] sm:$0xff]
        %v2244 = vld [vmem:[%s2238 + $0x38] sm:$0xff]
        %v2245 = vld [vmem:[%s2238 + $0x48] sm:$0xff]
        %v2246 = vld [vmem:[%s2238 + $0x50] sm:$0xff]
        %v2247 = vld [vmem:[%s2238 + $0x60] sm:$0xff]
        %v2248 = vld [vmem:[%s2238 + $0x68] sm:$0xff]
        %v2249 = vld [vmem:[%s2238 + $0x78] sm:$0xff]
        %v2250 = vld [vmem:[%s2238 + $0x80] sm:$0xff]
        %v2251 = vld [vmem:[%s2238 + $0x90] sm:$0xff]
        %v2252 = vld [vmem:[%s2238 + $0x98] sm:$0xff]
        %v2253 = vld [vmem:[%s2238 + $0xa8] sm:$0xff]
        %v2254 = vld [vmem:[%s2238 + $0xb0] sm:$0xff]
        %v2255 = vld [vmem:[%s2238 + $0xc0] sm:$0xff]
        %v2256 = vld [vmem:[%s2238 + $0xc8] sm:$0xff]
        %v2257 = vld [vmem:[%s2238 + $0xd8] sm:$0xff]
        %v2258 = vld [vmem:[%s2238 + $0xe0] sm:$0xff]
        %v2259 = vld [vmem:[%s2238 + $0xf0] sm:$0xff]
        %v2260 = vld [vmem:[%s2238 + $0xf8] sm:$0xff]
        %v2261 = vld [vmem:[%s2238 + $0x108] sm:$0xff]
        %v2262 = vld [vmem:[%s2238 + $0x110] sm:$0xff]
        %v2263 = vld [vmem:[%s2238 + $0x120] sm:$0xff]
        %v2264 = vld [vmem:[%s2238 + $0x128] sm:$0xff]
        %v2265 = vld [vmem:[%s2238 + $0x138] sm:$0xff]
        %v2266 = vld [vmem:[%s2238 + $0x140] sm:$0xff]
        %v2267 = vld [vmem:[%s2238 + $0x150] sm:$0xff]
        %v2268 = vld [vmem:[%s2238 + $0x158] sm:$0xff]
        %v2269 = vld [vmem:[%s2238 + $0x168] sm:$0xff]
        %v2270 = vld [vmem:[%s2238 + $0x170] sm:$0xff]
        %v2271 = vld [vmem:[%s1 + $0x300] sm:$0xff]
        %v2272 = vld [vmem:[%s1 + $0x308] sm:$0xff]
        %v2273 = vld [vmem:[%s1 + $0x310] sm:$0xff]
        %v2274 = vld [vmem:[%s1 + $0x318] sm:$0xff]
        %v2275 = vld [vmem:[%s1 + $0x320] sm:$0xff]
        %v2276 = vld [vmem:[%s1 + $0x328] sm:$0xff]
        %v2277 = vld [vmem:[%s1 + $0x330] sm:$0xff]
        %v2278 = vld [vmem:[%s1 + $0x338] sm:$0xff]
        %v2279 = vld [vmem:[%s1 + $0x340] sm:$0xff]
        %v2280 = vld [vmem:[%s1 + $0x348] sm:$0xff]
        %v2281 = vld [vmem:[%s1 + $0x350] sm:$0xff]
        %v2282 = vld [vmem:[%s1 + $0x358] sm:$0xff]
        %v2283 = vld [vmem:[%s1 + $0x360] sm:$0xff]
        %v2284 = vld [vmem:[%s1 + $0x368] sm:$0xff]
        %v2285 = vld [vmem:[%s1 + $0x370] sm:$0xff]
        %v2286 = vld [vmem:[%s1 + $0x378] sm:$0xff]
        %2287 = vmatprep.subr.mxu0 0.0
        %2288 = vmatpush1.msra.mxu0 %v2271
        %2289 = vmatprep.subr.mxu0 0.0
        %2290 = vmatpush1.msra.mxu0 %v2272
        %2291 = vmatprep.subr.mxu0 0.0
        %2292 = vmatpush1.msra.mxu0 %v2273
        %2293 = vmatprep.subr.mxu0 0.0
        %2294 = vmatpush1.msra.mxu0 %v2274
        %2295 = vmatprep.subr.mxu0 0.0
        %2296 = vmatpush1.msra.mxu0 %v2275
        %2297 = vmatprep.subr.mxu0 0.0
        %2298 = vmatpush1.msra.mxu0 %v2276
        %2299 = vmatprep.subr.mxu0 0.0
        %2300 = vmatpush1.msra.mxu0 %v2277
        %2301 = vmatprep.subr.mxu0 0.0
        %2302 = vmatpush1.msra.mxu0 %v2278
        %2303 = vmatprep.subr.mxu0 0.0
        %2304 = vmatpush1.msra.mxu0 %v2279
        %2305 = vmatprep.subr.mxu0 0.0
        %2306 = vmatpush1.msra.mxu0 %v2280
        %2307 = vmatprep.subr.mxu0 0.0
        %2308 = vmatpush1.msra.mxu0 %v2281
        %2309 = vmatprep.subr.mxu0 0.0
        %2310 = vmatpush1.msra.mxu0 %v2282
        %2311 = vmatprep.subr.mxu0 0.0
        %2312 = vmatpush1.msra.mxu0 %v2283
        %2313 = vmatprep.subr.mxu0 0.0
        %2314 = vmatpush1.msra.mxu0 %v2284
        %2315 = vmatprep.subr.mxu0 0.0
        %2316 = vmatpush1.msra.mxu0 %v2285
        %2317 = vmatprep.subr.mxu0 0.0
        %2318 = vmatpush1.msra.mxu0 %v2286
        %2319 = vmatprep.subr.mxu0 0.0
        %2320 = vmatpush1.msra.mxu0 0.0
        %2321 = vmatprep.subr.mxu0 0.0
        %2322 = vmatpush1.msra.mxu0 0.0
        %2323 = vmatprep.subr.mxu0 0.0
        %2324 = vmatpush1.msra.mxu0 0.0
        %2325 = vmatprep.subr.mxu0 0.0
        %2326 = vmatpush1.msra.mxu0 0.0
        %2327 = vmatprep.subr.mxu0 0.0
        %2328 = vmatpush1.msra.mxu0 0.0
        %2329 = vmatprep.subr.mxu0 0.0
        %2330 = vmatpush1.msra.mxu0 0.0
        %2331 = vmatprep.subr.mxu0 0.0
        %2332 = vmatpush1.msra.mxu0 0.0
        %2333 = vmatprep.subr.mxu0 0.0
        %2334 = vmatpush1.msra.mxu0 0.0
        %2335 = vmatprep.subr.mxu0 0.0
        %2336 = vmatpush1.msra.mxu0 0.0
        %2337 = vmatprep.subr.mxu0 0.0
        %2338 = vmatpush1.msra.mxu0 0.0
        %2339 = vmatprep.subr.mxu0 0.0
        %2340 = vmatpush1.msra.mxu0 0.0
        %2341 = vmatprep.subr.mxu0 0.0
        %2342 = vmatpush1.msra.mxu0 0.0
        %2343 = vmatprep.subr.mxu0 0.0
        %2344 = vmatpush1.msra.mxu0 0.0
        %2345 = vmatprep.subr.mxu0 0.0
        %2346 = vmatpush1.msra.mxu0 0.0
        %2347 = vmatprep.subr.mxu0 0.0
        %2348 = vmatpush1.msra.mxu0 0.0
        %2349 = vmatprep.subr.mxu0 0.0
        %2350 = vmatpush1.msra.mxu0 0.0
        %2351 = vmatprep.mubr.f32.mxu0 0.0
        %2352 = vmatmul.mubr.f32.gmra.mrb[0].mxu0 %v2239
        %v2353 = vpop.f32.mrb[0].mxu0
        %v2354 = vadd.f32 0.0, %v2353
        %v2355 = vpop.f32.mrb[0].mxu0
        %2356 = vmatprep.mubr.f32.mxu0 0.0
        %2357 = vmatmul.mubr.f32.gmra.mrb[0].mxu0 %v2240
        %v2358 = vpop.f32.mrb[0].mxu0
        %v2359 = vadd.f32 0.0, %v2358
        %v2360 = vpop.f32.mrb[0].mxu0
        %2361 = vmatprep.mubr.f32.mxu0 0.0
        %2362 = vmatmul.mubr.f32.gmra.mrb[0].mxu0 %v2241
        %v2363 = vpop.f32.mrb[0].mxu0
        %v2364 = vadd.f32 0.0, %v2363
        %v2365 = vpop.f32.mrb[0].mxu0
        %2366 = vmatprep.mubr.f32.mxu0 0.0
        %2367 = vmatmul.mubr.f32.gmra.mrb[0].mxu0 %v2242
        %v2368 = vpop.f32.mrb[0].mxu0
        %v2369 = vadd.f32 0.0, %v2368
        %v2370 = vpop.f32.mrb[0].mxu0
        %2371 = vmatprep.mubr.f32.mxu0 0.0
        %2372 = vmatmul.mubr.f32.gmra.mrb[0].mxu0 %v2243
        %v2373 = vpop.f32.mrb[0].mxu0
        %v2374 = vadd.f32 0.0, %v2373
        %v2375 = vpop.f32.mrb[0].mxu0
        %2376 = vmatprep.mubr.f32.mxu0 0.0
        %2377 = vmatmul.mubr.f32.gmra.mrb[0].mxu0 %v2244
        %v2378 = vpop.f32.mrb[0].mxu0
        %v2379 = vadd.f32 0.0, %v2378
        %v2380 = vpop.f32.mrb[0].mxu0
        %2381 = vmatprep.mubr.f32.mxu0 0.0
        %2382 = vmatmul.mubr.f32.gmra.mrb[0].mxu0 %v2245
        %v2383 = vpop.f32.mrb[0].mxu0
        %v2384 = vadd.f32 0.0, %v2383
        %v2385 = vpop.f32.mrb[0].mxu0
        %2386 = vmatprep.mubr.f32.mxu0 0.0
        %2387 = vmatmul.mubr.f32.gmra.mrb[0].mxu0 %v2246
        %v2388 = vpop.f32.mrb[0].mxu0
        %v2389 = vadd.f32 0.0, %v2388
        %v2390 = vpop.f32.mrb[0].mxu0
        %2391 = vmatprep.mubr.f32.mxu0 0.0
        %2392 = vmatmul.mubr.f32.gmra.mrb[0].mxu0 %v2247
        %v2393 = vpop.f32.mrb[0].mxu0
        %v2394 = vadd.f32 0.0, %v2393
        %v2395 = vpop.f32.mrb[0].mxu0
        %2396 = vmatprep.mubr.f32.mxu0 0.0
        %2397 = vmatmul.mubr.f32.gmra.mrb[0].mxu0 %v2248
        %v2398 = vpop.f32.mrb[0].mxu0
        %v2399 = vadd.f32 0.0, %v2398
        %v2400 = vpop.f32.mrb[0].mxu0
        %2401 = vmatprep.mubr.f32.mxu0 0.0
        %2402 = vmatmul.mubr.f32.gmra.mrb[0].mxu0 %v2249
        %v2403 = vpop.f32.mrb[0].mxu0
        %v2404 = vadd.f32 0.0, %v2403
        %v2405 = vpop.f32.mrb[0].mxu0
        %2406 = vmatprep.mubr.f32.mxu0 0.0
        %2407 = vmatmul.mubr.f32.gmra.mrb[0].mxu0 %v2250
        %v2408 = vpop.f32.mrb[0].mxu0
        %v2409 = vadd.f32 0.0, %v2408
        %v2410 = vpop.f32.mrb[0].mxu0
        %2411 = vmatprep.mubr.f32.mxu0 0.0
        %2412 = vmatmul.mubr.f32.gmra.mrb[0].mxu0 %v2251
        %v2413 = vpop.f32.mrb[0].mxu0
        %v2414 = vadd.f32 0.0, %v2413
        %v2415 = vpop.f32.mrb[0].mxu0
        %2416 = vmatprep.mubr.f32.mxu0 0.0
        %2417 = vmatmul.mubr.f32.gmra.mrb[0].mxu0 %v2252
        %v2418 = vpop.f32.mrb[0].mxu0
        %v2419 = vadd.f32 0.0, %v2418
        %v2420 = vpop.f32.mrb[0].mxu0
        %2421 = vmatprep.mubr.f32.mxu0 0.0
        %2422 = vmatmul.mubr.f32.gmra.mrb[0].mxu0 %v2253
        %v2423 = vpop.f32.mrb[0].mxu0
        %v2424 = vadd.f32 0.0, %v2423
        %v2425 = vpop.f32.mrb[0].mxu0
        %2426 = vmatprep.mubr.f32.mxu0 0.0
        %2427 = vmatmul.mubr.f32.gmra.mrb[0].mxu0 %v2254
        %v2428 = vpop.f32.mrb[0].mxu0
        %v2429 = vadd.f32 0.0, %v2428
        %v2430 = vpop.f32.mrb[0].mxu0
        %2431 = vmatprep.mubr.f32.mxu0 0.0
        %2432 = vmatmul.mubr.f32.gmra.mrb[0].mxu0 %v2255
        %v2433 = vpop.f32.mrb[0].mxu0
        %v2434 = vadd.f32 0.0, %v2433
        %v2435 = vpop.f32.mrb[0].mxu0
        %2436 = vmatprep.mubr.f32.mxu0 0.0
        %2437 = vmatmul.mubr.f32.gmra.mrb[0].mxu0 %v2256
        %v2438 = vpop.f32.mrb[0].mxu0
        %v2439 = vadd.f32 0.0, %v2438
        %v2440 = vpop.f32.mrb[0].mxu0
        %2441 = vmatprep.mubr.f32.mxu0 0.0
        %2442 = vmatmul.mubr.f32.gmra.mrb[0].mxu0 %v2257
        %v2443 = vpop.f32.mrb[0].mxu0
        %v2444 = vadd.f32 0.0, %v2443
        %v2445 = vpop.f32.mrb[0].mxu0
        %2446 = vmatprep.mubr.f32.mxu0 0.0
        %2447 = vmatmul.mubr.f32.gmra.mrb[0].mxu0 %v2258
        %v2448 = vpop.f32.mrb[0].mxu0
        %v2449 = vadd.f32 0.0, %v2448
        %v2450 = vpop.f32.mrb[0].mxu0
        %2451 = vmatprep.mubr.f32.mxu0 0.0
        %2452 = vmatmul.mubr.f32.gmra.mrb[0].mxu0 %v2259
        %v2453 = vpop.f32.mrb[0].mxu0
        %v2454 = vadd.f32 0.0, %v2453
        %v2455 = vpop.f32.mrb[0].mxu0
        %2456 = vmatprep.mubr.f32.mxu0 0.0
        %2457 = vmatmul.mubr.f32.gmra.mrb[0].mxu0 %v2260
        %v2458 = vpop.f32.mrb[0].mxu0
        %v2459 = vadd.f32 0.0, %v2458
        %v2460 = vpop.f32.mrb[0].mxu0
        %2461 = vmatprep.mubr.f32.mxu0 0.0
        %2462 = vmatmul.mubr.f32.gmra.mrb[0].mxu0 %v2261
        %v2463 = vpop.f32.mrb[0].mxu0
        %v2464 = vadd.f32 0.0, %v2463
        %v2465 = vpop.f32.mrb[0].mxu0
        %2466 = vmatprep.mubr.f32.mxu0 0.0
        %2467 = vmatmul.mubr.f32.gmra.mrb[0].mxu0 %v2262
        %v2468 = vpop.f32.mrb[0].mxu0
        %v2469 = vadd.f32 0.0, %v2468
        %v2470 = vpop.f32.mrb[0].mxu0
        %2471 = vmatprep.mubr.f32.mxu0 0.0
        %2472 = vmatmul.mubr.f32.gmra.mrb[0].mxu0 %v2263
        %v2473 = vpop.f32.mrb[0].mxu0
        %v2474 = vadd.f32 0.0, %v2473
        %v2475 = vpop.f32.mrb[0].mxu0
        %2476 = vmatprep.mubr.f32.mxu0 0.0
        %2477 = vmatmul.mubr.f32.gmra.mrb[0].mxu0 %v2264
        %v2478 = vpop.f32.mrb[0].mxu0
        %v2479 = vadd.f32 0.0, %v2478
        %v2480 = vpop.f32.mrb[0].mxu0
        %2481 = vmatprep.mubr.f32.mxu0 0.0
        %2482 = vmatmul.mubr.f32.gmra.mrb[0].mxu0 %v2265
        %v2483 = vpop.f32.mrb[0].mxu0
        %v2484 = vadd.f32 0.0, %v2483
        %v2485 = vpop.f32.mrb[0].mxu0
        %2486 = vmatprep.mubr.f32.mxu0 0.0
        %2487 = vmatmul.mubr.f32.gmra.mrb[0].mxu0 %v2266
        %v2488 = vpop.f32.mrb[0].mxu0
        %v2489 = vadd.f32 0.0, %v2488
        %v2490 = vpop.f32.mrb[0].mxu0
        %2491 = vmatprep.mubr.f32.mxu0 0.0
        %2492 = vmatmul.mubr.f32.gmra.mrb[0].mxu0 %v2267
        %v2493 = vpop.f32.mrb[0].mxu0
        %v2494 = vadd.f32 0.0, %v2493
        %v2495 = vpop.f32.mrb[0].mxu0
        %2496 = vmatprep.mubr.f32.mxu0 0.0
        %2497 = vmatmul.mubr.f32.gmra.mrb[0].mxu0 %v2268
        %v2498 = vpop.f32.mrb[0].mxu0
        %v2499 = vadd.f32 0.0, %v2498
        %v2500 = vpop.f32.mrb[0].mxu0
        %2501 = vmatprep.mubr.f32.mxu0 0.0
        %2502 = vmatmul.mubr.f32.gmra.mrb[0].mxu0 %v2269
        %v2503 = vpop.f32.mrb[0].mxu0
        %v2504 = vadd.f32 0.0, %v2503
        %v2505 = vpop.f32.mrb[0].mxu0
        %2506 = vmatprep.mubr.f32.mxu0 0.0
        %2507 = vmatmul.mubr.f32.gmra.mrb[0].mxu0 %v2270
        %v2508 = vpop.f32.mrb[0].mxu0
        %v2509 = vadd.f32 0.0, %v2508
        %v2510 = vpop.f32.mrb[0].mxu0
        %2511 = vdwg.mxu0
        %v2512 = vadd.f32 %v2206, %v2354
        %v2513 = vadd.f32 %v2207, %v2359
        %v2514 = vadd.f32 %v2208, %v2364
        %v2515 = vadd.f32 %v2209, %v2369
        %v2516 = vadd.f32 %v2210, %v2374
        %v2517 = vadd.f32 %v2211, %v2379
        %v2518 = vadd.f32 %v2212, %v2384
        %v2519 = vadd.f32 %v2213, %v2389
        %v2520 = vadd.f32 %v2214, %v2394
        %v2521 = vadd.f32 %v2215, %v2399
        %v2522 = vadd.f32 %v2216, %v2404
        %v2523 = vadd.f32 %v2217, %v2409
        %v2524 = vadd.f32 %v2218, %v2414
        %v2525 = vadd.f32 %v2219, %v2419
        %v2526 = vadd.f32 %v2220, %v2424
        %v2527 = vadd.f32 %v2221, %v2429
        %v2528 = vadd.f32 %v2222, %v2434
        %v2529 = vadd.f32 %v2223, %v2439
        %v2530 = vadd.f32 %v2224, %v2444
        %v2531 = vadd.f32 %v2225, %v2449
        %v2532 = vadd.f32 %v2226, %v2454
        %v2533 = vadd.f32 %v2227, %v2459
        %v2534 = vadd.f32 %v2228, %v2464
        %v2535 = vadd.f32 %v2229, %v2469
        %v2536 = vadd.f32 %v2230, %v2474
        %v2537 = vadd.f32 %v2231, %v2479
        %v2538 = vadd.f32 %v2232, %v2484
        %v2539 = vadd.f32 %v2233, %v2489
        %v2540 = vadd.f32 %v2234, %v2494
        %v2541 = vadd.f32 %v2235, %v2499
        %v2542 = vadd.f32 %v2236, %v2504
        %v2543 = vadd.f32 %v2237, %v2509
        %v2544 = vld [vmem:[%s2238 + $0x1] sm:$0xff]
        %v2545 = vld [vmem:[%s2238 + $0x9] sm:$0xff]
        %v2546 = vld [vmem:[%s2238 + $0x19] sm:$0xff]
        %v2547 = vld [vmem:[%s2238 + $0x21] sm:$0xff]
        %v2548 = vld [vmem:[%s2238 + $0x31] sm:$0xff]
        %v2549 = vld [vmem:[%s2238 + $0x39] sm:$0xff]
        %v2550 = vld [vmem:[%s2238 + $0x49] sm:$0xff]
        %v2551 = vld [vmem:[%s2238 + $0x51] sm:$0xff]
        %v2552 = vld [vmem:[%s2238 + $0x61] sm:$0xff]
        %v2553 = vld [vmem:[%s2238 + $0x69] sm:$0xff]
        %v2554 = vld [vmem:[%s2238 + $0x79] sm:$0xff]
        %v2555 = vld [vmem:[%s2238 + $0x81] sm:$0xff]
        %v2556 = vld [vmem:[%s2238 + $0x91] sm:$0xff]
        %v2557 = vld [vmem:[%s2238 + $0x99] sm:$0xff]
        %v2558 = vld [vmem:[%s2238 + $0xa9] sm:$0xff]
        %v2559 = vld [vmem:[%s2238 + $0xb1] sm:$0xff]
        %v2560 = vld [vmem:[%s2238 + $0xc1] sm:$0xff]
        %v2561 = vld [vmem:[%s2238 + $0xc9] sm:$0xff]
        %v2562 = vld [vmem:[%s2238 + $0xd9] sm:$0xff]
        %v2563 = vld [vmem:[%s2238 + $0xe1] sm:$0xff]
        %v2564 = vld [vmem:[%s2238 + $0xf1] sm:$0xff]
        %v2565 = vld [vmem:[%s2238 + $0xf9] sm:$0xff]
        %v2566 = vld [vmem:[%s2238 + $0x109] sm:$0xff]
        %v2567 = vld [vmem:[%s2238 + $0x111] sm:$0xff]
        %v2568 = vld [vmem:[%s2238 + $0x121] sm:$0xff]
        %v2569 = vld [vmem:[%s2238 + $0x129] sm:$0xff]
        %v2570 = vld [vmem:[%s2238 + $0x139] sm:$0xff]
        %v2571 = vld [vmem:[%s2238 + $0x141] sm:$0xff]
        %v2572 = vld [vmem:[%s2238 + $0x151] sm:$0xff]
        %v2573 = vld [vmem:[%s2238 + $0x159] sm:$0xff]
        %v2574 = vld [vmem:[%s2238 + $0x169] sm:$0xff]
        %v2575 = vld [vmem:[%s2238 + $0x171] sm:$0xff]
        %v2576 = vld [vmem:[%s1 + $0x380] sm:$0xff]
        %v2577 = vld [vmem:[%s1 + $0x388] sm:$0xff]
        %v2578 = vld [vmem:[%s1 + $0x390] sm:$0xff]
        %v2579 = vld [vmem:[%s1 + $0x398] sm:$0xff]
        %v2580 = vld [vmem:[%s1 + $0x3a0] sm:$0xff]
        %v2581 = vld [vmem:[%s1 + $0x3a8] sm:$0xff]
        %v2582 = vld [vmem:[%s1 + $0x3b0] sm:$0xff]
        %v2583 = vld [vmem:[%s1 + $0x3b8] sm:$0xff]
        %v2584 = vld [vmem:[%s1 + $0x3c0] sm:$0xff]
        %v2585 = vld [vmem:[%s1 + $0x3c8] sm:$0xff]
        %v2586 = vld [vmem:[%s1 + $0x3d0] sm:$0xff]
        %v2587 = vld [vmem:[%s1 + $0x3d8] sm:$0xff]
        %v2588 = vld [vmem:[%s1 + $0x3e0] sm:$0xff]
        %v2589 = vld [vmem:[%s1 + $0x3e8] sm:$0xff]
        %v2590 = vld [vmem:[%s1 + $0x3f0] sm:$0xff]
        %v2591 = vld [vmem:[%s1 + $0x3f8] sm:$0xff]
        %2592 = vmatprep.subr.mxu0 0.0
        %2593 = vmatpush1.msra.mxu0 %v2576
        %2594 = vmatprep.subr.mxu0 0.0
        %2595 = vmatpush1.msra.mxu0 %v2577
        %2596 = vmatprep.subr.mxu0 0.0
        %2597 = vmatpush1.msra.mxu0 %v2578
        %2598 = vmatprep.subr.mxu0 0.0
        %2599 = vmatpush1.msra.mxu0 %v2579
        %2600 = vmatprep.subr.mxu0 0.0
        %2601 = vmatpush1.msra.mxu0 %v2580
        %2602 = vmatprep.subr.mxu0 0.0
        %2603 = vmatpush1.msra.mxu0 %v2581
        %2604 = vmatprep.subr.mxu0 0.0
        %2605 = vmatpush1.msra.mxu0 %v2582
        %2606 = vmatprep.subr.mxu0 0.0
        %2607 = vmatpush1.msra.mxu0 %v2583
        %2608 = vmatprep.subr.mxu0 0.0
        %2609 = vmatpush1.msra.mxu0 %v2584
        %2610 = vmatprep.subr.mxu0 0.0
        %2611 = vmatpush1.msra.mxu0 %v2585
        %2612 = vmatprep.subr.mxu0 0.0
        %2613 = vmatpush1.msra.mxu0 %v2586
        %2614 = vmatprep.subr.mxu0 0.0
        %2615 = vmatpush1.msra.mxu0 %v2587
        %2616 = vmatprep.subr.mxu0 0.0
        %2617 = vmatpush1.msra.mxu0 %v2588
        %2618 = vmatprep.subr.mxu0 0.0
        %2619 = vmatpush1.msra.mxu0 %v2589
        %2620 = vmatprep.subr.mxu0 0.0
        %2621 = vmatpush1.msra.mxu0 %v2590
        %2622 = vmatprep.subr.mxu0 0.0
        %2623 = vmatpush1.msra.mxu0 %v2591
        %2624 = vmatprep.subr.mxu0 0.0
        %2625 = vmatpush1.msra.mxu0 0.0
        %2626 = vmatprep.subr.mxu0 0.0
        %2627 = vmatpush1.msra.mxu0 0.0
        %2628 = vmatprep.subr.mxu0 0.0
        %2629 = vmatpush1.msra.mxu0 0.0
        %2630 = vmatprep.subr.mxu0 0.0
        %2631 = vmatpush1.msra.mxu0 0.0
        %2632 = vmatprep.subr.mxu0 0.0
        %2633 = vmatpush1.msra.mxu0 0.0
        %2634 = vmatprep.subr.mxu0 0.0
        %2635 = vmatpush1.msra.mxu0 0.0
        %2636 = vmatprep.subr.mxu0 0.0
        %2637 = vmatpush1.msra.mxu0 0.0
        %2638 = vmatprep.subr.mxu0 0.0
        %2639 = vmatpush1.msra.mxu0 0.0
        %2640 = vmatprep.subr.mxu0 0.0
        %2641 = vmatpush1.msra.mxu0 0.0
        %2642 = vmatprep.subr.mxu0 0.0
        %2643 = vmatpush1.msra.mxu0 0.0
        %2644 = vmatprep.subr.mxu0 0.0
        %2645 = vmatpush1.msra.mxu0 0.0
        %2646 = vmatprep.subr.mxu0 0.0
        %2647 = vmatpush1.msra.mxu0 0.0
        %2648 = vmatprep.subr.mxu0 0.0
        %2649 = vmatpush1.msra.mxu0 0.0
        %2650 = vmatprep.subr.mxu0 0.0
        %2651 = vmatpush1.msra.mxu0 0.0
        %2652 = vmatprep.subr.mxu0 0.0
        %2653 = vmatpush1.msra.mxu0 0.0
        %2654 = vmatprep.subr.mxu0 0.0
        %2655 = vmatpush1.msra.mxu0 0.0
        %2656 = vmatprep.mubr.f32.mxu0 0.0
        %2657 = vmatmul.mubr.f32.gmra.mrb[0].mxu0 %v2544
        %v2658 = vpop.f32.mrb[0].mxu0
        %v2659 = vadd.f32 0.0, %v2658
        %v2660 = vpop.f32.mrb[0].mxu0
        %2661 = vmatprep.mubr.f32.mxu0 0.0
        %2662 = vmatmul.mubr.f32.gmra.mrb[0].mxu0 %v2545
        %v2663 = vpop.f32.mrb[0].mxu0
        %v2664 = vadd.f32 0.0, %v2663
        %v2665 = vpop.f32.mrb[0].mxu0
        %2666 = vmatprep.mubr.f32.mxu0 0.0
        %2667 = vmatmul.mubr.f32.gmra.mrb[0].mxu0 %v2546
        %v2668 = vpop.f32.mrb[0].mxu0
        %v2669 = vadd.f32 0.0, %v2668
        %v2670 = vpop.f32.mrb[0].mxu0
        %2671 = vmatprep.mubr.f32.mxu0 0.0
        %2672 = vmatmul.mubr.f32.gmra.mrb[0].mxu0 %v2547
        %v2673 = vpop.f32.mrb[0].mxu0
        %v2674 = vadd.f32 0.0, %v2673
        %v2675 = vpop.f32.mrb[0].mxu0
        %2676 = vmatprep.mubr.f32.mxu0 0.0
        %2677 = vmatmul.mubr.f32.gmra.mrb[0].mxu0 %v2548
        %v2678 = vpop.f32.mrb[0].mxu0
        %v2679 = vadd.f32 0.0, %v2678
        %v2680 = vpop.f32.mrb[0].mxu0
        %2681 = vmatprep.mubr.f32.mxu0 0.0
        %2682 = vmatmul.mubr.f32.gmra.mrb[0].mxu0 %v2549
        %v2683 = vpop.f32.mrb[0].mxu0
        %v2684 = vadd.f32 0.0, %v2683
        %v2685 = vpop.f32.mrb[0].mxu0
        %2686 = vmatprep.mubr.f32.mxu0 0.0
        %2687 = vmatmul.mubr.f32.gmra.mrb[0].mxu0 %v2550
        %v2688 = vpop.f32.mrb[0].mxu0
        %v2689 = vadd.f32 0.0, %v2688
        %v2690 = vpop.f32.mrb[0].mxu0
        %2691 = vmatprep.mubr.f32.mxu0 0.0
        %2692 = vmatmul.mubr.f32.gmra.mrb[0].mxu0 %v2551
        %v2693 = vpop.f32.mrb[0].mxu0
        %v2694 = vadd.f32 0.0, %v2693
        %v2695 = vpop.f32.mrb[0].mxu0
        %2696 = vmatprep.mubr.f32.mxu0 0.0
        %2697 = vmatmul.mubr.f32.gmra.mrb[0].mxu0 %v2552
        %v2698 = vpop.f32.mrb[0].mxu0
        %v2699 = vadd.f32 0.0, %v2698
        %v2700 = vpop.f32.mrb[0].mxu0
        %2701 = vmatprep.mubr.f32.mxu0 0.0
        %2702 = vmatmul.mubr.f32.gmra.mrb[0].mxu0 %v2553
        %v2703 = vpop.f32.mrb[0].mxu0
        %v2704 = vadd.f32 0.0, %v2703
        %v2705 = vpop.f32.mrb[0].mxu0
        %2706 = vmatprep.mubr.f32.mxu0 0.0
        %2707 = vmatmul.mubr.f32.gmra.mrb[0].mxu0 %v2554
        %v2708 = vpop.f32.mrb[0].mxu0
        %v2709 = vadd.f32 0.0, %v2708
        %v2710 = vpop.f32.mrb[0].mxu0
        %2711 = vmatprep.mubr.f32.mxu0 0.0
        %2712 = vmatmul.mubr.f32.gmra.mrb[0].mxu0 %v2555
        %v2713 = vpop.f32.mrb[0].mxu0
        %v2714 = vadd.f32 0.0, %v2713
        %v2715 = vpop.f32.mrb[0].mxu0
        %2716 = vmatprep.mubr.f32.mxu0 0.0
        %2717 = vmatmul.mubr.f32.gmra.mrb[0].mxu0 %v2556
        %v2718 = vpop.f32.mrb[0].mxu0
        %v2719 = vadd.f32 0.0, %v2718
        %v2720 = vpop.f32.mrb[0].mxu0
        %2721 = vmatprep.mubr.f32.mxu0 0.0
        %2722 = vmatmul.mubr.f32.gmra.mrb[0].mxu0 %v2557
        %v2723 = vpop.f32.mrb[0].mxu0
        %v2724 = vadd.f32 0.0, %v2723
        %v2725 = vpop.f32.mrb[0].mxu0
        %2726 = vmatprep.mubr.f32.mxu0 0.0
        %2727 = vmatmul.mubr.f32.gmra.mrb[0].mxu0 %v2558
        %v2728 = vpop.f32.mrb[0].mxu0
        %v2729 = vadd.f32 0.0, %v2728
        %v2730 = vpop.f32.mrb[0].mxu0
        %2731 = vmatprep.mubr.f32.mxu0 0.0
        %2732 = vmatmul.mubr.f32.gmra.mrb[0].mxu0 %v2559
        %v2733 = vpop.f32.mrb[0].mxu0
        %v2734 = vadd.f32 0.0, %v2733
        %v2735 = vpop.f32.mrb[0].mxu0
        %2736 = vmatprep.mubr.f32.mxu0 0.0
        %2737 = vmatmul.mubr.f32.gmra.mrb[0].mxu0 %v2560
        %v2738 = vpop.f32.mrb[0].mxu0
        %v2739 = vadd.f32 0.0, %v2738
        %v2740 = vpop.f32.mrb[0].mxu0
        %2741 = vmatprep.mubr.f32.mxu0 0.0
        %2742 = vmatmul.mubr.f32.gmra.mrb[0].mxu0 %v2561
        %v2743 = vpop.f32.mrb[0].mxu0
        %v2744 = vadd.f32 0.0, %v2743
        %v2745 = vpop.f32.mrb[0].mxu0
        %2746 = vmatprep.mubr.f32.mxu0 0.0
        %2747 = vmatmul.mubr.f32.gmra.mrb[0].mxu0 %v2562
        %v2748 = vpop.f32.mrb[0].mxu0
        %v2749 = vadd.f32 0.0, %v2748
        %v2750 = vpop.f32.mrb[0].mxu0
        %2751 = vmatprep.mubr.f32.mxu0 0.0
        %2752 = vmatmul.mubr.f32.gmra.mrb[0].mxu0 %v2563
        %v2753 = vpop.f32.mrb[0].mxu0
        %v2754 = vadd.f32 0.0, %v2753
        %v2755 = vpop.f32.mrb[0].mxu0
        %2756 = vmatprep.mubr.f32.mxu0 0.0
        %2757 = vmatmul.mubr.f32.gmra.mrb[0].mxu0 %v2564
        %v2758 = vpop.f32.mrb[0].mxu0
        %v2759 = vadd.f32 0.0, %v2758
        %v2760 = vpop.f32.mrb[0].mxu0
        %2761 = vmatprep.mubr.f32.mxu0 0.0
        %2762 = vmatmul.mubr.f32.gmra.mrb[0].mxu0 %v2565
        %v2763 = vpop.f32.mrb[0].mxu0
        %v2764 = vadd.f32 0.0, %v2763
        %v2765 = vpop.f32.mrb[0].mxu0
        %2766 = vmatprep.mubr.f32.mxu0 0.0
        %2767 = vmatmul.mubr.f32.gmra.mrb[0].mxu0 %v2566
        %v2768 = vpop.f32.mrb[0].mxu0
        %v2769 = vadd.f32 0.0, %v2768
        %v2770 = vpop.f32.mrb[0].mxu0
        %2771 = vmatprep.mubr.f32.mxu0 0.0
        %2772 = vmatmul.mubr.f32.gmra.mrb[0].mxu0 %v2567
        %v2773 = vpop.f32.mrb[0].mxu0
        %v2774 = vadd.f32 0.0, %v2773
        %v2775 = vpop.f32.mrb[0].mxu0
        %2776 = vmatprep.mubr.f32.mxu0 0.0
        %2777 = vmatmul.mubr.f32.gmra.mrb[0].mxu0 %v2568
        %v2778 = vpop.f32.mrb[0].mxu0
        %v2779 = vadd.f32 0.0, %v2778
        %v2780 = vpop.f32.mrb[0].mxu0
        %2781 = vmatprep.mubr.f32.mxu0 0.0
        %2782 = vmatmul.mubr.f32.gmra.mrb[0].mxu0 %v2569
        %v2783 = vpop.f32.mrb[0].mxu0
        %v2784 = vadd.f32 0.0, %v2783
        %v2785 = vpop.f32.mrb[0].mxu0
        %2786 = vmatprep.mubr.f32.mxu0 0.0
        %2787 = vmatmul.mubr.f32.gmra.mrb[0].mxu0 %v2570
        %v2788 = vpop.f32.mrb[0].mxu0
        %v2789 = vadd.f32 0.0, %v2788
        %v2790 = vpop.f32.mrb[0].mxu0
        %2791 = vmatprep.mubr.f32.mxu0 0.0
        %2792 = vmatmul.mubr.f32.gmra.mrb[0].mxu0 %v2571
        %v2793 = vpop.f32.mrb[0].mxu0
        %v2794 = vadd.f32 0.0, %v2793
        %v2795 = vpop.f32.mrb[0].mxu0
        %2796 = vmatprep.mubr.f32.mxu0 0.0
        %2797 = vmatmul.mubr.f32.gmra.mrb[0].mxu0 %v2572
        %v2798 = vpop.f32.mrb[0].mxu0
        %v2799 = vadd.f32 0.0, %v2798
        %v2800 = vpop.f32.mrb[0].mxu0
        %2801 = vmatprep.mubr.f32.mxu0 0.0
        %2802 = vmatmul.mubr.f32.gmra.mrb[0].mxu0 %v2573
        %v2803 = vpop.f32.mrb[0].mxu0
        %v2804 = vadd.f32 0.0, %v2803
        %v2805 = vpop.f32.mrb[0].mxu0
        %2806 = vmatprep.mubr.f32.mxu0 0.0
        %2807 = vmatmul.mubr.f32.gmra.mrb[0].mxu0 %v2574
        %v2808 = vpop.f32.mrb[0].mxu0
        %v2809 = vadd.f32 0.0, %v2808
        %v2810 = vpop.f32.mrb[0].mxu0
        %2811 = vmatprep.mubr.f32.mxu0 0.0
        %2812 = vmatmul.mubr.f32.gmra.mrb[0].mxu0 %v2575
        %v2813 = vpop.f32.mrb[0].mxu0
        %v2814 = vadd.f32 0.0, %v2813
        %v2815 = vpop.f32.mrb[0].mxu0
        %2816 = vdwg.mxu0
        %v2817 = vadd.f32 %v2512, %v2659
        %v2818 = vadd.f32 %v2513, %v2664
        %v2819 = vadd.f32 %v2514, %v2669
        %v2820 = vadd.f32 %v2515, %v2674
        %v2821 = vadd.f32 %v2516, %v2679
        %v2822 = vadd.f32 %v2517, %v2684
        %v2823 = vadd.f32 %v2518, %v2689
        %v2824 = vadd.f32 %v2519, %v2694
        %v2825 = vadd.f32 %v2520, %v2699
        %v2826 = vadd.f32 %v2521, %v2704
        %v2827 = vadd.f32 %v2522, %v2709
        %v2828 = vadd.f32 %v2523, %v2714
        %v2829 = vadd.f32 %v2524, %v2719
        %v2830 = vadd.f32 %v2525, %v2724
        %v2831 = vadd.f32 %v2526, %v2729
        %v2832 = vadd.f32 %v2527, %v2734
        %v2833 = vadd.f32 %v2528, %v2739
        %v2834 = vadd.f32 %v2529, %v2744
        %v2835 = vadd.f32 %v2530, %v2749
        %v2836 = vadd.f32 %v2531, %v2754
        %v2837 = vadd.f32 %v2532, %v2759
        %v2838 = vadd.f32 %v2533, %v2764
        %v2839 = vadd.f32 %v2534, %v2769
        %v2840 = vadd.f32 %v2535, %v2774
        %v2841 = vadd.f32 %v2536, %v2779
        %v2842 = vadd.f32 %v2537, %v2784
        %v2843 = vadd.f32 %v2538, %v2789
        %v2844 = vadd.f32 %v2539, %v2794
        %v2845 = vadd.f32 %v2540, %v2799
        %v2846 = vadd.f32 %v2541, %v2804
        %v2847 = vadd.f32 %v2542, %v2809
        %v2848 = vadd.f32 %v2543, %v2814
        %v2849 = vld [vmem:[%s2238 + $0x2] sm:$0xff]
        %v2850 = vld [vmem:[%s2238 + $0xa] sm:$0xff]
        %v2851 = vld [vmem:[%s2238 + $0x1a] sm:$0xff]
        %v2852 = vld [vmem:[%s2238 + $0x22] sm:$0xff]
        %v2853 = vld [vmem:[%s2238 + $0x32] sm:$0xff]
        %v2854 = vld [vmem:[%s2238 + $0x3a] sm:$0xff]
        %v2855 = vld [vmem:[%s2238 + $0x4a] sm:$0xff]
        %v2856 = vld [vmem:[%s2238 + $0x52] sm:$0xff]
        %v2857 = vld [vmem:[%s2238 + $0x62] sm:$0xff]
        %v2858 = vld [vmem:[%s2238 + $0x6a] sm:$0xff]
        %v2859 = vld [vmem:[%s2238 + $0x7a] sm:$0xff]
        %v2860 = vld [vmem:[%s2238 + $0x82] sm:$0xff]
        %v2861 = vld [vmem:[%s2238 + $0x92] sm:$0xff]
        %v2862 = vld [vmem:[%s2238 + $0x9a] sm:$0xff]
        %v2863 = vld [vmem:[%s2238 + $0xaa] sm:$0xff]
        %v2864 = vld [vmem:[%s2238 + $0xb2] sm:$0xff]
        %v2865 = vld [vmem:[%s2238 + $0xc2] sm:$0xff]
        %v2866 = vld [vmem:[%s2238 + $0xca] sm:$0xff]
        %v2867 = vld [vmem:[%s2238 + $0xda] sm:$0xff]
        %v2868 = vld [vmem:[%s2238 + $0xe2] sm:$0xff]
        %v2869 = vld [vmem:[%s2238 + $0xf2] sm:$0xff]
        %v2870 = vld [vmem:[%s2238 + $0xfa] sm:$0xff]
        %v2871 = vld [vmem:[%s2238 + $0x10a] sm:$0xff]
        %v2872 = vld [vmem:[%s2238 + $0x112] sm:$0xff]
        %v2873 = vld [vmem:[%s2238 + $0x122] sm:$0xff]
        %v2874 = vld [vmem:[%s2238 + $0x12a] sm:$0xff]
        %v2875 = vld [vmem:[%s2238 + $0x13a] sm:$0xff]
        %v2876 = vld [vmem:[%s2238 + $0x142] sm:$0xff]
        %v2877 = vld [vmem:[%s2238 + $0x152] sm:$0xff]
        %v2878 = vld [vmem:[%s2238 + $0x15a] sm:$0xff]
        %v2879 = vld [vmem:[%s2238 + $0x16a] sm:$0xff]
        %v2880 = vld [vmem:[%s2238 + $0x172] sm:$0xff]
        %v2881 = vld [vmem:[%s1 + $0x400] sm:$0xff]
        %v2882 = vld [vmem:[%s1 + $0x408] sm:$0xff]
        %v2883 = vld [vmem:[%s1 + $0x410] sm:$0xff]
        %v2884 = vld [vmem:[%s1 + $0x418] sm:$0xff]
        %v2885 = vld [vmem:[%s1 + $0x420] sm:$0xff]
        %v2886 = vld [vmem:[%s1 + $0x428] sm:$0xff]
        %v2887 = vld [vmem:[%s1 + $0x430] sm:$0xff]
        %v2888 = vld [vmem:[%s1 + $0x438] sm:$0xff]
        %v2889 = vld [vmem:[%s1 + $0x440] sm:$0xff]
        %v2890 = vld [vmem:[%s1 + $0x448] sm:$0xff]
        %v2891 = vld [vmem:[%s1 + $0x450] sm:$0xff]
        %v2892 = vld [vmem:[%s1 + $0x458] sm:$0xff]
        %v2893 = vld [vmem:[%s1 + $0x460] sm:$0xff]
        %v2894 = vld [vmem:[%s1 + $0x468] sm:$0xff]
        %v2895 = vld [vmem:[%s1 + $0x470] sm:$0xff]
        %v2896 = vld [vmem:[%s1 + $0x478] sm:$0xff]
        %2897 = vmatprep.subr.mxu0 0.0
        %2898 = vmatpush1.msra.mxu0 %v2881
        %2899 = vmatprep.subr.mxu0 0.0
        %2900 = vmatpush1.msra.mxu0 %v2882
        %2901 = vmatprep.subr.mxu0 0.0
        %2902 = vmatpush1.msra.mxu0 %v2883
        %2903 = vmatprep.subr.mxu0 0.0
        %2904 = vmatpush1.msra.mxu0 %v2884
        %2905 = vmatprep.subr.mxu0 0.0
        %2906 = vmatpush1.msra.mxu0 %v2885
        %2907 = vmatprep.subr.mxu0 0.0
        %2908 = vmatpush1.msra.mxu0 %v2886
        %2909 = vmatprep.subr.mxu0 0.0
        %2910 = vmatpush1.msra.mxu0 %v2887
        %2911 = vmatprep.subr.mxu0 0.0
        %2912 = vmatpush1.msra.mxu0 %v2888
        %2913 = vmatprep.subr.mxu0 0.0
        %2914 = vmatpush1.msra.mxu0 %v2889
        %2915 = vmatprep.subr.mxu0 0.0
        %2916 = vmatpush1.msra.mxu0 %v2890
        %2917 = vmatprep.subr.mxu0 0.0
        %2918 = vmatpush1.msra.mxu0 %v2891
        %2919 = vmatprep.subr.mxu0 0.0
        %2920 = vmatpush1.msra.mxu0 %v2892
        %2921 = vmatprep.subr.mxu0 0.0
        %2922 = vmatpush1.msra.mxu0 %v2893
        %2923 = vmatprep.subr.mxu0 0.0
        %2924 = vmatpush1.msra.mxu0 %v2894
        %2925 = vmatprep.subr.mxu0 0.0
        %2926 = vmatpush1.msra.mxu0 %v2895
        %2927 = vmatprep.subr.mxu0 0.0
        %2928 = vmatpush1.msra.mxu0 %v2896
        %2929 = vmatprep.subr.mxu0 0.0
        %2930 = vmatpush1.msra.mxu0 0.0
        %2931 = vmatprep.subr.mxu0 0.0
        %2932 = vmatpush1.msra.mxu0 0.0
        %2933 = vmatprep.subr.mxu0 0.0
        %2934 = vmatpush1.msra.mxu0 0.0
        %2935 = vmatprep.subr.mxu0 0.0
        %2936 = vmatpush1.msra.mxu0 0.0
        %2937 = vmatprep.subr.mxu0 0.0
        %2938 = vmatpush1.msra.mxu0 0.0
        %2939 = vmatprep.subr.mxu0 0.0
        %2940 = vmatpush1.msra.mxu0 0.0
        %2941 = vmatprep.subr.mxu0 0.0
        %2942 = vmatpush1.msra.mxu0 0.0
        %2943 = vmatprep.subr.mxu0 0.0
        %2944 = vmatpush1.msra.mxu0 0.0
        %2945 = vmatprep.subr.mxu0 0.0
        %2946 = vmatpush1.msra.mxu0 0.0
        %2947 = vmatprep.subr.mxu0 0.0
        %2948 = vmatpush1.msra.mxu0 0.0
        %2949 = vmatprep.subr.mxu0 0.0
        %2950 = vmatpush1.msra.mxu0 0.0
        %2951 = vmatprep.subr.mxu0 0.0
        %2952 = vmatpush1.msra.mxu0 0.0
        %2953 = vmatprep.subr.mxu0 0.0
        %2954 = vmatpush1.msra.mxu0 0.0
        %2955 = vmatprep.subr.mxu0 0.0
        %2956 = vmatpush1.msra.mxu0 0.0
        %2957 = vmatprep.subr.mxu0 0.0
        %2958 = vmatpush1.msra.mxu0 0.0
        %2959 = vmatprep.subr.mxu0 0.0
        %2960 = vmatpush1.msra.mxu0 0.0
        %2961 = vmatprep.mubr.f32.mxu0 0.0
        %2962 = vmatmul.mubr.f32.gmra.mrb[0].mxu0 %v2849
        %v2963 = vpop.f32.mrb[0].mxu0
        %v2964 = vadd.f32 0.0, %v2963
        %v2965 = vpop.f32.mrb[0].mxu0
        %2966 = vmatprep.mubr.f32.mxu0 0.0
        %2967 = vmatmul.mubr.f32.gmra.mrb[0].mxu0 %v2850
        %v2968 = vpop.f32.mrb[0].mxu0
        %v2969 = vadd.f32 0.0, %v2968
        %v2970 = vpop.f32.mrb[0].mxu0
        %2971 = vmatprep.mubr.f32.mxu0 0.0
        %2972 = vmatmul.mubr.f32.gmra.mrb[0].mxu0 %v2851
        %v2973 = vpop.f32.mrb[0].mxu0
        %v2974 = vadd.f32 0.0, %v2973
        %v2975 = vpop.f32.mrb[0].mxu0
        %2976 = vmatprep.mubr.f32.mxu0 0.0
        %2977 = vmatmul.mubr.f32.gmra.mrb[0].mxu0 %v2852
        %v2978 = vpop.f32.mrb[0].mxu0
        %v2979 = vadd.f32 0.0, %v2978
        %v2980 = vpop.f32.mrb[0].mxu0
        %2981 = vmatprep.mubr.f32.mxu0 0.0
        %2982 = vmatmul.mubr.f32.gmra.mrb[0].mxu0 %v2853
        %v2983 = vpop.f32.mrb[0].mxu0
        %v2984 = vadd.f32 0.0, %v2983
        %v2985 = vpop.f32.mrb[0].mxu0
        %2986 = vmatprep.mubr.f32.mxu0 0.0
        %2987 = vmatmul.mubr.f32.gmra.mrb[0].mxu0 %v2854
        %v2988 = vpop.f32.mrb[0].mxu0
        %v2989 = vadd.f32 0.0, %v2988
        %v2990 = vpop.f32.mrb[0].mxu0
        %2991 = vmatprep.mubr.f32.mxu0 0.0
        %2992 = vmatmul.mubr.f32.gmra.mrb[0].mxu0 %v2855
        %v2993 = vpop.f32.mrb[0].mxu0
        %v2994 = vadd.f32 0.0, %v2993
        %v2995 = vpop.f32.mrb[0].mxu0
        %2996 = vmatprep.mubr.f32.mxu0 0.0
        %2997 = vmatmul.mubr.f32.gmra.mrb[0].mxu0 %v2856
        %v2998 = vpop.f32.mrb[0].mxu0
        %v2999 = vadd.f32 0.0, %v2998
        %v3000 = vpop.f32.mrb[0].mxu0
        %3001 = vmatprep.mubr.f32.mxu0 0.0
        %3002 = vmatmul.mubr.f32.gmra.mrb[0].mxu0 %v2857
        %v3003 = vpop.f32.mrb[0].mxu0
        %v3004 = vadd.f32 0.0, %v3003
        %v3005 = vpop.f32.mrb[0].mxu0
        %3006 = vmatprep.mubr.f32.mxu0 0.0
        %3007 = vmatmul.mubr.f32.gmra.mrb[0].mxu0 %v2858
        %v3008 = vpop.f32.mrb[0].mxu0
        %v3009 = vadd.f32 0.0, %v3008
        %v3010 = vpop.f32.mrb[0].mxu0
        %3011 = vmatprep.mubr.f32.mxu0 0.0
        %3012 = vmatmul.mubr.f32.gmra.mrb[0].mxu0 %v2859
        %v3013 = vpop.f32.mrb[0].mxu0
        %v3014 = vadd.f32 0.0, %v3013
        %v3015 = vpop.f32.mrb[0].mxu0
        %3016 = vmatprep.mubr.f32.mxu0 0.0
        %3017 = vmatmul.mubr.f32.gmra.mrb[0].mxu0 %v2860
        %v3018 = vpop.f32.mrb[0].mxu0
        %v3019 = vadd.f32 0.0, %v3018
        %v3020 = vpop.f32.mrb[0].mxu0
        %3021 = vmatprep.mubr.f32.mxu0 0.0
        %3022 = vmatmul.mubr.f32.gmra.mrb[0].mxu0 %v2861
        %v3023 = vpop.f32.mrb[0].mxu0
        %v3024 = vadd.f32 0.0, %v3023
        %v3025 = vpop.f32.mrb[0].mxu0
        %3026 = vmatprep.mubr.f32.mxu0 0.0
        %3027 = vmatmul.mubr.f32.gmra.mrb[0].mxu0 %v2862
        %v3028 = vpop.f32.mrb[0].mxu0
        %v3029 = vadd.f32 0.0, %v3028
        %v3030 = vpop.f32.mrb[0].mxu0
        %3031 = vmatprep.mubr.f32.mxu0 0.0
        %3032 = vmatmul.mubr.f32.gmra.mrb[0].mxu0 %v2863
        %v3033 = vpop.f32.mrb[0].mxu0
        %v3034 = vadd.f32 0.0, %v3033
        %v3035 = vpop.f32.mrb[0].mxu0
        %3036 = vmatprep.mubr.f32.mxu0 0.0
        %3037 = vmatmul.mubr.f32.gmra.mrb[0].mxu0 %v2864
        %v3038 = vpop.f32.mrb[0].mxu0
        %v3039 = vadd.f32 0.0, %v3038
        %v3040 = vpop.f32.mrb[0].mxu0
        %3041 = vmatprep.mubr.f32.mxu0 0.0
        %3042 = vmatmul.mubr.f32.gmra.mrb[0].mxu0 %v2865
        %v3043 = vpop.f32.mrb[0].mxu0
        %v3044 = vadd.f32 0.0, %v3043
        %v3045 = vpop.f32.mrb[0].mxu0
        %3046 = vmatprep.mubr.f32.mxu0 0.0
        %3047 = vmatmul.mubr.f32.gmra.mrb[0].mxu0 %v2866
        %v3048 = vpop.f32.mrb[0].mxu0
        %v3049 = vadd.f32 0.0, %v3048
        %v3050 = vpop.f32.mrb[0].mxu0
        %3051 = vmatprep.mubr.f32.mxu0 0.0
        %3052 = vmatmul.mubr.f32.gmra.mrb[0].mxu0 %v2867
        %v3053 = vpop.f32.mrb[0].mxu0
        %v3054 = vadd.f32 0.0, %v3053
        %v3055 = vpop.f32.mrb[0].mxu0
        %3056 = vmatprep.mubr.f32.mxu0 0.0
        %3057 = vmatmul.mubr.f32.gmra.mrb[0].mxu0 %v2868
        %v3058 = vpop.f32.mrb[0].mxu0
        %v3059 = vadd.f32 0.0, %v3058
        %v3060 = vpop.f32.mrb[0].mxu0
        %3061 = vmatprep.mubr.f32.mxu0 0.0
        %3062 = vmatmul.mubr.f32.gmra.mrb[0].mxu0 %v2869
        %v3063 = vpop.f32.mrb[0].mxu0
        %v3064 = vadd.f32 0.0, %v3063
        %v3065 = vpop.f32.mrb[0].mxu0
        %3066 = vmatprep.mubr.f32.mxu0 0.0
        %3067 = vmatmul.mubr.f32.gmra.mrb[0].mxu0 %v2870
        %v3068 = vpop.f32.mrb[0].mxu0
        %v3069 = vadd.f32 0.0, %v3068
        %v3070 = vpop.f32.mrb[0].mxu0
        %3071 = vmatprep.mubr.f32.mxu0 0.0
        %3072 = vmatmul.mubr.f32.gmra.mrb[0].mxu0 %v2871
        %v3073 = vpop.f32.mrb[0].mxu0
        %v3074 = vadd.f32 0.0, %v3073
        %v3075 = vpop.f32.mrb[0].mxu0
        %3076 = vmatprep.mubr.f32.mxu0 0.0
        %3077 = vmatmul.mubr.f32.gmra.mrb[0].mxu0 %v2872
        %v3078 = vpop.f32.mrb[0].mxu0
        %v3079 = vadd.f32 0.0, %v3078
        %v3080 = vpop.f32.mrb[0].mxu0
        %3081 = vmatprep.mubr.f32.mxu0 0.0
        %3082 = vmatmul.mubr.f32.gmra.mrb[0].mxu0 %v2873
        %v3083 = vpop.f32.mrb[0].mxu0
        %v3084 = vadd.f32 0.0, %v3083
        %v3085 = vpop.f32.mrb[0].mxu0
        %3086 = vmatprep.mubr.f32.mxu0 0.0
        %3087 = vmatmul.mubr.f32.gmra.mrb[0].mxu0 %v2874
        %v3088 = vpop.f32.mrb[0].mxu0
        %v3089 = vadd.f32 0.0, %v3088
        %v3090 = vpop.f32.mrb[0].mxu0
        %3091 = vmatprep.mubr.f32.mxu0 0.0
        %3092 = vmatmul.mubr.f32.gmra.mrb[0].mxu0 %v2875
        %v3093 = vpop.f32.mrb[0].mxu0
        %v3094 = vadd.f32 0.0, %v3093
        %v3095 = vpop.f32.mrb[0].mxu0
        %3096 = vmatprep.mubr.f32.mxu0 0.0
        %3097 = vmatmul.mubr.f32.gmra.mrb[0].mxu0 %v2876
        %v3098 = vpop.f32.mrb[0].mxu0
        %v3099 = vadd.f32 0.0, %v3098
        %v3100 = vpop.f32.mrb[0].mxu0
        %3101 = vmatprep.mubr.f32.mxu0 0.0
        %3102 = vmatmul.mubr.f32.gmra.mrb[0].mxu0 %v2877
        %v3103 = vpop.f32.mrb[0].mxu0
        %v3104 = vadd.f32 0.0, %v3103
        %v3105 = vpop.f32.mrb[0].mxu0
        %3106 = vmatprep.mubr.f32.mxu0 0.0
        %3107 = vmatmul.mubr.f32.gmra.mrb[0].mxu0 %v2878
        %v3108 = vpop.f32.mrb[0].mxu0
        %v3109 = vadd.f32 0.0, %v3108
        %v3110 = vpop.f32.mrb[0].mxu0
        %3111 = vmatprep.mubr.f32.mxu0 0.0
        %3112 = vmatmul.mubr.f32.gmra.mrb[0].mxu0 %v2879
        %v3113 = vpop.f32.mrb[0].mxu0
        %v3114 = vadd.f32 0.0, %v3113
        %v3115 = vpop.f32.mrb[0].mxu0
        %3116 = vmatprep.mubr.f32.mxu0 0.0
        %3117 = vmatmul.mubr.f32.gmra.mrb[0].mxu0 %v2880
        %v3118 = vpop.f32.mrb[0].mxu0
        %v3119 = vadd.f32 0.0, %v3118
        %v3120 = vpop.f32.mrb[0].mxu0
        %3121 = vdwg.mxu0
        %v3122 = vadd.f32 %v2817, %v2964
        %v3123 = vadd.f32 %v2818, %v2969
        %v3124 = vadd.f32 %v2819, %v2974
        %v3125 = vadd.f32 %v2820, %v2979
        %v3126 = vadd.f32 %v2821, %v2984
        %v3127 = vadd.f32 %v2822, %v2989
        %v3128 = vadd.f32 %v2823, %v2994
        %v3129 = vadd.f32 %v2824, %v2999
        %v3130 = vadd.f32 %v2825, %v3004
        %v3131 = vadd.f32 %v2826, %v3009
        %v3132 = vadd.f32 %v2827, %v3014
        %v3133 = vadd.f32 %v2828, %v3019
        %v3134 = vadd.f32 %v2829, %v3024
        %v3135 = vadd.f32 %v2830, %v3029
        %v3136 = vadd.f32 %v2831, %v3034
        %v3137 = vadd.f32 %v2832, %v3039
        %v3138 = vadd.f32 %v2833, %v3044
        %v3139 = vadd.f32 %v2834, %v3049
        %v3140 = vadd.f32 %v2835, %v3054
        %v3141 = vadd.f32 %v2836, %v3059
        %v3142 = vadd.f32 %v2837, %v3064
        %v3143 = vadd.f32 %v2838, %v3069
        %v3144 = vadd.f32 %v2839, %v3074
        %v3145 = vadd.f32 %v2840, %v3079
        %v3146 = vadd.f32 %v2841, %v3084
        %v3147 = vadd.f32 %v2842, %v3089
        %v3148 = vadd.f32 %v2843, %v3094
        %v3149 = vadd.f32 %v2844, %v3099
        %v3150 = vadd.f32 %v2845, %v3104
        %v3151 = vadd.f32 %v2846, %v3109
        %v3152 = vadd.f32 %v2847, %v3114
        %v3153 = vadd.f32 %v2848, %v3119
        %v3154 = vmax.f32 %v3122, 0.0
        %v3155 = vmax.f32 %v3123, 0.0
        %v3156 = vmax.f32 %v3124, 0.0
        %v3157 = vmax.f32 %v3125, 0.0
        %v3158 = vmax.f32 %v3126, 0.0
        %v3159 = vmax.f32 %v3127, 0.0
        %v3160 = vmax.f32 %v3128, 0.0
        %v3161 = vmax.f32 %v3129, 0.0
        %v3162 = vmax.f32 %v3130, 0.0
        %v3163 = vmax.f32 %v3131, 0.0
        %v3164 = vmax.f32 %v3132, 0.0
        %v3165 = vmax.f32 %v3133, 0.0
        %v3166 = vmax.f32 %v3134, 0.0
        %v3167 = vmax.f32 %v3135, 0.0
        %v3168 = vmax.f32 %v3136, 0.0
        %v3169 = vmax.f32 %v3137, 0.0
        %v3170 = vmax.f32 %v3138, 0.0
        %v3171 = vmax.f32 %v3139, 0.0
        %v3172 = vmax.f32 %v3140, 0.0
        %v3173 = vmax.f32 %v3141, 0.0
        %v3174 = vmax.f32 %v3142, 0.0
        %v3175 = vmax.f32 %v3143, 0.0
        %v3176 = vmax.f32 %v3144, 0.0
        %v3177 = vmax.f32 %v3145, 0.0
        %v3178 = vmax.f32 %v3146, 0.0
        %v3179 = vmax.f32 %v3147, 0.0
        %v3180 = vmax.f32 %v3148, 0.0
        %v3181 = vmax.f32 %v3149, 0.0
        %v3182 = vmax.f32 %v3150, 0.0
        %v3183 = vmax.f32 %v3151, 0.0
        %v3184 = vmax.f32 %v3152, 0.0
        %v3185 = vmax.f32 %v3153, 0.0
        %v3186 = vmax.f32 %v3154, %v3156
        %v3187 = vmax.f32 %v3155, %v3157
        %v3188 = vmax.f32 %v3158, %v3160
        %v3189 = vmax.f32 %v3159, %v3161
        %v3190 = vmax.f32 %v3162, %v3164
        %v3191 = vmax.f32 %v3163, %v3165
        %v3192 = vmax.f32 %v3166, %v3168
        %v3193 = vmax.f32 %v3167, %v3169
        %v3194 = vmax.f32 %v3170, %v3172
        %v3195 = vmax.f32 %v3171, %v3173
        %v3196 = vmax.f32 %v3174, %v3176
        %v3197 = vmax.f32 %v3175, %v3177
        %v3198 = vmax.f32 %v3178, %v3180
        %v3199 = vmax.f32 %v3179, %v3181
        %v3200 = vmax.f32 %v3182, %v3184
        %v3201 = vmax.f32 %v3183, %v3185
        %3202 = vst [vmem:[#allocation2] sm:$0xff] %v3186
        %3203 = vst [vmem:[#allocation2 + $0x8] sm:$0xff] %v3187
        %3204 = vst [vmem:[#allocation2 + $0x10] sm:$0xff] %v3188
        %3205 = vst [vmem:[#allocation2 + $0x18] sm:$0xff] %v3189
        %3206 = vst [vmem:[#allocation2 + $0x20] sm:$0xff] %v3190
        %3207 = vst [vmem:[#allocation2 + $0x28] sm:$0xff] %v3191
        %3208 = vst [vmem:[#allocation2 + $0x30] sm:$0xff] %v3192
        %3209 = vst [vmem:[#allocation2 + $0x38] sm:$0xff] %v3193
        %3210 = vst [vmem:[#allocation2 + $0x40] sm:$0xff] %v3194
        %3211 = vst [vmem:[#allocation2 + $0x48] sm:$0xff] %v3195
        %3212 = vst [vmem:[#allocation2 + $0x50] sm:$0xff] %v3196
        %3213 = vst [vmem:[#allocation2 + $0x58] sm:$0xff] %v3197
        %3214 = vst [vmem:[#allocation2 + $0x60] sm:$0xff] %v3198
        %3215 = vst [vmem:[#allocation2 + $0x68] sm:$0xff] %v3199
        %3216 = vst [vmem:[#allocation2 + $0x70] sm:$0xff] %v3200
        %3217 = vst [vmem:[#allocation2 + $0x78] sm:$0xff] %v3201
        %v3218 = vld [vmem:[#allocation2] ss:$2 sm:$0xff]
        %s3219 = scalar_lea.vmem [#allocation2], 16
        %v3220 = vld [vmem:[%s3219] ss:$2 sm:$0xff]
        %s3221 = scalar_lea.vmem [#allocation2], 32
        %v3222 = vld [vmem:[%s3221] ss:$2 sm:$0xff]
        %s3223 = scalar_lea.vmem [#allocation2], 48
        %v3224 = vld [vmem:[%s3223] ss:$2 sm:$0xff]
        %s3225 = scalar_lea.vmem [#allocation2], 64
        %v3226 = vld [vmem:[%s3225] ss:$2 sm:$0xff]
        %s3227 = scalar_lea.vmem [#allocation2], 80
        %v3228 = vld [vmem:[%s3227] ss:$2 sm:$0xff]
        %s3229 = scalar_lea.vmem [#allocation2], 96
        %v3230 = vld [vmem:[%s3229] ss:$2 sm:$0xff]
        %s3231 = scalar_lea.vmem [#allocation2], 112
        %v3232 = vld [vmem:[%s3231] ss:$2 sm:$0xff]
        %s3233 = scalar_lea.vmem [#allocation2], 1
        %v3234 = vld [vmem:[%s3233] ss:$2 sm:$0xff]
        %s3235 = scalar_lea.vmem [#allocation2], 17
        %v3236 = vld [vmem:[%s3235] ss:$2 sm:$0xff]
        %s3237 = scalar_lea.vmem [#allocation2], 33
        %v3238 = vld [vmem:[%s3237] ss:$2 sm:$0xff]
        %s3239 = scalar_lea.vmem [#allocation2], 49
        %v3240 = vld [vmem:[%s3239] ss:$2 sm:$0xff]
        %s3241 = scalar_lea.vmem [#allocation2], 65
        %v3242 = vld [vmem:[%s3241] ss:$2 sm:$0xff]
        %s3243 = scalar_lea.vmem [#allocation2], 81
        %v3244 = vld [vmem:[%s3243] ss:$2 sm:$0xff]
        %s3245 = scalar_lea.vmem [#allocation2], 97
        %v3246 = vld [vmem:[%s3245] ss:$2 sm:$0xff]
        %s3247 = scalar_lea.vmem [#allocation2], 113
        %v3248 = vld [vmem:[%s3247] ss:$2 sm:$0xff]
        %v3249 = vmax.f32 %v3218, %v3234
        %v3250 = vmax.f32 %v3220, %v3236
        %v3251 = vmax.f32 %v3222, %v3238
        %v3252 = vmax.f32 %v3224, %v3240
        %v3253 = vmax.f32 %v3226, %v3242
        %v3254 = vmax.f32 %v3228, %v3244
        %v3255 = vmax.f32 %v3230, %v3246
        %v3256 = vmax.f32 %v3232, %v3248
        %3257 = vst [vmem:[#allocation3] sm:$0xff] 0.0
        %3258 = vst [vmem:[#allocation3 + $0x8] sm:$0x3] 0.0
        %3259 = vst [vmem:[#allocation3 + $0x10] sm:$0xff] 0.0
        %3260 = vst [vmem:[#allocation3 + $0x18] sm:$0x3] 0.0
        %3261 = vst [vmem:[#allocation3 + $0x20] sm:$0xff] 0.0
        %3262 = vst [vmem:[#allocation3 + $0x28] sm:$0x3] 0.0
        %3263 = vst [vmem:[#allocation3 + $0x30] sm:$0xff] 0.0
        %3264 = vst [vmem:[#allocation3 + $0x38] sm:$0x3] 0.0
        %3265 = vst [vmem:[#allocation3 + $0x40] sm:$0xff] 0.0
        %3266 = vst [vmem:[#allocation3 + $0x48] sm:$0x3] 0.0
        %3267 = vst [vmem:[#allocation3 + $0x50] sm:$0xff] 0.0
        %3268 = vst [vmem:[#allocation3 + $0x58] sm:$0x3] 0.0
        %3269 = vst [vmem:[#allocation3 + $0x60] sm:$0xff] 0.0
        %3270 = vst [vmem:[#allocation3 + $0x68] sm:$0x3] 0.0
        %3271 = vst [vmem:[#allocation3 + $0x70] sm:$0xff] 0.0
        %3272 = vst [vmem:[#allocation3 + $0x78] sm:$0x3] 0.0
        %3273 = vst [vmem:[#allocation3 + $0x80] sm:$0xff] 0.0
        %3274 = vst [vmem:[#allocation3 + $0x88] sm:$0x3] 0.0
        %3275 = vst [vmem:[#allocation3 + $0x90] sm:$0xff] 0.0
        %3276 = vst [vmem:[#allocation3 + $0x98] sm:$0x3] 0.0
        %s3277 = scalar_lea.vmem [#allocation3], 16
        %3278 = vst [vmem:[%s3277 + $0x1] sm:$0xff] %v3249
        %3279 = vst [vmem:[%s3277 + $0x11] sm:$0xff] %v3250
        %3280 = vst [vmem:[%s3277 + $0x21] sm:$0xff] %v3251
        %3281 = vst [vmem:[%s3277 + $0x31] sm:$0xff] %v3252
        %3282 = vst [vmem:[%s3277 + $0x41] sm:$0xff] %v3253
        %3283 = vst [vmem:[%s3277 + $0x51] sm:$0xff] %v3254
        %3284 = vst [vmem:[%s3277 + $0x61] sm:$0xff] %v3255
        %3285 = vst [vmem:[%s3277 + $0x71] sm:$0xff] %v3256
        %v3286 = vld [vmem:[#allocation3] sm:$0xff]
        %v3287 = vld [vmem:[#allocation3 + $0x10] sm:$0xff]
        %v3288 = vld [vmem:[#allocation3 + $0x20] sm:$0xff]
        %v3289 = vld [vmem:[#allocation3 + $0x30] sm:$0xff]
        %v3290 = vld [vmem:[#allocation3 + $0x40] sm:$0xff]
        %v3291 = vld [vmem:[#allocation3 + $0x50] sm:$0xff]
        %v3292 = vld [vmem:[#allocation3 + $0x60] sm:$0xff]
        %v3293 = vld [vmem:[#allocation3 + $0x70] sm:$0xff]
        %v3294 = vld [vmem:[#allocation5] sm:$0xff]
        %v3295 = vld [vmem:[#allocation5 + $0x8] sm:$0xff]
        %v3296 = vld [vmem:[#allocation5 + $0x10] sm:$0xff]
        %v3297 = vld [vmem:[#allocation5 + $0x18] sm:$0xff]
        %v3298 = vld [vmem:[#allocation5 + $0x20] sm:$0xff]
        %v3299 = vld [vmem:[#allocation5 + $0x28] sm:$0xff]
        %v3300 = vld [vmem:[#allocation5 + $0x30] sm:$0xff]
        %v3301 = vld [vmem:[#allocation5 + $0x38] sm:$0xff]
        %v3302 = vld [vmem:[#allocation5 + $0x40] sm:$0xff]
        %v3303 = vld [vmem:[#allocation5 + $0x48] sm:$0xff]
        %v3304 = vld [vmem:[#allocation5 + $0x50] sm:$0xff]
        %v3305 = vld [vmem:[#allocation5 + $0x58] sm:$0xff]
        %v3306 = vld [vmem:[#allocation5 + $0x60] sm:$0xff]
        %v3307 = vld [vmem:[#allocation5 + $0x68] sm:$0xff]
        %v3308 = vld [vmem:[#allocation5 + $0x70] sm:$0xff]
        %v3309 = vld [vmem:[#allocation5 + $0x78] sm:$0xff]
        %v3310 = vld [vmem:[#allocation3 + $0x1] sm:$0xff]
        %v3311 = vld [vmem:[#allocation3 + $0x11] sm:$0xff]
        %v3312 = vld [vmem:[#allocation3 + $0x21] sm:$0xff]
        %v3313 = vld [vmem:[#allocation3 + $0x31] sm:$0xff]
        %v3314 = vld [vmem:[#allocation3 + $0x41] sm:$0xff]
        %v3315 = vld [vmem:[#allocation3 + $0x51] sm:$0xff]
        %v3316 = vld [vmem:[#allocation3 + $0x61] sm:$0xff]
        %v3317 = vld [vmem:[#allocation3 + $0x71] sm:$0xff]
        %v3318 = vld [vmem:[#allocation5 + $0x80] sm:$0xff]
        %v3319 = vld [vmem:[#allocation5 + $0x88] sm:$0xff]
        %v3320 = vld [vmem:[#allocation5 + $0x90] sm:$0xff]
        %v3321 = vld [vmem:[#allocation5 + $0x98] sm:$0xff]
        %v3322 = vld [vmem:[#allocation5 + $0xa0] sm:$0xff]
        %v3323 = vld [vmem:[#allocation5 + $0xa8] sm:$0xff]
        %v3324 = vld [vmem:[#allocation5 + $0xb0] sm:$0xff]
        %v3325 = vld [vmem:[#allocation5 + $0xb8] sm:$0xff]
        %v3326 = vld [vmem:[#allocation5 + $0xc0] sm:$0xff]
        %v3327 = vld [vmem:[#allocation5 + $0xc8] sm:$0xff]
        %v3328 = vld [vmem:[#allocation5 + $0xd0] sm:$0xff]
        %v3329 = vld [vmem:[#allocation5 + $0xd8] sm:$0xff]
        %v3330 = vld [vmem:[#allocation5 + $0xe0] sm:$0xff]
        %v3331 = vld [vmem:[#allocation5 + $0xe8] sm:$0xff]
        %v3332 = vld [vmem:[#allocation5 + $0xf0] sm:$0xff]
        %v3333 = vld [vmem:[#allocation5 + $0xf8] sm:$0xff]
        %3334 = vmatprep.subr.mxu0 0.0
        %3335 = vmatpush1.msra.mxu0 %v3318
        %3336 = vmatprep.subr.mxu0 0.0
        %3337 = vmatpush1.msra.mxu0 %v3319
        %3338 = vmatprep.subr.mxu0 0.0
        %3339 = vmatpush1.msra.mxu0 %v3320
        %3340 = vmatprep.subr.mxu0 0.0
        %3341 = vmatpush1.msra.mxu0 %v3321
        %3342 = vmatprep.subr.mxu0 0.0
        %3343 = vmatpush1.msra.mxu0 %v3322
        %3344 = vmatprep.subr.mxu0 0.0
        %3345 = vmatpush1.msra.mxu0 %v3323
        %3346 = vmatprep.subr.mxu0 0.0
        %3347 = vmatpush1.msra.mxu0 %v3324
        %3348 = vmatprep.subr.mxu0 0.0
        %3349 = vmatpush1.msra.mxu0 %v3325
        %3350 = vmatprep.subr.mxu0 0.0
        %3351 = vmatpush1.msra.mxu0 %v3326
        %3352 = vmatprep.subr.mxu0 0.0
        %3353 = vmatpush1.msra.mxu0 %v3327
        %3354 = vmatprep.subr.mxu0 0.0
        %3355 = vmatpush1.msra.mxu0 %v3328
        %3356 = vmatprep.subr.mxu0 0.0
        %3357 = vmatpush1.msra.mxu0 %v3329
        %3358 = vmatprep.subr.mxu0 0.0
        %3359 = vmatpush1.msra.mxu0 %v3330
        %3360 = vmatprep.subr.mxu0 0.0
        %3361 = vmatpush1.msra.mxu0 %v3331
        %3362 = vmatprep.subr.mxu0 0.0
        %3363 = vmatpush1.msra.mxu0 %v3332
        %3364 = vmatprep.subr.mxu0 0.0
        %3365 = vmatpush1.msra.mxu0 %v3333
        %3366 = vmatprep.subr.mxu0 0.0
        %3367 = vmatpush1.msra.mxu0 0.0
        %3368 = vmatprep.subr.mxu0 0.0
        %3369 = vmatpush1.msra.mxu0 0.0
        %3370 = vmatprep.subr.mxu0 0.0
        %3371 = vmatpush1.msra.mxu0 0.0
        %3372 = vmatprep.subr.mxu0 0.0
        %3373 = vmatpush1.msra.mxu0 0.0
        %3374 = vmatprep.subr.mxu0 0.0
        %3375 = vmatpush1.msra.mxu0 0.0
        %3376 = vmatprep.subr.mxu0 0.0
        %3377 = vmatpush1.msra.mxu0 0.0
        %3378 = vmatprep.subr.mxu0 0.0
        %3379 = vmatpush1.msra.mxu0 0.0
        %3380 = vmatprep.subr.mxu0 0.0
        %3381 = vmatpush1.msra.mxu0 0.0
        %3382 = vmatprep.subr.mxu0 0.0
        %3383 = vmatpush1.msra.mxu0 0.0
        %3384 = vmatprep.subr.mxu0 0.0
        %3385 = vmatpush1.msra.mxu0 0.0
        %3386 = vmatprep.subr.mxu0 0.0
        %3387 = vmatpush1.msra.mxu0 0.0
        %3388 = vmatprep.subr.mxu0 0.0
        %3389 = vmatpush1.msra.mxu0 0.0
        %3390 = vmatprep.subr.mxu0 0.0
        %3391 = vmatpush1.msra.mxu0 0.0
        %3392 = vmatprep.subr.mxu0 0.0
        %3393 = vmatpush1.msra.mxu0 0.0
        %3394 = vmatprep.subr.mxu0 0.0
        %3395 = vmatpush1.msra.mxu0 0.0
        %3396 = vmatprep.subr.mxu0 0.0
        %3397 = vmatpush1.msra.mxu0 0.0
        %3398 = vmatprep.mubr.f32.mxu0 0.0
        %3399 = vmatmul.mubr.f32.gmra.mrb[0].mxu0 %v3310
        %v3400 = vpop.f32.mrb[0].mxu0
        %v3401 = vadd.f32 0.0, %v3400
        %v3402 = vpop.f32.mrb[0].mxu0
        %3403 = vmatprep.mubr.f32.mxu0 0.0
        %3404 = vmatmul.mubr.f32.gmra.mrb[0].mxu0 %v3311
        %v3405 = vpop.f32.mrb[0].mxu0
        %v3406 = vadd.f32 0.0, %v3405
        %v3407 = vpop.f32.mrb[0].mxu0
        %3408 = vmatprep.mubr.f32.mxu0 0.0
        %3409 = vmatmul.mubr.f32.gmra.mrb[0].mxu0 %v3312
        %v3410 = vpop.f32.mrb[0].mxu0
        %v3411 = vadd.f32 0.0, %v3410
        %v3412 = vpop.f32.mrb[0].mxu0
        %3413 = vmatprep.mubr.f32.mxu0 0.0
        %3414 = vmatmul.mubr.f32.gmra.mrb[0].mxu0 %v3313
        %v3415 = vpop.f32.mrb[0].mxu0
        %v3416 = vadd.f32 0.0, %v3415
        %v3417 = vpop.f32.mrb[0].mxu0
        %3418 = vmatprep.mubr.f32.mxu0 0.0
        %3419 = vmatmul.mubr.f32.gmra.mrb[0].mxu0 %v3314
        %v3420 = vpop.f32.mrb[0].mxu0
        %v3421 = vadd.f32 0.0, %v3420
        %v3422 = vpop.f32.mrb[0].mxu0
        %3423 = vmatprep.mubr.f32.mxu0 0.0
        %3424 = vmatmul.mubr.f32.gmra.mrb[0].mxu0 %v3315
        %v3425 = vpop.f32.mrb[0].mxu0
        %v3426 = vadd.f32 0.0, %v3425
        %v3427 = vpop.f32.mrb[0].mxu0
        %3428 = vmatprep.mubr.f32.mxu0 0.0
        %3429 = vmatmul.mubr.f32.gmra.mrb[0].mxu0 %v3316
        %v3430 = vpop.f32.mrb[0].mxu0
        %v3431 = vadd.f32 0.0, %v3430
        %v3432 = vpop.f32.mrb[0].mxu0
        %3433 = vmatprep.mubr.f32.mxu0 0.0
        %3434 = vmatmul.mubr.f32.gmra.mrb[0].mxu0 %v3317
        %v3435 = vpop.f32.mrb[0].mxu0
        %v3436 = vadd.f32 0.0, %v3435
        %v3437 = vpop.f32.mrb[0].mxu0
        %3438 = vdwg.mxu0
        %3439 = vmatprep.subr.mxu0 0.0
        %3440 = vmatpush1.msra.mxu0 %v3294
        %3441 = vmatprep.subr.mxu0 0.0
        %3442 = vmatpush1.msra.mxu0 %v3295
        %3443 = vmatprep.subr.mxu0 0.0
        %3444 = vmatpush1.msra.mxu0 %v3296
        %3445 = vmatprep.subr.mxu0 0.0
        %3446 = vmatpush1.msra.mxu0 %v3297
        %3447 = vmatprep.subr.mxu0 0.0
        %3448 = vmatpush1.msra.mxu0 %v3298
        %3449 = vmatprep.subr.mxu0 0.0
        %3450 = vmatpush1.msra.mxu0 %v3299
        %3451 = vmatprep.subr.mxu0 0.0
        %3452 = vmatpush1.msra.mxu0 %v3300
        %3453 = vmatprep.subr.mxu0 0.0
        %3454 = vmatpush1.msra.mxu0 %v3301
        %3455 = vmatprep.subr.mxu0 0.0
        %3456 = vmatpush1.msra.mxu0 %v3302
        %3457 = vmatprep.subr.mxu0 0.0
        %3458 = vmatpush1.msra.mxu0 %v3303
        %3459 = vmatprep.subr.mxu0 0.0
        %3460 = vmatpush1.msra.mxu0 %v3304
        %3461 = vmatprep.subr.mxu0 0.0
        %3462 = vmatpush1.msra.mxu0 %v3305
        %3463 = vmatprep.subr.mxu0 0.0
        %3464 = vmatpush1.msra.mxu0 %v3306
        %3465 = vmatprep.subr.mxu0 0.0
        %3466 = vmatpush1.msra.mxu0 %v3307
        %3467 = vmatprep.subr.mxu0 0.0
        %3468 = vmatpush1.msra.mxu0 %v3308
        %3469 = vmatprep.subr.mxu0 0.0
        %3470 = vmatpush1.msra.mxu0 %v3309
        %3471 = vmatprep.subr.mxu0 0.0
        %3472 = vmatpush1.msra.mxu0 0.0
        %3473 = vmatprep.subr.mxu0 0.0
        %3474 = vmatpush1.msra.mxu0 0.0
        %3475 = vmatprep.subr.mxu0 0.0
        %3476 = vmatpush1.msra.mxu0 0.0
        %3477 = vmatprep.subr.mxu0 0.0
        %3478 = vmatpush1.msra.mxu0 0.0
        %3479 = vmatprep.subr.mxu0 0.0
        %3480 = vmatpush1.msra.mxu0 0.0
        %3481 = vmatprep.subr.mxu0 0.0
        %3482 = vmatpush1.msra.mxu0 0.0
        %3483 = vmatprep.subr.mxu0 0.0
        %3484 = vmatpush1.msra.mxu0 0.0
        %3485 = vmatprep.subr.mxu0 0.0
        %3486 = vmatpush1.msra.mxu0 0.0
        %3487 = vmatprep.subr.mxu0 0.0
        %3488 = vmatpush1.msra.mxu0 0.0
        %3489 = vmatprep.subr.mxu0 0.0
        %3490 = vmatpush1.msra.mxu0 0.0
        %3491 = vmatprep.subr.mxu0 0.0
        %3492 = vmatpush1.msra.mxu0 0.0
        %3493 = vmatprep.subr.mxu0 0.0
        %3494 = vmatpush1.msra.mxu0 0.0
        %3495 = vmatprep.subr.mxu0 0.0
        %3496 = vmatpush1.msra.mxu0 0.0
        %3497 = vmatprep.subr.mxu0 0.0
        %3498 = vmatpush1.msra.mxu0 0.0
        %3499 = vmatprep.subr.mxu0 0.0
        %3500 = vmatpush1.msra.mxu0 0.0
        %3501 = vmatprep.subr.mxu0 0.0
        %3502 = vmatpush1.msra.mxu0 0.0
        %3503 = vmatprep.mubr.f32.mxu0 0.0
        %3504 = vmatmul.mubr.f32.gmra.mrb[0].mxu0 %v3286
        %v3505 = vpop.f32.mrb[0].mxu0
        %v3506 = vadd.f32 %v3401, %v3505
        %v3507 = vpop.f32.mrb[0].mxu0
        %3508 = vmatprep.mubr.f32.mxu0 0.0
        %3509 = vmatmul.mubr.f32.gmra.mrb[0].mxu0 %v3287
        %v3510 = vpop.f32.mrb[0].mxu0
        %v3511 = vadd.f32 %v3406, %v3510
        %v3512 = vpop.f32.mrb[0].mxu0
        %3513 = vmatprep.mubr.f32.mxu0 0.0
        %3514 = vmatmul.mubr.f32.gmra.mrb[0].mxu0 %v3288
        %v3515 = vpop.f32.mrb[0].mxu0
        %v3516 = vadd.f32 %v3411, %v3515
        %v3517 = vpop.f32.mrb[0].mxu0
        %3518 = vmatprep.mubr.f32.mxu0 0.0
        %3519 = vmatmul.mubr.f32.gmra.mrb[0].mxu0 %v3289
        %v3520 = vpop.f32.mrb[0].mxu0
        %v3521 = vadd.f32 %v3416, %v3520
        %v3522 = vpop.f32.mrb[0].mxu0
        %3523 = vmatprep.mubr.f32.mxu0 0.0
        %3524 = vmatmul.mubr.f32.gmra.mrb[0].mxu0 %v3290
        %v3525 = vpop.f32.mrb[0].mxu0
        %v3526 = vadd.f32 %v3421, %v3525
        %v3527 = vpop.f32.mrb[0].mxu0
        %3528 = vmatprep.mubr.f32.mxu0 0.0
        %3529 = vmatmul.mubr.f32.gmra.mrb[0].mxu0 %v3291
        %v3530 = vpop.f32.mrb[0].mxu0
        %v3531 = vadd.f32 %v3426, %v3530
        %v3532 = vpop.f32.mrb[0].mxu0
        %3533 = vmatprep.mubr.f32.mxu0 0.0
        %3534 = vmatmul.mubr.f32.gmra.mrb[0].mxu0 %v3292
        %v3535 = vpop.f32.mrb[0].mxu0
        %v3536 = vadd.f32 %v3431, %v3535
        %v3537 = vpop.f32.mrb[0].mxu0
        %3538 = vmatprep.mubr.f32.mxu0 0.0
        %3539 = vmatmul.mubr.f32.gmra.mrb[0].mxu0 %v3293
        %v3540 = vpop.f32.mrb[0].mxu0
        %v3541 = vadd.f32 %v3436, %v3540
        %v3542 = vpop.f32.mrb[0].mxu0
        %3543 = vdwg.mxu0
        %v3544 = vld [vmem:[#allocation3 + $0x2] sm:$0xff]
        %v3545 = vld [vmem:[#allocation3 + $0x12] sm:$0xff]
        %v3546 = vld [vmem:[#allocation3 + $0x22] sm:$0xff]
        %v3547 = vld [vmem:[#allocation3 + $0x32] sm:$0xff]
        %v3548 = vld [vmem:[#allocation3 + $0x42] sm:$0xff]
        %v3549 = vld [vmem:[#allocation3 + $0x52] sm:$0xff]
        %v3550 = vld [vmem:[#allocation3 + $0x62] sm:$0xff]
        %v3551 = vld [vmem:[#allocation3 + $0x72] sm:$0xff]
        %v3552 = vld [vmem:[#allocation5 + $0x100] sm:$0xff]
        %v3553 = vld [vmem:[#allocation5 + $0x108] sm:$0xff]
        %v3554 = vld [vmem:[#allocation5 + $0x110] sm:$0xff]
        %v3555 = vld [vmem:[#allocation5 + $0x118] sm:$0xff]
        %v3556 = vld [vmem:[#allocation5 + $0x120] sm:$0xff]
        %v3557 = vld [vmem:[#allocation5 + $0x128] sm:$0xff]
        %v3558 = vld [vmem:[#allocation5 + $0x130] sm:$0xff]
        %v3559 = vld [vmem:[#allocation5 + $0x138] sm:$0xff]
        %v3560 = vld [vmem:[#allocation5 + $0x140] sm:$0xff]
        %v3561 = vld [vmem:[#allocation5 + $0x148] sm:$0xff]
        %v3562 = vld [vmem:[#allocation5 + $0x150] sm:$0xff]
        %v3563 = vld [vmem:[#allocation5 + $0x158] sm:$0xff]
        %v3564 = vld [vmem:[#allocation5 + $0x160] sm:$0xff]
        %v3565 = vld [vmem:[#allocation5 + $0x168] sm:$0xff]
        %v3566 = vld [vmem:[#allocation5 + $0x170] sm:$0xff]
        %v3567 = vld [vmem:[#allocation5 + $0x178] sm:$0xff]
        %3568 = vmatprep.subr.mxu0 0.0
        %3569 = vmatpush1.msra.mxu0 %v3552
        %3570 = vmatprep.subr.mxu0 0.0
        %3571 = vmatpush1.msra.mxu0 %v3553
        %3572 = vmatprep.subr.mxu0 0.0
        %3573 = vmatpush1.msra.mxu0 %v3554
        %3574 = vmatprep.subr.mxu0 0.0
        %3575 = vmatpush1.msra.mxu0 %v3555
        %3576 = vmatprep.subr.mxu0 0.0
        %3577 = vmatpush1.msra.mxu0 %v3556
        %3578 = vmatprep.subr.mxu0 0.0
        %3579 = vmatpush1.msra.mxu0 %v3557
        %3580 = vmatprep.subr.mxu0 0.0
        %3581 = vmatpush1.msra.mxu0 %v3558
        %3582 = vmatprep.subr.mxu0 0.0
        %3583 = vmatpush1.msra.mxu0 %v3559
        %3584 = vmatprep.subr.mxu0 0.0
        %3585 = vmatpush1.msra.mxu0 %v3560
        %3586 = vmatprep.subr.mxu0 0.0
        %3587 = vmatpush1.msra.mxu0 %v3561
        %3588 = vmatprep.subr.mxu0 0.0
        %3589 = vmatpush1.msra.mxu0 %v3562
        %3590 = vmatprep.subr.mxu0 0.0
        %3591 = vmatpush1.msra.mxu0 %v3563
        %3592 = vmatprep.subr.mxu0 0.0
        %3593 = vmatpush1.msra.mxu0 %v3564
        %3594 = vmatprep.subr.mxu0 0.0
        %3595 = vmatpush1.msra.mxu0 %v3565
        %3596 = vmatprep.subr.mxu0 0.0
        %3597 = vmatpush1.msra.mxu0 %v3566
        %3598 = vmatprep.subr.mxu0 0.0
        %3599 = vmatpush1.msra.mxu0 %v3567
        %3600 = vmatprep.subr.mxu0 0.0
        %3601 = vmatpush1.msra.mxu0 0.0
        %3602 = vmatprep.subr.mxu0 0.0
        %3603 = vmatpush1.msra.mxu0 0.0
        %3604 = vmatprep.subr.mxu0 0.0
        %3605 = vmatpush1.msra.mxu0 0.0
        %3606 = vmatprep.subr.mxu0 0.0
        %3607 = vmatpush1.msra.mxu0 0.0
        %3608 = vmatprep.subr.mxu0 0.0
        %3609 = vmatpush1.msra.mxu0 0.0
        %3610 = vmatprep.subr.mxu0 0.0
        %3611 = vmatpush1.msra.mxu0 0.0
        %3612 = vmatprep.subr.mxu0 0.0
        %3613 = vmatpush1.msra.mxu0 0.0
        %3614 = vmatprep.subr.mxu0 0.0
        %3615 = vmatpush1.msra.mxu0 0.0
        %3616 = vmatprep.subr.mxu0 0.0
        %3617 = vmatpush1.msra.mxu0 0.0
        %3618 = vmatprep.subr.mxu0 0.0
        %3619 = vmatpush1.msra.mxu0 0.0
        %3620 = vmatprep.subr.mxu0 0.0
        %3621 = vmatpush1.msra.mxu0 0.0
        %3622 = vmatprep.subr.mxu0 0.0
        %3623 = vmatpush1.msra.mxu0 0.0
        %3624 = vmatprep.subr.mxu0 0.0
        %3625 = vmatpush1.msra.mxu0 0.0
        %3626 = vmatprep.subr.mxu0 0.0
        %3627 = vmatpush1.msra.mxu0 0.0
        %3628 = vmatprep.subr.mxu0 0.0
        %3629 = vmatpush1.msra.mxu0 0.0
        %3630 = vmatprep.subr.mxu0 0.0
        %3631 = vmatpush1.msra.mxu0 0.0
        %3632 = vmatprep.mubr.f32.mxu0 0.0
        %3633 = vmatmul.mubr.f32.gmra.mrb[0].mxu0 %v3544
        %v3634 = vpop.f32.mrb[0].mxu0
        %v3635 = vadd.f32 0.0, %v3634
        %v3636 = vpop.f32.mrb[0].mxu0
        %3637 = vmatprep.mubr.f32.mxu0 0.0
        %3638 = vmatmul.mubr.f32.gmra.mrb[0].mxu0 %v3545
        %v3639 = vpop.f32.mrb[0].mxu0
        %v3640 = vadd.f32 0.0, %v3639
        %v3641 = vpop.f32.mrb[0].mxu0
        %3642 = vmatprep.mubr.f32.mxu0 0.0
        %3643 = vmatmul.mubr.f32.gmra.mrb[0].mxu0 %v3546
        %v3644 = vpop.f32.mrb[0].mxu0
        %v3645 = vadd.f32 0.0, %v3644
        %v3646 = vpop.f32.mrb[0].mxu0
        %3647 = vmatprep.mubr.f32.mxu0 0.0
        %3648 = vmatmul.mubr.f32.gmra.mrb[0].mxu0 %v3547
        %v3649 = vpop.f32.mrb[0].mxu0
        %v3650 = vadd.f32 0.0, %v3649
        %v3651 = vpop.f32.mrb[0].mxu0
        %3652 = vmatprep.mubr.f32.mxu0 0.0
        %3653 = vmatmul.mubr.f32.gmra.mrb[0].mxu0 %v3548
        %v3654 = vpop.f32.mrb[0].mxu0
        %v3655 = vadd.f32 0.0, %v3654
        %v3656 = vpop.f32.mrb[0].mxu0
        %3657 = vmatprep.mubr.f32.mxu0 0.0
        %3658 = vmatmul.mubr.f32.gmra.mrb[0].mxu0 %v3549
        %v3659 = vpop.f32.mrb[0].mxu0
        %v3660 = vadd.f32 0.0, %v3659
        %v3661 = vpop.f32.mrb[0].mxu0
        %3662 = vmatprep.mubr.f32.mxu0 0.0
        %3663 = vmatmul.mubr.f32.gmra.mrb[0].mxu0 %v3550
        %v3664 = vpop.f32.mrb[0].mxu0
        %v3665 = vadd.f32 0.0, %v3664
        %v3666 = vpop.f32.mrb[0].mxu0
        %3667 = vmatprep.mubr.f32.mxu0 0.0
        %3668 = vmatmul.mubr.f32.gmra.mrb[0].mxu0 %v3551
        %v3669 = vpop.f32.mrb[0].mxu0
        %v3670 = vadd.f32 0.0, %v3669
        %v3671 = vpop.f32.mrb[0].mxu0
        %3672 = vdwg.mxu0
        %v3673 = vadd.f32 %v3506, %v3635
        %v3674 = vadd.f32 %v3511, %v3640
        %v3675 = vadd.f32 %v3516, %v3645
        %v3676 = vadd.f32 %v3521, %v3650
        %v3677 = vadd.f32 %v3526, %v3655
        %v3678 = vadd.f32 %v3531, %v3660
        %v3679 = vadd.f32 %v3536, %v3665
        %v3680 = vadd.f32 %v3541, %v3670
        %v3681 = vld [vmem:[%s3277] sm:$0xff]
        %v3682 = vld [vmem:[%s3277 + $0x10] sm:$0xff]
        %v3683 = vld [vmem:[%s3277 + $0x20] sm:$0xff]
        %v3684 = vld [vmem:[%s3277 + $0x30] sm:$0xff]
        %v3685 = vld [vmem:[%s3277 + $0x40] sm:$0xff]
        %v3686 = vld [vmem:[%s3277 + $0x50] sm:$0xff]
        %v3687 = vld [vmem:[%s3277 + $0x60] sm:$0xff]
        %v3688 = vld [vmem:[%s3277 + $0x70] sm:$0xff]
        %v3689 = vld [vmem:[#allocation5 + $0x180] sm:$0xff]
        %v3690 = vld [vmem:[#allocation5 + $0x188] sm:$0xff]
        %v3691 = vld [vmem:[#allocation5 + $0x190] sm:$0xff]
        %v3692 = vld [vmem:[#allocation5 + $0x198] sm:$0xff]
        %v3693 = vld [vmem:[#allocation5 + $0x1a0] sm:$0xff]
        %v3694 = vld [vmem:[#allocation5 + $0x1a8] sm:$0xff]
        %v3695 = vld [vmem:[#allocation5 + $0x1b0] sm:$0xff]
        %v3696 = vld [vmem:[#allocation5 + $0x1b8] sm:$0xff]
        %v3697 = vld [vmem:[#allocation5 + $0x1c0] sm:$0xff]
        %v3698 = vld [vmem:[#allocation5 + $0x1c8] sm:$0xff]
        %v3699 = vld [vmem:[#allocation5 + $0x1d0] sm:$0xff]
        %v3700 = vld [vmem:[#allocation5 + $0x1d8] sm:$0xff]
        %v3701 = vld [vmem:[#allocation5 + $0x1e0] sm:$0xff]
        %v3702 = vld [vmem:[#allocation5 + $0x1e8] sm:$0xff]
        %v3703 = vld [vmem:[#allocation5 + $0x1f0] sm:$0xff]
        %v3704 = vld [vmem:[#allocation5 + $0x1f8] sm:$0xff]
        %3705 = vmatprep.subr.mxu0 0.0
        %3706 = vmatpush1.msra.mxu0 %v3689
        %3707 = vmatprep.subr.mxu0 0.0
        %3708 = vmatpush1.msra.mxu0 %v3690
        %3709 = vmatprep.subr.mxu0 0.0
        %3710 = vmatpush1.msra.mxu0 %v3691
        %3711 = vmatprep.subr.mxu0 0.0
        %3712 = vmatpush1.msra.mxu0 %v3692
        %3713 = vmatprep.subr.mxu0 0.0
        %3714 = vmatpush1.msra.mxu0 %v3693
        %3715 = vmatprep.subr.mxu0 0.0
        %3716 = vmatpush1.msra.mxu0 %v3694
        %3717 = vmatprep.subr.mxu0 0.0
        %3718 = vmatpush1.msra.mxu0 %v3695
        %3719 = vmatprep.subr.mxu0 0.0
        %3720 = vmatpush1.msra.mxu0 %v3696
        %3721 = vmatprep.subr.mxu0 0.0
        %3722 = vmatpush1.msra.mxu0 %v3697
        %3723 = vmatprep.subr.mxu0 0.0
        %3724 = vmatpush1.msra.mxu0 %v3698
        %3725 = vmatprep.subr.mxu0 0.0
        %3726 = vmatpush1.msra.mxu0 %v3699
        %3727 = vmatprep.subr.mxu0 0.0
        %3728 = vmatpush1.msra.mxu0 %v3700
        %3729 = vmatprep.subr.mxu0 0.0
        %3730 = vmatpush1.msra.mxu0 %v3701
        %3731 = vmatprep.subr.mxu0 0.0
        %3732 = vmatpush1.msra.mxu0 %v3702
        %3733 = vmatprep.subr.mxu0 0.0
        %3734 = vmatpush1.msra.mxu0 %v3703
        %3735 = vmatprep.subr.mxu0 0.0
        %3736 = vmatpush1.msra.mxu0 %v3704
        %3737 = vmatprep.subr.mxu0 0.0
        %3738 = vmatpush1.msra.mxu0 0.0
        %3739 = vmatprep.subr.mxu0 0.0
        %3740 = vmatpush1.msra.mxu0 0.0
        %3741 = vmatprep.subr.mxu0 0.0
        %3742 = vmatpush1.msra.mxu0 0.0
        %3743 = vmatprep.subr.mxu0 0.0
        %3744 = vmatpush1.msra.mxu0 0.0
        %3745 = vmatprep.subr.mxu0 0.0
        %3746 = vmatpush1.msra.mxu0 0.0
        %3747 = vmatprep.subr.mxu0 0.0
        %3748 = vmatpush1.msra.mxu0 0.0
        %3749 = vmatprep.subr.mxu0 0.0
        %3750 = vmatpush1.msra.mxu0 0.0
        %3751 = vmatprep.subr.mxu0 0.0
        %3752 = vmatpush1.msra.mxu0 0.0
        %3753 = vmatprep.subr.mxu0 0.0
        %3754 = vmatpush1.msra.mxu0 0.0
        %3755 = vmatprep.subr.mxu0 0.0
        %3756 = vmatpush1.msra.mxu0 0.0
        %3757 = vmatprep.subr.mxu0 0.0
        %3758 = vmatpush1.msra.mxu0 0.0
        %3759 = vmatprep.subr.mxu0 0.0
        %3760 = vmatpush1.msra.mxu0 0.0
        %3761 = vmatprep.subr.mxu0 0.0
        %3762 = vmatpush1.msra.mxu0 0.0
        %3763 = vmatprep.subr.mxu0 0.0
        %3764 = vmatpush1.msra.mxu0 0.0
        %3765 = vmatprep.subr.mxu0 0.0
        %3766 = vmatpush1.msra.mxu0 0.0
        %3767 = vmatprep.subr.mxu0 0.0
        %3768 = vmatpush1.msra.mxu0 0.0
        %3769 = vmatprep.mubr.f32.mxu0 0.0
        %3770 = vmatmul.mubr.f32.gmra.mrb[0].mxu0 %v3681
        %v3771 = vpop.f32.mrb[0].mxu0
        %v3772 = vadd.f32 0.0, %v3771
        %v3773 = vpop.f32.mrb[0].mxu0
        %3774 = vmatprep.mubr.f32.mxu0 0.0
        %3775 = vmatmul.mubr.f32.gmra.mrb[0].mxu0 %v3682
        %v3776 = vpop.f32.mrb[0].mxu0
        %v3777 = vadd.f32 0.0, %v3776
        %v3778 = vpop.f32.mrb[0].mxu0
        %3779 = vmatprep.mubr.f32.mxu0 0.0
        %3780 = vmatmul.mubr.f32.gmra.mrb[0].mxu0 %v3683
        %v3781 = vpop.f32.mrb[0].mxu0
        %v3782 = vadd.f32 0.0, %v3781
        %v3783 = vpop.f32.mrb[0].mxu0
        %3784 = vmatprep.mubr.f32.mxu0 0.0
        %3785 = vmatmul.mubr.f32.gmra.mrb[0].mxu0 %v3684
        %v3786 = vpop.f32.mrb[0].mxu0
        %v3787 = vadd.f32 0.0, %v3786
        %v3788 = vpop.f32.mrb[0].mxu0
        %3789 = vmatprep.mubr.f32.mxu0 0.0
        %3790 = vmatmul.mubr.f32.gmra.mrb[0].mxu0 %v3685
        %v3791 = vpop.f32.mrb[0].mxu0
        %v3792 = vadd.f32 0.0, %v3791
        %v3793 = vpop.f32.mrb[0].mxu0
        %3794 = vmatprep.mubr.f32.mxu0 0.0
        %3795 = vmatmul.mubr.f32.gmra.mrb[0].mxu0 %v3686
        %v3796 = vpop.f32.mrb[0].mxu0
        %v3797 = vadd.f32 0.0, %v3796
        %v3798 = vpop.f32.mrb[0].mxu0
        %3799 = vmatprep.mubr.f32.mxu0 0.0
        %3800 = vmatmul.mubr.f32.gmra.mrb[0].mxu0 %v3687
        %v3801 = vpop.f32.mrb[0].mxu0
        %v3802 = vadd.f32 0.0, %v3801
        %v3803 = vpop.f32.mrb[0].mxu0
        %3804 = vmatprep.mubr.f32.mxu0 0.0
        %3805 = vmatmul.mubr.f32.gmra.mrb[0].mxu0 %v3688
        %v3806 = vpop.f32.mrb[0].mxu0
        %v3807 = vadd.f32 0.0, %v3806
        %v3808 = vpop.f32.mrb[0].mxu0
        %3809 = vdwg.mxu0
        %v3810 = vadd.f32 %v3673, %v3772
        %v3811 = vadd.f32 %v3674, %v3777
        %v3812 = vadd.f32 %v3675, %v3782
        %v3813 = vadd.f32 %v3676, %v3787
        %v3814 = vadd.f32 %v3677, %v3792
        %v3815 = vadd.f32 %v3678, %v3797
        %v3816 = vadd.f32 %v3679, %v3802
        %v3817 = vadd.f32 %v3680, %v3807
        %v3818 = vld [vmem:[%s3277 + $0x1] sm:$0xff]
        %v3819 = vld [vmem:[%s3277 + $0x11] sm:$0xff]
        %v3820 = vld [vmem:[%s3277 + $0x21] sm:$0xff]
        %v3821 = vld [vmem:[%s3277 + $0x31] sm:$0xff]
        %v3822 = vld [vmem:[%s3277 + $0x41] sm:$0xff]
        %v3823 = vld [vmem:[%s3277 + $0x51] sm:$0xff]
        %v3824 = vld [vmem:[%s3277 + $0x61] sm:$0xff]
        %v3825 = vld [vmem:[%s3277 + $0x71] sm:$0xff]
        %v3826 = vld [vmem:[#allocation5 + $0x200] sm:$0xff]
        %v3827 = vld [vmem:[#allocation5 + $0x208] sm:$0xff]
        %v3828 = vld [vmem:[#allocation5 + $0x210] sm:$0xff]
        %v3829 = vld [vmem:[#allocation5 + $0x218] sm:$0xff]
        %v3830 = vld [vmem:[#allocation5 + $0x220] sm:$0xff]
        %v3831 = vld [vmem:[#allocation5 + $0x228] sm:$0xff]
        %v3832 = vld [vmem:[#allocation5 + $0x230] sm:$0xff]
        %v3833 = vld [vmem:[#allocation5 + $0x238] sm:$0xff]
        %v3834 = vld [vmem:[#allocation5 + $0x240] sm:$0xff]
        %v3835 = vld [vmem:[#allocation5 + $0x248] sm:$0xff]
        %v3836 = vld [vmem:[#allocation5 + $0x250] sm:$0xff]
        %v3837 = vld [vmem:[#allocation5 + $0x258] sm:$0xff]
        %v3838 = vld [vmem:[#allocation5 + $0x260] sm:$0xff]
        %v3839 = vld [vmem:[#allocation5 + $0x268] sm:$0xff]
        %v3840 = vld [vmem:[#allocation5 + $0x270] sm:$0xff]
        %v3841 = vld [vmem:[#allocation5 + $0x278] sm:$0xff]
        %3842 = vmatprep.subr.mxu0 0.0
        %3843 = vmatpush1.msra.mxu0 %v3826
        %3844 = vmatprep.subr.mxu0 0.0
        %3845 = vmatpush1.msra.mxu0 %v3827
        %3846 = vmatprep.subr.mxu0 0.0
        %3847 = vmatpush1.msra.mxu0 %v3828
        %3848 = vmatprep.subr.mxu0 0.0
        %3849 = vmatpush1.msra.mxu0 %v3829
        %3850 = vmatprep.subr.mxu0 0.0
        %3851 = vmatpush1.msra.mxu0 %v3830
        %3852 = vmatprep.subr.mxu0 0.0
        %3853 = vmatpush1.msra.mxu0 %v3831
        %3854 = vmatprep.subr.mxu0 0.0
        %3855 = vmatpush1.msra.mxu0 %v3832
        %3856 = vmatprep.subr.mxu0 0.0
        %3857 = vmatpush1.msra.mxu0 %v3833
        %3858 = vmatprep.subr.mxu0 0.0
        %3859 = vmatpush1.msra.mxu0 %v3834
        %3860 = vmatprep.subr.mxu0 0.0
        %3861 = vmatpush1.msra.mxu0 %v3835
        %3862 = vmatprep.subr.mxu0 0.0
        %3863 = vmatpush1.msra.mxu0 %v3836
        %3864 = vmatprep.subr.mxu0 0.0
        %3865 = vmatpush1.msra.mxu0 %v3837
        %3866 = vmatprep.subr.mxu0 0.0
        %3867 = vmatpush1.msra.mxu0 %v3838
        %3868 = vmatprep.subr.mxu0 0.0
        %3869 = vmatpush1.msra.mxu0 %v3839
        %3870 = vmatprep.subr.mxu0 0.0
        %3871 = vmatpush1.msra.mxu0 %v3840
        %3872 = vmatprep.subr.mxu0 0.0
        %3873 = vmatpush1.msra.mxu0 %v3841
        %3874 = vmatprep.subr.mxu0 0.0
        %3875 = vmatpush1.msra.mxu0 0.0
        %3876 = vmatprep.subr.mxu0 0.0
        %3877 = vmatpush1.msra.mxu0 0.0
        %3878 = vmatprep.subr.mxu0 0.0
        %3879 = vmatpush1.msra.mxu0 0.0
        %3880 = vmatprep.subr.mxu0 0.0
        %3881 = vmatpush1.msra.mxu0 0.0
        %3882 = vmatprep.subr.mxu0 0.0
        %3883 = vmatpush1.msra.mxu0 0.0
        %3884 = vmatprep.subr.mxu0 0.0
        %3885 = vmatpush1.msra.mxu0 0.0
        %3886 = vmatprep.subr.mxu0 0.0
        %3887 = vmatpush1.msra.mxu0 0.0
        %3888 = vmatprep.subr.mxu0 0.0
        %3889 = vmatpush1.msra.mxu0 0.0
        %3890 = vmatprep.subr.mxu0 0.0
        %3891 = vmatpush1.msra.mxu0 0.0
        %3892 = vmatprep.subr.mxu0 0.0
        %3893 = vmatpush1.msra.mxu0 0.0
        %3894 = vmatprep.subr.mxu0 0.0
        %3895 = vmatpush1.msra.mxu0 0.0
        %3896 = vmatprep.subr.mxu0 0.0
        %3897 = vmatpush1.msra.mxu0 0.0
        %3898 = vmatprep.subr.mxu0 0.0
        %3899 = vmatpush1.msra.mxu0 0.0
        %3900 = vmatprep.subr.mxu0 0.0
        %3901 = vmatpush1.msra.mxu0 0.0
        %3902 = vmatprep.subr.mxu0 0.0
        %3903 = vmatpush1.msra.mxu0 0.0
        %3904 = vmatprep.subr.mxu0 0.0
        %3905 = vmatpush1.msra.mxu0 0.0
        %3906 = vmatprep.mubr.f32.mxu0 0.0
        %3907 = vmatmul.mubr.f32.gmra.mrb[0].mxu0 %v3818
        %v3908 = vpop.f32.mrb[0].mxu0
        %v3909 = vadd.f32 0.0, %v3908
        %v3910 = vpop.f32.mrb[0].mxu0
        %3911 = vmatprep.mubr.f32.mxu0 0.0
        %3912 = vmatmul.mubr.f32.gmra.mrb[0].mxu0 %v3819
        %v3913 = vpop.f32.mrb[0].mxu0
        %v3914 = vadd.f32 0.0, %v3913
        %v3915 = vpop.f32.mrb[0].mxu0
        %3916 = vmatprep.mubr.f32.mxu0 0.0
        %3917 = vmatmul.mubr.f32.gmra.mrb[0].mxu0 %v3820
        %v3918 = vpop.f32.mrb[0].mxu0
        %v3919 = vadd.f32 0.0, %v3918
        %v3920 = vpop.f32.mrb[0].mxu0
        %3921 = vmatprep.mubr.f32.mxu0 0.0
        %3922 = vmatmul.mubr.f32.gmra.mrb[0].mxu0 %v3821
        %v3923 = vpop.f32.mrb[0].mxu0
        %v3924 = vadd.f32 0.0, %v3923
        %v3925 = vpop.f32.mrb[0].mxu0
        %3926 = vmatprep.mubr.f32.mxu0 0.0
        %3927 = vmatmul.mubr.f32.gmra.mrb[0].mxu0 %v3822
        %v3928 = vpop.f32.mrb[0].mxu0
        %v3929 = vadd.f32 0.0, %v3928
        %v3930 = vpop.f32.mrb[0].mxu0
        %3931 = vmatprep.mubr.f32.mxu0 0.0
        %3932 = vmatmul.mubr.f32.gmra.mrb[0].mxu0 %v3823
        %v3933 = vpop.f32.mrb[0].mxu0
        %v3934 = vadd.f32 0.0, %v3933
        %v3935 = vpop.f32.mrb[0].mxu0
        %3936 = vmatprep.mubr.f32.mxu0 0.0
        %3937 = vmatmul.mubr.f32.gmra.mrb[0].mxu0 %v3824
        %v3938 = vpop.f32.mrb[0].mxu0
        %v3939 = vadd.f32 0.0, %v3938
        %v3940 = vpop.f32.mrb[0].mxu0
        %3941 = vmatprep.mubr.f32.mxu0 0.0
        %3942 = vmatmul.mubr.f32.gmra.mrb[0].mxu0 %v3825
        %v3943 = vpop.f32.mrb[0].mxu0
        %v3944 = vadd.f32 0.0, %v3943
        %v3945 = vpop.f32.mrb[0].mxu0
        %3946 = vdwg.mxu0
        %v3947 = vadd.f32 %v3810, %v3909
        %v3948 = vadd.f32 %v3811, %v3914
        %v3949 = vadd.f32 %v3812, %v3919
        %v3950 = vadd.f32 %v3813, %v3924
        %v3951 = vadd.f32 %v3814, %v3929
        %v3952 = vadd.f32 %v3815, %v3934
        %v3953 = vadd.f32 %v3816, %v3939
        %v3954 = vadd.f32 %v3817, %v3944
        %v3955 = vld [vmem:[%s3277 + $0x2] sm:$0xff]
        %v3956 = vld [vmem:[%s3277 + $0x12] sm:$0xff]
        %v3957 = vld [vmem:[%s3277 + $0x22] sm:$0xff]
        %v3958 = vld [vmem:[%s3277 + $0x32] sm:$0xff]
        %v3959 = vld [vmem:[%s3277 + $0x42] sm:$0xff]
        %v3960 = vld [vmem:[%s3277 + $0x52] sm:$0xff]
        %v3961 = vld [vmem:[%s3277 + $0x62] sm:$0xff]
        %v3962 = vld [vmem:[%s3277 + $0x72] sm:$0xff]
        %v3963 = vld [vmem:[#allocation5 + $0x280] sm:$0xff]
        %v3964 = vld [vmem:[#allocation5 + $0x288] sm:$0xff]
        %v3965 = vld [vmem:[#allocation5 + $0x290] sm:$0xff]
        %v3966 = vld [vmem:[#allocation5 + $0x298] sm:$0xff]
        %v3967 = vld [vmem:[#allocation5 + $0x2a0] sm:$0xff]
        %v3968 = vld [vmem:[#allocation5 + $0x2a8] sm:$0xff]
        %v3969 = vld [vmem:[#allocation5 + $0x2b0] sm:$0xff]
        %v3970 = vld [vmem:[#allocation5 + $0x2b8] sm:$0xff]
        %v3971 = vld [vmem:[#allocation5 + $0x2c0] sm:$0xff]
        %v3972 = vld [vmem:[#allocation5 + $0x2c8] sm:$0xff]
        %v3973 = vld [vmem:[#allocation5 + $0x2d0] sm:$0xff]
        %v3974 = vld [vmem:[#allocation5 + $0x2d8] sm:$0xff]
        %v3975 = vld [vmem:[#allocation5 + $0x2e0] sm:$0xff]
        %v3976 = vld [vmem:[#allocation5 + $0x2e8] sm:$0xff]
        %v3977 = vld [vmem:[#allocation5 + $0x2f0] sm:$0xff]
        %v3978 = vld [vmem:[#allocation5 + $0x2f8] sm:$0xff]
        %3979 = vmatprep.subr.mxu0 0.0
        %3980 = vmatpush1.msra.mxu0 %v3963
        %3981 = vmatprep.subr.mxu0 0.0
        %3982 = vmatpush1.msra.mxu0 %v3964
        %3983 = vmatprep.subr.mxu0 0.0
        %3984 = vmatpush1.msra.mxu0 %v3965
        %3985 = vmatprep.subr.mxu0 0.0
        %3986 = vmatpush1.msra.mxu0 %v3966
        %3987 = vmatprep.subr.mxu0 0.0
        %3988 = vmatpush1.msra.mxu0 %v3967
        %3989 = vmatprep.subr.mxu0 0.0
        %3990 = vmatpush1.msra.mxu0 %v3968
        %3991 = vmatprep.subr.mxu0 0.0
        %3992 = vmatpush1.msra.mxu0 %v3969
        %3993 = vmatprep.subr.mxu0 0.0
        %3994 = vmatpush1.msra.mxu0 %v3970
        %3995 = vmatprep.subr.mxu0 0.0
        %3996 = vmatpush1.msra.mxu0 %v3971
        %3997 = vmatprep.subr.mxu0 0.0
        %3998 = vmatpush1.msra.mxu0 %v3972
        %3999 = vmatprep.subr.mxu0 0.0
        %4000 = vmatpush1.msra.mxu0 %v3973
        %4001 = vmatprep.subr.mxu0 0.0
        %4002 = vmatpush1.msra.mxu0 %v3974
        %4003 = vmatprep.subr.mxu0 0.0
        %4004 = vmatpush1.msra.mxu0 %v3975
        %4005 = vmatprep.subr.mxu0 0.0
        %4006 = vmatpush1.msra.mxu0 %v3976
        %4007 = vmatprep.subr.mxu0 0.0
        %4008 = vmatpush1.msra.mxu0 %v3977
        %4009 = vmatprep.subr.mxu0 0.0
        %4010 = vmatpush1.msra.mxu0 %v3978
        %4011 = vmatprep.subr.mxu0 0.0
        %4012 = vmatpush1.msra.mxu0 0.0
        %4013 = vmatprep.subr.mxu0 0.0
        %4014 = vmatpush1.msra.mxu0 0.0
        %4015 = vmatprep.subr.mxu0 0.0
        %4016 = vmatpush1.msra.mxu0 0.0
        %4017 = vmatprep.subr.mxu0 0.0
        %4018 = vmatpush1.msra.mxu0 0.0
        %4019 = vmatprep.subr.mxu0 0.0
        %4020 = vmatpush1.msra.mxu0 0.0
        %4021 = vmatprep.subr.mxu0 0.0
        %4022 = vmatpush1.msra.mxu0 0.0
        %4023 = vmatprep.subr.mxu0 0.0
        %4024 = vmatpush1.msra.mxu0 0.0
        %4025 = vmatprep.subr.mxu0 0.0
        %4026 = vmatpush1.msra.mxu0 0.0
        %4027 = vmatprep.subr.mxu0 0.0
        %4028 = vmatpush1.msra.mxu0 0.0
        %4029 = vmatprep.subr.mxu0 0.0
        %4030 = vmatpush1.msra.mxu0 0.0
        %4031 = vmatprep.subr.mxu0 0.0
        %4032 = vmatpush1.msra.mxu0 0.0
        %4033 = vmatprep.subr.mxu0 0.0
        %4034 = vmatpush1.msra.mxu0 0.0
        %4035 = vmatprep.subr.mxu0 0.0
        %4036 = vmatpush1.msra.mxu0 0.0
        %4037 = vmatprep.subr.mxu0 0.0
        %4038 = vmatpush1.msra.mxu0 0.0
        %4039 = vmatprep.subr.mxu0 0.0
        %4040 = vmatpush1.msra.mxu0 0.0
        %4041 = vmatprep.subr.mxu0 0.0
        %4042 = vmatpush1.msra.mxu0 0.0
        %4043 = vmatprep.mubr.f32.mxu0 0.0
        %4044 = vmatmul.mubr.f32.gmra.mrb[0].mxu0 %v3955
        %v4045 = vpop.f32.mrb[0].mxu0
        %v4046 = vadd.f32 0.0, %v4045
        %v4047 = vpop.f32.mrb[0].mxu0
        %4048 = vmatprep.mubr.f32.mxu0 0.0
        %4049 = vmatmul.mubr.f32.gmra.mrb[0].mxu0 %v3956
        %v4050 = vpop.f32.mrb[0].mxu0
        %v4051 = vadd.f32 0.0, %v4050
        %v4052 = vpop.f32.mrb[0].mxu0
        %4053 = vmatprep.mubr.f32.mxu0 0.0
        %4054 = vmatmul.mubr.f32.gmra.mrb[0].mxu0 %v3957
        %v4055 = vpop.f32.mrb[0].mxu0
        %v4056 = vadd.f32 0.0, %v4055
        %v4057 = vpop.f32.mrb[0].mxu0
        %4058 = vmatprep.mubr.f32.mxu0 0.0
        %4059 = vmatmul.mubr.f32.gmra.mrb[0].mxu0 %v3958
        %v4060 = vpop.f32.mrb[0].mxu0
        %v4061 = vadd.f32 0.0, %v4060
        %v4062 = vpop.f32.mrb[0].mxu0
        %4063 = vmatprep.mubr.f32.mxu0 0.0
        %4064 = vmatmul.mubr.f32.gmra.mrb[0].mxu0 %v3959
        %v4065 = vpop.f32.mrb[0].mxu0
        %v4066 = vadd.f32 0.0, %v4065
        %v4067 = vpop.f32.mrb[0].mxu0
        %4068 = vmatprep.mubr.f32.mxu0 0.0
        %4069 = vmatmul.mubr.f32.gmra.mrb[0].mxu0 %v3960
        %v4070 = vpop.f32.mrb[0].mxu0
        %v4071 = vadd.f32 0.0, %v4070
        %v4072 = vpop.f32.mrb[0].mxu0
        %4073 = vmatprep.mubr.f32.mxu0 0.0
        %4074 = vmatmul.mubr.f32.gmra.mrb[0].mxu0 %v3961
        %v4075 = vpop.f32.mrb[0].mxu0
        %v4076 = vadd.f32 0.0, %v4075
        %v4077 = vpop.f32.mrb[0].mxu0
        %4078 = vmatprep.mubr.f32.mxu0 0.0
        %4079 = vmatmul.mubr.f32.gmra.mrb[0].mxu0 %v3962
        %v4080 = vpop.f32.mrb[0].mxu0
        %v4081 = vadd.f32 0.0, %v4080
        %v4082 = vpop.f32.mrb[0].mxu0
        %4083 = vdwg.mxu0
        %v4084 = vadd.f32 %v3947, %v4046
        %v4085 = vadd.f32 %v3948, %v4051
        %v4086 = vadd.f32 %v3949, %v4056
        %v4087 = vadd.f32 %v3950, %v4061
        %v4088 = vadd.f32 %v3951, %v4066
        %v4089 = vadd.f32 %v3952, %v4071
        %v4090 = vadd.f32 %v3953, %v4076
        %v4091 = vadd.f32 %v3954, %v4081
        %s4092 = scalar_lea.vmem [#allocation3], 32
        %v4093 = vld [vmem:[%s4092] sm:$0xff]
        %v4094 = vld [vmem:[%s4092 + $0x10] sm:$0xff]
        %v4095 = vld [vmem:[%s4092 + $0x20] sm:$0xff]
        %v4096 = vld [vmem:[%s4092 + $0x30] sm:$0xff]
        %v4097 = vld [vmem:[%s4092 + $0x40] sm:$0xff]
        %v4098 = vld [vmem:[%s4092 + $0x50] sm:$0xff]
        %v4099 = vld [vmem:[%s4092 + $0x60] sm:$0xff]
        %v4100 = vld [vmem:[%s4092 + $0x70] sm:$0xff]
        %v4101 = vld [vmem:[#allocation5 + $0x300] sm:$0xff]
        %v4102 = vld [vmem:[#allocation5 + $0x308] sm:$0xff]
        %v4103 = vld [vmem:[#allocation5 + $0x310] sm:$0xff]
        %v4104 = vld [vmem:[#allocation5 + $0x318] sm:$0xff]
        %v4105 = vld [vmem:[#allocation5 + $0x320] sm:$0xff]
        %v4106 = vld [vmem:[#allocation5 + $0x328] sm:$0xff]
        %v4107 = vld [vmem:[#allocation5 + $0x330] sm:$0xff]
        %v4108 = vld [vmem:[#allocation5 + $0x338] sm:$0xff]
        %v4109 = vld [vmem:[#allocation5 + $0x340] sm:$0xff]
        %v4110 = vld [vmem:[#allocation5 + $0x348] sm:$0xff]
        %v4111 = vld [vmem:[#allocation5 + $0x350] sm:$0xff]
        %v4112 = vld [vmem:[#allocation5 + $0x358] sm:$0xff]
        %v4113 = vld [vmem:[#allocation5 + $0x360] sm:$0xff]
        %v4114 = vld [vmem:[#allocation5 + $0x368] sm:$0xff]
        %v4115 = vld [vmem:[#allocation5 + $0x370] sm:$0xff]
        %v4116 = vld [vmem:[#allocation5 + $0x378] sm:$0xff]
        %4117 = vmatprep.subr.mxu0 0.0
        %4118 = vmatpush1.msra.mxu0 %v4101
        %4119 = vmatprep.subr.mxu0 0.0
        %4120 = vmatpush1.msra.mxu0 %v4102
        %4121 = vmatprep.subr.mxu0 0.0
        %4122 = vmatpush1.msra.mxu0 %v4103
        %4123 = vmatprep.subr.mxu0 0.0
        %4124 = vmatpush1.msra.mxu0 %v4104
        %4125 = vmatprep.subr.mxu0 0.0
        %4126 = vmatpush1.msra.mxu0 %v4105
        %4127 = vmatprep.subr.mxu0 0.0
        %4128 = vmatpush1.msra.mxu0 %v4106
        %4129 = vmatprep.subr.mxu0 0.0
        %4130 = vmatpush1.msra.mxu0 %v4107
        %4131 = vmatprep.subr.mxu0 0.0
        %4132 = vmatpush1.msra.mxu0 %v4108
        %4133 = vmatprep.subr.mxu0 0.0
        %4134 = vmatpush1.msra.mxu0 %v4109
        %4135 = vmatprep.subr.mxu0 0.0
        %4136 = vmatpush1.msra.mxu0 %v4110
        %4137 = vmatprep.subr.mxu0 0.0
        %4138 = vmatpush1.msra.mxu0 %v4111
        %4139 = vmatprep.subr.mxu0 0.0
        %4140 = vmatpush1.msra.mxu0 %v4112
        %4141 = vmatprep.subr.mxu0 0.0
        %4142 = vmatpush1.msra.mxu0 %v4113
        %4143 = vmatprep.subr.mxu0 0.0
        %4144 = vmatpush1.msra.mxu0 %v4114
        %4145 = vmatprep.subr.mxu0 0.0
        %4146 = vmatpush1.msra.mxu0 %v4115
        %4147 = vmatprep.subr.mxu0 0.0
        %4148 = vmatpush1.msra.mxu0 %v4116
        %4149 = vmatprep.subr.mxu0 0.0
        %4150 = vmatpush1.msra.mxu0 0.0
        %4151 = vmatprep.subr.mxu0 0.0
        %4152 = vmatpush1.msra.mxu0 0.0
        %4153 = vmatprep.subr.mxu0 0.0
        %4154 = vmatpush1.msra.mxu0 0.0
        %4155 = vmatprep.subr.mxu0 0.0
        %4156 = vmatpush1.msra.mxu0 0.0
        %4157 = vmatprep.subr.mxu0 0.0
        %4158 = vmatpush1.msra.mxu0 0.0
        %4159 = vmatprep.subr.mxu0 0.0
        %4160 = vmatpush1.msra.mxu0 0.0
        %4161 = vmatprep.subr.mxu0 0.0
        %4162 = vmatpush1.msra.mxu0 0.0
        %4163 = vmatprep.subr.mxu0 0.0
        %4164 = vmatpush1.msra.mxu0 0.0
        %4165 = vmatprep.subr.mxu0 0.0
        %4166 = vmatpush1.msra.mxu0 0.0
        %4167 = vmatprep.subr.mxu0 0.0
        %4168 = vmatpush1.msra.mxu0 0.0
        %4169 = vmatprep.subr.mxu0 0.0
        %4170 = vmatpush1.msra.mxu0 0.0
        %4171 = vmatprep.subr.mxu0 0.0
        %4172 = vmatpush1.msra.mxu0 0.0
        %4173 = vmatprep.subr.mxu0 0.0
        %4174 = vmatpush1.msra.mxu0 0.0
        %4175 = vmatprep.subr.mxu0 0.0
        %4176 = vmatpush1.msra.mxu0 0.0
        %4177 = vmatprep.subr.mxu0 0.0
        %4178 = vmatpush1.msra.mxu0 0.0
        %4179 = vmatprep.subr.mxu0 0.0
        %4180 = vmatpush1.msra.mxu0 0.0
        %4181 = vmatprep.mubr.f32.mxu0 0.0
        %4182 = vmatmul.mubr.f32.gmra.mrb[0].mxu0 %v4093
        %v4183 = vpop.f32.mrb[0].mxu0
        %v4184 = vadd.f32 0.0, %v4183
        %v4185 = vpop.f32.mrb[0].mxu0
        %4186 = vmatprep.mubr.f32.mxu0 0.0
        %4187 = vmatmul.mubr.f32.gmra.mrb[0].mxu0 %v4094
        %v4188 = vpop.f32.mrb[0].mxu0
        %v4189 = vadd.f32 0.0, %v4188
        %v4190 = vpop.f32.mrb[0].mxu0
        %4191 = vmatprep.mubr.f32.mxu0 0.0
        %4192 = vmatmul.mubr.f32.gmra.mrb[0].mxu0 %v4095
        %v4193 = vpop.f32.mrb[0].mxu0
        %v4194 = vadd.f32 0.0, %v4193
        %v4195 = vpop.f32.mrb[0].mxu0
        %4196 = vmatprep.mubr.f32.mxu0 0.0
        %4197 = vmatmul.mubr.f32.gmra.mrb[0].mxu0 %v4096
        %v4198 = vpop.f32.mrb[0].mxu0
        %v4199 = vadd.f32 0.0, %v4198
        %v4200 = vpop.f32.mrb[0].mxu0
        %4201 = vmatprep.mubr.f32.mxu0 0.0
        %4202 = vmatmul.mubr.f32.gmra.mrb[0].mxu0 %v4097
        %v4203 = vpop.f32.mrb[0].mxu0
        %v4204 = vadd.f32 0.0, %v4203
        %v4205 = vpop.f32.mrb[0].mxu0
        %4206 = vmatprep.mubr.f32.mxu0 0.0
        %4207 = vmatmul.mubr.f32.gmra.mrb[0].mxu0 %v4098
        %v4208 = vpop.f32.mrb[0].mxu0
        %v4209 = vadd.f32 0.0, %v4208
        %v4210 = vpop.f32.mrb[0].mxu0
        %4211 = vmatprep.mubr.f32.mxu0 0.0
        %4212 = vmatmul.mubr.f32.gmra.mrb[0].mxu0 %v4099
        %v4213 = vpop.f32.mrb[0].mxu0
        %v4214 = vadd.f32 0.0, %v4213
        %v4215 = vpop.f32.mrb[0].mxu0
        %4216 = vmatprep.mubr.f32.mxu0 0.0
        %4217 = vmatmul.mubr.f32.gmra.mrb[0].mxu0 %v4100
        %v4218 = vpop.f32.mrb[0].mxu0
        %v4219 = vadd.f32 0.0, %v4218
        %v4220 = vpop.f32.mrb[0].mxu0
        %4221 = vdwg.mxu0
        %v4222 = vadd.f32 %v4084, %v4184
        %v4223 = vadd.f32 %v4085, %v4189
        %v4224 = vadd.f32 %v4086, %v4194
        %v4225 = vadd.f32 %v4087, %v4199
        %v4226 = vadd.f32 %v4088, %v4204
        %v4227 = vadd.f32 %v4089, %v4209
        %v4228 = vadd.f32 %v4090, %v4214
        %v4229 = vadd.f32 %v4091, %v4219
        %v4230 = vld [vmem:[%s4092 + $0x1] sm:$0xff]
        %v4231 = vld [vmem:[%s4092 + $0x11] sm:$0xff]
        %v4232 = vld [vmem:[%s4092 + $0x21] sm:$0xff]
        %v4233 = vld [vmem:[%s4092 + $0x31] sm:$0xff]
        %v4234 = vld [vmem:[%s4092 + $0x41] sm:$0xff]
        %v4235 = vld [vmem:[%s4092 + $0x51] sm:$0xff]
        %v4236 = vld [vmem:[%s4092 + $0x61] sm:$0xff]
        %v4237 = vld [vmem:[%s4092 + $0x71] sm:$0xff]
        %v4238 = vld [vmem:[#allocation5 + $0x380] sm:$0xff]
        %v4239 = vld [vmem:[#allocation5 + $0x388] sm:$0xff]
        %v4240 = vld [vmem:[#allocation5 + $0x390] sm:$0xff]
        %v4241 = vld [vmem:[#allocation5 + $0x398] sm:$0xff]
        %v4242 = vld [vmem:[#allocation5 + $0x3a0] sm:$0xff]
        %v4243 = vld [vmem:[#allocation5 + $0x3a8] sm:$0xff]
        %v4244 = vld [vmem:[#allocation5 + $0x3b0] sm:$0xff]
        %v4245 = vld [vmem:[#allocation5 + $0x3b8] sm:$0xff]
        %v4246 = vld [vmem:[#allocation5 + $0x3c0] sm:$0xff]
        %v4247 = vld [vmem:[#allocation5 + $0x3c8] sm:$0xff]
        %v4248 = vld [vmem:[#allocation5 + $0x3d0] sm:$0xff]
        %v4249 = vld [vmem:[#allocation5 + $0x3d8] sm:$0xff]
        %v4250 = vld [vmem:[#allocation5 + $0x3e0] sm:$0xff]
        %v4251 = vld [vmem:[#allocation5 + $0x3e8] sm:$0xff]
        %v4252 = vld [vmem:[#allocation5 + $0x3f0] sm:$0xff]
        %v4253 = vld [vmem:[#allocation5 + $0x3f8] sm:$0xff]
        %4254 = vmatprep.subr.mxu0 0.0
        %4255 = vmatpush1.msra.mxu0 %v4238
        %4256 = vmatprep.subr.mxu0 0.0
        %4257 = vmatpush1.msra.mxu0 %v4239
        %4258 = vmatprep.subr.mxu0 0.0
        %4259 = vmatpush1.msra.mxu0 %v4240
        %4260 = vmatprep.subr.mxu0 0.0
        %4261 = vmatpush1.msra.mxu0 %v4241
        %4262 = vmatprep.subr.mxu0 0.0
        %4263 = vmatpush1.msra.mxu0 %v4242
        %4264 = vmatprep.subr.mxu0 0.0
        %4265 = vmatpush1.msra.mxu0 %v4243
        %4266 = vmatprep.subr.mxu0 0.0
        %4267 = vmatpush1.msra.mxu0 %v4244
        %4268 = vmatprep.subr.mxu0 0.0
        %4269 = vmatpush1.msra.mxu0 %v4245
        %4270 = vmatprep.subr.mxu0 0.0
        %4271 = vmatpush1.msra.mxu0 %v4246
        %4272 = vmatprep.subr.mxu0 0.0
        %4273 = vmatpush1.msra.mxu0 %v4247
        %4274 = vmatprep.subr.mxu0 0.0
        %4275 = vmatpush1.msra.mxu0 %v4248
        %4276 = vmatprep.subr.mxu0 0.0
        %4277 = vmatpush1.msra.mxu0 %v4249
        %4278 = vmatprep.subr.mxu0 0.0
        %4279 = vmatpush1.msra.mxu0 %v4250
        %4280 = vmatprep.subr.mxu0 0.0
        %4281 = vmatpush1.msra.mxu0 %v4251
        %4282 = vmatprep.subr.mxu0 0.0
        %4283 = vmatpush1.msra.mxu0 %v4252
        %4284 = vmatprep.subr.mxu0 0.0
        %4285 = vmatpush1.msra.mxu0 %v4253
        %4286 = vmatprep.subr.mxu0 0.0
        %4287 = vmatpush1.msra.mxu0 0.0
        %4288 = vmatprep.subr.mxu0 0.0
        %4289 = vmatpush1.msra.mxu0 0.0
        %4290 = vmatprep.subr.mxu0 0.0
        %4291 = vmatpush1.msra.mxu0 0.0
        %4292 = vmatprep.subr.mxu0 0.0
        %4293 = vmatpush1.msra.mxu0 0.0
        %4294 = vmatprep.subr.mxu0 0.0
        %4295 = vmatpush1.msra.mxu0 0.0
        %4296 = vmatprep.subr.mxu0 0.0
        %4297 = vmatpush1.msra.mxu0 0.0
        %4298 = vmatprep.subr.mxu0 0.0
        %4299 = vmatpush1.msra.mxu0 0.0
        %4300 = vmatprep.subr.mxu0 0.0
        %4301 = vmatpush1.msra.mxu0 0.0
        %4302 = vmatprep.subr.mxu0 0.0
        %4303 = vmatpush1.msra.mxu0 0.0
        %4304 = vmatprep.subr.mxu0 0.0
        %4305 = vmatpush1.msra.mxu0 0.0
        %4306 = vmatprep.subr.mxu0 0.0
        %4307 = vmatpush1.msra.mxu0 0.0
        %4308 = vmatprep.subr.mxu0 0.0
        %4309 = vmatpush1.msra.mxu0 0.0
        %4310 = vmatprep.subr.mxu0 0.0
        %4311 = vmatpush1.msra.mxu0 0.0
        %4312 = vmatprep.subr.mxu0 0.0
        %4313 = vmatpush1.msra.mxu0 0.0
        %4314 = vmatprep.subr.mxu0 0.0
        %4315 = vmatpush1.msra.mxu0 0.0
        %4316 = vmatprep.subr.mxu0 0.0
        %4317 = vmatpush1.msra.mxu0 0.0
        %4318 = vmatprep.mubr.f32.mxu0 0.0
        %4319 = vmatmul.mubr.f32.gmra.mrb[0].mxu0 %v4230
        %v4320 = vpop.f32.mrb[0].mxu0
        %v4321 = vadd.f32 0.0, %v4320
        %v4322 = vpop.f32.mrb[0].mxu0
        %4323 = vmatprep.mubr.f32.mxu0 0.0
        %4324 = vmatmul.mubr.f32.gmra.mrb[0].mxu0 %v4231
        %v4325 = vpop.f32.mrb[0].mxu0
        %v4326 = vadd.f32 0.0, %v4325
        %v4327 = vpop.f32.mrb[0].mxu0
        %4328 = vmatprep.mubr.f32.mxu0 0.0
        %4329 = vmatmul.mubr.f32.gmra.mrb[0].mxu0 %v4232
        %v4330 = vpop.f32.mrb[0].mxu0
        %v4331 = vadd.f32 0.0, %v4330
        %v4332 = vpop.f32.mrb[0].mxu0
        %4333 = vmatprep.mubr.f32.mxu0 0.0
        %4334 = vmatmul.mubr.f32.gmra.mrb[0].mxu0 %v4233
        %v4335 = vpop.f32.mrb[0].mxu0
        %v4336 = vadd.f32 0.0, %v4335
        %v4337 = vpop.f32.mrb[0].mxu0
        %4338 = vmatprep.mubr.f32.mxu0 0.0
        %4339 = vmatmul.mubr.f32.gmra.mrb[0].mxu0 %v4234
        %v4340 = vpop.f32.mrb[0].mxu0
        %v4341 = vadd.f32 0.0, %v4340
        %v4342 = vpop.f32.mrb[0].mxu0
        %4343 = vmatprep.mubr.f32.mxu0 0.0
        %4344 = vmatmul.mubr.f32.gmra.mrb[0].mxu0 %v4235
        %v4345 = vpop.f32.mrb[0].mxu0
        %v4346 = vadd.f32 0.0, %v4345
        %v4347 = vpop.f32.mrb[0].mxu0
        %4348 = vmatprep.mubr.f32.mxu0 0.0
        %4349 = vmatmul.mubr.f32.gmra.mrb[0].mxu0 %v4236
        %v4350 = vpop.f32.mrb[0].mxu0
        %v4351 = vadd.f32 0.0, %v4350
        %v4352 = vpop.f32.mrb[0].mxu0
        %4353 = vmatprep.mubr.f32.mxu0 0.0
        %4354 = vmatmul.mubr.f32.gmra.mrb[0].mxu0 %v4237
        %v4355 = vpop.f32.mrb[0].mxu0
        %v4356 = vadd.f32 0.0, %v4355
        %v4357 = vpop.f32.mrb[0].mxu0
        %4358 = vdwg.mxu0
        %v4359 = vadd.f32 %v4222, %v4321
        %v4360 = vadd.f32 %v4223, %v4326
        %v4361 = vadd.f32 %v4224, %v4331
        %v4362 = vadd.f32 %v4225, %v4336
        %v4363 = vadd.f32 %v4226, %v4341
        %v4364 = vadd.f32 %v4227, %v4346
        %v4365 = vadd.f32 %v4228, %v4351
        %v4366 = vadd.f32 %v4229, %v4356
        %v4367 = vld [vmem:[%s4092 + $0x2] sm:$0xff]
        %v4368 = vld [vmem:[%s4092 + $0x12] sm:$0xff]
        %v4369 = vld [vmem:[%s4092 + $0x22] sm:$0xff]
        %v4370 = vld [vmem:[%s4092 + $0x32] sm:$0xff]
        %v4371 = vld [vmem:[%s4092 + $0x42] sm:$0xff]
        %v4372 = vld [vmem:[%s4092 + $0x52] sm:$0xff]
        %v4373 = vld [vmem:[%s4092 + $0x62] sm:$0xff]
        %v4374 = vld [vmem:[%s4092 + $0x72] sm:$0xff]
        %v4375 = vld [vmem:[#allocation5 + $0x400] sm:$0xff]
        %v4376 = vld [vmem:[#allocation5 + $0x408] sm:$0xff]
        %v4377 = vld [vmem:[#allocation5 + $0x410] sm:$0xff]
        %v4378 = vld [vmem:[#allocation5 + $0x418] sm:$0xff]
        %v4379 = vld [vmem:[#allocation5 + $0x420] sm:$0xff]
        %v4380 = vld [vmem:[#allocation5 + $0x428] sm:$0xff]
        %v4381 = vld [vmem:[#allocation5 + $0x430] sm:$0xff]
        %v4382 = vld [vmem:[#allocation5 + $0x438] sm:$0xff]
        %v4383 = vld [vmem:[#allocation5 + $0x440] sm:$0xff]
        %v4384 = vld [vmem:[#allocation5 + $0x448] sm:$0xff]
        %v4385 = vld [vmem:[#allocation5 + $0x450] sm:$0xff]
        %v4386 = vld [vmem:[#allocation5 + $0x458] sm:$0xff]
        %v4387 = vld [vmem:[#allocation5 + $0x460] sm:$0xff]
        %v4388 = vld [vmem:[#allocation5 + $0x468] sm:$0xff]
        %v4389 = vld [vmem:[#allocation5 + $0x470] sm:$0xff]
        %v4390 = vld [vmem:[#allocation5 + $0x478] sm:$0xff]
        %4391 = vmatprep.subr.mxu0 0.0
        %4392 = vmatpush1.msra.mxu0 %v4375
        %4393 = vmatprep.subr.mxu0 0.0
        %4394 = vmatpush1.msra.mxu0 %v4376
        %4395 = vmatprep.subr.mxu0 0.0
        %4396 = vmatpush1.msra.mxu0 %v4377
        %4397 = vmatprep.subr.mxu0 0.0
        %4398 = vmatpush1.msra.mxu0 %v4378
        %4399 = vmatprep.subr.mxu0 0.0
        %4400 = vmatpush1.msra.mxu0 %v4379
        %4401 = vmatprep.subr.mxu0 0.0
        %4402 = vmatpush1.msra.mxu0 %v4380
        %4403 = vmatprep.subr.mxu0 0.0
        %4404 = vmatpush1.msra.mxu0 %v4381
        %4405 = vmatprep.subr.mxu0 0.0
        %4406 = vmatpush1.msra.mxu0 %v4382
        %4407 = vmatprep.subr.mxu0 0.0
        %4408 = vmatpush1.msra.mxu0 %v4383
        %4409 = vmatprep.subr.mxu0 0.0
        %4410 = vmatpush1.msra.mxu0 %v4384
        %4411 = vmatprep.subr.mxu0 0.0
        %4412 = vmatpush1.msra.mxu0 %v4385
        %4413 = vmatprep.subr.mxu0 0.0
        %4414 = vmatpush1.msra.mxu0 %v4386
        %4415 = vmatprep.subr.mxu0 0.0
        %4416 = vmatpush1.msra.mxu0 %v4387
        %4417 = vmatprep.subr.mxu0 0.0
        %4418 = vmatpush1.msra.mxu0 %v4388
        %4419 = vmatprep.subr.mxu0 0.0
        %4420 = vmatpush1.msra.mxu0 %v4389
        %4421 = vmatprep.subr.mxu0 0.0
        %4422 = vmatpush1.msra.mxu0 %v4390
        %4423 = vmatprep.subr.mxu0 0.0
        %4424 = vmatpush1.msra.mxu0 0.0
        %4425 = vmatprep.subr.mxu0 0.0
        %4426 = vmatpush1.msra.mxu0 0.0
        %4427 = vmatprep.subr.mxu0 0.0
        %4428 = vmatpush1.msra.mxu0 0.0
        %4429 = vmatprep.subr.mxu0 0.0
        %4430 = vmatpush1.msra.mxu0 0.0
        %4431 = vmatprep.subr.mxu0 0.0
        %4432 = vmatpush1.msra.mxu0 0.0
        %4433 = vmatprep.subr.mxu0 0.0
        %4434 = vmatpush1.msra.mxu0 0.0
        %4435 = vmatprep.subr.mxu0 0.0
        %4436 = vmatpush1.msra.mxu0 0.0
        %4437 = vmatprep.subr.mxu0 0.0
        %4438 = vmatpush1.msra.mxu0 0.0
        %4439 = vmatprep.subr.mxu0 0.0
        %4440 = vmatpush1.msra.mxu0 0.0
        %4441 = vmatprep.subr.mxu0 0.0
        %4442 = vmatpush1.msra.mxu0 0.0
        %4443 = vmatprep.subr.mxu0 0.0
        %4444 = vmatpush1.msra.mxu0 0.0
        %4445 = vmatprep.subr.mxu0 0.0
        %4446 = vmatpush1.msra.mxu0 0.0
        %4447 = vmatprep.subr.mxu0 0.0
        %4448 = vmatpush1.msra.mxu0 0.0
        %4449 = vmatprep.subr.mxu0 0.0
        %4450 = vmatpush1.msra.mxu0 0.0
        %4451 = vmatprep.subr.mxu0 0.0
        %4452 = vmatpush1.msra.mxu0 0.0
        %4453 = vmatprep.subr.mxu0 0.0
        %4454 = vmatpush1.msra.mxu0 0.0
        %4455 = vmatprep.mubr.f32.mxu0 0.0
        %4456 = vmatmul.mubr.f32.gmra.mrb[0].mxu0 %v4367
        %v4457 = vpop.f32.mrb[0].mxu0
        %v4458 = vadd.f32 0.0, %v4457
        %v4459 = vpop.f32.mrb[0].mxu0
        %4460 = vmatprep.mubr.f32.mxu0 0.0
        %4461 = vmatmul.mubr.f32.gmra.mrb[0].mxu0 %v4368
        %v4462 = vpop.f32.mrb[0].mxu0
        %v4463 = vadd.f32 0.0, %v4462
        %v4464 = vpop.f32.mrb[0].mxu0
        %4465 = vmatprep.mubr.f32.mxu0 0.0
        %4466 = vmatmul.mubr.f32.gmra.mrb[0].mxu0 %v4369
        %v4467 = vpop.f32.mrb[0].mxu0
        %v4468 = vadd.f32 0.0, %v4467
        %v4469 = vpop.f32.mrb[0].mxu0
        %4470 = vmatprep.mubr.f32.mxu0 0.0
        %4471 = vmatmul.mubr.f32.gmra.mrb[0].mxu0 %v4370
        %v4472 = vpop.f32.mrb[0].mxu0
        %v4473 = vadd.f32 0.0, %v4472
        %v4474 = vpop.f32.mrb[0].mxu0
        %4475 = vmatprep.mubr.f32.mxu0 0.0
        %4476 = vmatmul.mubr.f32.gmra.mrb[0].mxu0 %v4371
        %v4477 = vpop.f32.mrb[0].mxu0
        %v4478 = vadd.f32 0.0, %v4477
        %v4479 = vpop.f32.mrb[0].mxu0
        %4480 = vmatprep.mubr.f32.mxu0 0.0
        %4481 = vmatmul.mubr.f32.gmra.mrb[0].mxu0 %v4372
        %v4482 = vpop.f32.mrb[0].mxu0
        %v4483 = vadd.f32 0.0, %v4482
        %v4484 = vpop.f32.mrb[0].mxu0
        %4485 = vmatprep.mubr.f32.mxu0 0.0
        %4486 = vmatmul.mubr.f32.gmra.mrb[0].mxu0 %v4373
        %v4487 = vpop.f32.mrb[0].mxu0
        %v4488 = vadd.f32 0.0, %v4487
        %v4489 = vpop.f32.mrb[0].mxu0
        %4490 = vmatprep.mubr.f32.mxu0 0.0
        %4491 = vmatmul.mubr.f32.gmra.mrb[0].mxu0 %v4374
        %v4492 = vpop.f32.mrb[0].mxu0
        %v4493 = vadd.f32 0.0, %v4492
        %v4494 = vpop.f32.mrb[0].mxu0
        %4495 = vdwg.mxu0
        %v4496 = vadd.f32 %v4359, %v4458
        %v4497 = vadd.f32 %v4360, %v4463
        %v4498 = vadd.f32 %v4361, %v4468
        %v4499 = vadd.f32 %v4362, %v4473
        %v4500 = vadd.f32 %v4363, %v4478
        %v4501 = vadd.f32 %v4364, %v4483
        %v4502 = vadd.f32 %v4365, %v4488
        %v4503 = vadd.f32 %v4366, %v4493
        %v4504 = vld [vmem:[%s4] sm:$0x1]
        %v4506 = vlaneseq
        %v4507 = vshrl.u32 %v4506, 7
        %v4508 = vsub.s32 0, %v4507
        %v4509 = vrot.slane %v4504, %v4508
        %v4511 = vadd.f32 %v4496, %v4509
        %v4512 = vadd.f32 %v4497, %v4509
        %v4513 = vadd.f32 %v4498, %v4509
        %v4514 = vadd.f32 %v4499, %v4509
        %v4515 = vadd.f32 %v4500, %v4509
        %v4516 = vadd.f32 %v4501, %v4509
        %v4517 = vadd.f32 %v4502, %v4509
        %v4518 = vadd.f32 %v4503, %v4509
        %v4519 = vmax.f32 %v4511, 0.0
        %v4520 = vmax.f32 %v4512, 0.0
        %v4521 = vmax.f32 %v4513, 0.0
        %v4522 = vmax.f32 %v4514, 0.0
        %v4523 = vmax.f32 %v4515, 0.0
        %v4524 = vmax.f32 %v4516, 0.0
        %v4525 = vmax.f32 %v4517, 0.0
        %v4526 = vmax.f32 %v4518, 0.0
        %v4527 = vmax.f32 %v4519, %v4520
        %v4528 = vmax.f32 %v4521, %v4522
        %v4529 = vmax.f32 %v4523, %v4524
        %v4530 = vmax.f32 %v4525, %v4526
        %4531 = vst [vmem:[#allocation4] sm:$0xff] %v4527
        %4532 = vst [vmem:[#allocation4 + $0x8] sm:$0xff] %v4528
        %4533 = vst [vmem:[#allocation4 + $0x10] sm:$0xff] %v4529
        %4534 = vst [vmem:[#allocation4 + $0x18] sm:$0xff] %v4530
        %v4535 = vld [vmem:[#allocation4] ss:$2 sm:$0xff]
        %s4536 = scalar_lea.vmem [#allocation4], 16
        %v4537 = vld [vmem:[%s4536] ss:$2 sm:$0xff]
        %s4538 = scalar_lea.vmem [#allocation4], 1
        %v4539 = vld [vmem:[%s4538] ss:$2 sm:$0xff]
        %s4540 = scalar_lea.vmem [#allocation4], 17
        %v4541 = vld [vmem:[%s4540] ss:$2 sm:$0xff]
        %v4542 = vmax.f32 %v4535, %v4539
        %v4543 = vmax.f32 %v4537, %v4541
        %v4544 = vld [vmem:[%s6] sm:$0x1]
        %v4545 = vld [vmem:[#allocation8] sm:$0xff]
        %v4546 = vld [vmem:[#allocation8 + $0x8] sm:$0xff]
        %v4547 = vld [vmem:[#allocation8 + $0x10] sm:$0xff]
        %v4548 = vld [vmem:[#allocation8 + $0x18] sm:$0xff]
        %v4549 = vld [vmem:[#allocation8 + $0x20] sm:$0xff]
        %v4550 = vld [vmem:[#allocation8 + $0x28] sm:$0xff]
        %v4551 = vld [vmem:[#allocation8 + $0x30] sm:$0xff]
        %v4552 = vld [vmem:[#allocation8 + $0x38] sm:$0xff]
        %v4553 = vld [vmem:[#allocation8 + $0x40] sm:$0xff]
        %v4554 = vld [vmem:[#allocation8 + $0x48] sm:$0xff]
        %v4555 = vld [vmem:[#allocation8 + $0x50] sm:$0xff]
        %v4556 = vld [vmem:[#allocation8 + $0x58] sm:$0xff]
        %v4557 = vld [vmem:[#allocation8 + $0x60] sm:$0xff]
        %v4558 = vld [vmem:[#allocation8 + $0x68] sm:$0xff]
        %v4559 = vld [vmem:[#allocation8 + $0x70] sm:$0xff]
        %v4560 = vld [vmem:[#allocation8 + $0x78] sm:$0xff]
        %4561 = vmatprep.subr.mxu0 0.0
        %4562 = vmatpush1.msra.mxu0 %v4545
        %4563 = vmatprep.subr.mxu0 0.0
        %4564 = vmatpush1.msra.mxu0 %v4546
        %4565 = vmatprep.subr.mxu0 0.0
        %4566 = vmatpush1.msra.mxu0 %v4547
        %4567 = vmatprep.subr.mxu0 0.0
        %4568 = vmatpush1.msra.mxu0 %v4548
        %4569 = vmatprep.subr.mxu0 0.0
        %4570 = vmatpush1.msra.mxu0 %v4549
        %4571 = vmatprep.subr.mxu0 0.0
        %4572 = vmatpush1.msra.mxu0 %v4550
        %4573 = vmatprep.subr.mxu0 0.0
        %4574 = vmatpush1.msra.mxu0 %v4551
        %4575 = vmatprep.subr.mxu0 0.0
        %4576 = vmatpush1.msra.mxu0 %v4552
        %4577 = vmatprep.subr.mxu0 0.0
        %4578 = vmatpush1.msra.mxu0 %v4553
        %4579 = vmatprep.subr.mxu0 0.0
        %4580 = vmatpush1.msra.mxu0 %v4554
        %4581 = vmatprep.subr.mxu0 0.0
        %4582 = vmatpush1.msra.mxu0 %v4555
        %4583 = vmatprep.subr.mxu0 0.0
        %4584 = vmatpush1.msra.mxu0 %v4556
        %4585 = vmatprep.subr.mxu0 0.0
        %4586 = vmatpush1.msra.mxu0 %v4557
        %4587 = vmatprep.subr.mxu0 0.0
        %4588 = vmatpush1.msra.mxu0 %v4558
        %4589 = vmatprep.subr.mxu0 0.0
        %4590 = vmatpush1.msra.mxu0 %v4559
        %4591 = vmatprep.subr.mxu0 0.0
        %4592 = vmatpush1.msra.mxu0 %v4560
        %4593 = vmatprep.subr.mxu0 0.0
        %4594 = vmatpush1.msra.mxu0 0.0
        %4595 = vmatprep.subr.mxu0 0.0
        %4596 = vmatpush1.msra.mxu0 0.0
        %4597 = vmatprep.subr.mxu0 0.0
        %4598 = vmatpush1.msra.mxu0 0.0
        %4599 = vmatprep.subr.mxu0 0.0
        %4600 = vmatpush1.msra.mxu0 0.0
        %4601 = vmatprep.subr.mxu0 0.0
        %4602 = vmatpush1.msra.mxu0 0.0
        %4603 = vmatprep.subr.mxu0 0.0
        %4604 = vmatpush1.msra.mxu0 0.0
        %4605 = vmatprep.subr.mxu0 0.0
        %4606 = vmatpush1.msra.mxu0 0.0
        %4607 = vmatprep.subr.mxu0 0.0
        %4608 = vmatpush1.msra.mxu0 0.0
        %4609 = vmatprep.subr.mxu0 0.0
        %4610 = vmatpush1.msra.mxu0 0.0
        %4611 = vmatprep.subr.mxu0 0.0
        %4612 = vmatpush1.msra.mxu0 0.0
        %4613 = vmatprep.subr.mxu0 0.0
        %4614 = vmatpush1.msra.mxu0 0.0
        %4615 = vmatprep.subr.mxu0 0.0
        %4616 = vmatpush1.msra.mxu0 0.0
        %4617 = vmatprep.subr.mxu0 0.0
        %4618 = vmatpush1.msra.mxu0 0.0
        %4619 = vmatprep.subr.mxu0 0.0
        %4620 = vmatpush1.msra.mxu0 0.0
        %4621 = vmatprep.subr.mxu0 0.0
        %4622 = vmatpush1.msra.mxu0 0.0
        %4623 = vmatprep.subr.mxu0 0.0
        %4624 = vmatpush1.msra.mxu0 0.0
        %4625 = vmatprep.mubr.f32.mxu0 0.0
        %4626 = vmatmul.mubr.f32.gmra.mrb[0].mxu0 %v4542
        %v4627 = vpop.f32.mrb[0].mxu0
        %v4628 = vadd.f32 0.0, %v4627
        %v4629 = vpop.f32.mrb[0].mxu0
        %4630 = vdwg.mxu0
        %v4631 = vadd.f32 %v4544, %v4628
        %s4632 = scalar_lea.vmem [#allocation8], 128
        %v4633 = vld [vmem:[%s4632] sm:$0xff]
        %v4634 = vld [vmem:[%s4632 + $0x8] sm:$0xff]
        %v4635 = vld [vmem:[%s4632 + $0x10] sm:$0xff]
        %v4636 = vld [vmem:[%s4632 + $0x18] sm:$0xff]
        %v4637 = vld [vmem:[%s4632 + $0x20] sm:$0xff]
        %v4638 = vld [vmem:[%s4632 + $0x28] sm:$0xff]
        %v4639 = vld [vmem:[%s4632 + $0x30] sm:$0xff]
        %v4640 = vld [vmem:[%s4632 + $0x38] sm:$0xff]
        %v4641 = vld [vmem:[%s4632 + $0x40] sm:$0xff]
        %v4642 = vld [vmem:[%s4632 + $0x48] sm:$0xff]
        %v4643 = vld [vmem:[%s4632 + $0x50] sm:$0xff]
        %v4644 = vld [vmem:[%s4632 + $0x58] sm:$0xff]
        %v4645 = vld [vmem:[%s4632 + $0x60] sm:$0xff]
        %v4646 = vld [vmem:[%s4632 + $0x68] sm:$0xff]
        %v4647 = vld [vmem:[%s4632 + $0x70] sm:$0xff]
        %v4648 = vld [vmem:[%s4632 + $0x78] sm:$0xff]
        %v4650 = vrot.slane %v4542, 1
        %4652 = vmatprep.subr.mxu0 0.0
        %4653 = vmatpush1.msra.mxu0 %v4633
        %4654 = vmatprep.subr.mxu0 0.0
        %4655 = vmatpush1.msra.mxu0 %v4634
        %4656 = vmatprep.subr.mxu0 0.0
        %4657 = vmatpush1.msra.mxu0 %v4635
        %4658 = vmatprep.subr.mxu0 0.0
        %4659 = vmatpush1.msra.mxu0 %v4636
        %4660 = vmatprep.subr.mxu0 0.0
        %4661 = vmatpush1.msra.mxu0 %v4637
        %4662 = vmatprep.subr.mxu0 0.0
        %4663 = vmatpush1.msra.mxu0 %v4638
        %4664 = vmatprep.subr.mxu0 0.0
        %4665 = vmatpush1.msra.mxu0 %v4639
        %4666 = vmatprep.subr.mxu0 0.0
        %4667 = vmatpush1.msra.mxu0 %v4640
        %4668 = vmatprep.subr.mxu0 0.0
        %4669 = vmatpush1.msra.mxu0 %v4641
        %4670 = vmatprep.subr.mxu0 0.0
        %4671 = vmatpush1.msra.mxu0 %v4642
        %4672 = vmatprep.subr.mxu0 0.0
        %4673 = vmatpush1.msra.mxu0 %v4643
        %4674 = vmatprep.subr.mxu0 0.0
        %4675 = vmatpush1.msra.mxu0 %v4644
        %4676 = vmatprep.subr.mxu0 0.0
        %4677 = vmatpush1.msra.mxu0 %v4645
        %4678 = vmatprep.subr.mxu0 0.0
        %4679 = vmatpush1.msra.mxu0 %v4646
        %4680 = vmatprep.subr.mxu0 0.0
        %4681 = vmatpush1.msra.mxu0 %v4647
        %4682 = vmatprep.subr.mxu0 0.0
        %4683 = vmatpush1.msra.mxu0 %v4648
        %4684 = vmatprep.subr.mxu0 0.0
        %4685 = vmatpush1.msra.mxu0 0.0
        %4686 = vmatprep.subr.mxu0 0.0
        %4687 = vmatpush1.msra.mxu0 0.0
        %4688 = vmatprep.subr.mxu0 0.0
        %4689 = vmatpush1.msra.mxu0 0.0
        %4690 = vmatprep.subr.mxu0 0.0
        %4691 = vmatpush1.msra.mxu0 0.0
        %4692 = vmatprep.subr.mxu0 0.0
        %4693 = vmatpush1.msra.mxu0 0.0
        %4694 = vmatprep.subr.mxu0 0.0
        %4695 = vmatpush1.msra.mxu0 0.0
        %4696 = vmatprep.subr.mxu0 0.0
        %4697 = vmatpush1.msra.mxu0 0.0
        %4698 = vmatprep.subr.mxu0 0.0
        %4699 = vmatpush1.msra.mxu0 0.0
        %4700 = vmatprep.subr.mxu0 0.0
        %4701 = vmatpush1.msra.mxu0 0.0
        %4702 = vmatprep.subr.mxu0 0.0
        %4703 = vmatpush1.msra.mxu0 0.0
        %4704 = vmatprep.subr.mxu0 0.0
        %4705 = vmatpush1.msra.mxu0 0.0
        %4706 = vmatprep.subr.mxu0 0.0
        %4707 = vmatpush1.msra.mxu0 0.0
        %4708 = vmatprep.subr.mxu0 0.0
        %4709 = vmatpush1.msra.mxu0 0.0
        %4710 = vmatprep.subr.mxu0 0.0
        %4711 = vmatpush1.msra.mxu0 0.0
        %4712 = vmatprep.subr.mxu0 0.0
        %4713 = vmatpush1.msra.mxu0 0.0
        %4714 = vmatprep.subr.mxu0 0.0
        %4715 = vmatpush1.msra.mxu0 0.0
        %4716 = vmatprep.mubr.f32.mxu0 0.0
        %4717 = vmatmul.mubr.f32.gmra.mrb[0].mxu0 %v4650
        %v4718 = vpop.f32.mrb[0].mxu0
        %v4719 = vadd.f32 0.0, %v4718
        %v4720 = vpop.f32.mrb[0].mxu0
        %4721 = vdwg.mxu0
        %v4722 = vadd.f32 %v4631, %v4719
        %s4723 = scalar_lea.vmem [#allocation8], 256
        %v4724 = vld [vmem:[%s4723] sm:$0xff]
        %v4725 = vld [vmem:[%s4723 + $0x8] sm:$0xff]
        %v4726 = vld [vmem:[%s4723 + $0x10] sm:$0xff]
        %v4727 = vld [vmem:[%s4723 + $0x18] sm:$0xff]
        %v4728 = vld [vmem:[%s4723 + $0x20] sm:$0xff]
        %v4729 = vld [vmem:[%s4723 + $0x28] sm:$0xff]
        %v4730 = vld [vmem:[%s4723 + $0x30] sm:$0xff]
        %v4731 = vld [vmem:[%s4723 + $0x38] sm:$0xff]
        %v4732 = vld [vmem:[%s4723 + $0x40] sm:$0xff]
        %v4733 = vld [vmem:[%s4723 + $0x48] sm:$0xff]
        %v4734 = vld [vmem:[%s4723 + $0x50] sm:$0xff]
        %v4735 = vld [vmem:[%s4723 + $0x58] sm:$0xff]
        %v4736 = vld [vmem:[%s4723 + $0x60] sm:$0xff]
        %v4737 = vld [vmem:[%s4723 + $0x68] sm:$0xff]
        %v4738 = vld [vmem:[%s4723 + $0x70] sm:$0xff]
        %v4739 = vld [vmem:[%s4723 + $0x78] sm:$0xff]
        %v4740 = vrot.slane %v4542, 2
        %4742 = vmatprep.subr.mxu0 0.0
        %4743 = vmatpush1.msra.mxu0 %v4724
        %4744 = vmatprep.subr.mxu0 0.0
        %4745 = vmatpush1.msra.mxu0 %v4725
        %4746 = vmatprep.subr.mxu0 0.0
        %4747 = vmatpush1.msra.mxu0 %v4726
        %4748 = vmatprep.subr.mxu0 0.0
        %4749 = vmatpush1.msra.mxu0 %v4727
        %4750 = vmatprep.subr.mxu0 0.0
        %4751 = vmatpush1.msra.mxu0 %v4728
        %4752 = vmatprep.subr.mxu0 0.0
        %4753 = vmatpush1.msra.mxu0 %v4729
        %4754 = vmatprep.subr.mxu0 0.0
        %4755 = vmatpush1.msra.mxu0 %v4730
        %4756 = vmatprep.subr.mxu0 0.0
        %4757 = vmatpush1.msra.mxu0 %v4731
        %4758 = vmatprep.subr.mxu0 0.0
        %4759 = vmatpush1.msra.mxu0 %v4732
        %4760 = vmatprep.subr.mxu0 0.0
        %4761 = vmatpush1.msra.mxu0 %v4733
        %4762 = vmatprep.subr.mxu0 0.0
        %4763 = vmatpush1.msra.mxu0 %v4734
        %4764 = vmatprep.subr.mxu0 0.0
        %4765 = vmatpush1.msra.mxu0 %v4735
        %4766 = vmatprep.subr.mxu0 0.0
        %4767 = vmatpush1.msra.mxu0 %v4736
        %4768 = vmatprep.subr.mxu0 0.0
        %4769 = vmatpush1.msra.mxu0 %v4737
        %4770 = vmatprep.subr.mxu0 0.0
        %4771 = vmatpush1.msra.mxu0 %v4738
        %4772 = vmatprep.subr.mxu0 0.0
        %4773 = vmatpush1.msra.mxu0 %v4739
        %4774 = vmatprep.subr.mxu0 0.0
        %4775 = vmatpush1.msra.mxu0 0.0
        %4776 = vmatprep.subr.mxu0 0.0
        %4777 = vmatpush1.msra.mxu0 0.0
        %4778 = vmatprep.subr.mxu0 0.0
        %4779 = vmatpush1.msra.mxu0 0.0
        %4780 = vmatprep.subr.mxu0 0.0
        %4781 = vmatpush1.msra.mxu0 0.0
        %4782 = vmatprep.subr.mxu0 0.0
        %4783 = vmatpush1.msra.mxu0 0.0
        %4784 = vmatprep.subr.mxu0 0.0
        %4785 = vmatpush1.msra.mxu0 0.0
        %4786 = vmatprep.subr.mxu0 0.0
        %4787 = vmatpush1.msra.mxu0 0.0
        %4788 = vmatprep.subr.mxu0 0.0
        %4789 = vmatpush1.msra.mxu0 0.0
        %4790 = vmatprep.subr.mxu0 0.0
        %4791 = vmatpush1.msra.mxu0 0.0
        %4792 = vmatprep.subr.mxu0 0.0
        %4793 = vmatpush1.msra.mxu0 0.0
        %4794 = vmatprep.subr.mxu0 0.0
        %4795 = vmatpush1.msra.mxu0 0.0
        %4796 = vmatprep.subr.mxu0 0.0
        %4797 = vmatpush1.msra.mxu0 0.0
        %4798 = vmatprep.subr.mxu0 0.0
        %4799 = vmatpush1.msra.mxu0 0.0
        %4800 = vmatprep.subr.mxu0 0.0
        %4801 = vmatpush1.msra.mxu0 0.0
        %4802 = vmatprep.subr.mxu0 0.0
        %4803 = vmatpush1.msra.mxu0 0.0
        %4804 = vmatprep.subr.mxu0 0.0
        %4805 = vmatpush1.msra.mxu0 0.0
        %4806 = vmatprep.mubr.f32.mxu0 0.0
        %4807 = vmatmul.mubr.f32.gmra.mrb[0].mxu0 %v4740
        %v4808 = vpop.f32.mrb[0].mxu0
        %v4809 = vadd.f32 0.0, %v4808
        %v4810 = vpop.f32.mrb[0].mxu0
        %4811 = vdwg.mxu0
        %v4812 = vadd.f32 %v4722, %v4809
        %s4813 = scalar_lea.vmem [#allocation8], 384
        %v4814 = vld [vmem:[%s4813] sm:$0xff]
        %v4815 = vld [vmem:[%s4813 + $0x8] sm:$0xff]
        %v4816 = vld [vmem:[%s4813 + $0x10] sm:$0xff]
        %v4817 = vld [vmem:[%s4813 + $0x18] sm:$0xff]
        %v4818 = vld [vmem:[%s4813 + $0x20] sm:$0xff]
        %v4819 = vld [vmem:[%s4813 + $0x28] sm:$0xff]
        %v4820 = vld [vmem:[%s4813 + $0x30] sm:$0xff]
        %v4821 = vld [vmem:[%s4813 + $0x38] sm:$0xff]
        %v4822 = vld [vmem:[%s4813 + $0x40] sm:$0xff]
        %v4823 = vld [vmem:[%s4813 + $0x48] sm:$0xff]
        %v4824 = vld [vmem:[%s4813 + $0x50] sm:$0xff]
        %v4825 = vld [vmem:[%s4813 + $0x58] sm:$0xff]
        %v4826 = vld [vmem:[%s4813 + $0x60] sm:$0xff]
        %v4827 = vld [vmem:[%s4813 + $0x68] sm:$0xff]
        %v4828 = vld [vmem:[%s4813 + $0x70] sm:$0xff]
        %v4829 = vld [vmem:[%s4813 + $0x78] sm:$0xff]
        %v4830 = vrot.slane %v4542, 3
        %4832 = vmatprep.subr.mxu0 0.0
        %4833 = vmatpush1.msra.mxu0 %v4814
        %4834 = vmatprep.subr.mxu0 0.0
        %4835 = vmatpush1.msra.mxu0 %v4815
        %4836 = vmatprep.subr.mxu0 0.0
        %4837 = vmatpush1.msra.mxu0 %v4816
        %4838 = vmatprep.subr.mxu0 0.0
        %4839 = vmatpush1.msra.mxu0 %v4817
        %4840 = vmatprep.subr.mxu0 0.0
        %4841 = vmatpush1.msra.mxu0 %v4818
        %4842 = vmatprep.subr.mxu0 0.0
        %4843 = vmatpush1.msra.mxu0 %v4819
        %4844 = vmatprep.subr.mxu0 0.0
        %4845 = vmatpush1.msra.mxu0 %v4820
        %4846 = vmatprep.subr.mxu0 0.0
        %4847 = vmatpush1.msra.mxu0 %v4821
        %4848 = vmatprep.subr.mxu0 0.0
        %4849 = vmatpush1.msra.mxu0 %v4822
        %4850 = vmatprep.subr.mxu0 0.0
        %4851 = vmatpush1.msra.mxu0 %v4823
        %4852 = vmatprep.subr.mxu0 0.0
        %4853 = vmatpush1.msra.mxu0 %v4824
        %4854 = vmatprep.subr.mxu0 0.0
        %4855 = vmatpush1.msra.mxu0 %v4825
        %4856 = vmatprep.subr.mxu0 0.0
        %4857 = vmatpush1.msra.mxu0 %v4826
        %4858 = vmatprep.subr.mxu0 0.0
        %4859 = vmatpush1.msra.mxu0 %v4827
        %4860 = vmatprep.subr.mxu0 0.0
        %4861 = vmatpush1.msra.mxu0 %v4828
        %4862 = vmatprep.subr.mxu0 0.0
        %4863 = vmatpush1.msra.mxu0 %v4829
        %4864 = vmatprep.subr.mxu0 0.0
        %4865 = vmatpush1.msra.mxu0 0.0
        %4866 = vmatprep.subr.mxu0 0.0
        %4867 = vmatpush1.msra.mxu0 0.0
        %4868 = vmatprep.subr.mxu0 0.0
        %4869 = vmatpush1.msra.mxu0 0.0
        %4870 = vmatprep.subr.mxu0 0.0
        %4871 = vmatpush1.msra.mxu0 0.0
        %4872 = vmatprep.subr.mxu0 0.0
        %4873 = vmatpush1.msra.mxu0 0.0
        %4874 = vmatprep.subr.mxu0 0.0
        %4875 = vmatpush1.msra.mxu0 0.0
        %4876 = vmatprep.subr.mxu0 0.0
        %4877 = vmatpush1.msra.mxu0 0.0
        %4878 = vmatprep.subr.mxu0 0.0
        %4879 = vmatpush1.msra.mxu0 0.0
        %4880 = vmatprep.subr.mxu0 0.0
        %4881 = vmatpush1.msra.mxu0 0.0
        %4882 = vmatprep.subr.mxu0 0.0
        %4883 = vmatpush1.msra.mxu0 0.0
        %4884 = vmatprep.subr.mxu0 0.0
        %4885 = vmatpush1.msra.mxu0 0.0
        %4886 = vmatprep.subr.mxu0 0.0
        %4887 = vmatpush1.msra.mxu0 0.0
        %4888 = vmatprep.subr.mxu0 0.0
        %4889 = vmatpush1.msra.mxu0 0.0
        %4890 = vmatprep.subr.mxu0 0.0
        %4891 = vmatpush1.msra.mxu0 0.0
        %4892 = vmatprep.subr.mxu0 0.0
        %4893 = vmatpush1.msra.mxu0 0.0
        %4894 = vmatprep.subr.mxu0 0.0
        %4895 = vmatpush1.msra.mxu0 0.0
        %4896 = vmatprep.mubr.f32.mxu0 0.0
        %4897 = vmatmul.mubr.f32.gmra.mrb[0].mxu0 %v4830
        %v4898 = vpop.f32.mrb[0].mxu0
        %v4899 = vadd.f32 0.0, %v4898
        %v4900 = vpop.f32.mrb[0].mxu0
        %4901 = vdwg.mxu0
        %v4902 = vadd.f32 %v4812, %v4899
        %s4903 = scalar_lea.vmem [#allocation8], 512
        %v4904 = vld [vmem:[%s4903] sm:$0xff]
        %v4905 = vld [vmem:[%s4903 + $0x8] sm:$0xff]
        %v4906 = vld [vmem:[%s4903 + $0x10] sm:$0xff]
        %v4907 = vld [vmem:[%s4903 + $0x18] sm:$0xff]
        %v4908 = vld [vmem:[%s4903 + $0x20] sm:$0xff]
        %v4909 = vld [vmem:[%s4903 + $0x28] sm:$0xff]
        %v4910 = vld [vmem:[%s4903 + $0x30] sm:$0xff]
        %v4911 = vld [vmem:[%s4903 + $0x38] sm:$0xff]
        %v4912 = vld [vmem:[%s4903 + $0x40] sm:$0xff]
        %v4913 = vld [vmem:[%s4903 + $0x48] sm:$0xff]
        %v4914 = vld [vmem:[%s4903 + $0x50] sm:$0xff]
        %v4915 = vld [vmem:[%s4903 + $0x58] sm:$0xff]
        %v4916 = vld [vmem:[%s4903 + $0x60] sm:$0xff]
        %v4917 = vld [vmem:[%s4903 + $0x68] sm:$0xff]
        %v4918 = vld [vmem:[%s4903 + $0x70] sm:$0xff]
        %v4919 = vld [vmem:[%s4903 + $0x78] sm:$0xff]
        %v4920 = vrot.slane %v4542, 4
        %4922 = vmatprep.subr.mxu0 0.0
        %4923 = vmatpush1.msra.mxu0 %v4904
        %4924 = vmatprep.subr.mxu0 0.0
        %4925 = vmatpush1.msra.mxu0 %v4905
        %4926 = vmatprep.subr.mxu0 0.0
        %4927 = vmatpush1.msra.mxu0 %v4906
        %4928 = vmatprep.subr.mxu0 0.0
        %4929 = vmatpush1.msra.mxu0 %v4907
        %4930 = vmatprep.subr.mxu0 0.0
        %4931 = vmatpush1.msra.mxu0 %v4908
        %4932 = vmatprep.subr.mxu0 0.0
        %4933 = vmatpush1.msra.mxu0 %v4909
        %4934 = vmatprep.subr.mxu0 0.0
        %4935 = vmatpush1.msra.mxu0 %v4910
        %4936 = vmatprep.subr.mxu0 0.0
        %4937 = vmatpush1.msra.mxu0 %v4911
        %4938 = vmatprep.subr.mxu0 0.0
        %4939 = vmatpush1.msra.mxu0 %v4912
        %4940 = vmatprep.subr.mxu0 0.0
        %4941 = vmatpush1.msra.mxu0 %v4913
        %4942 = vmatprep.subr.mxu0 0.0
        %4943 = vmatpush1.msra.mxu0 %v4914
        %4944 = vmatprep.subr.mxu0 0.0
        %4945 = vmatpush1.msra.mxu0 %v4915
        %4946 = vmatprep.subr.mxu0 0.0
        %4947 = vmatpush1.msra.mxu0 %v4916
        %4948 = vmatprep.subr.mxu0 0.0
        %4949 = vmatpush1.msra.mxu0 %v4917
        %4950 = vmatprep.subr.mxu0 0.0
        %4951 = vmatpush1.msra.mxu0 %v4918
        %4952 = vmatprep.subr.mxu0 0.0
        %4953 = vmatpush1.msra.mxu0 %v4919
        %4954 = vmatprep.subr.mxu0 0.0
        %4955 = vmatpush1.msra.mxu0 0.0
        %4956 = vmatprep.subr.mxu0 0.0
        %4957 = vmatpush1.msra.mxu0 0.0
        %4958 = vmatprep.subr.mxu0 0.0
        %4959 = vmatpush1.msra.mxu0 0.0
        %4960 = vmatprep.subr.mxu0 0.0
        %4961 = vmatpush1.msra.mxu0 0.0
        %4962 = vmatprep.subr.mxu0 0.0
        %4963 = vmatpush1.msra.mxu0 0.0
        %4964 = vmatprep.subr.mxu0 0.0
        %4965 = vmatpush1.msra.mxu0 0.0
        %4966 = vmatprep.subr.mxu0 0.0
        %4967 = vmatpush1.msra.mxu0 0.0
        %4968 = vmatprep.subr.mxu0 0.0
        %4969 = vmatpush1.msra.mxu0 0.0
        %4970 = vmatprep.subr.mxu0 0.0
        %4971 = vmatpush1.msra.mxu0 0.0
        %4972 = vmatprep.subr.mxu0 0.0
        %4973 = vmatpush1.msra.mxu0 0.0
        %4974 = vmatprep.subr.mxu0 0.0
        %4975 = vmatpush1.msra.mxu0 0.0
        %4976 = vmatprep.subr.mxu0 0.0
        %4977 = vmatpush1.msra.mxu0 0.0
        %4978 = vmatprep.subr.mxu0 0.0
        %4979 = vmatpush1.msra.mxu0 0.0
        %4980 = vmatprep.subr.mxu0 0.0
        %4981 = vmatpush1.msra.mxu0 0.0
        %4982 = vmatprep.subr.mxu0 0.0
        %4983 = vmatpush1.msra.mxu0 0.0
        %4984 = vmatprep.subr.mxu0 0.0
        %4985 = vmatpush1.msra.mxu0 0.0
        %4986 = vmatprep.mubr.f32.mxu0 0.0
        %4987 = vmatmul.mubr.f32.gmra.mrb[0].mxu0 %v4920
        %v4988 = vpop.f32.mrb[0].mxu0
        %v4989 = vadd.f32 0.0, %v4988
        %v4990 = vpop.f32.mrb[0].mxu0
        %4991 = vdwg.mxu0
        %v4992 = vadd.f32 %v4902, %v4989
        %s4993 = scalar_lea.vmem [#allocation8], 640
        %v4994 = vld [vmem:[%s4993] sm:$0xff]
        %v4995 = vld [vmem:[%s4993 + $0x8] sm:$0xff]
        %v4996 = vld [vmem:[%s4993 + $0x10] sm:$0xff]
        %v4997 = vld [vmem:[%s4993 + $0x18] sm:$0xff]
        %v4998 = vld [vmem:[%s4993 + $0x20] sm:$0xff]
        %v4999 = vld [vmem:[%s4993 + $0x28] sm:$0xff]
        %v5000 = vld [vmem:[%s4993 + $0x30] sm:$0xff]
        %v5001 = vld [vmem:[%s4993 + $0x38] sm:$0xff]
        %v5002 = vld [vmem:[%s4993 + $0x40] sm:$0xff]
        %v5003 = vld [vmem:[%s4993 + $0x48] sm:$0xff]
        %v5004 = vld [vmem:[%s4993 + $0x50] sm:$0xff]
        %v5005 = vld [vmem:[%s4993 + $0x58] sm:$0xff]
        %v5006 = vld [vmem:[%s4993 + $0x60] sm:$0xff]
        %v5007 = vld [vmem:[%s4993 + $0x68] sm:$0xff]
        %v5008 = vld [vmem:[%s4993 + $0x70] sm:$0xff]
        %v5009 = vld [vmem:[%s4993 + $0x78] sm:$0xff]
        %v5010 = vrot.slane %v4542, 5
        %5012 = vmatprep.subr.mxu0 0.0
        %5013 = vmatpush1.msra.mxu0 %v4994
        %5014 = vmatprep.subr.mxu0 0.0
        %5015 = vmatpush1.msra.mxu0 %v4995
        %5016 = vmatprep.subr.mxu0 0.0
        %5017 = vmatpush1.msra.mxu0 %v4996
        %5018 = vmatprep.subr.mxu0 0.0
        %5019 = vmatpush1.msra.mxu0 %v4997
        %5020 = vmatprep.subr.mxu0 0.0
        %5021 = vmatpush1.msra.mxu0 %v4998
        %5022 = vmatprep.subr.mxu0 0.0
        %5023 = vmatpush1.msra.mxu0 %v4999
        %5024 = vmatprep.subr.mxu0 0.0
        %5025 = vmatpush1.msra.mxu0 %v5000
        %5026 = vmatprep.subr.mxu0 0.0
        %5027 = vmatpush1.msra.mxu0 %v5001
        %5028 = vmatprep.subr.mxu0 0.0
        %5029 = vmatpush1.msra.mxu0 %v5002
        %5030 = vmatprep.subr.mxu0 0.0
        %5031 = vmatpush1.msra.mxu0 %v5003
        %5032 = vmatprep.subr.mxu0 0.0
        %5033 = vmatpush1.msra.mxu0 %v5004
        %5034 = vmatprep.subr.mxu0 0.0
        %5035 = vmatpush1.msra.mxu0 %v5005
        %5036 = vmatprep.subr.mxu0 0.0
        %5037 = vmatpush1.msra.mxu0 %v5006
        %5038 = vmatprep.subr.mxu0 0.0
        %5039 = vmatpush1.msra.mxu0 %v5007
        %5040 = vmatprep.subr.mxu0 0.0
        %5041 = vmatpush1.msra.mxu0 %v5008
        %5042 = vmatprep.subr.mxu0 0.0
        %5043 = vmatpush1.msra.mxu0 %v5009
        %5044 = vmatprep.subr.mxu0 0.0
        %5045 = vmatpush1.msra.mxu0 0.0
        %5046 = vmatprep.subr.mxu0 0.0
        %5047 = vmatpush1.msra.mxu0 0.0
        %5048 = vmatprep.subr.mxu0 0.0
        %5049 = vmatpush1.msra.mxu0 0.0
        %5050 = vmatprep.subr.mxu0 0.0
        %5051 = vmatpush1.msra.mxu0 0.0
        %5052 = vmatprep.subr.mxu0 0.0
        %5053 = vmatpush1.msra.mxu0 0.0
        %5054 = vmatprep.subr.mxu0 0.0
        %5055 = vmatpush1.msra.mxu0 0.0
        %5056 = vmatprep.subr.mxu0 0.0
        %5057 = vmatpush1.msra.mxu0 0.0
        %5058 = vmatprep.subr.mxu0 0.0
        %5059 = vmatpush1.msra.mxu0 0.0
        %5060 = vmatprep.subr.mxu0 0.0
        %5061 = vmatpush1.msra.mxu0 0.0
        %5062 = vmatprep.subr.mxu0 0.0
        %5063 = vmatpush1.msra.mxu0 0.0
        %5064 = vmatprep.subr.mxu0 0.0
        %5065 = vmatpush1.msra.mxu0 0.0
        %5066 = vmatprep.subr.mxu0 0.0
        %5067 = vmatpush1.msra.mxu0 0.0
        %5068 = vmatprep.subr.mxu0 0.0
        %5069 = vmatpush1.msra.mxu0 0.0
        %5070 = vmatprep.subr.mxu0 0.0
        %5071 = vmatpush1.msra.mxu0 0.0
        %5072 = vmatprep.subr.mxu0 0.0
        %5073 = vmatpush1.msra.mxu0 0.0
        %5074 = vmatprep.subr.mxu0 0.0
        %5075 = vmatpush1.msra.mxu0 0.0
        %5076 = vmatprep.mubr.f32.mxu0 0.0
        %5077 = vmatmul.mubr.f32.gmra.mrb[0].mxu0 %v5010
        %v5078 = vpop.f32.mrb[0].mxu0
        %v5079 = vadd.f32 0.0, %v5078
        %v5080 = vpop.f32.mrb[0].mxu0
        %5081 = vdwg.mxu0
        %v5082 = vadd.f32 %v4992, %v5079
        %s5083 = scalar_lea.vmem [#allocation8], 768
        %v5084 = vld [vmem:[%s5083] sm:$0xff]
        %v5085 = vld [vmem:[%s5083 + $0x8] sm:$0xff]
        %v5086 = vld [vmem:[%s5083 + $0x10] sm:$0xff]
        %v5087 = vld [vmem:[%s5083 + $0x18] sm:$0xff]
        %v5088 = vld [vmem:[%s5083 + $0x20] sm:$0xff]
        %v5089 = vld [vmem:[%s5083 + $0x28] sm:$0xff]
        %v5090 = vld [vmem:[%s5083 + $0x30] sm:$0xff]
        %v5091 = vld [vmem:[%s5083 + $0x38] sm:$0xff]
        %v5092 = vld [vmem:[%s5083 + $0x40] sm:$0xff]
        %v5093 = vld [vmem:[%s5083 + $0x48] sm:$0xff]
        %v5094 = vld [vmem:[%s5083 + $0x50] sm:$0xff]
        %v5095 = vld [vmem:[%s5083 + $0x58] sm:$0xff]
        %v5096 = vld [vmem:[%s5083 + $0x60] sm:$0xff]
        %v5097 = vld [vmem:[%s5083 + $0x68] sm:$0xff]
        %v5098 = vld [vmem:[%s5083 + $0x70] sm:$0xff]
        %v5099 = vld [vmem:[%s5083 + $0x78] sm:$0xff]
        %v5100 = vrot.slane %v4542, 6
        %5102 = vmatprep.subr.mxu0 0.0
        %5103 = vmatpush1.msra.mxu0 %v5084
        %5104 = vmatprep.subr.mxu0 0.0
        %5105 = vmatpush1.msra.mxu0 %v5085
        %5106 = vmatprep.subr.mxu0 0.0
        %5107 = vmatpush1.msra.mxu0 %v5086
        %5108 = vmatprep.subr.mxu0 0.0
        %5109 = vmatpush1.msra.mxu0 %v5087
        %5110 = vmatprep.subr.mxu0 0.0
        %5111 = vmatpush1.msra.mxu0 %v5088
        %5112 = vmatprep.subr.mxu0 0.0
        %5113 = vmatpush1.msra.mxu0 %v5089
        %5114 = vmatprep.subr.mxu0 0.0
        %5115 = vmatpush1.msra.mxu0 %v5090
        %5116 = vmatprep.subr.mxu0 0.0
        %5117 = vmatpush1.msra.mxu0 %v5091
        %5118 = vmatprep.subr.mxu0 0.0
        %5119 = vmatpush1.msra.mxu0 %v5092
        %5120 = vmatprep.subr.mxu0 0.0
        %5121 = vmatpush1.msra.mxu0 %v5093
        %5122 = vmatprep.subr.mxu0 0.0
        %5123 = vmatpush1.msra.mxu0 %v5094
        %5124 = vmatprep.subr.mxu0 0.0
        %5125 = vmatpush1.msra.mxu0 %v5095
        %5126 = vmatprep.subr.mxu0 0.0
        %5127 = vmatpush1.msra.mxu0 %v5096
        %5128 = vmatprep.subr.mxu0 0.0
        %5129 = vmatpush1.msra.mxu0 %v5097
        %5130 = vmatprep.subr.mxu0 0.0
        %5131 = vmatpush1.msra.mxu0 %v5098
        %5132 = vmatprep.subr.mxu0 0.0
        %5133 = vmatpush1.msra.mxu0 %v5099
        %5134 = vmatprep.subr.mxu0 0.0
        %5135 = vmatpush1.msra.mxu0 0.0
        %5136 = vmatprep.subr.mxu0 0.0
        %5137 = vmatpush1.msra.mxu0 0.0
        %5138 = vmatprep.subr.mxu0 0.0
        %5139 = vmatpush1.msra.mxu0 0.0
        %5140 = vmatprep.subr.mxu0 0.0
        %5141 = vmatpush1.msra.mxu0 0.0
        %5142 = vmatprep.subr.mxu0 0.0
        %5143 = vmatpush1.msra.mxu0 0.0
        %5144 = vmatprep.subr.mxu0 0.0
        %5145 = vmatpush1.msra.mxu0 0.0
        %5146 = vmatprep.subr.mxu0 0.0
        %5147 = vmatpush1.msra.mxu0 0.0
        %5148 = vmatprep.subr.mxu0 0.0
        %5149 = vmatpush1.msra.mxu0 0.0
        %5150 = vmatprep.subr.mxu0 0.0
        %5151 = vmatpush1.msra.mxu0 0.0
        %5152 = vmatprep.subr.mxu0 0.0
        %5153 = vmatpush1.msra.mxu0 0.0
        %5154 = vmatprep.subr.mxu0 0.0
        %5155 = vmatpush1.msra.mxu0 0.0
        %5156 = vmatprep.subr.mxu0 0.0
        %5157 = vmatpush1.msra.mxu0 0.0
        %5158 = vmatprep.subr.mxu0 0.0
        %5159 = vmatpush1.msra.mxu0 0.0
        %5160 = vmatprep.subr.mxu0 0.0
        %5161 = vmatpush1.msra.mxu0 0.0
        %5162 = vmatprep.subr.mxu0 0.0
        %5163 = vmatpush1.msra.mxu0 0.0
        %5164 = vmatprep.subr.mxu0 0.0
        %5165 = vmatpush1.msra.mxu0 0.0
        %5166 = vmatprep.mubr.f32.mxu0 0.0
        %5167 = vmatmul.mubr.f32.gmra.mrb[0].mxu0 %v5100
        %v5168 = vpop.f32.mrb[0].mxu0
        %v5169 = vadd.f32 0.0, %v5168
        %v5170 = vpop.f32.mrb[0].mxu0
        %5171 = vdwg.mxu0
        %v5172 = vadd.f32 %v5082, %v5169
        %s5173 = scalar_lea.vmem [#allocation8], 896
        %v5174 = vld [vmem:[%s5173] sm:$0xff]
        %v5175 = vld [vmem:[%s5173 + $0x8] sm:$0xff]
        %v5176 = vld [vmem:[%s5173 + $0x10] sm:$0xff]
        %v5177 = vld [vmem:[%s5173 + $0x18] sm:$0xff]
        %v5178 = vld [vmem:[%s5173 + $0x20] sm:$0xff]
        %v5179 = vld [vmem:[%s5173 + $0x28] sm:$0xff]
        %v5180 = vld [vmem:[%s5173 + $0x30] sm:$0xff]
        %v5181 = vld [vmem:[%s5173 + $0x38] sm:$0xff]
        %v5182 = vld [vmem:[%s5173 + $0x40] sm:$0xff]
        %v5183 = vld [vmem:[%s5173 + $0x48] sm:$0xff]
        %v5184 = vld [vmem:[%s5173 + $0x50] sm:$0xff]
        %v5185 = vld [vmem:[%s5173 + $0x58] sm:$0xff]
        %v5186 = vld [vmem:[%s5173 + $0x60] sm:$0xff]
        %v5187 = vld [vmem:[%s5173 + $0x68] sm:$0xff]
        %v5188 = vld [vmem:[%s5173 + $0x70] sm:$0xff]
        %v5189 = vld [vmem:[%s5173 + $0x78] sm:$0xff]
        %v5190 = vrot.slane %v4542, 7
        %5192 = vmatprep.subr.mxu0 0.0
        %5193 = vmatpush1.msra.mxu0 %v5174
        %5194 = vmatprep.subr.mxu0 0.0
        %5195 = vmatpush1.msra.mxu0 %v5175
        %5196 = vmatprep.subr.mxu0 0.0
        %5197 = vmatpush1.msra.mxu0 %v5176
        %5198 = vmatprep.subr.mxu0 0.0
        %5199 = vmatpush1.msra.mxu0 %v5177
        %5200 = vmatprep.subr.mxu0 0.0
        %5201 = vmatpush1.msra.mxu0 %v5178
        %5202 = vmatprep.subr.mxu0 0.0
        %5203 = vmatpush1.msra.mxu0 %v5179
        %5204 = vmatprep.subr.mxu0 0.0
        %5205 = vmatpush1.msra.mxu0 %v5180
        %5206 = vmatprep.subr.mxu0 0.0
        %5207 = vmatpush1.msra.mxu0 %v5181
        %5208 = vmatprep.subr.mxu0 0.0
        %5209 = vmatpush1.msra.mxu0 %v5182
        %5210 = vmatprep.subr.mxu0 0.0
        %5211 = vmatpush1.msra.mxu0 %v5183
        %5212 = vmatprep.subr.mxu0 0.0
        %5213 = vmatpush1.msra.mxu0 %v5184
        %5214 = vmatprep.subr.mxu0 0.0
        %5215 = vmatpush1.msra.mxu0 %v5185
        %5216 = vmatprep.subr.mxu0 0.0
        %5217 = vmatpush1.msra.mxu0 %v5186
        %5218 = vmatprep.subr.mxu0 0.0
        %5219 = vmatpush1.msra.mxu0 %v5187
        %5220 = vmatprep.subr.mxu0 0.0
        %5221 = vmatpush1.msra.mxu0 %v5188
        %5222 = vmatprep.subr.mxu0 0.0
        %5223 = vmatpush1.msra.mxu0 %v5189
        %5224 = vmatprep.subr.mxu0 0.0
        %5225 = vmatpush1.msra.mxu0 0.0
        %5226 = vmatprep.subr.mxu0 0.0
        %5227 = vmatpush1.msra.mxu0 0.0
        %5228 = vmatprep.subr.mxu0 0.0
        %5229 = vmatpush1.msra.mxu0 0.0
        %5230 = vmatprep.subr.mxu0 0.0
        %5231 = vmatpush1.msra.mxu0 0.0
        %5232 = vmatprep.subr.mxu0 0.0
        %5233 = vmatpush1.msra.mxu0 0.0
        %5234 = vmatprep.subr.mxu0 0.0
        %5235 = vmatpush1.msra.mxu0 0.0
        %5236 = vmatprep.subr.mxu0 0.0
        %5237 = vmatpush1.msra.mxu0 0.0
        %5238 = vmatprep.subr.mxu0 0.0
        %5239 = vmatpush1.msra.mxu0 0.0
        %5240 = vmatprep.subr.mxu0 0.0
        %5241 = vmatpush1.msra.mxu0 0.0
        %5242 = vmatprep.subr.mxu0 0.0
        %5243 = vmatpush1.msra.mxu0 0.0
        %5244 = vmatprep.subr.mxu0 0.0
        %5245 = vmatpush1.msra.mxu0 0.0
        %5246 = vmatprep.subr.mxu0 0.0
        %5247 = vmatpush1.msra.mxu0 0.0
        %5248 = vmatprep.subr.mxu0 0.0
        %5249 = vmatpush1.msra.mxu0 0.0
        %5250 = vmatprep.subr.mxu0 0.0
        %5251 = vmatpush1.msra.mxu0 0.0
        %5252 = vmatprep.subr.mxu0 0.0
        %5253 = vmatpush1.msra.mxu0 0.0
        %5254 = vmatprep.subr.mxu0 0.0
        %5255 = vmatpush1.msra.mxu0 0.0
        %5256 = vmatprep.mubr.f32.mxu0 0.0
        %5257 = vmatmul.mubr.f32.gmra.mrb[0].mxu0 %v5190
        %v5258 = vpop.f32.mrb[0].mxu0
        %v5259 = vadd.f32 0.0, %v5258
        %v5260 = vpop.f32.mrb[0].mxu0
        %5261 = vdwg.mxu0
        %v5262 = vadd.f32 %v5172, %v5259
        %s5263 = scalar_lea.vmem [#allocation8], 1024
        %v5264 = vld [vmem:[%s5263] sm:$0xff]
        %v5265 = vld [vmem:[%s5263 + $0x8] sm:$0xff]
        %v5266 = vld [vmem:[%s5263 + $0x10] sm:$0xff]
        %v5267 = vld [vmem:[%s5263 + $0x18] sm:$0xff]
        %v5268 = vld [vmem:[%s5263 + $0x20] sm:$0xff]
        %v5269 = vld [vmem:[%s5263 + $0x28] sm:$0xff]
        %v5270 = vld [vmem:[%s5263 + $0x30] sm:$0xff]
        %v5271 = vld [vmem:[%s5263 + $0x38] sm:$0xff]
        %v5272 = vld [vmem:[%s5263 + $0x40] sm:$0xff]
        %v5273 = vld [vmem:[%s5263 + $0x48] sm:$0xff]
        %v5274 = vld [vmem:[%s5263 + $0x50] sm:$0xff]
        %v5275 = vld [vmem:[%s5263 + $0x58] sm:$0xff]
        %v5276 = vld [vmem:[%s5263 + $0x60] sm:$0xff]
        %v5277 = vld [vmem:[%s5263 + $0x68] sm:$0xff]
        %v5278 = vld [vmem:[%s5263 + $0x70] sm:$0xff]
        %v5279 = vld [vmem:[%s5263 + $0x78] sm:$0xff]
        %5280 = vmatprep.subr.mxu0 0.0
        %5281 = vmatpush1.msra.mxu0 %v5264
        %5282 = vmatprep.subr.mxu0 0.0
        %5283 = vmatpush1.msra.mxu0 %v5265
        %5284 = vmatprep.subr.mxu0 0.0
        %5285 = vmatpush1.msra.mxu0 %v5266
        %5286 = vmatprep.subr.mxu0 0.0
        %5287 = vmatpush1.msra.mxu0 %v5267
        %5288 = vmatprep.subr.mxu0 0.0
        %5289 = vmatpush1.msra.mxu0 %v5268
        %5290 = vmatprep.subr.mxu0 0.0
        %5291 = vmatpush1.msra.mxu0 %v5269
        %5292 = vmatprep.subr.mxu0 0.0
        %5293 = vmatpush1.msra.mxu0 %v5270
        %5294 = vmatprep.subr.mxu0 0.0
        %5295 = vmatpush1.msra.mxu0 %v5271
        %5296 = vmatprep.subr.mxu0 0.0
        %5297 = vmatpush1.msra.mxu0 %v5272
        %5298 = vmatprep.subr.mxu0 0.0
        %5299 = vmatpush1.msra.mxu0 %v5273
        %5300 = vmatprep.subr.mxu0 0.0
        %5301 = vmatpush1.msra.mxu0 %v5274
        %5302 = vmatprep.subr.mxu0 0.0
        %5303 = vmatpush1.msra.mxu0 %v5275
        %5304 = vmatprep.subr.mxu0 0.0
        %5305 = vmatpush1.msra.mxu0 %v5276
        %5306 = vmatprep.subr.mxu0 0.0
        %5307 = vmatpush1.msra.mxu0 %v5277
        %5308 = vmatprep.subr.mxu0 0.0
        %5309 = vmatpush1.msra.mxu0 %v5278
        %5310 = vmatprep.subr.mxu0 0.0
        %5311 = vmatpush1.msra.mxu0 %v5279
        %5312 = vmatprep.subr.mxu0 0.0
        %5313 = vmatpush1.msra.mxu0 0.0
        %5314 = vmatprep.subr.mxu0 0.0
        %5315 = vmatpush1.msra.mxu0 0.0
        %5316 = vmatprep.subr.mxu0 0.0
        %5317 = vmatpush1.msra.mxu0 0.0
        %5318 = vmatprep.subr.mxu0 0.0
        %5319 = vmatpush1.msra.mxu0 0.0
        %5320 = vmatprep.subr.mxu0 0.0
        %5321 = vmatpush1.msra.mxu0 0.0
        %5322 = vmatprep.subr.mxu0 0.0
        %5323 = vmatpush1.msra.mxu0 0.0
        %5324 = vmatprep.subr.mxu0 0.0
        %5325 = vmatpush1.msra.mxu0 0.0
        %5326 = vmatprep.subr.mxu0 0.0
        %5327 = vmatpush1.msra.mxu0 0.0
        %5328 = vmatprep.subr.mxu0 0.0
        %5329 = vmatpush1.msra.mxu0 0.0
        %5330 = vmatprep.subr.mxu0 0.0
        %5331 = vmatpush1.msra.mxu0 0.0
        %5332 = vmatprep.subr.mxu0 0.0
        %5333 = vmatpush1.msra.mxu0 0.0
        %5334 = vmatprep.subr.mxu0 0.0
        %5335 = vmatpush1.msra.mxu0 0.0
        %5336 = vmatprep.subr.mxu0 0.0
        %5337 = vmatpush1.msra.mxu0 0.0
        %5338 = vmatprep.subr.mxu0 0.0
        %5339 = vmatpush1.msra.mxu0 0.0
        %5340 = vmatprep.subr.mxu0 0.0
        %5341 = vmatpush1.msra.mxu0 0.0
        %5342 = vmatprep.subr.mxu0 0.0
        %5343 = vmatpush1.msra.mxu0 0.0
        %5344 = vmatprep.mubr.f32.mxu0 0.0
        %5345 = vmatmul.mubr.f32.gmra.mrb[0].mxu0 %v4543
        %v5346 = vpop.f32.mrb[0].mxu0
        %v5347 = vadd.f32 0.0, %v5346
        %v5348 = vpop.f32.mrb[0].mxu0
        %5349 = vdwg.mxu0
        %v5350 = vadd.f32 %v5262, %v5347
        %s5351 = scalar_lea.vmem [#allocation8], 1152
        %v5352 = vld [vmem:[%s5351] sm:$0xff]
        %v5353 = vld [vmem:[%s5351 + $0x8] sm:$0xff]
        %v5354 = vld [vmem:[%s5351 + $0x10] sm:$0xff]
        %v5355 = vld [vmem:[%s5351 + $0x18] sm:$0xff]
        %v5356 = vld [vmem:[%s5351 + $0x20] sm:$0xff]
        %v5357 = vld [vmem:[%s5351 + $0x28] sm:$0xff]
        %v5358 = vld [vmem:[%s5351 + $0x30] sm:$0xff]
        %v5359 = vld [vmem:[%s5351 + $0x38] sm:$0xff]
        %v5360 = vld [vmem:[%s5351 + $0x40] sm:$0xff]
        %v5361 = vld [vmem:[%s5351 + $0x48] sm:$0xff]
        %v5362 = vld [vmem:[%s5351 + $0x50] sm:$0xff]
        %v5363 = vld [vmem:[%s5351 + $0x58] sm:$0xff]
        %v5364 = vld [vmem:[%s5351 + $0x60] sm:$0xff]
        %v5365 = vld [vmem:[%s5351 + $0x68] sm:$0xff]
        %v5366 = vld [vmem:[%s5351 + $0x70] sm:$0xff]
        %v5367 = vld [vmem:[%s5351 + $0x78] sm:$0xff]
        %v5369 = vrot.slane %v4543, 1
        %5371 = vmatprep.subr.mxu0 0.0
        %5372 = vmatpush1.msra.mxu0 %v5352
        %5373 = vmatprep.subr.mxu0 0.0
        %5374 = vmatpush1.msra.mxu0 %v5353
        %5375 = vmatprep.subr.mxu0 0.0
        %5376 = vmatpush1.msra.mxu0 %v5354
        %5377 = vmatprep.subr.mxu0 0.0
        %5378 = vmatpush1.msra.mxu0 %v5355
        %5379 = vmatprep.subr.mxu0 0.0
        %5380 = vmatpush1.msra.mxu0 %v5356
        %5381 = vmatprep.subr.mxu0 0.0
        %5382 = vmatpush1.msra.mxu0 %v5357
        %5383 = vmatprep.subr.mxu0 0.0
        %5384 = vmatpush1.msra.mxu0 %v5358
        %5385 = vmatprep.subr.mxu0 0.0
        %5386 = vmatpush1.msra.mxu0 %v5359
        %5387 = vmatprep.subr.mxu0 0.0
        %5388 = vmatpush1.msra.mxu0 %v5360
        %5389 = vmatprep.subr.mxu0 0.0
        %5390 = vmatpush1.msra.mxu0 %v5361
        %5391 = vmatprep.subr.mxu0 0.0
        %5392 = vmatpush1.msra.mxu0 %v5362
        %5393 = vmatprep.subr.mxu0 0.0
        %5394 = vmatpush1.msra.mxu0 %v5363
        %5395 = vmatprep.subr.mxu0 0.0
        %5396 = vmatpush1.msra.mxu0 %v5364
        %5397 = vmatprep.subr.mxu0 0.0
        %5398 = vmatpush1.msra.mxu0 %v5365
        %5399 = vmatprep.subr.mxu0 0.0
        %5400 = vmatpush1.msra.mxu0 %v5366
        %5401 = vmatprep.subr.mxu0 0.0
        %5402 = vmatpush1.msra.mxu0 %v5367
        %5403 = vmatprep.subr.mxu0 0.0
        %5404 = vmatpush1.msra.mxu0 0.0
        %5405 = vmatprep.subr.mxu0 0.0
        %5406 = vmatpush1.msra.mxu0 0.0
        %5407 = vmatprep.subr.mxu0 0.0
        %5408 = vmatpush1.msra.mxu0 0.0
        %5409 = vmatprep.subr.mxu0 0.0
        %5410 = vmatpush1.msra.mxu0 0.0
        %5411 = vmatprep.subr.mxu0 0.0
        %5412 = vmatpush1.msra.mxu0 0.0
        %5413 = vmatprep.subr.mxu0 0.0
        %5414 = vmatpush1.msra.mxu0 0.0
        %5415 = vmatprep.subr.mxu0 0.0
        %5416 = vmatpush1.msra.mxu0 0.0
        %5417 = vmatprep.subr.mxu0 0.0
        %5418 = vmatpush1.msra.mxu0 0.0
        %5419 = vmatprep.subr.mxu0 0.0
        %5420 = vmatpush1.msra.mxu0 0.0
        %5421 = vmatprep.subr.mxu0 0.0
        %5422 = vmatpush1.msra.mxu0 0.0
        %5423 = vmatprep.subr.mxu0 0.0
        %5424 = vmatpush1.msra.mxu0 0.0
        %5425 = vmatprep.subr.mxu0 0.0
        %5426 = vmatpush1.msra.mxu0 0.0
        %5427 = vmatprep.subr.mxu0 0.0
        %5428 = vmatpush1.msra.mxu0 0.0
        %5429 = vmatprep.subr.mxu0 0.0
        %5430 = vmatpush1.msra.mxu0 0.0
        %5431 = vmatprep.subr.mxu0 0.0
        %5432 = vmatpush1.msra.mxu0 0.0
        %5433 = vmatprep.subr.mxu0 0.0
        %5434 = vmatpush1.msra.mxu0 0.0
        %5435 = vmatprep.mubr.f32.mxu0 0.0
        %5436 = vmatmul.mubr.f32.gmra.mrb[0].mxu0 %v5369
        %v5437 = vpop.f32.mrb[0].mxu0
        %v5438 = vadd.f32 0.0, %v5437
        %v5439 = vpop.f32.mrb[0].mxu0
        %5440 = vdwg.mxu0
        %v5441 = vadd.f32 %v5350, %v5438
        %s5442 = scalar_lea.vmem [#allocation8], 1280
        %v5443 = vld [vmem:[%s5442] sm:$0xff]
        %v5444 = vld [vmem:[%s5442 + $0x8] sm:$0xff]
        %v5445 = vld [vmem:[%s5442 + $0x10] sm:$0xff]
        %v5446 = vld [vmem:[%s5442 + $0x18] sm:$0xff]
        %v5447 = vld [vmem:[%s5442 + $0x20] sm:$0xff]
        %v5448 = vld [vmem:[%s5442 + $0x28] sm:$0xff]
        %v5449 = vld [vmem:[%s5442 + $0x30] sm:$0xff]
        %v5450 = vld [vmem:[%s5442 + $0x38] sm:$0xff]
        %v5451 = vld [vmem:[%s5442 + $0x40] sm:$0xff]
        %v5452 = vld [vmem:[%s5442 + $0x48] sm:$0xff]
        %v5453 = vld [vmem:[%s5442 + $0x50] sm:$0xff]
        %v5454 = vld [vmem:[%s5442 + $0x58] sm:$0xff]
        %v5455 = vld [vmem:[%s5442 + $0x60] sm:$0xff]
        %v5456 = vld [vmem:[%s5442 + $0x68] sm:$0xff]
        %v5457 = vld [vmem:[%s5442 + $0x70] sm:$0xff]
        %v5458 = vld [vmem:[%s5442 + $0x78] sm:$0xff]
        %v5459 = vrot.slane %v4543, 2
        %5461 = vmatprep.subr.mxu0 0.0
        %5462 = vmatpush1.msra.mxu0 %v5443
        %5463 = vmatprep.subr.mxu0 0.0
        %5464 = vmatpush1.msra.mxu0 %v5444
        %5465 = vmatprep.subr.mxu0 0.0
        %5466 = vmatpush1.msra.mxu0 %v5445
        %5467 = vmatprep.subr.mxu0 0.0
        %5468 = vmatpush1.msra.mxu0 %v5446
        %5469 = vmatprep.subr.mxu0 0.0
        %5470 = vmatpush1.msra.mxu0 %v5447
        %5471 = vmatprep.subr.mxu0 0.0
        %5472 = vmatpush1.msra.mxu0 %v5448
        %5473 = vmatprep.subr.mxu0 0.0
        %5474 = vmatpush1.msra.mxu0 %v5449
        %5475 = vmatprep.subr.mxu0 0.0
        %5476 = vmatpush1.msra.mxu0 %v5450
        %5477 = vmatprep.subr.mxu0 0.0
        %5478 = vmatpush1.msra.mxu0 %v5451
        %5479 = vmatprep.subr.mxu0 0.0
        %5480 = vmatpush1.msra.mxu0 %v5452
        %5481 = vmatprep.subr.mxu0 0.0
        %5482 = vmatpush1.msra.mxu0 %v5453
        %5483 = vmatprep.subr.mxu0 0.0
        %5484 = vmatpush1.msra.mxu0 %v5454
        %5485 = vmatprep.subr.mxu0 0.0
        %5486 = vmatpush1.msra.mxu0 %v5455
        %5487 = vmatprep.subr.mxu0 0.0
        %5488 = vmatpush1.msra.mxu0 %v5456
        %5489 = vmatprep.subr.mxu0 0.0
        %5490 = vmatpush1.msra.mxu0 %v5457
        %5491 = vmatprep.subr.mxu0 0.0
        %5492 = vmatpush1.msra.mxu0 %v5458
        %5493 = vmatprep.subr.mxu0 0.0
        %5494 = vmatpush1.msra.mxu0 0.0
        %5495 = vmatprep.subr.mxu0 0.0
        %5496 = vmatpush1.msra.mxu0 0.0
        %5497 = vmatprep.subr.mxu0 0.0
        %5498 = vmatpush1.msra.mxu0 0.0
        %5499 = vmatprep.subr.mxu0 0.0
        %5500 = vmatpush1.msra.mxu0 0.0
        %5501 = vmatprep.subr.mxu0 0.0
        %5502 = vmatpush1.msra.mxu0 0.0
        %5503 = vmatprep.subr.mxu0 0.0
        %5504 = vmatpush1.msra.mxu0 0.0
        %5505 = vmatprep.subr.mxu0 0.0
        %5506 = vmatpush1.msra.mxu0 0.0
        %5507 = vmatprep.subr.mxu0 0.0
        %5508 = vmatpush1.msra.mxu0 0.0
        %5509 = vmatprep.subr.mxu0 0.0
        %5510 = vmatpush1.msra.mxu0 0.0
        %5511 = vmatprep.subr.mxu0 0.0
        %5512 = vmatpush1.msra.mxu0 0.0
        %5513 = vmatprep.subr.mxu0 0.0
        %5514 = vmatpush1.msra.mxu0 0.0
        %5515 = vmatprep.subr.mxu0 0.0
        %5516 = vmatpush1.msra.mxu0 0.0
        %5517 = vmatprep.subr.mxu0 0.0
        %5518 = vmatpush1.msra.mxu0 0.0
        %5519 = vmatprep.subr.mxu0 0.0
        %5520 = vmatpush1.msra.mxu0 0.0
        %5521 = vmatprep.subr.mxu0 0.0
        %5522 = vmatpush1.msra.mxu0 0.0
        %5523 = vmatprep.subr.mxu0 0.0
        %5524 = vmatpush1.msra.mxu0 0.0
        %5525 = vmatprep.mubr.f32.mxu0 0.0
        %5526 = vmatmul.mubr.f32.gmra.mrb[0].mxu0 %v5459
        %v5527 = vpop.f32.mrb[0].mxu0
        %v5528 = vadd.f32 0.0, %v5527
        %v5529 = vpop.f32.mrb[0].mxu0
        %5530 = vdwg.mxu0
        %v5531 = vadd.f32 %v5441, %v5528
        %s5532 = scalar_lea.vmem [#allocation8], 1408
        %v5533 = vld [vmem:[%s5532] sm:$0xff]
        %v5534 = vld [vmem:[%s5532 + $0x8] sm:$0xff]
        %v5535 = vld [vmem:[%s5532 + $0x10] sm:$0xff]
        %v5536 = vld [vmem:[%s5532 + $0x18] sm:$0xff]
        %v5537 = vld [vmem:[%s5532 + $0x20] sm:$0xff]
        %v5538 = vld [vmem:[%s5532 + $0x28] sm:$0xff]
        %v5539 = vld [vmem:[%s5532 + $0x30] sm:$0xff]
        %v5540 = vld [vmem:[%s5532 + $0x38] sm:$0xff]
        %v5541 = vld [vmem:[%s5532 + $0x40] sm:$0xff]
        %v5542 = vld [vmem:[%s5532 + $0x48] sm:$0xff]
        %v5543 = vld [vmem:[%s5532 + $0x50] sm:$0xff]
        %v5544 = vld [vmem:[%s5532 + $0x58] sm:$0xff]
        %v5545 = vld [vmem:[%s5532 + $0x60] sm:$0xff]
        %v5546 = vld [vmem:[%s5532 + $0x68] sm:$0xff]
        %v5547 = vld [vmem:[%s5532 + $0x70] sm:$0xff]
        %v5548 = vld [vmem:[%s5532 + $0x78] sm:$0xff]
        %v5549 = vrot.slane %v4543, 3
        %5551 = vmatprep.subr.mxu0 0.0
        %5552 = vmatpush1.msra.mxu0 %v5533
        %5553 = vmatprep.subr.mxu0 0.0
        %5554 = vmatpush1.msra.mxu0 %v5534
        %5555 = vmatprep.subr.mxu0 0.0
        %5556 = vmatpush1.msra.mxu0 %v5535
        %5557 = vmatprep.subr.mxu0 0.0
        %5558 = vmatpush1.msra.mxu0 %v5536
        %5559 = vmatprep.subr.mxu0 0.0
        %5560 = vmatpush1.msra.mxu0 %v5537
        %5561 = vmatprep.subr.mxu0 0.0
        %5562 = vmatpush1.msra.mxu0 %v5538
        %5563 = vmatprep.subr.mxu0 0.0
        %5564 = vmatpush1.msra.mxu0 %v5539
        %5565 = vmatprep.subr.mxu0 0.0
        %5566 = vmatpush1.msra.mxu0 %v5540
        %5567 = vmatprep.subr.mxu0 0.0
        %5568 = vmatpush1.msra.mxu0 %v5541
        %5569 = vmatprep.subr.mxu0 0.0
        %5570 = vmatpush1.msra.mxu0 %v5542
        %5571 = vmatprep.subr.mxu0 0.0
        %5572 = vmatpush1.msra.mxu0 %v5543
        %5573 = vmatprep.subr.mxu0 0.0
        %5574 = vmatpush1.msra.mxu0 %v5544
        %5575 = vmatprep.subr.mxu0 0.0
        %5576 = vmatpush1.msra.mxu0 %v5545
        %5577 = vmatprep.subr.mxu0 0.0
        %5578 = vmatpush1.msra.mxu0 %v5546
        %5579 = vmatprep.subr.mxu0 0.0
        %5580 = vmatpush1.msra.mxu0 %v5547
        %5581 = vmatprep.subr.mxu0 0.0
        %5582 = vmatpush1.msra.mxu0 %v5548
        %5583 = vmatprep.subr.mxu0 0.0
        %5584 = vmatpush1.msra.mxu0 0.0
        %5585 = vmatprep.subr.mxu0 0.0
        %5586 = vmatpush1.msra.mxu0 0.0
        %5587 = vmatprep.subr.mxu0 0.0
        %5588 = vmatpush1.msra.mxu0 0.0
        %5589 = vmatprep.subr.mxu0 0.0
        %5590 = vmatpush1.msra.mxu0 0.0
        %5591 = vmatprep.subr.mxu0 0.0
        %5592 = vmatpush1.msra.mxu0 0.0
        %5593 = vmatprep.subr.mxu0 0.0
        %5594 = vmatpush1.msra.mxu0 0.0
        %5595 = vmatprep.subr.mxu0 0.0
        %5596 = vmatpush1.msra.mxu0 0.0
        %5597 = vmatprep.subr.mxu0 0.0
        %5598 = vmatpush1.msra.mxu0 0.0
        %5599 = vmatprep.subr.mxu0 0.0
        %5600 = vmatpush1.msra.mxu0 0.0
        %5601 = vmatprep.subr.mxu0 0.0
        %5602 = vmatpush1.msra.mxu0 0.0
        %5603 = vmatprep.subr.mxu0 0.0
        %5604 = vmatpush1.msra.mxu0 0.0
        %5605 = vmatprep.subr.mxu0 0.0
        %5606 = vmatpush1.msra.mxu0 0.0
        %5607 = vmatprep.subr.mxu0 0.0
        %5608 = vmatpush1.msra.mxu0 0.0
        %5609 = vmatprep.subr.mxu0 0.0
        %5610 = vmatpush1.msra.mxu0 0.0
        %5611 = vmatprep.subr.mxu0 0.0
        %5612 = vmatpush1.msra.mxu0 0.0
        %5613 = vmatprep.subr.mxu0 0.0
        %5614 = vmatpush1.msra.mxu0 0.0
        %5615 = vmatprep.mubr.f32.mxu0 0.0
        %5616 = vmatmul.mubr.f32.gmra.mrb[0].mxu0 %v5549
        %v5617 = vpop.f32.mrb[0].mxu0
        %v5618 = vadd.f32 0.0, %v5617
        %v5619 = vpop.f32.mrb[0].mxu0
        %5620 = vdwg.mxu0
        %v5621 = vadd.f32 %v5531, %v5618
        %s5622 = scalar_lea.vmem [#allocation8], 1536
        %v5623 = vld [vmem:[%s5622] sm:$0xff]
        %v5624 = vld [vmem:[%s5622 + $0x8] sm:$0xff]
        %v5625 = vld [vmem:[%s5622 + $0x10] sm:$0xff]
        %v5626 = vld [vmem:[%s5622 + $0x18] sm:$0xff]
        %v5627 = vld [vmem:[%s5622 + $0x20] sm:$0xff]
        %v5628 = vld [vmem:[%s5622 + $0x28] sm:$0xff]
        %v5629 = vld [vmem:[%s5622 + $0x30] sm:$0xff]
        %v5630 = vld [vmem:[%s5622 + $0x38] sm:$0xff]
        %v5631 = vld [vmem:[%s5622 + $0x40] sm:$0xff]
        %v5632 = vld [vmem:[%s5622 + $0x48] sm:$0xff]
        %v5633 = vld [vmem:[%s5622 + $0x50] sm:$0xff]
        %v5634 = vld [vmem:[%s5622 + $0x58] sm:$0xff]
        %v5635 = vld [vmem:[%s5622 + $0x60] sm:$0xff]
        %v5636 = vld [vmem:[%s5622 + $0x68] sm:$0xff]
        %v5637 = vld [vmem:[%s5622 + $0x70] sm:$0xff]
        %v5638 = vld [vmem:[%s5622 + $0x78] sm:$0xff]
        %v5639 = vrot.slane %v4543, 4
        %5641 = vmatprep.subr.mxu0 0.0
        %5642 = vmatpush1.msra.mxu0 %v5623
        %5643 = vmatprep.subr.mxu0 0.0
        %5644 = vmatpush1.msra.mxu0 %v5624
        %5645 = vmatprep.subr.mxu0 0.0
        %5646 = vmatpush1.msra.mxu0 %v5625
        %5647 = vmatprep.subr.mxu0 0.0
        %5648 = vmatpush1.msra.mxu0 %v5626
        %5649 = vmatprep.subr.mxu0 0.0
        %5650 = vmatpush1.msra.mxu0 %v5627
        %5651 = vmatprep.subr.mxu0 0.0
        %5652 = vmatpush1.msra.mxu0 %v5628
        %5653 = vmatprep.subr.mxu0 0.0
        %5654 = vmatpush1.msra.mxu0 %v5629
        %5655 = vmatprep.subr.mxu0 0.0
        %5656 = vmatpush1.msra.mxu0 %v5630
        %5657 = vmatprep.subr.mxu0 0.0
        %5658 = vmatpush1.msra.mxu0 %v5631
        %5659 = vmatprep.subr.mxu0 0.0
        %5660 = vmatpush1.msra.mxu0 %v5632
        %5661 = vmatprep.subr.mxu0 0.0
        %5662 = vmatpush1.msra.mxu0 %v5633
        %5663 = vmatprep.subr.mxu0 0.0
        %5664 = vmatpush1.msra.mxu0 %v5634
        %5665 = vmatprep.subr.mxu0 0.0
        %5666 = vmatpush1.msra.mxu0 %v5635
        %5667 = vmatprep.subr.mxu0 0.0
        %5668 = vmatpush1.msra.mxu0 %v5636
        %5669 = vmatprep.subr.mxu0 0.0
        %5670 = vmatpush1.msra.mxu0 %v5637
        %5671 = vmatprep.subr.mxu0 0.0
        %5672 = vmatpush1.msra.mxu0 %v5638
        %5673 = vmatprep.subr.mxu0 0.0
        %5674 = vmatpush1.msra.mxu0 0.0
        %5675 = vmatprep.subr.mxu0 0.0
        %5676 = vmatpush1.msra.mxu0 0.0
        %5677 = vmatprep.subr.mxu0 0.0
        %5678 = vmatpush1.msra.mxu0 0.0
        %5679 = vmatprep.subr.mxu0 0.0
        %5680 = vmatpush1.msra.mxu0 0.0
        %5681 = vmatprep.subr.mxu0 0.0
        %5682 = vmatpush1.msra.mxu0 0.0
        %5683 = vmatprep.subr.mxu0 0.0
        %5684 = vmatpush1.msra.mxu0 0.0
        %5685 = vmatprep.subr.mxu0 0.0
        %5686 = vmatpush1.msra.mxu0 0.0
        %5687 = vmatprep.subr.mxu0 0.0
        %5688 = vmatpush1.msra.mxu0 0.0
        %5689 = vmatprep.subr.mxu0 0.0
        %5690 = vmatpush1.msra.mxu0 0.0
        %5691 = vmatprep.subr.mxu0 0.0
        %5692 = vmatpush1.msra.mxu0 0.0
        %5693 = vmatprep.subr.mxu0 0.0
        %5694 = vmatpush1.msra.mxu0 0.0
        %5695 = vmatprep.subr.mxu0 0.0
        %5696 = vmatpush1.msra.mxu0 0.0
        %5697 = vmatprep.subr.mxu0 0.0
        %5698 = vmatpush1.msra.mxu0 0.0
        %5699 = vmatprep.subr.mxu0 0.0
        %5700 = vmatpush1.msra.mxu0 0.0
        %5701 = vmatprep.subr.mxu0 0.0
        %5702 = vmatpush1.msra.mxu0 0.0
        %5703 = vmatprep.subr.mxu0 0.0
        %5704 = vmatpush1.msra.mxu0 0.0
        %5705 = vmatprep.mubr.f32.mxu0 0.0
        %5706 = vmatmul.mubr.f32.gmra.mrb[0].mxu0 %v5639
        %v5707 = vpop.f32.mrb[0].mxu0
        %v5708 = vadd.f32 0.0, %v5707
        %v5709 = vpop.f32.mrb[0].mxu0
        %5710 = vdwg.mxu0
        %v5711 = vadd.f32 %v5621, %v5708
        %s5712 = scalar_lea.vmem [#allocation8], 1664
        %v5713 = vld [vmem:[%s5712] sm:$0xff]
        %v5714 = vld [vmem:[%s5712 + $0x8] sm:$0xff]
        %v5715 = vld [vmem:[%s5712 + $0x10] sm:$0xff]
        %v5716 = vld [vmem:[%s5712 + $0x18] sm:$0xff]
        %v5717 = vld [vmem:[%s5712 + $0x20] sm:$0xff]
        %v5718 = vld [vmem:[%s5712 + $0x28] sm:$0xff]
        %v5719 = vld [vmem:[%s5712 + $0x30] sm:$0xff]
        %v5720 = vld [vmem:[%s5712 + $0x38] sm:$0xff]
        %v5721 = vld [vmem:[%s5712 + $0x40] sm:$0xff]
        %v5722 = vld [vmem:[%s5712 + $0x48] sm:$0xff]
        %v5723 = vld [vmem:[%s5712 + $0x50] sm:$0xff]
        %v5724 = vld [vmem:[%s5712 + $0x58] sm:$0xff]
        %v5725 = vld [vmem:[%s5712 + $0x60] sm:$0xff]
        %v5726 = vld [vmem:[%s5712 + $0x68] sm:$0xff]
        %v5727 = vld [vmem:[%s5712 + $0x70] sm:$0xff]
        %v5728 = vld [vmem:[%s5712 + $0x78] sm:$0xff]
        %v5729 = vrot.slane %v4543, 5
        %5731 = vmatprep.subr.mxu0 0.0
        %5732 = vmatpush1.msra.mxu0 %v5713
        %5733 = vmatprep.subr.mxu0 0.0
        %5734 = vmatpush1.msra.mxu0 %v5714
        %5735 = vmatprep.subr.mxu0 0.0
        %5736 = vmatpush1.msra.mxu0 %v5715
        %5737 = vmatprep.subr.mxu0 0.0
        %5738 = vmatpush1.msra.mxu0 %v5716
        %5739 = vmatprep.subr.mxu0 0.0
        %5740 = vmatpush1.msra.mxu0 %v5717
        %5741 = vmatprep.subr.mxu0 0.0
        %5742 = vmatpush1.msra.mxu0 %v5718
        %5743 = vmatprep.subr.mxu0 0.0
        %5744 = vmatpush1.msra.mxu0 %v5719
        %5745 = vmatprep.subr.mxu0 0.0
        %5746 = vmatpush1.msra.mxu0 %v5720
        %5747 = vmatprep.subr.mxu0 0.0
        %5748 = vmatpush1.msra.mxu0 %v5721
        %5749 = vmatprep.subr.mxu0 0.0
        %5750 = vmatpush1.msra.mxu0 %v5722
        %5751 = vmatprep.subr.mxu0 0.0
        %5752 = vmatpush1.msra.mxu0 %v5723
        %5753 = vmatprep.subr.mxu0 0.0
        %5754 = vmatpush1.msra.mxu0 %v5724
        %5755 = vmatprep.subr.mxu0 0.0
        %5756 = vmatpush1.msra.mxu0 %v5725
        %5757 = vmatprep.subr.mxu0 0.0
        %5758 = vmatpush1.msra.mxu0 %v5726
        %5759 = vmatprep.subr.mxu0 0.0
        %5760 = vmatpush1.msra.mxu0 %v5727
        %5761 = vmatprep.subr.mxu0 0.0
        %5762 = vmatpush1.msra.mxu0 %v5728
        %5763 = vmatprep.subr.mxu0 0.0
        %5764 = vmatpush1.msra.mxu0 0.0
        %5765 = vmatprep.subr.mxu0 0.0
        %5766 = vmatpush1.msra.mxu0 0.0
        %5767 = vmatprep.subr.mxu0 0.0
        %5768 = vmatpush1.msra.mxu0 0.0
        %5769 = vmatprep.subr.mxu0 0.0
        %5770 = vmatpush1.msra.mxu0 0.0
        %5771 = vmatprep.subr.mxu0 0.0
        %5772 = vmatpush1.msra.mxu0 0.0
        %5773 = vmatprep.subr.mxu0 0.0
        %5774 = vmatpush1.msra.mxu0 0.0
        %5775 = vmatprep.subr.mxu0 0.0
        %5776 = vmatpush1.msra.mxu0 0.0
        %5777 = vmatprep.subr.mxu0 0.0
        %5778 = vmatpush1.msra.mxu0 0.0
        %5779 = vmatprep.subr.mxu0 0.0
        %5780 = vmatpush1.msra.mxu0 0.0
        %5781 = vmatprep.subr.mxu0 0.0
        %5782 = vmatpush1.msra.mxu0 0.0
        %5783 = vmatprep.subr.mxu0 0.0
        %5784 = vmatpush1.msra.mxu0 0.0
        %5785 = vmatprep.subr.mxu0 0.0
        %5786 = vmatpush1.msra.mxu0 0.0
        %5787 = vmatprep.subr.mxu0 0.0
        %5788 = vmatpush1.msra.mxu0 0.0
        %5789 = vmatprep.subr.mxu0 0.0
        %5790 = vmatpush1.msra.mxu0 0.0
        %5791 = vmatprep.subr.mxu0 0.0
        %5792 = vmatpush1.msra.mxu0 0.0
        %5793 = vmatprep.subr.mxu0 0.0
        %5794 = vmatpush1.msra.mxu0 0.0
        %5795 = vmatprep.mubr.f32.mxu0 0.0
        %5796 = vmatmul.mubr.f32.gmra.mrb[0].mxu0 %v5729
        %v5797 = vpop.f32.mrb[0].mxu0
        %v5798 = vadd.f32 0.0, %v5797
        %v5799 = vpop.f32.mrb[0].mxu0
        %5800 = vdwg.mxu0
        %v5801 = vadd.f32 %v5711, %v5798
        %s5802 = scalar_lea.vmem [#allocation8], 1792
        %v5803 = vld [vmem:[%s5802] sm:$0xff]
        %v5804 = vld [vmem:[%s5802 + $0x8] sm:$0xff]
        %v5805 = vld [vmem:[%s5802 + $0x10] sm:$0xff]
        %v5806 = vld [vmem:[%s5802 + $0x18] sm:$0xff]
        %v5807 = vld [vmem:[%s5802 + $0x20] sm:$0xff]
        %v5808 = vld [vmem:[%s5802 + $0x28] sm:$0xff]
        %v5809 = vld [vmem:[%s5802 + $0x30] sm:$0xff]
        %v5810 = vld [vmem:[%s5802 + $0x38] sm:$0xff]
        %v5811 = vld [vmem:[%s5802 + $0x40] sm:$0xff]
        %v5812 = vld [vmem:[%s5802 + $0x48] sm:$0xff]
        %v5813 = vld [vmem:[%s5802 + $0x50] sm:$0xff]
        %v5814 = vld [vmem:[%s5802 + $0x58] sm:$0xff]
        %v5815 = vld [vmem:[%s5802 + $0x60] sm:$0xff]
        %v5816 = vld [vmem:[%s5802 + $0x68] sm:$0xff]
        %v5817 = vld [vmem:[%s5802 + $0x70] sm:$0xff]
        %v5818 = vld [vmem:[%s5802 + $0x78] sm:$0xff]
        %v5819 = vrot.slane %v4543, 6
        %5821 = vmatprep.subr.mxu0 0.0
        %5822 = vmatpush1.msra.mxu0 %v5803
        %5823 = vmatprep.subr.mxu0 0.0
        %5824 = vmatpush1.msra.mxu0 %v5804
        %5825 = vmatprep.subr.mxu0 0.0
        %5826 = vmatpush1.msra.mxu0 %v5805
        %5827 = vmatprep.subr.mxu0 0.0
        %5828 = vmatpush1.msra.mxu0 %v5806
        %5829 = vmatprep.subr.mxu0 0.0
        %5830 = vmatpush1.msra.mxu0 %v5807
        %5831 = vmatprep.subr.mxu0 0.0
        %5832 = vmatpush1.msra.mxu0 %v5808
        %5833 = vmatprep.subr.mxu0 0.0
        %5834 = vmatpush1.msra.mxu0 %v5809
        %5835 = vmatprep.subr.mxu0 0.0
        %5836 = vmatpush1.msra.mxu0 %v5810
        %5837 = vmatprep.subr.mxu0 0.0
        %5838 = vmatpush1.msra.mxu0 %v5811
        %5839 = vmatprep.subr.mxu0 0.0
        %5840 = vmatpush1.msra.mxu0 %v5812
        %5841 = vmatprep.subr.mxu0 0.0
        %5842 = vmatpush1.msra.mxu0 %v5813
        %5843 = vmatprep.subr.mxu0 0.0
        %5844 = vmatpush1.msra.mxu0 %v5814
        %5845 = vmatprep.subr.mxu0 0.0
        %5846 = vmatpush1.msra.mxu0 %v5815
        %5847 = vmatprep.subr.mxu0 0.0
        %5848 = vmatpush1.msra.mxu0 %v5816
        %5849 = vmatprep.subr.mxu0 0.0
        %5850 = vmatpush1.msra.mxu0 %v5817
        %5851 = vmatprep.subr.mxu0 0.0
        %5852 = vmatpush1.msra.mxu0 %v5818
        %5853 = vmatprep.subr.mxu0 0.0
        %5854 = vmatpush1.msra.mxu0 0.0
        %5855 = vmatprep.subr.mxu0 0.0
        %5856 = vmatpush1.msra.mxu0 0.0
        %5857 = vmatprep.subr.mxu0 0.0
        %5858 = vmatpush1.msra.mxu0 0.0
        %5859 = vmatprep.subr.mxu0 0.0
        %5860 = vmatpush1.msra.mxu0 0.0
        %5861 = vmatprep.subr.mxu0 0.0
        %5862 = vmatpush1.msra.mxu0 0.0
        %5863 = vmatprep.subr.mxu0 0.0
        %5864 = vmatpush1.msra.mxu0 0.0
        %5865 = vmatprep.subr.mxu0 0.0
        %5866 = vmatpush1.msra.mxu0 0.0
        %5867 = vmatprep.subr.mxu0 0.0
        %5868 = vmatpush1.msra.mxu0 0.0
        %5869 = vmatprep.subr.mxu0 0.0
        %5870 = vmatpush1.msra.mxu0 0.0
        %5871 = vmatprep.subr.mxu0 0.0
        %5872 = vmatpush1.msra.mxu0 0.0
        %5873 = vmatprep.subr.mxu0 0.0
        %5874 = vmatpush1.msra.mxu0 0.0
        %5875 = vmatprep.subr.mxu0 0.0
        %5876 = vmatpush1.msra.mxu0 0.0
        %5877 = vmatprep.subr.mxu0 0.0
        %5878 = vmatpush1.msra.mxu0 0.0
        %5879 = vmatprep.subr.mxu0 0.0
        %5880 = vmatpush1.msra.mxu0 0.0
        %5881 = vmatprep.subr.mxu0 0.0
        %5882 = vmatpush1.msra.mxu0 0.0
        %5883 = vmatprep.subr.mxu0 0.0
        %5884 = vmatpush1.msra.mxu0 0.0
        %5885 = vmatprep.mubr.f32.mxu0 0.0
        %5886 = vmatmul.mubr.f32.gmra.mrb[0].mxu0 %v5819
        %v5887 = vpop.f32.mrb[0].mxu0
        %v5888 = vadd.f32 0.0, %v5887
        %v5889 = vpop.f32.mrb[0].mxu0
        %5890 = vdwg.mxu0
        %v5891 = vadd.f32 %v5801, %v5888
        %s5892 = scalar_lea.vmem [#allocation8], 1920
        %v5893 = vld [vmem:[%s5892] sm:$0xff]
        %v5894 = vld [vmem:[%s5892 + $0x8] sm:$0xff]
        %v5895 = vld [vmem:[%s5892 + $0x10] sm:$0xff]
        %v5896 = vld [vmem:[%s5892 + $0x18] sm:$0xff]
        %v5897 = vld [vmem:[%s5892 + $0x20] sm:$0xff]
        %v5898 = vld [vmem:[%s5892 + $0x28] sm:$0xff]
        %v5899 = vld [vmem:[%s5892 + $0x30] sm:$0xff]
        %v5900 = vld [vmem:[%s5892 + $0x38] sm:$0xff]
        %v5901 = vld [vmem:[%s5892 + $0x40] sm:$0xff]
        %v5902 = vld [vmem:[%s5892 + $0x48] sm:$0xff]
        %v5903 = vld [vmem:[%s5892 + $0x50] sm:$0xff]
        %v5904 = vld [vmem:[%s5892 + $0x58] sm:$0xff]
        %v5905 = vld [vmem:[%s5892 + $0x60] sm:$0xff]
        %v5906 = vld [vmem:[%s5892 + $0x68] sm:$0xff]
        %v5907 = vld [vmem:[%s5892 + $0x70] sm:$0xff]
        %v5908 = vld [vmem:[%s5892 + $0x78] sm:$0xff]
        %v5909 = vrot.slane %v4543, 7
        %5911 = vmatprep.subr.mxu0 0.0
        %5912 = vmatpush1.msra.mxu0 %v5893
        %5913 = vmatprep.subr.mxu0 0.0
        %5914 = vmatpush1.msra.mxu0 %v5894
        %5915 = vmatprep.subr.mxu0 0.0
        %5916 = vmatpush1.msra.mxu0 %v5895
        %5917 = vmatprep.subr.mxu0 0.0
        %5918 = vmatpush1.msra.mxu0 %v5896
        %5919 = vmatprep.subr.mxu0 0.0
        %5920 = vmatpush1.msra.mxu0 %v5897
        %5921 = vmatprep.subr.mxu0 0.0
        %5922 = vmatpush1.msra.mxu0 %v5898
        %5923 = vmatprep.subr.mxu0 0.0
        %5924 = vmatpush1.msra.mxu0 %v5899
        %5925 = vmatprep.subr.mxu0 0.0
        %5926 = vmatpush1.msra.mxu0 %v5900
        %5927 = vmatprep.subr.mxu0 0.0
        %5928 = vmatpush1.msra.mxu0 %v5901
        %5929 = vmatprep.subr.mxu0 0.0
        %5930 = vmatpush1.msra.mxu0 %v5902
        %5931 = vmatprep.subr.mxu0 0.0
        %5932 = vmatpush1.msra.mxu0 %v5903
        %5933 = vmatprep.subr.mxu0 0.0
        %5934 = vmatpush1.msra.mxu0 %v5904
        %5935 = vmatprep.subr.mxu0 0.0
        %5936 = vmatpush1.msra.mxu0 %v5905
        %5937 = vmatprep.subr.mxu0 0.0
        %5938 = vmatpush1.msra.mxu0 %v5906
        %5939 = vmatprep.subr.mxu0 0.0
        %5940 = vmatpush1.msra.mxu0 %v5907
        %5941 = vmatprep.subr.mxu0 0.0
        %5942 = vmatpush1.msra.mxu0 %v5908
        %5943 = vmatprep.subr.mxu0 0.0
        %5944 = vmatpush1.msra.mxu0 0.0
        %5945 = vmatprep.subr.mxu0 0.0
        %5946 = vmatpush1.msra.mxu0 0.0
        %5947 = vmatprep.subr.mxu0 0.0
        %5948 = vmatpush1.msra.mxu0 0.0
        %5949 = vmatprep.subr.mxu0 0.0
        %5950 = vmatpush1.msra.mxu0 0.0
        %5951 = vmatprep.subr.mxu0 0.0
        %5952 = vmatpush1.msra.mxu0 0.0
        %5953 = vmatprep.subr.mxu0 0.0
        %5954 = vmatpush1.msra.mxu0 0.0
        %5955 = vmatprep.subr.mxu0 0.0
        %5956 = vmatpush1.msra.mxu0 0.0
        %5957 = vmatprep.subr.mxu0 0.0
        %5958 = vmatpush1.msra.mxu0 0.0
        %5959 = vmatprep.subr.mxu0 0.0
        %5960 = vmatpush1.msra.mxu0 0.0
        %5961 = vmatprep.subr.mxu0 0.0
        %5962 = vmatpush1.msra.mxu0 0.0
        %5963 = vmatprep.subr.mxu0 0.0
        %5964 = vmatpush1.msra.mxu0 0.0
        %5965 = vmatprep.subr.mxu0 0.0
        %5966 = vmatpush1.msra.mxu0 0.0
        %5967 = vmatprep.subr.mxu0 0.0
        %5968 = vmatpush1.msra.mxu0 0.0
        %5969 = vmatprep.subr.mxu0 0.0
        %5970 = vmatpush1.msra.mxu0 0.0
        %5971 = vmatprep.subr.mxu0 0.0
        %5972 = vmatpush1.msra.mxu0 0.0
        %5973 = vmatprep.subr.mxu0 0.0
        %5974 = vmatpush1.msra.mxu0 0.0
        %5975 = vmatprep.mubr.f32.mxu0 0.0
        %5976 = vmatmul.mubr.f32.gmra.mrb[0].mxu0 %v5909
        %v5977 = vpop.f32.mrb[0].mxu0
        %v5978 = vadd.f32 0.0, %v5977
        %v5979 = vpop.f32.mrb[0].mxu0
        %5980 = vdwg.mxu0
        %v5981 = vadd.f32 %v5891, %v5978
        %v5982 = vmax.f32 %v5981, 0.0
        %v5983 = vld [vmem:[#allocation10] sm:$0xff]
        %v5984 = vld [vmem:[#allocation10 + $0x8] sm:$0xff]
        %v5985 = vld [vmem:[#allocation10 + $0x10] sm:$0xff]
        %v5986 = vld [vmem:[#allocation10 + $0x18] sm:$0xff]
        %v5987 = vld [vmem:[#allocation10 + $0x20] sm:$0xff]
        %v5988 = vld [vmem:[#allocation10 + $0x28] sm:$0xff]
        %v5989 = vld [vmem:[#allocation10 + $0x30] sm:$0xff]
        %v5990 = vld [vmem:[#allocation10 + $0x38] sm:$0xff]
        %v5991 = vld [vmem:[#allocation10 + $0x40] sm:$0xff]
        %v5992 = vld [vmem:[#allocation10 + $0x48] sm:$0xff]
        %v5993 = vld [vmem:[#allocation10 + $0x50] sm:$0xff]
        %v5994 = vld [vmem:[#allocation10 + $0x58] sm:$0xff]
        %v5995 = vld [vmem:[#allocation10 + $0x60] sm:$0xff]
        %v5996 = vld [vmem:[#allocation10 + $0x68] sm:$0xff]
        %v5997 = vld [vmem:[#allocation10 + $0x70] sm:$0xff]
        %v5998 = vld [vmem:[#allocation10 + $0x78] sm:$0xff]
        %v5999 = vld [vmem:[%s8] sm:$0x1]
        %6000 = vmatprep.subr.mxu0 0.0
        %6001 = vmatpush1.msra.mxu0 %v5983
        %6002 = vmatprep.subr.mxu0 0.0
        %6003 = vmatpush1.msra.mxu0 %v5984
        %6004 = vmatprep.subr.mxu0 0.0
        %6005 = vmatpush1.msra.mxu0 %v5985
        %6006 = vmatprep.subr.mxu0 0.0
        %6007 = vmatpush1.msra.mxu0 %v5986
        %6008 = vmatprep.subr.mxu0 0.0
        %6009 = vmatpush1.msra.mxu0 %v5987
        %6010 = vmatprep.subr.mxu0 0.0
        %6011 = vmatpush1.msra.mxu0 %v5988
        %6012 = vmatprep.subr.mxu0 0.0
        %6013 = vmatpush1.msra.mxu0 %v5989
        %6014 = vmatprep.subr.mxu0 0.0
        %6015 = vmatpush1.msra.mxu0 %v5990
        %6016 = vmatprep.subr.mxu0 0.0
        %6017 = vmatpush1.msra.mxu0 %v5991
        %6018 = vmatprep.subr.mxu0 0.0
        %6019 = vmatpush1.msra.mxu0 %v5992
        %6020 = vmatprep.subr.mxu0 0.0
        %6021 = vmatpush1.msra.mxu0 %v5993
        %6022 = vmatprep.subr.mxu0 0.0
        %6023 = vmatpush1.msra.mxu0 %v5994
        %6024 = vmatprep.subr.mxu0 0.0
        %6025 = vmatpush1.msra.mxu0 %v5995
        %6026 = vmatprep.subr.mxu0 0.0
        %6027 = vmatpush1.msra.mxu0 %v5996
        %6028 = vmatprep.subr.mxu0 0.0
        %6029 = vmatpush1.msra.mxu0 %v5997
        %6030 = vmatprep.subr.mxu0 0.0
        %6031 = vmatpush1.msra.mxu0 %v5998
        %6032 = vmatprep.subr.mxu0 0.0
        %6033 = vmatpush1.msra.mxu0 0.0
        %6034 = vmatprep.subr.mxu0 0.0
        %6035 = vmatpush1.msra.mxu0 0.0
        %6036 = vmatprep.subr.mxu0 0.0
        %6037 = vmatpush1.msra.mxu0 0.0
        %6038 = vmatprep.subr.mxu0 0.0
        %6039 = vmatpush1.msra.mxu0 0.0
        %6040 = vmatprep.subr.mxu0 0.0
        %6041 = vmatpush1.msra.mxu0 0.0
        %6042 = vmatprep.subr.mxu0 0.0
        %6043 = vmatpush1.msra.mxu0 0.0
        %6044 = vmatprep.subr.mxu0 0.0
        %6045 = vmatpush1.msra.mxu0 0.0
        %6046 = vmatprep.subr.mxu0 0.0
        %6047 = vmatpush1.msra.mxu0 0.0
        %6048 = vmatprep.subr.mxu0 0.0
        %6049 = vmatpush1.msra.mxu0 0.0
        %6050 = vmatprep.subr.mxu0 0.0
        %6051 = vmatpush1.msra.mxu0 0.0
        %6052 = vmatprep.subr.mxu0 0.0
        %6053 = vmatpush1.msra.mxu0 0.0
        %6054 = vmatprep.subr.mxu0 0.0
        %6055 = vmatpush1.msra.mxu0 0.0
        %6056 = vmatprep.subr.mxu0 0.0
        %6057 = vmatpush1.msra.mxu0 0.0
        %6058 = vmatprep.subr.mxu0 0.0
        %6059 = vmatpush1.msra.mxu0 0.0
        %6060 = vmatprep.subr.mxu0 0.0
        %6061 = vmatpush1.msra.mxu0 0.0
        %6062 = vmatprep.subr.mxu0 0.0
        %6063 = vmatpush1.msra.mxu0 0.0
        %6064 = vmatprep.mubr.f32.mxu0 0.0
        %6065 = vmatmul.mubr.f32.gmra.mrb[0].mxu0 %v5982
        %v6066 = vpop.f32.mrb[0].mxu0
        %v6067 = vadd.f32 %v5999, %v6066
        %v6068 = vpop.f32.mrb[0].mxu0
        %6069 = vdwg.mxu0
        %v6070 = vlaneseq
        %v6071 = vshrl.u32 %v6070, 7
        %v6072 = vsub.s32 0, %v6071
        %v6073 = vrot.slane %v6067, %v6072
        %6074 = vst [vmem:[%s369] sm:$0xff] %v6073
        %s6075 = sand.u32 %s227, 1
        %s6076 = scalar_lea.sflag [#allocation7], %s6075
        %s6077 = sand.u32 %s227, 1
        %s6078 = smul.addr %s6077, 8
        %s6079 = scalar_lea.vmem [#allocation11], %s6078
        // Predicated region
        $region69: #{tpu_custom_call.1} parent=55 // pred_check
          %p6080 = pneg %p237
        $region70: #{tpu_custom_call.1} parent=55 // pred_check_branch
          %6082 = sbr.rel (%p6080) target = $region72
        $region71: #{tpu_custom_call.1} parent=55 // pred_region
          %s6084 = ssub.s32 128, 128
          %6085 = vsyncadd %s6076, %s6084
          %s6086 = smul.addr %s25, 128
          %s6087 = scalar_lea.hbm %s9, %s6086
          %s6089 = sshll.u32 %s6079, 4
          %s6090 = int_to_ptr.vmem [resolvable:$true] %s6089
          %6092 = dma.vmem_to_hbm [thread:$0]  %s6090, 128, %s6087, %s6076
        $region72: #{tpu_custom_call.1} parent=55 // pred_fallthru
          _
      $region56: #{tpu_custom_call.1} parent=5 // pred_fallthru
        _
      %p6093 = scmp.le.s32.totalorder 2, %s20
      // Predicated region
      $region73: #{tpu_custom_call.1} parent=5 // pred_check
        %p6094 = pneg %p6093
      $region74: #{tpu_custom_call.1} parent=5 // pred_check_branch
        %6096 = sbr.rel (%p6094) target = $region76
      $region75: #{tpu_custom_call.1} parent=5 // pred_region
        %s6097 = ssub.s32 %s20, 2
        // Predicated region
        $region77: #{tpu_custom_call.1} parent=75 // pred_check
          %p6098 = pneg %p243
        $region78: #{tpu_custom_call.1} parent=75 // pred_check_branch
          %6100 = sbr.rel (%p6098) target = $region80
        $region79: #{tpu_custom_call.1} parent=75 // pred_region
          %s6101 = sand.u32 %s228, 1
          %s6102 = scalar_lea.sflag [#allocation7], %s6101
          %s6103 = sand.u32 %s228, 1
          %s6104 = smul.addr %s6103, 8
          %s6105 = scalar_lea.vmem [#allocation11], %s6104
          %6106 = dma.done %s6102, 128
        $region80: #{tpu_custom_call.1} parent=75 // pred_fallthru
          _
      $region76: #{tpu_custom_call.1} parent=5 // pred_fallthru
        _
    $region6: #{tpu_custom_call.1} parent=1 // loop_footer
      %s24 = sadd.s32 1, %s20
    $region7: #{tpu_custom_call.1} parent=1 // loop_footer_branch
      %19 = sbr.rel target = $region3
    $region8: #{tpu_custom_call.1} parent=1 // loop_exit
      _
    %6107 = vsyncpa [#allocation6], 1
    %s6108 = scalar_lea.sflag [#allocation6], 1
    %6109 = vsyncpa %s6108, 1
    %6110 = vsyncpa [#allocation9], 1
    %6111 = vsyncpa [#allocation7], 1
    %s6112 = scalar_lea.sflag [#allocation7], 1
    %6113 = vsyncpa %s6112, 1

</llo_original>
